<compile_context>
chip_gen: v7x
topology: tpu7x:2x2x1
jax: 0.10.0
libtpu: 0.0.40
codegen_flags: <defaults>
</compile_context>

<pallas_src>
import math
import jax
import jax.numpy as jnp
from jax.experimental import pallas as pl
from jax.experimental.pallas import tpu as pltpu

D_MODEL = 128
N_HEADS = 4
D_K = D_MODEL // N_HEADS
LN_EPS = 1e-5
_ATTN_SCALE = 1.0 / math.sqrt(D_K)


def _softmax_rows(s):
    """Stable softmax over the last axis.  approx reciprocal lands on the
    otherwise-idle EUP slot; one Newton step restores ~f32 accuracy."""
    s = s - jnp.max(s, axis=-1, keepdims=True)
    p = jnp.exp(s)
    denom = jnp.sum(p, axis=-1, keepdims=True)
    inv = pl.reciprocal(denom, approx=True)
    inv = inv * (2.0 - denom * inv)          # Newton refinement
    return p * inv


def _mha_heads(q, k, v, mm_dtype):
    """Multi-head attention batched over the batch chunk.

    q: (BB, Lq, D) already scaled by 1/sqrt(d_k); k, v: (BB, Lk, D).
    Returns a list of per-head outputs (BB, Lq, D_K).  Head outputs are NOT
    concatenated along lanes; the caller folds the recombination into the next
    (D, N) projection via per-head partial-matmul accumulation, removing the
    128-lane concat relayout flagged by the perf review.
    """
    outs = []
    for h in range(N_HEADS):
        lo = h * D_K
        qh = q[:, :, lo:lo + D_K].astype(mm_dtype)
        kh = k[:, :, lo:lo + D_K].astype(mm_dtype)
        vh = v[:, :, lo:lo + D_K].astype(mm_dtype)
        s = jnp.einsum('bqd,bkd->bqk', qh, kh,
                       preferred_element_type=jnp.float32)
        p = _softmax_rows(s)
        outs.append(jnp.einsum('bqk,bkd->bqd', p.astype(mm_dtype), vh,
                               preferred_element_type=jnp.float32))
    return outs


def processing_block_kernel(tok_ref, res_ref,
                            wq1_ref, wres_ref, wkv2_ref,
                            wo_ref, bo_ref, gamma_ref, beta_ref,
                            out_ref):
    BB, S, D = tok_ref.shape
    _, R, _ = res_ref.shape
    mm_dtype = wq1_ref.dtype          # f32 (exact) or bf16 (fast MXU v6e/v7x)

    def mm(x, w):
        return jnp.dot(x.astype(mm_dtype), w,
                       preferred_element_type=jnp.float32)

    tok2d = tok_ref[...].reshape(BB * S, D)
    res2d = res_ref[...].reshape(BB * R, D)       # f32 for residual-add + LN

    # --- token-side query projection (queries pre-scaled once, not per head)
    q1 = (mm(tok2d, wq1_ref[...]) * _ATTN_SCALE).reshape(BB, S, D)

    # --- residual-side fused projection: [k1 | v1 | q2]  (N = 3*D)
    resp = mm(res2d, wres_ref[...])
    k1 = resp[:, :D].reshape(BB, R, D)
    v1 = resp[:, D:2 * D].reshape(BB, R, D)
    q2 = (resp[:, 2 * D:] * _ATTN_SCALE).reshape(BB, R, D)

    # --- ProcessingAttention: tokens (queries) attend to residual state
    a1_heads = _mha_heads(q1, k1, v1, mm_dtype)   # H x (BB, S, D_K)

    # --- fused K/V projection of token representations: [k2 | v2] (N = 2*D)
    #     concat-free head recombination: sum_h a1_h @ W[h*dk:(h+1)*dk, :]
    kv2 = None
    for h in range(N_HEADS):
        part = mm(a1_heads[h].reshape(BB * S, D_K),
                  wkv2_ref[h * D_K:(h + 1) * D_K, :])
        kv2 = part if kv2 is None else kv2 + part
    k2 = kv2[:, :D].reshape(BB, S, D)
    v2 = kv2[:, D:].reshape(BB, S, D)

    # --- ResidualUpdater: residual (queries) attend to token representations
    a2_heads = _mha_heads(q2, k2, v2, mm_dtype)   # H x (BB, R, D_K)

    upd = None
    for h in range(N_HEADS):
        part = mm(a2_heads[h].reshape(BB * R, D_K),
                  wo_ref[h * D_K:(h + 1) * D_K, :])
        upd = part if upd is None else upd + part
    upd = upd + bo_ref[...]

    # --- residual add + LayerNorm (dropout is identity in eval mode)
    x = res2d + upd
    mean = jnp.mean(x, axis=-1, keepdims=True)
    var = jnp.mean((x - mean) ** 2, axis=-1, keepdims=True)
    y = (x - mean) * jax.lax.rsqrt(var + LN_EPS)
    y = y * gamma_ref[...] + beta_ref[...]
    out_ref[...] = y.reshape(BB, R, D).astype(out_ref.dtype)


def prepare_params(params, matmul_dtype=jnp.float32):
    """One-time parameter preparation (hoisted out of the per-call wrapper).

    Fuses weights that consume the same activations and optionally casts the
    matmul weights to bf16 (recommended on v6e/v7x; re-validate tolerance).
    """
    wq1, wk1, wv1, wq2, wk2, wv2, wo, bo, gamma, beta = params
    w_res = jnp.concatenate([wk1, wv1, wq2], axis=1)     # (D, 3D) -> [k1|v1|q2]
    w_kv2 = jnp.concatenate([wk2, wv2], axis=1)          # (D, 2D) -> [k2|v2]
    c = lambda w: w.astype(matmul_dtype)
    return (c(wq1), c(w_res), c(w_kv2), c(wo),
            bo.astype(jnp.float32), gamma.astype(jnp.float32),
            beta.astype(jnp.float32))


def _chunk_vmem_bytes(bb, S, R, D, w_itemsize):
    """Rough per-grid-step VMEM footprint (activation blocks double-buffered,
    live f32 temporaries, fused weights double-buffered)."""
    act = 4 * bb * D * (S + 2 * R) * 2
    inter = 4 * bb * D * (6 * S + 6 * R)
    weights = w_itemsize * D * (7 * D) * 2 + 4 * 3 * D
    return act + inter + weights


def _pick_num_chunks(B, S, R, D, w_itemsize=4, vmem_budget=16 * 1024 * 1024):
    """Smallest batch split (divisor of B) whose per-chunk footprint fits well
    under the default scoped-VMEM limit on every generation (budget 16 MiB).
    Tiny batches fold into a single grid step (max matmul M-dim, one fixed
    overhead).  If half the batch still gives >=256 matmul rows, prefer two
    chunks so v7x's two TensorCores each get one ('parallel' grid axis)."""
    divisors = [d for d in range(1, B + 1) if B % d == 0]
    fitting = [d for d in divisors
               if _chunk_vmem_bytes(B // d, S, R, D, w_itemsize) <= vmem_budget]
    chunks = fitting[0] if fitting else B
    if (chunks == 1 and B % 2 == 0 and (B // 2) * min(S, R) >= 256
            and _chunk_vmem_bytes(B // 2, S, R, D, w_itemsize) <= vmem_budget):
        chunks = 2
    return chunks


def processing_block(token_embeddings, residual_state, prepared_params,
                     num_chunks=None):
    B, S, D = token_embeddings.shape
    _, R, _ = residual_state.shape
    assert D == D_MODEL and D % N_HEADS == 0
    wq1, w_res, w_kv2, wo, bo, gamma, beta = prepared_params

    if num_chunks is None:
        num_chunks = _pick_num_chunks(B, S, R, D,
                                      jnp.dtype(wq1.dtype).itemsize)
    assert B % num_chunks == 0, "num_chunks must divide the batch"
    # TODO(synk): for awkward (e.g. prime) large batches, pad B to a convenient
    # multiple and mask the tail instead of degrading toward BB=1.
    BB = B // num_chunks

    def const_spec(shape):
        n = len(shape)
        return pl.BlockSpec(shape, lambda b, _n=n: (0,) * _n)

    in_specs = [
        pl.BlockSpec((BB, S, D), lambda b: (b, 0, 0)),   # token_embeddings
        pl.BlockSpec((BB, R, D), lambda b: (b, 0, 0)),   # residual_state
        const_spec(wq1.shape),     # constant index_map -> fetched once across
        const_spec(w_res.shape),   # the grid (only revisit bookkeeping left);
        const_spec(w_kv2.shape),   # pl.Buffered(1) would also drop the spare
        const_spec(wo.shape),      # buffer if BB/S grow.
        const_spec(bo.shape),
        const_spec(gamma.shape),
        const_spec(beta.shape),
    ]

    # Advisory cost estimate (whole call).
    proj_flops = 2 * D * D * (S + 3 * R + 2 * S + R)     # per batch element
    attn_flops = 8 * S * R * D                           # both attentions
    flops = B * (proj_flops + attn_flops)
    transcendentals = B * (2 * N_HEADS * S * R + N_HEADS * (S + R) + R)
    bytes_accessed = (4 * B * (S * D + 2 * R * D)
                      + sum(int(p.size) * jnp.dtype(p.dtype).itemsize
                            for p in prepared_params))
    cost = pl.CostEstimate(flops=int(flops),
                           transcendentals=int(transcendentals),
                           bytes_accessed=int(bytes_accessed))

    return pl.pallas_call(
        processing_block_kernel,
        out_shape=jax.ShapeDtypeStruct((B, R, D), jnp.float32),
        grid=(num_chunks,),
        in_specs=in_specs,
        out_specs=pl.BlockSpec((BB, R, D), lambda b: (b, 0, 0)),
        compiler_params=pltpu.CompilerParams(
            dimension_semantics=("parallel",)),   # batch chunks independent
        cost_estimate=cost,
    )(token_embeddings, residual_state, wq1, w_res, w_kv2, wo, bo, gamma, beta)


def ref_forward(tok, res, params):
    """Pure-JAX reference mirroring the PyTorch module (eval mode)."""
    wq1, wk1, wv1, wq2, wk2, wv2, wo, bo, gamma, beta = params

    def mha(q, k, v):
        B, Lq, D = q.shape
        Lk = k.shape[1]
        qh = q.reshape(B, Lq, N_HEADS, D_K).transpose(0, 2, 1, 3)
        kh = k.reshape(B, Lk, N_HEADS, D_K).transpose(0, 2, 1, 3)
        vh = v.reshape(B, Lk, N_HEADS, D_K).transpose(0, 2, 1, 3)
        s = jnp.einsum('bhqd,bhkd->bhqk', qh, kh) / math.sqrt(D_K)
        p = jax.nn.softmax(s, axis=-1)
        o = jnp.einsum('bhqk,bhkd->bhqd', p, vh)
        return o.transpose(0, 2, 1, 3).reshape(B, Lq, D)

    a1 = mha(tok @ wq1, res @ wk1, res @ wv1)
    a2 = mha(res @ wq2, a1 @ wk2, a1 @ wv2)
    upd = a2 @ wo + bo
    x = res + upd
    mean = jnp.mean(x, -1, keepdims=True)
    var = jnp.mean((x - mean) ** 2, -1, keepdims=True)
    return (x - mean) / jnp.sqrt(var + LN_EPS) * gamma + beta


if __name__ == "__main__":
    B, S, R = 4, 8, 8   # batch, seq_len, fixed_kv_length
    key = jax.random.PRNGKey(0)
    keys = jax.random.split(key, 12)

    token_embeddings = jax.random.normal(keys[0], (B, S, D_MODEL), jnp.float32)
    residual_state = jax.random.normal(keys[1], (B, R, D_MODEL), jnp.float32)

    w_scale = 0.05
    wq1 = jax.random.normal(keys[2], (D_MODEL, D_MODEL), jnp.float32) * w_scale
    wk1 = jax.random.normal(keys[3], (D_MODEL, D_MODEL), jnp.float32) * w_scale
    wv1 = jax.random.normal(keys[4], (D_MODEL, D_MODEL), jnp.float32) * w_scale
    wq2 = jax.random.normal(keys[5], (D_MODEL, D_MODEL), jnp.float32) * w_scale
    wk2 = jax.random.normal(keys[6], (D_MODEL, D_MODEL), jnp.float32) * w_scale
    wv2 = jax.random.normal(keys[7], (D_MODEL, D_MODEL), jnp.float32) * w_scale
    wo = jax.random.normal(keys[8], (D_MODEL, D_MODEL), jnp.float32) * w_scale
    bo = jax.random.normal(keys[9], (1, D_MODEL), jnp.float32) * w_scale
    gamma = jnp.ones((1, D_MODEL), jnp.float32) \
        + 0.1 * jax.random.normal(keys[10], (1, D_MODEL), jnp.float32)
    beta = 0.1 * jax.random.normal(keys[11], (1, D_MODEL), jnp.float32)
    params = (wq1, wk1, wv1, wq2, wk2, wv2, wo, bo, gamma, beta)

    ref = ref_forward(token_embeddings, residual_state, params)

    # f32 matmul path (exact): auto chunking folds the whole tiny batch into a
    # single grid step (M = B*S = 32 rows per projection).
    prepped = prepare_params(params)                        # one-time fusion
    out = jax.block_until_ready(
        processing_block(token_embeddings, residual_state, prepped))
    assert out.shape == (B, R, D_MODEL)
    err = float(jnp.max(jnp.abs(out - ref)))
    assert jnp.allclose(out, ref, rtol=1e-4, atol=1e-4), f"f32 max err {err}"

    # Multi-chunk grid path (what a v7x-sized batch would use): still exact.
    out2 = jax.block_until_ready(
        processing_block(token_embeddings, residual_state, prepped,
                         num_chunks=2))
    assert jnp.allclose(out2, ref, rtol=1e-4, atol=1e-4)

    # bf16 matmul path (v6e/v7x MXU-native); softmax/LayerNorm stay f32, so a
    # looser tolerance applies.
    prepped_bf16 = prepare_params(params, jnp.bfloat16)
    out_bf16 = jax.block_until_ready(
        processing_block(token_embeddings, residual_state, prepped_bf16))
    bf16_err = float(jnp.max(jnp.abs(out_bf16 - ref)))
    assert bf16_err < 0.1, f"bf16 max err {bf16_err}"

    print("KERNEL_OK")
</pallas_src>

<mosaic_0001>
module attributes {stable_mosaic.version = 11 : i64} {
  func.func @processing_block_kernel(%arg0: i32, %arg1: memref<4x8x128xf32, #tpu.memory_space<vmem>>, %arg2: memref<4x8x128xf32, #tpu.memory_space<vmem>>, %arg3: memref<128x128xf32, #tpu.memory_space<vmem>>, %arg4: memref<128x384xf32, #tpu.memory_space<vmem>>, %arg5: memref<128x256xf32, #tpu.memory_space<vmem>>, %arg6: memref<128x128xf32, #tpu.memory_space<vmem>>, %arg7: memref<1x128xf32, #tpu.memory_space<vmem>>, %arg8: memref<1x128xf32, #tpu.memory_space<vmem>>, %arg9: memref<1x128xf32, #tpu.memory_space<vmem>>, %arg10: memref<4x8x128xf32, #tpu.memory_space<vmem>>) attributes {dimension_semantics = [#tpu.dimension_semantics<parallel>], iteration_bounds = array<i64: 1>, scalar_prefetch = 0 : i64, scratch_operands = 0 : i64, tpu.core_type = #tpu.core_type<tc>, window_params = [{transform_indices = @transform_0, window_bounds = array<i64: 4, 8, 128>}, {transform_indices = @transform_1, window_bounds = array<i64: 4, 8, 128>}, {pipeline_mode = #tpu.pipeline_mode<synchronous>, transform_indices = @transform_2, window_bounds = array<i64: 128, 128>}, {pipeline_mode = #tpu.pipeline_mode<synchronous>, transform_indices = @transform_3, window_bounds = array<i64: 128, 384>}, {pipeline_mode = #tpu.pipeline_mode<synchronous>, transform_indices = @transform_4, window_bounds = array<i64: 128, 256>}, {pipeline_mode = #tpu.pipeline_mode<synchronous>, transform_indices = @transform_5, window_bounds = array<i64: 128, 128>}, {pipeline_mode = #tpu.pipeline_mode<synchronous>, transform_indices = @transform_6, window_bounds = array<i64: 1, 128>}, {pipeline_mode = #tpu.pipeline_mode<synchronous>, transform_indices = @transform_7, window_bounds = array<i64: 1, 128>}, {pipeline_mode = #tpu.pipeline_mode<synchronous>, transform_indices = @transform_8, window_bounds = array<i64: 1, 128>}, {transform_indices = @transform_9, window_bounds = array<i64: 4, 8, 128>}]} {
    %c0 = arith.constant 0 : index
    %c0_0 = arith.constant 0 : index
    %c0_1 = arith.constant 0 : index
    %0 = vector.load %arg1[%c0, %c0_0, %c0_1] : memref<4x8x128xf32, #tpu.memory_space<vmem>>, vector<4x8x128xf32>
    %1 = vector.shape_cast %0 : vector<4x8x128xf32> to vector<32x128xf32>
    %c0_2 = arith.constant 0 : index
    %c0_3 = arith.constant 0 : index
    %c0_4 = arith.constant 0 : index
    %2 = vector.load %arg2[%c0_2, %c0_3, %c0_4] : memref<4x8x128xf32, #tpu.memory_space<vmem>>, vector<4x8x128xf32>
    %3 = vector.shape_cast %2 : vector<4x8x128xf32> to vector<32x128xf32>
    %c0_5 = arith.constant 0 : index
    %c0_6 = arith.constant 0 : index
    %4 = vector.load %arg3[%c0_5, %c0_6] : memref<128x128xf32, #tpu.memory_space<vmem>>, vector<128x128xf32>
    %cst = arith.constant dense<0.000000e+00> : vector<32x128xf32>
    %5 = tpu.matmul %1, %4, %cst {dimension_numbers = #tpu.dot_dimension_numbers<[1], [0], [0], [1], [0, 0, 1, 1], [], []>} : vector<32x128xf32>, vector<128x128xf32>, vector<32x128xf32> -> vector<32x128xf32>
    %cst_7 = arith.constant 0.176776692 : f32
    %6 = vector.broadcast %cst_7 : f32 to vector<32x128xf32>
    %7 = arith.mulf %5, %6 : vector<32x128xf32>
    %8 = vector.shape_cast %7 : vector<32x128xf32> to vector<4x8x128xf32>
    %c0_8 = arith.constant 0 : index
    %c0_9 = arith.constant 0 : index
    %9 = vector.load %arg4[%c0_8, %c0_9] : memref<128x384xf32, #tpu.memory_space<vmem>>, vector<128x384xf32>
    %cst_10 = arith.constant dense<0.000000e+00> : vector<32x384xf32>
    %10 = tpu.matmul %3, %9, %cst_10 {dimension_numbers = #tpu.dot_dimension_numbers<[1], [0], [0], [1], [0, 0, 1, 1], [], []>} : vector<32x128xf32>, vector<128x384xf32>, vector<32x384xf32> -> vector<32x384xf32>
    %11 = vector.extract_strided_slice %10 {offsets = [0, 0], sizes = [32, 128], strides = [1, 1]} : vector<32x384xf32> to vector<32x128xf32>
    %12 = vector.shape_cast %11 : vector<32x128xf32> to vector<4x8x128xf32>
    %13 = vector.extract_strided_slice %10 {offsets = [0, 128], sizes = [32, 128], strides = [1, 1]} : vector<32x384xf32> to vector<32x128xf32>
    %14 = vector.shape_cast %13 : vector<32x128xf32> to vector<4x8x128xf32>
    %15 = vector.extract_strided_slice %10 {offsets = [0, 256], sizes = [32, 128], strides = [1, 1]} : vector<32x384xf32> to vector<32x128xf32>
    %cst_11 = arith.constant 0.176776692 : f32
    %16 = vector.broadcast %cst_11 : f32 to vector<32x128xf32>
    %17 = arith.mulf %15, %16 : vector<32x128xf32>
    %18 = vector.shape_cast %17 : vector<32x128xf32> to vector<4x8x128xf32>
    %19 = vector.extract_strided_slice %8 {offsets = [0, 0, 0], sizes = [4, 8, 32], strides = [1, 1, 1]} : vector<4x8x128xf32> to vector<4x8x32xf32>
    %20 = vector.extract_strided_slice %12 {offsets = [0, 0, 0], sizes = [4, 8, 32], strides = [1, 1, 1]} : vector<4x8x128xf32> to vector<4x8x32xf32>
    %21 = vector.extract_strided_slice %14 {offsets = [0, 0, 0], sizes = [4, 8, 32], strides = [1, 1, 1]} : vector<4x8x128xf32> to vector<4x8x32xf32>
    "tpu.trace_start"() <{level = 10 : i32, message = "bqd,bkd->bqk"}> : () -> ()
    %cst_12 = arith.constant dense<0.000000e+00> : vector<4x8x8xf32>
    %22 = tpu.matmul %19, %20, %cst_12 {dimension_numbers = #tpu.dot_dimension_numbers<[2], [2], [1], [1], [0, 0, 0, 1, 1, 1], [0], [0]>} : vector<4x8x32xf32>, vector<4x8x32xf32>, vector<4x8x8xf32> -> vector<4x8x8xf32>
    "tpu.trace_stop"() : () -> ()
    %cst_13 = arith.constant dense<0xFF800000> : vector<4x8xf32>
    %23 = vector.multi_reduction <maximumf>, %22, %cst_13 [2] : vector<4x8x8xf32> to vector<4x8xf32>
    %24 = vector.shape_cast %23 : vector<4x8xf32> to vector<4x8x1xf32>
    %25 = vector.broadcast %24 : vector<4x8x1xf32> to vector<4x8x8xf32>
    %26 = arith.subf %22, %25 : vector<4x8x8xf32>
    %27 = math.exp %26 : vector<4x8x8xf32>
    %cst_14 = arith.constant dense<0.000000e+00> : vector<4x8xf32>
    %28 = vector.multi_reduction <add>, %27, %cst_14 [2] : vector<4x8x8xf32> to vector<4x8xf32>
    %29 = vector.shape_cast %28 : vector<4x8xf32> to vector<4x8x1xf32>
    %30 = tpu.reciprocal %29 {approx = true} : vector<4x8x1xf32> -> vector<4x8x1xf32>
    %31 = arith.mulf %29, %30 : vector<4x8x1xf32>
    %cst_15 = arith.constant 2.000000e+00 : f32
    %32 = vector.broadcast %cst_15 : f32 to vector<4x8x1xf32>
    %33 = arith.subf %32, %31 : vector<4x8x1xf32>
    %34 = arith.mulf %30, %33 : vector<4x8x1xf32>
    %35 = vector.broadcast %34 : vector<4x8x1xf32> to vector<4x8x8xf32>
    %36 = arith.mulf %27, %35 : vector<4x8x8xf32>
    "tpu.trace_start"() <{level = 10 : i32, message = "bqk,bkd->bqd"}> : () -> ()
    %cst_16 = arith.constant dense<0.000000e+00> : vector<4x8x32xf32>
    %37 = tpu.matmul %36, %21, %cst_16 {dimension_numbers = #tpu.dot_dimension_numbers<[2], [1], [1], [2], [0, 0, 0, 1, 1, 2], [0], [0]>} : vector<4x8x8xf32>, vector<4x8x32xf32>, vector<4x8x32xf32> -> vector<4x8x32xf32>
    "tpu.trace_stop"() : () -> ()
    %38 = vector.extract_strided_slice %8 {offsets = [0, 0, 32], sizes = [4, 8, 32], strides = [1, 1, 1]} : vector<4x8x128xf32> to vector<4x8x32xf32>
    %39 = vector.extract_strided_slice %12 {offsets = [0, 0, 32], sizes = [4, 8, 32], strides = [1, 1, 1]} : vector<4x8x128xf32> to vector<4x8x32xf32>
    %40 = vector.extract_strided_slice %14 {offsets = [0, 0, 32], sizes = [4, 8, 32], strides = [1, 1, 1]} : vector<4x8x128xf32> to vector<4x8x32xf32>
    "tpu.trace_start"() <{level = 10 : i32, message = "bqd,bkd->bqk"}> : () -> ()
    %cst_17 = arith.constant dense<0.000000e+00> : vector<4x8x8xf32>
    %41 = tpu.matmul %38, %39, %cst_17 {dimension_numbers = #tpu.dot_dimension_numbers<[2], [2], [1], [1], [0, 0, 0, 1, 1, 1], [0], [0]>} : vector<4x8x32xf32>, vector<4x8x32xf32>, vector<4x8x8xf32> -> vector<4x8x8xf32>
    "tpu.trace_stop"() : () -> ()
    %cst_18 = arith.constant dense<0xFF800000> : vector<4x8xf32>
    %42 = vector.multi_reduction <maximumf>, %41, %cst_18 [2] : vector<4x8x8xf32> to vector<4x8xf32>
    %43 = vector.shape_cast %42 : vector<4x8xf32> to vector<4x8x1xf32>
    %44 = vector.broadcast %43 : vector<4x8x1xf32> to vector<4x8x8xf32>
    %45 = arith.subf %41, %44 : vector<4x8x8xf32>
    %46 = math.exp %45 : vector<4x8x8xf32>
    %cst_19 = arith.constant dense<0.000000e+00> : vector<4x8xf32>
    %47 = vector.multi_reduction <add>, %46, %cst_19 [2] : vector<4x8x8xf32> to vector<4x8xf32>
    %48 = vector.shape_cast %47 : vector<4x8xf32> to vector<4x8x1xf32>
    %49 = tpu.reciprocal %48 {approx = true} : vector<4x8x1xf32> -> vector<4x8x1xf32>
    %50 = arith.mulf %48, %49 : vector<4x8x1xf32>
    %cst_20 = arith.constant 2.000000e+00 : f32
    %51 = vector.broadcast %cst_20 : f32 to vector<4x8x1xf32>
    %52 = arith.subf %51, %50 : vector<4x8x1xf32>
    %53 = arith.mulf %49, %52 : vector<4x8x1xf32>
    %54 = vector.broadcast %53 : vector<4x8x1xf32> to vector<4x8x8xf32>
    %55 = arith.mulf %46, %54 : vector<4x8x8xf32>
    "tpu.trace_start"() <{level = 10 : i32, message = "bqk,bkd->bqd"}> : () -> ()
    %cst_21 = arith.constant dense<0.000000e+00> : vector<4x8x32xf32>
    %56 = tpu.matmul %55, %40, %cst_21 {dimension_numbers = #tpu.dot_dimension_numbers<[2], [1], [1], [2], [0, 0, 0, 1, 1, 2], [0], [0]>} : vector<4x8x8xf32>, vector<4x8x32xf32>, vector<4x8x32xf32> -> vector<4x8x32xf32>
    "tpu.trace_stop"() : () -> ()
    %57 = vector.extract_strided_slice %8 {offsets = [0, 0, 64], sizes = [4, 8, 32], strides = [1, 1, 1]} : vector<4x8x128xf32> to vector<4x8x32xf32>
    %58 = vector.extract_strided_slice %12 {offsets = [0, 0, 64], sizes = [4, 8, 32], strides = [1, 1, 1]} : vector<4x8x128xf32> to vector<4x8x32xf32>
    %59 = vector.extract_strided_slice %14 {offsets = [0, 0, 64], sizes = [4, 8, 32], strides = [1, 1, 1]} : vector<4x8x128xf32> to vector<4x8x32xf32>
    "tpu.trace_start"() <{level = 10 : i32, message = "bqd,bkd->bqk"}> : () -> ()
    %cst_22 = arith.constant dense<0.000000e+00> : vector<4x8x8xf32>
    %60 = tpu.matmul %57, %58, %cst_22 {dimension_numbers = #tpu.dot_dimension_numbers<[2], [2], [1], [1], [0, 0, 0, 1, 1, 1], [0], [0]>} : vector<4x8x32xf32>, vector<4x8x32xf32>, vector<4x8x8xf32> -> vector<4x8x8xf32>
    "tpu.trace_stop"() : () -> ()
    %cst_23 = arith.constant dense<0xFF800000> : vector<4x8xf32>
    %61 = vector.multi_reduction <maximumf>, %60, %cst_23 [2] : vector<4x8x8xf32> to vector<4x8xf32>
    %62 = vector.shape_cast %61 : vector<4x8xf32> to vector<4x8x1xf32>
    %63 = vector.broadcast %62 : vector<4x8x1xf32> to vector<4x8x8xf32>
    %64 = arith.subf %60, %63 : vector<4x8x8xf32>
    %65 = math.exp %64 : vector<4x8x8xf32>
    %cst_24 = arith.constant dense<0.000000e+00> : vector<4x8xf32>
    %66 = vector.multi_reduction <add>, %65, %cst_24 [2] : vector<4x8x8xf32> to vector<4x8xf32>
    %67 = vector.shape_cast %66 : vector<4x8xf32> to vector<4x8x1xf32>
    %68 = tpu.reciprocal %67 {approx = true} : vector<4x8x1xf32> -> vector<4x8x1xf32>
    %69 = arith.mulf %67, %68 : vector<4x8x1xf32>
    %cst_25 = arith.constant 2.000000e+00 : f32
    %70 = vector.broadcast %cst_25 : f32 to vector<4x8x1xf32>
    %71 = arith.subf %70, %69 : vector<4x8x1xf32>
    %72 = arith.mulf %68, %71 : vector<4x8x1xf32>
    %73 = vector.broadcast %72 : vector<4x8x1xf32> to vector<4x8x8xf32>
    %74 = arith.mulf %65, %73 : vector<4x8x8xf32>
    "tpu.trace_start"() <{level = 10 : i32, message = "bqk,bkd->bqd"}> : () -> ()
    %cst_26 = arith.constant dense<0.000000e+00> : vector<4x8x32xf32>
    %75 = tpu.matmul %74, %59, %cst_26 {dimension_numbers = #tpu.dot_dimension_numbers<[2], [1], [1], [2], [0, 0, 0, 1, 1, 2], [0], [0]>} : vector<4x8x8xf32>, vector<4x8x32xf32>, vector<4x8x32xf32> -> vector<4x8x32xf32>
    "tpu.trace_stop"() : () -> ()
    %76 = vector.extract_strided_slice %8 {offsets = [0, 0, 96], sizes = [4, 8, 32], strides = [1, 1, 1]} : vector<4x8x128xf32> to vector<4x8x32xf32>
    %77 = vector.extract_strided_slice %12 {offsets = [0, 0, 96], sizes = [4, 8, 32], strides = [1, 1, 1]} : vector<4x8x128xf32> to vector<4x8x32xf32>
    %78 = vector.extract_strided_slice %14 {offsets = [0, 0, 96], sizes = [4, 8, 32], strides = [1, 1, 1]} : vector<4x8x128xf32> to vector<4x8x32xf32>
    "tpu.trace_start"() <{level = 10 : i32, message = "bqd,bkd->bqk"}> : () -> ()
    %cst_27 = arith.constant dense<0.000000e+00> : vector<4x8x8xf32>
    %79 = tpu.matmul %76, %77, %cst_27 {dimension_numbers = #tpu.dot_dimension_numbers<[2], [2], [1], [1], [0, 0, 0, 1, 1, 1], [0], [0]>} : vector<4x8x32xf32>, vector<4x8x32xf32>, vector<4x8x8xf32> -> vector<4x8x8xf32>
    "tpu.trace_stop"() : () -> ()
    %cst_28 = arith.constant dense<0xFF800000> : vector<4x8xf32>
    %80 = vector.multi_reduction <maximumf>, %79, %cst_28 [2] : vector<4x8x8xf32> to vector<4x8xf32>
    %81 = vector.shape_cast %80 : vector<4x8xf32> to vector<4x8x1xf32>
    %82 = vector.broadcast %81 : vector<4x8x1xf32> to vector<4x8x8xf32>
    %83 = arith.subf %79, %82 : vector<4x8x8xf32>
    %84 = math.exp %83 : vector<4x8x8xf32>
    %cst_29 = arith.constant dense<0.000000e+00> : vector<4x8xf32>
    %85 = vector.multi_reduction <add>, %84, %cst_29 [2] : vector<4x8x8xf32> to vector<4x8xf32>
    %86 = vector.shape_cast %85 : vector<4x8xf32> to vector<4x8x1xf32>
    %87 = tpu.reciprocal %86 {approx = true} : vector<4x8x1xf32> -> vector<4x8x1xf32>
    %88 = arith.mulf %86, %87 : vector<4x8x1xf32>
    %cst_30 = arith.constant 2.000000e+00 : f32
    %89 = vector.broadcast %cst_30 : f32 to vector<4x8x1xf32>
    %90 = arith.subf %89, %88 : vector<4x8x1xf32>
    %91 = arith.mulf %87, %90 : vector<4x8x1xf32>
    %92 = vector.broadcast %91 : vector<4x8x1xf32> to vector<4x8x8xf32>
    %93 = arith.mulf %84, %92 : vector<4x8x8xf32>
    "tpu.trace_start"() <{level = 10 : i32, message = "bqk,bkd->bqd"}> : () -> ()
    %cst_31 = arith.constant dense<0.000000e+00> : vector<4x8x32xf32>
    %94 = tpu.matmul %93, %78, %cst_31 {dimension_numbers = #tpu.dot_dimension_numbers<[2], [1], [1], [2], [0, 0, 0, 1, 1, 2], [0], [0]>} : vector<4x8x8xf32>, vector<4x8x32xf32>, vector<4x8x32xf32> -> vector<4x8x32xf32>
    "tpu.trace_stop"() : () -> ()
    %95 = vector.shape_cast %37 : vector<4x8x32xf32> to vector<32x32xf32>
    %c0_32 = arith.constant 0 : index
    %c0_33 = arith.constant 0 : index
    %96 = vector.load %arg5[%c0_32, %c0_33] : memref<128x256xf32, #tpu.memory_space<vmem>>, vector<32x256xf32>
    %cst_34 = arith.constant dense<0.000000e+00> : vector<32x256xf32>
    %97 = tpu.matmul %95, %96, %cst_34 {dimension_numbers = #tpu.dot_dimension_numbers<[1], [0], [0], [1], [0, 0, 1, 1], [], []>} : vector<32x32xf32>, vector<32x256xf32>, vector<32x256xf32> -> vector<32x256xf32>
    %98 = vector.shape_cast %56 : vector<4x8x32xf32> to vector<32x32xf32>
    %c32 = arith.constant 32 : index
    %c0_35 = arith.constant 0 : index
    %99 = vector.load %arg5[%c32, %c0_35] : memref<128x256xf32, #tpu.memory_space<vmem>>, vector<32x256xf32>
    %cst_36 = arith.constant dense<0.000000e+00> : vector<32x256xf32>
    %100 = tpu.matmul %98, %99, %cst_36 {dimension_numbers = #tpu.dot_dimension_numbers<[1], [0], [0], [1], [0, 0, 1, 1], [], []>} : vector<32x32xf32>, vector<32x256xf32>, vector<32x256xf32> -> vector<32x256xf32>
    %101 = arith.addf %97, %100 : vector<32x256xf32>
    %102 = vector.shape_cast %75 : vector<4x8x32xf32> to vector<32x32xf32>
    %c64 = arith.constant 64 : index
    %c0_37 = arith.constant 0 : index
    %103 = vector.load %arg5[%c64, %c0_37] : memref<128x256xf32, #tpu.memory_space<vmem>>, vector<32x256xf32>
    %cst_38 = arith.constant dense<0.000000e+00> : vector<32x256xf32>
    %104 = tpu.matmul %102, %103, %cst_38 {dimension_numbers = #tpu.dot_dimension_numbers<[1], [0], [0], [1], [0, 0, 1, 1], [], []>} : vector<32x32xf32>, vector<32x256xf32>, vector<32x256xf32> -> vector<32x256xf32>
    %105 = arith.addf %101, %104 : vector<32x256xf32>
    %106 = vector.shape_cast %94 : vector<4x8x32xf32> to vector<32x32xf32>
    %c96 = arith.constant 96 : index
    %c0_39 = arith.constant 0 : index
    %107 = vector.load %arg5[%c96, %c0_39] : memref<128x256xf32, #tpu.memory_space<vmem>>, vector<32x256xf32>
    %cst_40 = arith.constant dense<0.000000e+00> : vector<32x256xf32>
    %108 = tpu.matmul %106, %107, %cst_40 {dimension_numbers = #tpu.dot_dimension_numbers<[1], [0], [0], [1], [0, 0, 1, 1], [], []>} : vector<32x32xf32>, vector<32x256xf32>, vector<32x256xf32> -> vector<32x256xf32>
    %109 = arith.addf %105, %108 : vector<32x256xf32>
    %110 = vector.extract_strided_slice %109 {offsets = [0, 0], sizes = [32, 128], strides = [1, 1]} : vector<32x256xf32> to vector<32x128xf32>
    %111 = vector.shape_cast %110 : vector<32x128xf32> to vector<4x8x128xf32>
    %112 = vector.extract_strided_slice %109 {offsets = [0, 128], sizes = [32, 128], strides = [1, 1]} : vector<32x256xf32> to vector<32x128xf32>
    %113 = vector.shape_cast %112 : vector<32x128xf32> to vector<4x8x128xf32>
    %114 = vector.extract_strided_slice %18 {offsets = [0, 0, 0], sizes = [4, 8, 32], strides = [1, 1, 1]} : vector<4x8x128xf32> to vector<4x8x32xf32>
    %115 = vector.extract_strided_slice %111 {offsets = [0, 0, 0], sizes = [4, 8, 32], strides = [1, 1, 1]} : vector<4x8x128xf32> to vector<4x8x32xf32>
    %116 = vector.extract_strided_slice %113 {offsets = [0, 0, 0], sizes = [4, 8, 32], strides = [1, 1, 1]} : vector<4x8x128xf32> to vector<4x8x32xf32>
    "tpu.trace_start"() <{level = 10 : i32, message = "bqd,bkd->bqk"}> : () -> ()
    %cst_41 = arith.constant dense<0.000000e+00> : vector<4x8x8xf32>
    %117 = tpu.matmul %114, %115, %cst_41 {dimension_numbers = #tpu.dot_dimension_numbers<[2], [2], [1], [1], [0, 0, 0, 1, 1, 1], [0], [0]>} : vector<4x8x32xf32>, vector<4x8x32xf32>, vector<4x8x8xf32> -> vector<4x8x8xf32>
    "tpu.trace_stop"() : () -> ()
    %cst_42 = arith.constant dense<0xFF800000> : vector<4x8xf32>
    %118 = vector.multi_reduction <maximumf>, %117, %cst_42 [2] : vector<4x8x8xf32> to vector<4x8xf32>
    %119 = vector.shape_cast %118 : vector<4x8xf32> to vector<4x8x1xf32>
    %120 = vector.broadcast %119 : vector<4x8x1xf32> to vector<4x8x8xf32>
    %121 = arith.subf %117, %120 : vector<4x8x8xf32>
    %122 = math.exp %121 : vector<4x8x8xf32>
    %cst_43 = arith.constant dense<0.000000e+00> : vector<4x8xf32>
    %123 = vector.multi_reduction <add>, %122, %cst_43 [2] : vector<4x8x8xf32> to vector<4x8xf32>
    %124 = vector.shape_cast %123 : vector<4x8xf32> to vector<4x8x1xf32>
    %125 = tpu.reciprocal %124 {approx = true} : vector<4x8x1xf32> -> vector<4x8x1xf32>
    %126 = arith.mulf %124, %125 : vector<4x8x1xf32>
    %cst_44 = arith.constant 2.000000e+00 : f32
    %127 = vector.broadcast %cst_44 : f32 to vector<4x8x1xf32>
    %128 = arith.subf %127, %126 : vector<4x8x1xf32>
    %129 = arith.mulf %125, %128 : vector<4x8x1xf32>
    %130 = vector.broadcast %129 : vector<4x8x1xf32> to vector<4x8x8xf32>
    %131 = arith.mulf %122, %130 : vector<4x8x8xf32>
    "tpu.trace_start"() <{level = 10 : i32, message = "bqk,bkd->bqd"}> : () -> ()
    %cst_45 = arith.constant dense<0.000000e+00> : vector<4x8x32xf32>
    %132 = tpu.matmul %131, %116, %cst_45 {dimension_numbers = #tpu.dot_dimension_numbers<[2], [1], [1], [2], [0, 0, 0, 1, 1, 2], [0], [0]>} : vector<4x8x8xf32>, vector<4x8x32xf32>, vector<4x8x32xf32> -> vector<4x8x32xf32>
    "tpu.trace_stop"() : () -> ()
    %133 = vector.extract_strided_slice %18 {offsets = [0, 0, 32], sizes = [4, 8, 32], strides = [1, 1, 1]} : vector<4x8x128xf32> to vector<4x8x32xf32>
    %134 = vector.extract_strided_slice %111 {offsets = [0, 0, 32], sizes = [4, 8, 32], strides = [1, 1, 1]} : vector<4x8x128xf32> to vector<4x8x32xf32>
    %135 = vector.extract_strided_slice %113 {offsets = [0, 0, 32], sizes = [4, 8, 32], strides = [1, 1, 1]} : vector<4x8x128xf32> to vector<4x8x32xf32>
    "tpu.trace_start"() <{level = 10 : i32, message = "bqd,bkd->bqk"}> : () -> ()
    %cst_46 = arith.constant dense<0.000000e+00> : vector<4x8x8xf32>
    %136 = tpu.matmul %133, %134, %cst_46 {dimension_numbers = #tpu.dot_dimension_numbers<[2], [2], [1], [1], [0, 0, 0, 1, 1, 1], [0], [0]>} : vector<4x8x32xf32>, vector<4x8x32xf32>, vector<4x8x8xf32> -> vector<4x8x8xf32>
    "tpu.trace_stop"() : () -> ()
    %cst_47 = arith.constant dense<0xFF800000> : vector<4x8xf32>
    %137 = vector.multi_reduction <maximumf>, %136, %cst_47 [2] : vector<4x8x8xf32> to vector<4x8xf32>
    %138 = vector.shape_cast %137 : vector<4x8xf32> to vector<4x8x1xf32>
    %139 = vector.broadcast %138 : vector<4x8x1xf32> to vector<4x8x8xf32>
    %140 = arith.subf %136, %139 : vector<4x8x8xf32>
    %141 = math.exp %140 : vector<4x8x8xf32>
    %cst_48 = arith.constant dense<0.000000e+00> : vector<4x8xf32>
    %142 = vector.multi_reduction <add>, %141, %cst_48 [2] : vector<4x8x8xf32> to vector<4x8xf32>
    %143 = vector.shape_cast %142 : vector<4x8xf32> to vector<4x8x1xf32>
    %144 = tpu.reciprocal %143 {approx = true} : vector<4x8x1xf32> -> vector<4x8x1xf32>
    %145 = arith.mulf %143, %144 : vector<4x8x1xf32>
    %cst_49 = arith.constant 2.000000e+00 : f32
    %146 = vector.broadcast %cst_49 : f32 to vector<4x8x1xf32>
    %147 = arith.subf %146, %145 : vector<4x8x1xf32>
    %148 = arith.mulf %144, %147 : vector<4x8x1xf32>
    %149 = vector.broadcast %148 : vector<4x8x1xf32> to vector<4x8x8xf32>
    %150 = arith.mulf %141, %149 : vector<4x8x8xf32>
    "tpu.trace_start"() <{level = 10 : i32, message = "bqk,bkd->bqd"}> : () -> ()
    %cst_50 = arith.constant dense<0.000000e+00> : vector<4x8x32xf32>
    %151 = tpu.matmul %150, %135, %cst_50 {dimension_numbers = #tpu.dot_dimension_numbers<[2], [1], [1], [2], [0, 0, 0, 1, 1, 2], [0], [0]>} : vector<4x8x8xf32>, vector<4x8x32xf32>, vector<4x8x32xf32> -> vector<4x8x32xf32>
    "tpu.trace_stop"() : () -> ()
    %152 = vector.extract_strided_slice %18 {offsets = [0, 0, 64], sizes = [4, 8, 32], strides = [1, 1, 1]} : vector<4x8x128xf32> to vector<4x8x32xf32>
    %153 = vector.extract_strided_slice %111 {offsets = [0, 0, 64], sizes = [4, 8, 32], strides = [1, 1, 1]} : vector<4x8x128xf32> to vector<4x8x32xf32>
    %154 = vector.extract_strided_slice %113 {offsets = [0, 0, 64], sizes = [4, 8, 32], strides = [1, 1, 1]} : vector<4x8x128xf32> to vector<4x8x32xf32>
    "tpu.trace_start"() <{level = 10 : i32, message = "bqd,bkd->bqk"}> : () -> ()
    %cst_51 = arith.constant dense<0.000000e+00> : vector<4x8x8xf32>
    %155 = tpu.matmul %152, %153, %cst_51 {dimension_numbers = #tpu.dot_dimension_numbers<[2], [2], [1], [1], [0, 0, 0, 1, 1, 1], [0], [0]>} : vector<4x8x32xf32>, vector<4x8x32xf32>, vector<4x8x8xf32> -> vector<4x8x8xf32>
    "tpu.trace_stop"() : () -> ()
    %cst_52 = arith.constant dense<0xFF800000> : vector<4x8xf32>
    %156 = vector.multi_reduction <maximumf>, %155, %cst_52 [2] : vector<4x8x8xf32> to vector<4x8xf32>
    %157 = vector.shape_cast %156 : vector<4x8xf32> to vector<4x8x1xf32>
    %158 = vector.broadcast %157 : vector<4x8x1xf32> to vector<4x8x8xf32>
    %159 = arith.subf %155, %158 : vector<4x8x8xf32>
    %160 = math.exp %159 : vector<4x8x8xf32>
    %cst_53 = arith.constant dense<0.000000e+00> : vector<4x8xf32>
    %161 = vector.multi_reduction <add>, %160, %cst_53 [2] : vector<4x8x8xf32> to vector<4x8xf32>
    %162 = vector.shape_cast %161 : vector<4x8xf32> to vector<4x8x1xf32>
    %163 = tpu.reciprocal %162 {approx = true} : vector<4x8x1xf32> -> vector<4x8x1xf32>
    %164 = arith.mulf %162, %163 : vector<4x8x1xf32>
    %cst_54 = arith.constant 2.000000e+00 : f32
    %165 = vector.broadcast %cst_54 : f32 to vector<4x8x1xf32>
    %166 = arith.subf %165, %164 : vector<4x8x1xf32>
    %167 = arith.mulf %163, %166 : vector<4x8x1xf32>
    %168 = vector.broadcast %167 : vector<4x8x1xf32> to vector<4x8x8xf32>
    %169 = arith.mulf %160, %168 : vector<4x8x8xf32>
    "tpu.trace_start"() <{level = 10 : i32, message = "bqk,bkd->bqd"}> : () -> ()
    %cst_55 = arith.constant dense<0.000000e+00> : vector<4x8x32xf32>
    %170 = tpu.matmul %169, %154, %cst_55 {dimension_numbers = #tpu.dot_dimension_numbers<[2], [1], [1], [2], [0, 0, 0, 1, 1, 2], [0], [0]>} : vector<4x8x8xf32>, vector<4x8x32xf32>, vector<4x8x32xf32> -> vector<4x8x32xf32>
    "tpu.trace_stop"() : () -> ()
    %171 = vector.extract_strided_slice %18 {offsets = [0, 0, 96], sizes = [4, 8, 32], strides = [1, 1, 1]} : vector<4x8x128xf32> to vector<4x8x32xf32>
    %172 = vector.extract_strided_slice %111 {offsets = [0, 0, 96], sizes = [4, 8, 32], strides = [1, 1, 1]} : vector<4x8x128xf32> to vector<4x8x32xf32>
    %173 = vector.extract_strided_slice %113 {offsets = [0, 0, 96], sizes = [4, 8, 32], strides = [1, 1, 1]} : vector<4x8x128xf32> to vector<4x8x32xf32>
    "tpu.trace_start"() <{level = 10 : i32, message = "bqd,bkd->bqk"}> : () -> ()
    %cst_56 = arith.constant dense<0.000000e+00> : vector<4x8x8xf32>
    %174 = tpu.matmul %171, %172, %cst_56 {dimension_numbers = #tpu.dot_dimension_numbers<[2], [2], [1], [1], [0, 0, 0, 1, 1, 1], [0], [0]>} : vector<4x8x32xf32>, vector<4x8x32xf32>, vector<4x8x8xf32> -> vector<4x8x8xf32>
    "tpu.trace_stop"() : () -> ()
    %cst_57 = arith.constant dense<0xFF800000> : vector<4x8xf32>
    %175 = vector.multi_reduction <maximumf>, %174, %cst_57 [2] : vector<4x8x8xf32> to vector<4x8xf32>
    %176 = vector.shape_cast %175 : vector<4x8xf32> to vector<4x8x1xf32>
    %177 = vector.broadcast %176 : vector<4x8x1xf32> to vector<4x8x8xf32>
    %178 = arith.subf %174, %177 : vector<4x8x8xf32>
    %179 = math.exp %178 : vector<4x8x8xf32>
    %cst_58 = arith.constant dense<0.000000e+00> : vector<4x8xf32>
    %180 = vector.multi_reduction <add>, %179, %cst_58 [2] : vector<4x8x8xf32> to vector<4x8xf32>
    %181 = vector.shape_cast %180 : vector<4x8xf32> to vector<4x8x1xf32>
    %182 = tpu.reciprocal %181 {approx = true} : vector<4x8x1xf32> -> vector<4x8x1xf32>
    %183 = arith.mulf %181, %182 : vector<4x8x1xf32>
    %cst_59 = arith.constant 2.000000e+00 : f32
    %184 = vector.broadcast %cst_59 : f32 to vector<4x8x1xf32>
    %185 = arith.subf %184, %183 : vector<4x8x1xf32>
    %186 = arith.mulf %182, %185 : vector<4x8x1xf32>
    %187 = vector.broadcast %186 : vector<4x8x1xf32> to vector<4x8x8xf32>
    %188 = arith.mulf %179, %187 : vector<4x8x8xf32>
    "tpu.trace_start"() <{level = 10 : i32, message = "bqk,bkd->bqd"}> : () -> ()
    %cst_60 = arith.constant dense<0.000000e+00> : vector<4x8x32xf32>
    %189 = tpu.matmul %188, %173, %cst_60 {dimension_numbers = #tpu.dot_dimension_numbers<[2], [1], [1], [2], [0, 0, 0, 1, 1, 2], [0], [0]>} : vector<4x8x8xf32>, vector<4x8x32xf32>, vector<4x8x32xf32> -> vector<4x8x32xf32>
    "tpu.trace_stop"() : () -> ()
    %190 = vector.shape_cast %132 : vector<4x8x32xf32> to vector<32x32xf32>
    %c0_61 = arith.constant 0 : index
    %c0_62 = arith.constant 0 : index
    %191 = vector.load %arg6[%c0_61, %c0_62] : memref<128x128xf32, #tpu.memory_space<vmem>>, vector<32x128xf32>
    %cst_63 = arith.constant dense<0.000000e+00> : vector<32x128xf32>
    %192 = tpu.matmul %190, %191, %cst_63 {dimension_numbers = #tpu.dot_dimension_numbers<[1], [0], [0], [1], [0, 0, 1, 1], [], []>} : vector<32x32xf32>, vector<32x128xf32>, vector<32x128xf32> -> vector<32x128xf32>
    %193 = vector.shape_cast %151 : vector<4x8x32xf32> to vector<32x32xf32>
    %c32_64 = arith.constant 32 : index
    %c0_65 = arith.constant 0 : index
    %194 = vector.load %arg6[%c32_64, %c0_65] : memref<128x128xf32, #tpu.memory_space<vmem>>, vector<32x128xf32>
    %cst_66 = arith.constant dense<0.000000e+00> : vector<32x128xf32>
    %195 = tpu.matmul %193, %194, %cst_66 {dimension_numbers = #tpu.dot_dimension_numbers<[1], [0], [0], [1], [0, 0, 1, 1], [], []>} : vector<32x32xf32>, vector<32x128xf32>, vector<32x128xf32> -> vector<32x128xf32>
    %196 = arith.addf %192, %195 : vector<32x128xf32>
    %197 = vector.shape_cast %170 : vector<4x8x32xf32> to vector<32x32xf32>
    %c64_67 = arith.constant 64 : index
    %c0_68 = arith.constant 0 : index
    %198 = vector.load %arg6[%c64_67, %c0_68] : memref<128x128xf32, #tpu.memory_space<vmem>>, vector<32x128xf32>
    %cst_69 = arith.constant dense<0.000000e+00> : vector<32x128xf32>
    %199 = tpu.matmul %197, %198, %cst_69 {dimension_numbers = #tpu.dot_dimension_numbers<[1], [0], [0], [1], [0, 0, 1, 1], [], []>} : vector<32x32xf32>, vector<32x128xf32>, vector<32x128xf32> -> vector<32x128xf32>
    %200 = arith.addf %196, %199 : vector<32x128xf32>
    %201 = vector.shape_cast %189 : vector<4x8x32xf32> to vector<32x32xf32>
    %c96_70 = arith.constant 96 : index
    %c0_71 = arith.constant 0 : index
    %202 = vector.load %arg6[%c96_70, %c0_71] : memref<128x128xf32, #tpu.memory_space<vmem>>, vector<32x128xf32>
    %cst_72 = arith.constant dense<0.000000e+00> : vector<32x128xf32>
    %203 = tpu.matmul %201, %202, %cst_72 {dimension_numbers = #tpu.dot_dimension_numbers<[1], [0], [0], [1], [0, 0, 1, 1], [], []>} : vector<32x32xf32>, vector<32x128xf32>, vector<32x128xf32> -> vector<32x128xf32>
    %204 = arith.addf %200, %203 : vector<32x128xf32>
    %c0_73 = arith.constant 0 : index
    %c0_74 = arith.constant 0 : index
    %205 = vector.load %arg7[%c0_73, %c0_74] : memref<1x128xf32, #tpu.memory_space<vmem>>, vector<1x128xf32>
    %206 = vector.broadcast %205 : vector<1x128xf32> to vector<32x128xf32>
    %207 = arith.addf %204, %206 : vector<32x128xf32>
    %208 = arith.addf %3, %207 : vector<32x128xf32>
    %cst_75 = arith.constant dense<0.000000e+00> : vector<32xf32>
    %209 = vector.multi_reduction <add>, %208, %cst_75 [1] : vector<32x128xf32> to vector<32xf32>
    %210 = vector.shape_cast %209 : vector<32xf32> to vector<32x1xf32>
    %cst_76 = arith.constant 1.280000e+02 : f32
    %211 = vector.broadcast %cst_76 : f32 to vector<32x1xf32>
    %212 = arith.divf %210, %211 : vector<32x1xf32>
    %213 = vector.broadcast %212 : vector<32x1xf32> to vector<32x128xf32>
    %214 = arith.subf %208, %213 : vector<32x128xf32>
    %215 = arith.mulf %214, %214 : vector<32x128xf32>
    %cst_77 = arith.constant dense<0.000000e+00> : vector<32xf32>
    %216 = vector.multi_reduction <add>, %215, %cst_77 [1] : vector<32x128xf32> to vector<32xf32>
    %217 = vector.shape_cast %216 : vector<32xf32> to vector<32x1xf32>
    %cst_78 = arith.constant 1.280000e+02 : f32
    %218 = vector.broadcast %cst_78 : f32 to vector<32x1xf32>
    %219 = arith.divf %217, %218 : vector<32x1xf32>
    %220 = vector.broadcast %212 : vector<32x1xf32> to vector<32x128xf32>
    %221 = arith.subf %208, %220 : vector<32x128xf32>
    %cst_79 = arith.constant 9.99999974E-6 : f32
    %222 = vector.broadcast %cst_79 : f32 to vector<32x1xf32>
    %223 = arith.addf %219, %222 : vector<32x1xf32>
    %224 = math.rsqrt %223 : vector<32x1xf32>
    %225 = vector.broadcast %224 : vector<32x1xf32> to vector<32x128xf32>
    %226 = arith.mulf %221, %225 : vector<32x128xf32>
    %c0_80 = arith.constant 0 : index
    %c0_81 = arith.constant 0 : index
    %227 = vector.load %arg8[%c0_80, %c0_81] : memref<1x128xf32, #tpu.memory_space<vmem>>, vector<1x128xf32>
    %228 = vector.broadcast %227 : vector<1x128xf32> to vector<32x128xf32>
    %229 = arith.mulf %226, %228 : vector<32x128xf32>
    %c0_82 = arith.constant 0 : index
    %c0_83 = arith.constant 0 : index
    %230 = vector.load %arg9[%c0_82, %c0_83] : memref<1x128xf32, #tpu.memory_space<vmem>>, vector<1x128xf32>
    %231 = vector.broadcast %230 : vector<1x128xf32> to vector<32x128xf32>
    %232 = arith.addf %229, %231 : vector<32x128xf32>
    %233 = vector.shape_cast %232 : vector<32x128xf32> to vector<4x8x128xf32>
    %c0_84 = arith.constant 0 : index
    %c0_85 = arith.constant 0 : index
    %c0_86 = arith.constant 0 : index
    %234 = vector.load %arg10[%c0_84, %c0_85, %c0_86] : memref<4x8x128xf32, #tpu.memory_space<vmem>>, vector<4x8x128xf32>
    tpu.vector_store %arg10[%c0_84, %c0_85, %c0_86], %233 {strides = array<i32>} : memref<4x8x128xf32, #tpu.memory_space<vmem>>, vector<4x8x128xf32>,
    return
  }
  func.func @transform_0(%arg0: i32) -> (i32, i32, i32) {
    %c0_i32 = arith.constant 0 : i32
    %c0_i32_0 = arith.constant 0 : i32
    %c0_i32_1 = arith.constant 0 : i32
    return %arg0, %c0_i32, %c0_i32_0 : i32, i32, i32
  }
  func.func @transform_1(%arg0: i32) -> (i32, i32, i32) {
    %c0_i32 = arith.constant 0 : i32
    %c0_i32_0 = arith.constant 0 : i32
    %c0_i32_1 = arith.constant 0 : i32
    return %arg0, %c0_i32, %c0_i32_0 : i32, i32, i32
  }
  func.func @transform_2(%arg0: i32) -> (i32, i32) {
    %c0_i32 = arith.constant 0 : i32
    %c0_i32_0 = arith.constant 0 : i32
    %c0_i32_1 = arith.constant 0 : i32
    return %c0_i32, %c0_i32_0 : i32, i32
  }
  func.func @transform_3(%arg0: i32) -> (i32, i32) {
    %c0_i32 = arith.constant 0 : i32
    %c0_i32_0 = arith.constant 0 : i32
    %c0_i32_1 = arith.constant 0 : i32
    return %c0_i32, %c0_i32_0 : i32, i32
  }
  func.func @transform_4(%arg0: i32) -> (i32, i32) {
    %c0_i32 = arith.constant 0 : i32
    %c0_i32_0 = arith.constant 0 : i32
    %c0_i32_1 = arith.constant 0 : i32
    return %c0_i32, %c0_i32_0 : i32, i32
  }
  func.func @transform_5(%arg0: i32) -> (i32, i32) {
    %c0_i32 = arith.constant 0 : i32
    %c0_i32_0 = arith.constant 0 : i32
    %c0_i32_1 = arith.constant 0 : i32
    return %c0_i32, %c0_i32_0 : i32, i32
  }
  func.func @transform_6(%arg0: i32) -> (i32, i32) {
    %c0_i32 = arith.constant 0 : i32
    %c0_i32_0 = arith.constant 0 : i32
    %c0_i32_1 = arith.constant 0 : i32
    return %c0_i32, %c0_i32_0 : i32, i32
  }
  func.func @transform_7(%arg0: i32) -> (i32, i32) {
    %c0_i32 = arith.constant 0 : i32
    %c0_i32_0 = arith.constant 0 : i32
    %c0_i32_1 = arith.constant 0 : i32
    return %c0_i32, %c0_i32_0 : i32, i32
  }
  func.func @transform_8(%arg0: i32) -> (i32, i32) {
    %c0_i32 = arith.constant 0 : i32
    %c0_i32_0 = arith.constant 0 : i32
    %c0_i32_1 = arith.constant 0 : i32
    return %c0_i32, %c0_i32_0 : i32, i32
  }
  func.func @transform_9(%arg0: i32) -> (i32, i32, i32) {
    %c0_i32 = arith.constant 0 : i32
    %c0_i32_0 = arith.constant 0 : i32
    %c0_i32_1 = arith.constant 0 : i32
    return %arg0, %c0_i32, %c0_i32_0 : i32, i32, i32
  }
}

</mosaic_0001>

<llo_original>
// kernel: tpu_custom_call.1
$region0: #{tpu_custom_call.1}
  #allocation0 [shape = 'u32[]', space=smem, size = 0x4, offset = 0x4, fixed_abs, tag = 'smem constant byte address 0x4 - core index']
  #allocation1 [shape = 'u32[144,128]{1,0:T(1,128)}', space=vmem, size = 0x12000, scoped, tag = 'internal scratch']
  %s0 = inlined_call_operand.hbm [shape: f32[4,8,128], index: 0, kind: input, shape index: {}]
  %s1 = inlined_call_operand.hbm [shape: f32[4,8,128], index: 1, kind: input, shape index: {}]
  %s2 = inlined_call_operand.hbm [shape: f32[128,128], index: 2, kind: input, shape index: {}]
  %s3 = inlined_call_operand.hbm [shape: f32[128,384], index: 3, kind: input, shape index: {}]
  %s4 = inlined_call_operand.hbm [shape: f32[128,256], index: 4, kind: input, shape index: {}]
  %s5 = inlined_call_operand.hbm [shape: f32[128,128], index: 5, kind: input, shape index: {}]
  %s6 = inlined_call_operand.vmem [shape: f32[1,128], index: 6, kind: input, shape index: {}]
  %s7 = inlined_call_operand.vmem [shape: f32[1,128], index: 7, kind: input, shape index: {}]
  %s8 = inlined_call_operand.vmem [shape: f32[1,128], index: 8, kind: input, shape index: {}]
  %s9 = inlined_call_operand.hbm [shape: f32[4,8,128], index: 9, kind: output, shape index: {}]
  %s10 = sld [smem:[#allocation0]]
  $region70: #{tpu_custom_call.1} parent=0
    _
  %s12 = ssub.s32 1, %s10
  %s13 = scalar_select 0, %s12, %s10
  $region1: #{tpu_custom_call.1} parent=0
    #allocation2 [shape = 'u8[16384]{0}', space=vmem, size = 0x4000, scoped, tag = 'input window, operand 0, single buffered']
    #allocation3 [shape = 's32[1]{0}', space=sflag, size = 0x4, scoped, tag = 'scoped memory for tpu_custom_call.1']
    #allocation4 [shape = 's32[1]{0}', space=sflag, size = 0x4, scoped, tag = 'scoped memory for tpu_custom_call.1']
    #allocation5 [shape = 'u8[16384]{0}', space=vmem, size = 0x4000, scoped, tag = 'input window, operand 1, single buffered']
    #allocation6 [shape = 's32[1]{0}', space=sflag, size = 0x4, scoped, tag = 'scoped memory for tpu_custom_call.1']
    #allocation7 [shape = 'u8[65536]{0}', space=vmem, size = 0x10000, scoped, tag = 'input window, operand 2, single buffered']
    #allocation8 [shape = 'u8[196608]{0}', space=vmem, size = 0x30000, scoped, tag = 'input window, operand 3, single buffered']
    #allocation9 [shape = 's32[1]{0}', space=sflag, size = 0x4, scoped, tag = 'scoped memory for tpu_custom_call.1']
    #allocation10 [shape = 'u8[131072]{0}', space=vmem, size = 0x20000, scoped, tag = 'input window, operand 4, single buffered']
    #allocation11 [shape = 'u8[65536]{0}', space=vmem, size = 0x10000, scoped, tag = 'input window, operand 5, single buffered']
    #allocation12 [shape = 's32[1]{0}', space=sflag, size = 0x4, scoped, tag = 'scoped memory for tpu_custom_call.1']
    #allocation13 [shape = 'u8[16384]{0}', space=vmem, size = 0x4000, scoped, tag = 'output window, operand 0, single buffered']
    %14 = vsyncpa [#allocation3], 0
    %15 = vsyncpa [#allocation6], 0
    %16 = vsyncpa [#allocation9], 0
    %17 = vsyncpa [#allocation12], 0
    %18 = vsyncpa [#allocation4], 0
    // Predicated region
    $region2: #{tpu_custom_call.1} parent=1 // pred_check
      _
    $region3: #{tpu_custom_call.1} parent=1 // pred_check_branch
      %20 = sbr.rel (0) target = $region5
    $region4: #{tpu_custom_call.1} parent=1 // pred_region
      %s22 = ssub.s32 512, 512
      %23 = vsyncadd [#allocation3], %s22
      %s24 = sshll.u32 [#allocation2], 4
      %s25 = int_to_ptr.vmem [resolvable:$true] %s24
      %30 = dma.hbm_to_vmem [thread:$0]  %s0, 512, %s25, [#allocation3], 128, 128, 8
    $region5: #{tpu_custom_call.1} parent=1 // pred_fallthru
      _
    // Predicated region
    $region6: #{tpu_custom_call.1} parent=1 // pred_check
      _
    $region7: #{tpu_custom_call.1} parent=1 // pred_check_branch
      %32 = sbr.rel (0) target = $region9
    $region8: #{tpu_custom_call.1} parent=1 // pred_region
      %s34 = ssub.s32 512, 512
      %35 = vsyncadd [#allocation6], %s34
      %s36 = sshll.u32 [#allocation5], 4
      %s37 = int_to_ptr.vmem [resolvable:$true] %s36
      %42 = dma.hbm_to_vmem [thread:$0]  %s1, 512, %s37, [#allocation6], 128, 128, 8
    $region9: #{tpu_custom_call.1} parent=1 // pred_fallthru
      _
    // Predicated region
    $region10: #{tpu_custom_call.1} parent=1 // pred_check
      _
    $region11: #{tpu_custom_call.1} parent=1 // pred_check_branch
      %44 = sbr.rel (0) target = $region13
    $region12: #{tpu_custom_call.1} parent=1 // pred_region
      %s46 = ssub.s32 2048, 2048
      %47 = vsyncadd [#allocation6], %s46
      %s48 = sshll.u32 [#allocation7], 4
      %s49 = int_to_ptr.vmem [resolvable:$true] %s48
      %54 = dma.hbm_to_vmem [thread:$0]  %s2, 2048, %s49, [#allocation6], 128, 128, 8
    $region13: #{tpu_custom_call.1} parent=1 // pred_fallthru
      _
    // Predicated region
    $region14: #{tpu_custom_call.1} parent=1 // pred_check
      _
    $region15: #{tpu_custom_call.1} parent=1 // pred_check_branch
      %56 = sbr.rel (0) target = $region17
    $region16: #{tpu_custom_call.1} parent=1 // pred_region
      %s58 = ssub.s32 6144, 6144
      %59 = vsyncadd [#allocation9], %s58
      %s60 = sshll.u32 [#allocation8], 4
      %s61 = int_to_ptr.vmem [resolvable:$true] %s60
      %66 = dma.hbm_to_vmem [thread:$0]  %s3, 6144, %s61, [#allocation9], 384, 384, 24
    $region17: #{tpu_custom_call.1} parent=1 // pred_fallthru
      _
    // Predicated region
    $region18: #{tpu_custom_call.1} parent=1 // pred_check
      _
    $region19: #{tpu_custom_call.1} parent=1 // pred_check_branch
      %68 = sbr.rel (0) target = $region21
    $region20: #{tpu_custom_call.1} parent=1 // pred_region
      %s70 = ssub.s32 4096, 4096
      %71 = vsyncadd [#allocation9], %s70
      %s72 = sshll.u32 [#allocation10], 4
      %s73 = int_to_ptr.vmem [resolvable:$true] %s72
      %78 = dma.hbm_to_vmem [thread:$0]  %s4, 4096, %s73, [#allocation9], 256, 256, 16
    $region21: #{tpu_custom_call.1} parent=1 // pred_fallthru
      _
    // Predicated region
    $region22: #{tpu_custom_call.1} parent=1 // pred_check
      _
    $region23: #{tpu_custom_call.1} parent=1 // pred_check_branch
      %80 = sbr.rel (0) target = $region25
    $region24: #{tpu_custom_call.1} parent=1 // pred_region
      %s82 = ssub.s32 2048, 2048
      %83 = vsyncadd [#allocation12], %s82
      %s84 = sshll.u32 [#allocation11], 4
      %s85 = int_to_ptr.vmem [resolvable:$true] %s84
      %90 = dma.hbm_to_vmem [thread:$0]  %s5, 2048, %s85, [#allocation12], 128, 128, 8
    $region25: #{tpu_custom_call.1} parent=1 // pred_fallthru
      _
    // Predicated region
    $region26: #{tpu_custom_call.1} parent=1 // pred_check
      _
    $region27: #{tpu_custom_call.1} parent=1 // pred_check_branch
      %92 = sbr.rel (0) target = $region29
    $region28: #{tpu_custom_call.1} parent=1 // pred_region
      _
    $region29: #{tpu_custom_call.1} parent=1 // pred_fallthru
      _
    // Predicated region
    $region30: #{tpu_custom_call.1} parent=1 // pred_check
      _
    $region31: #{tpu_custom_call.1} parent=1 // pred_check_branch
      %94 = sbr.rel (0) target = $region33
    $region32: #{tpu_custom_call.1} parent=1 // pred_region
      _
    $region33: #{tpu_custom_call.1} parent=1 // pred_fallthru
      _
    // Predicated region
    $region34: #{tpu_custom_call.1} parent=1 // pred_check
      _
    $region35: #{tpu_custom_call.1} parent=1 // pred_check_branch
      %96 = sbr.rel (0) target = $region37
    $region36: #{tpu_custom_call.1} parent=1 // pred_region
      _
    $region37: #{tpu_custom_call.1} parent=1 // pred_fallthru
      _
    // Predicated region
    $region38: #{tpu_custom_call.1} parent=1 // pred_check
      _
    $region39: #{tpu_custom_call.1} parent=1 // pred_check_branch
      %98 = sbr.rel (0) target = $region41
    $region40: #{tpu_custom_call.1} parent=1 // pred_region
      %99 = dma.done [#allocation3], 512
    $region41: #{tpu_custom_call.1} parent=1 // pred_fallthru
      _
    // Predicated region
    $region42: #{tpu_custom_call.1} parent=1 // pred_check
      _
    $region43: #{tpu_custom_call.1} parent=1 // pred_check_branch
      %101 = sbr.rel (0) target = $region45
    $region44: #{tpu_custom_call.1} parent=1 // pred_region
      %102 = dma.done [#allocation6], 512
    $region45: #{tpu_custom_call.1} parent=1 // pred_fallthru
      _
    // Predicated region
    $region46: #{tpu_custom_call.1} parent=1 // pred_check
      _
    $region47: #{tpu_custom_call.1} parent=1 // pred_check_branch
      %104 = sbr.rel (0) target = $region49
    $region48: #{tpu_custom_call.1} parent=1 // pred_region
      %105 = dma.done [#allocation6], 2048
    $region49: #{tpu_custom_call.1} parent=1 // pred_fallthru
      _
    // Predicated region
    $region50: #{tpu_custom_call.1} parent=1 // pred_check
      _
    $region51: #{tpu_custom_call.1} parent=1 // pred_check_branch
      %107 = sbr.rel (0) target = $region53
    $region52: #{tpu_custom_call.1} parent=1 // pred_region
      %108 = dma.done [#allocation9], 6144
    $region53: #{tpu_custom_call.1} parent=1 // pred_fallthru
      _
    // Predicated region
    $region54: #{tpu_custom_call.1} parent=1 // pred_check
      _
    $region55: #{tpu_custom_call.1} parent=1 // pred_check_branch
      %110 = sbr.rel (0) target = $region57
    $region56: #{tpu_custom_call.1} parent=1 // pred_region
      %111 = dma.done [#allocation9], 4096
    $region57: #{tpu_custom_call.1} parent=1 // pred_fallthru
      _
    // Predicated region
    $region58: #{tpu_custom_call.1} parent=1 // pred_check
      _
    $region59: #{tpu_custom_call.1} parent=1 // pred_check_branch
      %113 = sbr.rel (0) target = $region61
    $region60: #{tpu_custom_call.1} parent=1 // pred_region
      %114 = dma.done [#allocation12], 2048
    $region61: #{tpu_custom_call.1} parent=1 // pred_fallthru
      _
    %v115 = vld [vmem:[#allocation2] sm:$0xff]
    %v116 = vld [vmem:[#allocation2 + $0x8] sm:$0xff]
    %v117 = vld [vmem:[#allocation2 + $0x10] sm:$0xff]
    %v118 = vld [vmem:[#allocation2 + $0x18] sm:$0xff]
    %v119 = vld [vmem:[#allocation5] sm:$0xff]
    %v120 = vld [vmem:[#allocation5 + $0x8] sm:$0xff]
    %v121 = vld [vmem:[#allocation5 + $0x10] sm:$0xff]
    %v122 = vld [vmem:[#allocation5 + $0x18] sm:$0xff]
    %v123 = vld [vmem:[#allocation7] sm:$0xff]
    %v124 = vld [vmem:[#allocation7 + $0x8] sm:$0xff]
    %v125 = vld [vmem:[#allocation7 + $0x10] sm:$0xff]
    %v126 = vld [vmem:[#allocation7 + $0x18] sm:$0xff]
    %v127 = vld [vmem:[#allocation7 + $0x20] sm:$0xff]
    %v128 = vld [vmem:[#allocation7 + $0x28] sm:$0xff]
    %v129 = vld [vmem:[#allocation7 + $0x30] sm:$0xff]
    %v130 = vld [vmem:[#allocation7 + $0x38] sm:$0xff]
    %v131 = vld [vmem:[#allocation7 + $0x40] sm:$0xff]
    %v132 = vld [vmem:[#allocation7 + $0x48] sm:$0xff]
    %v133 = vld [vmem:[#allocation7 + $0x50] sm:$0xff]
    %v134 = vld [vmem:[#allocation7 + $0x58] sm:$0xff]
    %v135 = vld [vmem:[#allocation7 + $0x60] sm:$0xff]
    %v136 = vld [vmem:[#allocation7 + $0x68] sm:$0xff]
    %v137 = vld [vmem:[#allocation7 + $0x70] sm:$0xff]
    %v138 = vld [vmem:[#allocation7 + $0x78] sm:$0xff]
    %139 = vmatprep.subr.mxu0 0.0
    %140 = vmatpush1.msra.mxu0 %v123
    %141 = vmatprep.subr.mxu0 0.0
    %142 = vmatpush1.msra.mxu0 %v124
    %143 = vmatprep.subr.mxu0 0.0
    %144 = vmatpush1.msra.mxu0 %v125
    %145 = vmatprep.subr.mxu0 0.0
    %146 = vmatpush1.msra.mxu0 %v126
    %147 = vmatprep.subr.mxu0 0.0
    %148 = vmatpush1.msra.mxu0 %v127
    %149 = vmatprep.subr.mxu0 0.0
    %150 = vmatpush1.msra.mxu0 %v128
    %151 = vmatprep.subr.mxu0 0.0
    %152 = vmatpush1.msra.mxu0 %v129
    %153 = vmatprep.subr.mxu0 0.0
    %154 = vmatpush1.msra.mxu0 %v130
    %155 = vmatprep.subr.mxu0 0.0
    %156 = vmatpush1.msra.mxu0 %v131
    %157 = vmatprep.subr.mxu0 0.0
    %158 = vmatpush1.msra.mxu0 %v132
    %159 = vmatprep.subr.mxu0 0.0
    %160 = vmatpush1.msra.mxu0 %v133
    %161 = vmatprep.subr.mxu0 0.0
    %162 = vmatpush1.msra.mxu0 %v134
    %163 = vmatprep.subr.mxu0 0.0
    %164 = vmatpush1.msra.mxu0 %v135
    %165 = vmatprep.subr.mxu0 0.0
    %166 = vmatpush1.msra.mxu0 %v136
    %167 = vmatprep.subr.mxu0 0.0
    %168 = vmatpush1.msra.mxu0 %v137
    %169 = vmatprep.subr.mxu0 0.0
    %170 = vmatpush1.msra.mxu0 %v138
    %171 = vmatprep.subr.mxu0 0.0
    %172 = vmatpush1.msra.mxu0 0.0
    %173 = vmatprep.subr.mxu0 0.0
    %174 = vmatpush1.msra.mxu0 0.0
    %175 = vmatprep.subr.mxu0 0.0
    %176 = vmatpush1.msra.mxu0 0.0
    %177 = vmatprep.subr.mxu0 0.0
    %178 = vmatpush1.msra.mxu0 0.0
    %179 = vmatprep.subr.mxu0 0.0
    %180 = vmatpush1.msra.mxu0 0.0
    %181 = vmatprep.subr.mxu0 0.0
    %182 = vmatpush1.msra.mxu0 0.0
    %183 = vmatprep.subr.mxu0 0.0
    %184 = vmatpush1.msra.mxu0 0.0
    %185 = vmatprep.subr.mxu0 0.0
    %186 = vmatpush1.msra.mxu0 0.0
    %187 = vmatprep.subr.mxu0 0.0
    %188 = vmatpush1.msra.mxu0 0.0
    %189 = vmatprep.subr.mxu0 0.0
    %190 = vmatpush1.msra.mxu0 0.0
    %191 = vmatprep.subr.mxu0 0.0
    %192 = vmatpush1.msra.mxu0 0.0
    %193 = vmatprep.subr.mxu0 0.0
    %194 = vmatpush1.msra.mxu0 0.0
    %195 = vmatprep.subr.mxu0 0.0
    %196 = vmatpush1.msra.mxu0 0.0
    %197 = vmatprep.subr.mxu0 0.0
    %198 = vmatpush1.msra.mxu0 0.0
    %199 = vmatprep.subr.mxu0 0.0
    %200 = vmatpush1.msra.mxu0 0.0
    %201 = vmatprep.subr.mxu0 0.0
    %202 = vmatpush1.msra.mxu0 0.0
    %203 = vmatprep.mubr.f32.mxu0 0.0
    %204 = vmatmul.mubr.f32.gmra.mrb[0].mxu0 %v115
    %v205 = vpop.f32.mrb[0].mxu0
    %v206 = vadd.f32 0.0, %v205
    %v207 = vpop.f32.mrb[0].mxu0
    %208 = vmatprep.mubr.f32.mxu0 0.0
    %209 = vmatmul.mubr.f32.gmra.mrb[0].mxu0 %v116
    %v210 = vpop.f32.mrb[0].mxu0
    %v211 = vadd.f32 0.0, %v210
    %v212 = vpop.f32.mrb[0].mxu0
    %213 = vmatprep.mubr.f32.mxu0 0.0
    %214 = vmatmul.mubr.f32.gmra.mrb[0].mxu0 %v117
    %v215 = vpop.f32.mrb[0].mxu0
    %v216 = vadd.f32 0.0, %v215
    %v217 = vpop.f32.mrb[0].mxu0
    %218 = vmatprep.mubr.f32.mxu0 0.0
    %219 = vmatmul.mubr.f32.gmra.mrb[0].mxu0 %v118
    %v220 = vpop.f32.mrb[0].mxu0
    %v221 = vadd.f32 0.0, %v220
    %v222 = vpop.f32.mrb[0].mxu0
    %223 = vdwg.mxu0
    %v224 = vmul.f32 %v206, 0.17677669
    %v225 = vmul.f32 %v211, 0.17677669
    %v226 = vmul.f32 %v216, 0.17677669
    %v227 = vmul.f32 %v221, 0.17677669
    %v228 = vld [vmem:[#allocation8] sm:$0xff]
    %v229 = vld [vmem:[#allocation8 + $0x8] sm:$0xff]
    %v230 = vld [vmem:[#allocation8 + $0x10] sm:$0xff]
    %v231 = vld [vmem:[#allocation8 + $0x18] sm:$0xff]
    %v232 = vld [vmem:[#allocation8 + $0x20] sm:$0xff]
    %v233 = vld [vmem:[#allocation8 + $0x28] sm:$0xff]
    %v234 = vld [vmem:[#allocation8 + $0x30] sm:$0xff]
    %v235 = vld [vmem:[#allocation8 + $0x38] sm:$0xff]
    %v236 = vld [vmem:[#allocation8 + $0x40] sm:$0xff]
    %v237 = vld [vmem:[#allocation8 + $0x48] sm:$0xff]
    %v238 = vld [vmem:[#allocation8 + $0x50] sm:$0xff]
    %v239 = vld [vmem:[#allocation8 + $0x58] sm:$0xff]
    %v240 = vld [vmem:[#allocation8 + $0x60] sm:$0xff]
    %v241 = vld [vmem:[#allocation8 + $0x68] sm:$0xff]
    %v242 = vld [vmem:[#allocation8 + $0x70] sm:$0xff]
    %v243 = vld [vmem:[#allocation8 + $0x78] sm:$0xff]
    %v244 = vld [vmem:[#allocation8 + $0x80] sm:$0xff]
    %v245 = vld [vmem:[#allocation8 + $0x88] sm:$0xff]
    %v246 = vld [vmem:[#allocation8 + $0x90] sm:$0xff]
    %v247 = vld [vmem:[#allocation8 + $0x98] sm:$0xff]
    %v248 = vld [vmem:[#allocation8 + $0xa0] sm:$0xff]
    %v249 = vld [vmem:[#allocation8 + $0xa8] sm:$0xff]
    %v250 = vld [vmem:[#allocation8 + $0xb0] sm:$0xff]
    %v251 = vld [vmem:[#allocation8 + $0xb8] sm:$0xff]
    %v252 = vld [vmem:[#allocation8 + $0xc0] sm:$0xff]
    %v253 = vld [vmem:[#allocation8 + $0xc8] sm:$0xff]
    %v254 = vld [vmem:[#allocation8 + $0xd0] sm:$0xff]
    %v255 = vld [vmem:[#allocation8 + $0xd8] sm:$0xff]
    %v256 = vld [vmem:[#allocation8 + $0xe0] sm:$0xff]
    %v257 = vld [vmem:[#allocation8 + $0xe8] sm:$0xff]
    %v258 = vld [vmem:[#allocation8 + $0xf0] sm:$0xff]
    %v259 = vld [vmem:[#allocation8 + $0xf8] sm:$0xff]
    %v260 = vld [vmem:[#allocation8 + $0x100] sm:$0xff]
    %v261 = vld [vmem:[#allocation8 + $0x108] sm:$0xff]
    %v262 = vld [vmem:[#allocation8 + $0x110] sm:$0xff]
    %v263 = vld [vmem:[#allocation8 + $0x118] sm:$0xff]
    %v264 = vld [vmem:[#allocation8 + $0x120] sm:$0xff]
    %v265 = vld [vmem:[#allocation8 + $0x128] sm:$0xff]
    %v266 = vld [vmem:[#allocation8 + $0x130] sm:$0xff]
    %v267 = vld [vmem:[#allocation8 + $0x138] sm:$0xff]
    %v268 = vld [vmem:[#allocation8 + $0x140] sm:$0xff]
    %v269 = vld [vmem:[#allocation8 + $0x148] sm:$0xff]
    %v270 = vld [vmem:[#allocation8 + $0x150] sm:$0xff]
    %v271 = vld [vmem:[#allocation8 + $0x158] sm:$0xff]
    %v272 = vld [vmem:[#allocation8 + $0x160] sm:$0xff]
    %v273 = vld [vmem:[#allocation8 + $0x168] sm:$0xff]
    %v274 = vld [vmem:[#allocation8 + $0x170] sm:$0xff]
    %v275 = vld [vmem:[#allocation8 + $0x178] sm:$0xff]
    %276 = vmatprep.subr.mxu0 %v229
    %277 = vmatpush1.msra.mxu0 %v228
    %278 = vmatprep.subr.mxu0 %v232
    %279 = vmatpush1.msra.mxu0 %v231
    %280 = vmatprep.subr.mxu0 %v235
    %281 = vmatpush1.msra.mxu0 %v234
    %282 = vmatprep.subr.mxu0 %v238
    %283 = vmatpush1.msra.mxu0 %v237
    %284 = vmatprep.subr.mxu0 %v241
    %285 = vmatpush1.msra.mxu0 %v240
    %286 = vmatprep.subr.mxu0 %v244
    %287 = vmatpush1.msra.mxu0 %v243
    %288 = vmatprep.subr.mxu0 %v247
    %289 = vmatpush1.msra.mxu0 %v246
    %290 = vmatprep.subr.mxu0 %v250
    %291 = vmatpush1.msra.mxu0 %v249
    %292 = vmatprep.subr.mxu0 %v253
    %293 = vmatpush1.msra.mxu0 %v252
    %294 = vmatprep.subr.mxu0 %v256
    %295 = vmatpush1.msra.mxu0 %v255
    %296 = vmatprep.subr.mxu0 %v259
    %297 = vmatpush1.msra.mxu0 %v258
    %298 = vmatprep.subr.mxu0 %v262
    %299 = vmatpush1.msra.mxu0 %v261
    %300 = vmatprep.subr.mxu0 %v265
    %301 = vmatpush1.msra.mxu0 %v264
    %302 = vmatprep.subr.mxu0 %v268
    %303 = vmatpush1.msra.mxu0 %v267
    %304 = vmatprep.subr.mxu0 %v271
    %305 = vmatpush1.msra.mxu0 %v270
    %306 = vmatprep.subr.mxu0 %v274
    %307 = vmatpush1.msra.mxu0 %v273
    %308 = vmatprep.subr.mxu0 0.0
    %309 = vmatpush1.msra.mxu0 0.0
    %310 = vmatprep.subr.mxu0 0.0
    %311 = vmatpush1.msra.mxu0 0.0
    %312 = vmatprep.subr.mxu0 0.0
    %313 = vmatpush1.msra.mxu0 0.0
    %314 = vmatprep.subr.mxu0 0.0
    %315 = vmatpush1.msra.mxu0 0.0
    %316 = vmatprep.subr.mxu0 0.0
    %317 = vmatpush1.msra.mxu0 0.0
    %318 = vmatprep.subr.mxu0 0.0
    %319 = vmatpush1.msra.mxu0 0.0
    %320 = vmatprep.subr.mxu0 0.0
    %321 = vmatpush1.msra.mxu0 0.0
    %322 = vmatprep.subr.mxu0 0.0
    %323 = vmatpush1.msra.mxu0 0.0
    %324 = vmatprep.subr.mxu0 0.0
    %325 = vmatpush1.msra.mxu0 0.0
    %326 = vmatprep.subr.mxu0 0.0
    %327 = vmatpush1.msra.mxu0 0.0
    %328 = vmatprep.subr.mxu0 0.0
    %329 = vmatpush1.msra.mxu0 0.0
    %330 = vmatprep.subr.mxu0 0.0
    %331 = vmatpush1.msra.mxu0 0.0
    %332 = vmatprep.subr.mxu0 0.0
    %333 = vmatpush1.msra.mxu0 0.0
    %334 = vmatprep.subr.mxu0 0.0
    %335 = vmatpush1.msra.mxu0 0.0
    %336 = vmatprep.subr.mxu0 0.0
    %337 = vmatpush1.msra.mxu0 0.0
    %338 = vmatprep.subr.mxu0 0.0
    %339 = vmatpush1.msra.mxu0 0.0
    %340 = vmatprep.mubr.f32.mxu0 0.0
    %341 = vmatmul.mubr.f32.gmra.mrb[0].mxu0 %v119
    %v342 = vpop.f32.mrb[0].mxu0
    %v343 = vadd.f32 0.0, %v342
    %v344 = vpop.f32.mrb[0].mxu0
    %v345 = vadd.f32 0.0, %v344
    %346 = vmatprep.mubr.f32.mxu0 0.0
    %347 = vmatmul.mubr.f32.gmra.mrb[0].mxu0 %v120
    %v348 = vpop.f32.mrb[0].mxu0
    %v349 = vadd.f32 0.0, %v348
    %v350 = vpop.f32.mrb[0].mxu0
    %v351 = vadd.f32 0.0, %v350
    %352 = vmatprep.mubr.f32.mxu0 0.0
    %353 = vmatmul.mubr.f32.gmra.mrb[0].mxu0 %v121
    %v354 = vpop.f32.mrb[0].mxu0
    %v355 = vadd.f32 0.0, %v354
    %v356 = vpop.f32.mrb[0].mxu0
    %v357 = vadd.f32 0.0, %v356
    %358 = vmatprep.mubr.f32.mxu0 0.0
    %359 = vmatmul.mubr.f32.gmra.mrb[0].mxu0 %v122
    %v360 = vpop.f32.mrb[0].mxu0
    %v361 = vadd.f32 0.0, %v360
    %v362 = vpop.f32.mrb[0].mxu0
    %v363 = vadd.f32 0.0, %v362
    %364 = vdwg.mxu0
    %365 = vmatprep.subr.mxu0 0.0
    %366 = vmatpush1.msra.mxu0 %v230
    %367 = vmatprep.subr.mxu0 0.0
    %368 = vmatpush1.msra.mxu0 %v233
    %369 = vmatprep.subr.mxu0 0.0
    %370 = vmatpush1.msra.mxu0 %v236
    %371 = vmatprep.subr.mxu0 0.0
    %372 = vmatpush1.msra.mxu0 %v239
    %373 = vmatprep.subr.mxu0 0.0
    %374 = vmatpush1.msra.mxu0 %v242
    %375 = vmatprep.subr.mxu0 0.0
    %376 = vmatpush1.msra.mxu0 %v245
    %377 = vmatprep.subr.mxu0 0.0
    %378 = vmatpush1.msra.mxu0 %v248
    %379 = vmatprep.subr.mxu0 0.0
    %380 = vmatpush1.msra.mxu0 %v251
    %381 = vmatprep.subr.mxu0 0.0
    %382 = vmatpush1.msra.mxu0 %v254
    %383 = vmatprep.subr.mxu0 0.0
    %384 = vmatpush1.msra.mxu0 %v257
    %385 = vmatprep.subr.mxu0 0.0
    %386 = vmatpush1.msra.mxu0 %v260
    %387 = vmatprep.subr.mxu0 0.0
    %388 = vmatpush1.msra.mxu0 %v263
    %389 = vmatprep.subr.mxu0 0.0
    %390 = vmatpush1.msra.mxu0 %v266
    %391 = vmatprep.subr.mxu0 0.0
    %392 = vmatpush1.msra.mxu0 %v269
    %393 = vmatprep.subr.mxu0 0.0
    %394 = vmatpush1.msra.mxu0 %v272
    %395 = vmatprep.subr.mxu0 0.0
    %396 = vmatpush1.msra.mxu0 %v275
    %397 = vmatprep.subr.mxu0 0.0
    %398 = vmatpush1.msra.mxu0 0.0
    %399 = vmatprep.subr.mxu0 0.0
    %400 = vmatpush1.msra.mxu0 0.0
    %401 = vmatprep.subr.mxu0 0.0
    %402 = vmatpush1.msra.mxu0 0.0
    %403 = vmatprep.subr.mxu0 0.0
    %404 = vmatpush1.msra.mxu0 0.0
    %405 = vmatprep.subr.mxu0 0.0
    %406 = vmatpush1.msra.mxu0 0.0
    %407 = vmatprep.subr.mxu0 0.0
    %408 = vmatpush1.msra.mxu0 0.0
    %409 = vmatprep.subr.mxu0 0.0
    %410 = vmatpush1.msra.mxu0 0.0
    %411 = vmatprep.subr.mxu0 0.0
    %412 = vmatpush1.msra.mxu0 0.0
    %413 = vmatprep.subr.mxu0 0.0
    %414 = vmatpush1.msra.mxu0 0.0
    %415 = vmatprep.subr.mxu0 0.0
    %416 = vmatpush1.msra.mxu0 0.0
    %417 = vmatprep.subr.mxu0 0.0
    %418 = vmatpush1.msra.mxu0 0.0
    %419 = vmatprep.subr.mxu0 0.0
    %420 = vmatpush1.msra.mxu0 0.0
    %421 = vmatprep.subr.mxu0 0.0
    %422 = vmatpush1.msra.mxu0 0.0
    %423 = vmatprep.subr.mxu0 0.0
    %424 = vmatpush1.msra.mxu0 0.0
    %425 = vmatprep.subr.mxu0 0.0
    %426 = vmatpush1.msra.mxu0 0.0
    %427 = vmatprep.subr.mxu0 0.0
    %428 = vmatpush1.msra.mxu0 0.0
    %429 = vmatprep.mubr.f32.mxu0 0.0
    %430 = vmatmul.mubr.f32.gmra.mrb[0].mxu0 %v119
    %v431 = vpop.f32.mrb[0].mxu0
    %v432 = vadd.f32 0.0, %v431
    %v433 = vpop.f32.mrb[0].mxu0
    %434 = vmatprep.mubr.f32.mxu0 0.0
    %435 = vmatmul.mubr.f32.gmra.mrb[0].mxu0 %v120
    %v436 = vpop.f32.mrb[0].mxu0
    %v437 = vadd.f32 0.0, %v436
    %v438 = vpop.f32.mrb[0].mxu0
    %439 = vmatprep.mubr.f32.mxu0 0.0
    %440 = vmatmul.mubr.f32.gmra.mrb[0].mxu0 %v121
    %v441 = vpop.f32.mrb[0].mxu0
    %v442 = vadd.f32 0.0, %v441
    %v443 = vpop.f32.mrb[0].mxu0
    %444 = vmatprep.mubr.f32.mxu0 0.0
    %445 = vmatmul.mubr.f32.gmra.mrb[0].mxu0 %v122
    %v446 = vpop.f32.mrb[0].mxu0
    %v447 = vadd.f32 0.0, %v446
    %v448 = vpop.f32.mrb[0].mxu0
    %449 = vdwg.mxu0
    %v450 = vmul.f32 %v432, 0.17677669
    %v451 = vmul.f32 %v437, 0.17677669
    %v452 = vmul.f32 %v442, 0.17677669
    %v453 = vmul.f32 %v447, 0.17677669
    %vm454 = vcmask 261120
    %v456 = vsel %vm454, %v224, 0
    %v459 = vsel %vm454, %v343, 0
    %461 = vmatprep.subr.mxu0 0.0
    %462 = vmatpush1.xpose.msra.mxu0 %v459
    %463 = vmatprep.subr.mxu0 0.0
    %464 = vmatpush1.xpose.msra.mxu0 0.0
    %465 = vmatprep.subr.mxu0 0.0
    %466 = vmatpush1.xpose.msra.mxu0 0.0
    %467 = vmatprep.subr.mxu0 0.0
    %468 = vmatpush1.xpose.msra.mxu0 0.0
    %469 = vmatprep.subr.mxu0 0.0
    %470 = vmatpush1.xpose.msra.mxu0 0.0
    %471 = vmatprep.subr.mxu0 0.0
    %472 = vmatpush1.xpose.msra.mxu0 0.0
    %473 = vmatprep.subr.mxu0 0.0
    %474 = vmatpush1.xpose.msra.mxu0 0.0
    %475 = vmatprep.subr.mxu0 0.0
    %476 = vmatpush1.xpose.msra.mxu0 0.0
    %477 = vmatprep.subr.mxu0 0.0
    %478 = vmatpush1.xpose.msra.mxu0 0.0
    %479 = vmatprep.subr.mxu0 0.0
    %480 = vmatpush1.xpose.msra.mxu0 0.0
    %481 = vmatprep.subr.mxu0 0.0
    %482 = vmatpush1.xpose.msra.mxu0 0.0
    %483 = vmatprep.subr.mxu0 0.0
    %484 = vmatpush1.xpose.msra.mxu0 0.0
    %485 = vmatprep.subr.mxu0 0.0
    %486 = vmatpush1.xpose.msra.mxu0 0.0
    %487 = vmatprep.subr.mxu0 0.0
    %488 = vmatpush1.xpose.msra.mxu0 0.0
    %489 = vmatprep.subr.mxu0 0.0
    %490 = vmatpush1.xpose.msra.mxu0 0.0
    %491 = vmatprep.subr.mxu0 0.0
    %492 = vmatpush1.xpose.msra.mxu0 0.0
    %493 = vmatprep.subr.mxu0 0.0
    %494 = vmatpush1.xpose.msra.mxu0 0.0
    %495 = vmatprep.subr.mxu0 0.0
    %496 = vmatpush1.xpose.msra.mxu0 0.0
    %497 = vmatprep.subr.mxu0 0.0
    %498 = vmatpush1.xpose.msra.mxu0 0.0
    %499 = vmatprep.subr.mxu0 0.0
    %500 = vmatpush1.xpose.msra.mxu0 0.0
    %501 = vmatprep.subr.mxu0 0.0
    %502 = vmatpush1.xpose.msra.mxu0 0.0
    %503 = vmatprep.subr.mxu0 0.0
    %504 = vmatpush1.xpose.msra.mxu0 0.0
    %505 = vmatprep.subr.mxu0 0.0
    %506 = vmatpush1.xpose.msra.mxu0 0.0
    %507 = vmatprep.subr.mxu0 0.0
    %508 = vmatpush1.xpose.msra.mxu0 0.0
    %509 = vmatprep.subr.mxu0 0.0
    %510 = vmatpush1.xpose.msra.mxu0 0.0
    %511 = vmatprep.subr.mxu0 0.0
    %512 = vmatpush1.xpose.msra.mxu0 0.0
    %513 = vmatprep.subr.mxu0 0.0
    %514 = vmatpush1.xpose.msra.mxu0 0.0
    %515 = vmatprep.subr.mxu0 0.0
    %516 = vmatpush1.xpose.msra.mxu0 0.0
    %517 = vmatprep.subr.mxu0 0.0
    %518 = vmatpush1.xpose.msra.mxu0 0.0
    %519 = vmatprep.subr.mxu0 0.0
    %520 = vmatpush1.xpose.msra.mxu0 0.0
    %521 = vmatprep.subr.mxu0 0.0
    %522 = vmatpush1.xpose.msra.mxu0 0.0
    %523 = vmatprep.subr.mxu0 0.0
    %524 = vmatpush1.xpose.msra.mxu0 0.0
    %525 = vmatprep.mubr.f32.mxu0 0.0
    %526 = vmatmul.mubr.f32.gmra.mrb[0].mxu0 %v456
    %v527 = vpop.f32.mrb[0].mxu0
    %v528 = vadd.f32 0.0, %v527
    %v529 = vpop.f32.mrb[0].mxu0
    %530 = vdwg.mxu0
    %v532 = vsel %vm454, %v225, 0
    %v535 = vsel %vm454, %v349, 0
    %537 = vmatprep.subr.mxu0 0.0
    %538 = vmatpush1.xpose.msra.mxu0 %v535
    %539 = vmatprep.subr.mxu0 0.0
    %540 = vmatpush1.xpose.msra.mxu0 0.0
    %541 = vmatprep.subr.mxu0 0.0
    %542 = vmatpush1.xpose.msra.mxu0 0.0
    %543 = vmatprep.subr.mxu0 0.0
    %544 = vmatpush1.xpose.msra.mxu0 0.0
    %545 = vmatprep.subr.mxu0 0.0
    %546 = vmatpush1.xpose.msra.mxu0 0.0
    %547 = vmatprep.subr.mxu0 0.0
    %548 = vmatpush1.xpose.msra.mxu0 0.0
    %549 = vmatprep.subr.mxu0 0.0
    %550 = vmatpush1.xpose.msra.mxu0 0.0
    %551 = vmatprep.subr.mxu0 0.0
    %552 = vmatpush1.xpose.msra.mxu0 0.0
    %553 = vmatprep.subr.mxu0 0.0
    %554 = vmatpush1.xpose.msra.mxu0 0.0
    %555 = vmatprep.subr.mxu0 0.0
    %556 = vmatpush1.xpose.msra.mxu0 0.0
    %557 = vmatprep.subr.mxu0 0.0
    %558 = vmatpush1.xpose.msra.mxu0 0.0
    %559 = vmatprep.subr.mxu0 0.0
    %560 = vmatpush1.xpose.msra.mxu0 0.0
    %561 = vmatprep.subr.mxu0 0.0
    %562 = vmatpush1.xpose.msra.mxu0 0.0
    %563 = vmatprep.subr.mxu0 0.0
    %564 = vmatpush1.xpose.msra.mxu0 0.0
    %565 = vmatprep.subr.mxu0 0.0
    %566 = vmatpush1.xpose.msra.mxu0 0.0
    %567 = vmatprep.subr.mxu0 0.0
    %568 = vmatpush1.xpose.msra.mxu0 0.0
    %569 = vmatprep.subr.mxu0 0.0
    %570 = vmatpush1.xpose.msra.mxu0 0.0
    %571 = vmatprep.subr.mxu0 0.0
    %572 = vmatpush1.xpose.msra.mxu0 0.0
    %573 = vmatprep.subr.mxu0 0.0
    %574 = vmatpush1.xpose.msra.mxu0 0.0
    %575 = vmatprep.subr.mxu0 0.0
    %576 = vmatpush1.xpose.msra.mxu0 0.0
    %577 = vmatprep.subr.mxu0 0.0
    %578 = vmatpush1.xpose.msra.mxu0 0.0
    %579 = vmatprep.subr.mxu0 0.0
    %580 = vmatpush1.xpose.msra.mxu0 0.0
    %581 = vmatprep.subr.mxu0 0.0
    %582 = vmatpush1.xpose.msra.mxu0 0.0
    %583 = vmatprep.subr.mxu0 0.0
    %584 = vmatpush1.xpose.msra.mxu0 0.0
    %585 = vmatprep.subr.mxu0 0.0
    %586 = vmatpush1.xpose.msra.mxu0 0.0
    %587 = vmatprep.subr.mxu0 0.0
    %588 = vmatpush1.xpose.msra.mxu0 0.0
    %589 = vmatprep.subr.mxu0 0.0
    %590 = vmatpush1.xpose.msra.mxu0 0.0
    %591 = vmatprep.subr.mxu0 0.0
    %592 = vmatpush1.xpose.msra.mxu0 0.0
    %593 = vmatprep.subr.mxu0 0.0
    %594 = vmatpush1.xpose.msra.mxu0 0.0
    %595 = vmatprep.subr.mxu0 0.0
    %596 = vmatpush1.xpose.msra.mxu0 0.0
    %597 = vmatprep.subr.mxu0 0.0
    %598 = vmatpush1.xpose.msra.mxu0 0.0
    %599 = vmatprep.subr.mxu0 0.0
    %600 = vmatpush1.xpose.msra.mxu0 0.0
    %601 = vmatprep.mubr.f32.mxu0 0.0
    %602 = vmatmul.mubr.f32.gmra.mrb[0].mxu0 %v532
    %v603 = vpop.f32.mrb[0].mxu0
    %v604 = vadd.f32 0.0, %v603
    %v605 = vpop.f32.mrb[0].mxu0
    %606 = vdwg.mxu0
    %v608 = vsel %vm454, %v226, 0
    %v611 = vsel %vm454, %v355, 0
    %613 = vmatprep.subr.mxu0 0.0
    %614 = vmatpush1.xpose.msra.mxu0 %v611
    %615 = vmatprep.subr.mxu0 0.0
    %616 = vmatpush1.xpose.msra.mxu0 0.0
    %617 = vmatprep.subr.mxu0 0.0
    %618 = vmatpush1.xpose.msra.mxu0 0.0
    %619 = vmatprep.subr.mxu0 0.0
    %620 = vmatpush1.xpose.msra.mxu0 0.0
    %621 = vmatprep.subr.mxu0 0.0
    %622 = vmatpush1.xpose.msra.mxu0 0.0
    %623 = vmatprep.subr.mxu0 0.0
    %624 = vmatpush1.xpose.msra.mxu0 0.0
    %625 = vmatprep.subr.mxu0 0.0
    %626 = vmatpush1.xpose.msra.mxu0 0.0
    %627 = vmatprep.subr.mxu0 0.0
    %628 = vmatpush1.xpose.msra.mxu0 0.0
    %629 = vmatprep.subr.mxu0 0.0
    %630 = vmatpush1.xpose.msra.mxu0 0.0
    %631 = vmatprep.subr.mxu0 0.0
    %632 = vmatpush1.xpose.msra.mxu0 0.0
    %633 = vmatprep.subr.mxu0 0.0
    %634 = vmatpush1.xpose.msra.mxu0 0.0
    %635 = vmatprep.subr.mxu0 0.0
    %636 = vmatpush1.xpose.msra.mxu0 0.0
    %637 = vmatprep.subr.mxu0 0.0
    %638 = vmatpush1.xpose.msra.mxu0 0.0
    %639 = vmatprep.subr.mxu0 0.0
    %640 = vmatpush1.xpose.msra.mxu0 0.0
    %641 = vmatprep.subr.mxu0 0.0
    %642 = vmatpush1.xpose.msra.mxu0 0.0
    %643 = vmatprep.subr.mxu0 0.0
    %644 = vmatpush1.xpose.msra.mxu0 0.0
    %645 = vmatprep.subr.mxu0 0.0
    %646 = vmatpush1.xpose.msra.mxu0 0.0
    %647 = vmatprep.subr.mxu0 0.0
    %648 = vmatpush1.xpose.msra.mxu0 0.0
    %649 = vmatprep.subr.mxu0 0.0
    %650 = vmatpush1.xpose.msra.mxu0 0.0
    %651 = vmatprep.subr.mxu0 0.0
    %652 = vmatpush1.xpose.msra.mxu0 0.0
    %653 = vmatprep.subr.mxu0 0.0
    %654 = vmatpush1.xpose.msra.mxu0 0.0
    %655 = vmatprep.subr.mxu0 0.0
    %656 = vmatpush1.xpose.msra.mxu0 0.0
    %657 = vmatprep.subr.mxu0 0.0
    %658 = vmatpush1.xpose.msra.mxu0 0.0
    %659 = vmatprep.subr.mxu0 0.0
    %660 = vmatpush1.xpose.msra.mxu0 0.0
    %661 = vmatprep.subr.mxu0 0.0
    %662 = vmatpush1.xpose.msra.mxu0 0.0
    %663 = vmatprep.subr.mxu0 0.0
    %664 = vmatpush1.xpose.msra.mxu0 0.0
    %665 = vmatprep.subr.mxu0 0.0
    %666 = vmatpush1.xpose.msra.mxu0 0.0
    %667 = vmatprep.subr.mxu0 0.0
    %668 = vmatpush1.xpose.msra.mxu0 0.0
    %669 = vmatprep.subr.mxu0 0.0
    %670 = vmatpush1.xpose.msra.mxu0 0.0
    %671 = vmatprep.subr.mxu0 0.0
    %672 = vmatpush1.xpose.msra.mxu0 0.0
    %673 = vmatprep.subr.mxu0 0.0
    %674 = vmatpush1.xpose.msra.mxu0 0.0
    %675 = vmatprep.subr.mxu0 0.0
    %676 = vmatpush1.xpose.msra.mxu0 0.0
    %677 = vmatprep.mubr.f32.mxu0 0.0
    %678 = vmatmul.mubr.f32.gmra.mrb[0].mxu0 %v608
    %v679 = vpop.f32.mrb[0].mxu0
    %v680 = vadd.f32 0.0, %v679
    %v681 = vpop.f32.mrb[0].mxu0
    %682 = vdwg.mxu0
    %v684 = vsel %vm454, %v227, 0
    %v687 = vsel %vm454, %v361, 0
    %689 = vmatprep.subr.mxu0 0.0
    %690 = vmatpush1.xpose.msra.mxu0 %v687
    %691 = vmatprep.subr.mxu0 0.0
    %692 = vmatpush1.xpose.msra.mxu0 0.0
    %693 = vmatprep.subr.mxu0 0.0
    %694 = vmatpush1.xpose.msra.mxu0 0.0
    %695 = vmatprep.subr.mxu0 0.0
    %696 = vmatpush1.xpose.msra.mxu0 0.0
    %697 = vmatprep.subr.mxu0 0.0
    %698 = vmatpush1.xpose.msra.mxu0 0.0
    %699 = vmatprep.subr.mxu0 0.0
    %700 = vmatpush1.xpose.msra.mxu0 0.0
    %701 = vmatprep.subr.mxu0 0.0
    %702 = vmatpush1.xpose.msra.mxu0 0.0
    %703 = vmatprep.subr.mxu0 0.0
    %704 = vmatpush1.xpose.msra.mxu0 0.0
    %705 = vmatprep.subr.mxu0 0.0
    %706 = vmatpush1.xpose.msra.mxu0 0.0
    %707 = vmatprep.subr.mxu0 0.0
    %708 = vmatpush1.xpose.msra.mxu0 0.0
    %709 = vmatprep.subr.mxu0 0.0
    %710 = vmatpush1.xpose.msra.mxu0 0.0
    %711 = vmatprep.subr.mxu0 0.0
    %712 = vmatpush1.xpose.msra.mxu0 0.0
    %713 = vmatprep.subr.mxu0 0.0
    %714 = vmatpush1.xpose.msra.mxu0 0.0
    %715 = vmatprep.subr.mxu0 0.0
    %716 = vmatpush1.xpose.msra.mxu0 0.0
    %717 = vmatprep.subr.mxu0 0.0
    %718 = vmatpush1.xpose.msra.mxu0 0.0
    %719 = vmatprep.subr.mxu0 0.0
    %720 = vmatpush1.xpose.msra.mxu0 0.0
    %721 = vmatprep.subr.mxu0 0.0
    %722 = vmatpush1.xpose.msra.mxu0 0.0
    %723 = vmatprep.subr.mxu0 0.0
    %724 = vmatpush1.xpose.msra.mxu0 0.0
    %725 = vmatprep.subr.mxu0 0.0
    %726 = vmatpush1.xpose.msra.mxu0 0.0
    %727 = vmatprep.subr.mxu0 0.0
    %728 = vmatpush1.xpose.msra.mxu0 0.0
    %729 = vmatprep.subr.mxu0 0.0
    %730 = vmatpush1.xpose.msra.mxu0 0.0
    %731 = vmatprep.subr.mxu0 0.0
    %732 = vmatpush1.xpose.msra.mxu0 0.0
    %733 = vmatprep.subr.mxu0 0.0
    %734 = vmatpush1.xpose.msra.mxu0 0.0
    %735 = vmatprep.subr.mxu0 0.0
    %736 = vmatpush1.xpose.msra.mxu0 0.0
    %737 = vmatprep.subr.mxu0 0.0
    %738 = vmatpush1.xpose.msra.mxu0 0.0
    %739 = vmatprep.subr.mxu0 0.0
    %740 = vmatpush1.xpose.msra.mxu0 0.0
    %741 = vmatprep.subr.mxu0 0.0
    %742 = vmatpush1.xpose.msra.mxu0 0.0
    %743 = vmatprep.subr.mxu0 0.0
    %744 = vmatpush1.xpose.msra.mxu0 0.0
    %745 = vmatprep.subr.mxu0 0.0
    %746 = vmatpush1.xpose.msra.mxu0 0.0
    %747 = vmatprep.subr.mxu0 0.0
    %748 = vmatpush1.xpose.msra.mxu0 0.0
    %749 = vmatprep.subr.mxu0 0.0
    %750 = vmatpush1.xpose.msra.mxu0 0.0
    %751 = vmatprep.subr.mxu0 0.0
    %752 = vmatpush1.xpose.msra.mxu0 0.0
    %753 = vmatprep.mubr.f32.mxu0 0.0
    %754 = vmatmul.mubr.f32.gmra.mrb[0].mxu0 %v684
    %v755 = vpop.f32.mrb[0].mxu0
    %v756 = vadd.f32 0.0, %v755
    %v757 = vpop.f32.mrb[0].mxu0
    %758 = vdwg.mxu0
    %vm759 = vcmask 64512
    %v760 = vsel %vm759, %v528, -inf
    %761 = vmax.xlane.f32.xlu0 %v760
    %v762 = vpop.xlane.xlu0 %761
    %v763 = vsel %vm759, %v604, -inf
    %764 = vmax.xlane.f32.xlu0 %v763
    %v765 = vpop.xlane.xlu0 %764
    %v766 = vsel %vm759, %v680, -inf
    %767 = vmax.xlane.f32.xlu0 %v766
    %v768 = vpop.xlane.xlu0 %767
    %v769 = vsel %vm759, %v756, -inf
    %770 = vmax.xlane.f32.xlu0 %v769
    %v771 = vpop.xlane.xlu0 %770
    %v772 = vsub.f32 %v528, %v762
    %v773 = vsub.f32 %v604, %v765
    %v774 = vsub.f32 %v680, %v768
    %v775 = vsub.f32 %v756, %v771
    %v776 = vmul.f32 %v772, 1.442695
    %v777 = vpow.pop %v776
    %v778 = vmul.f32 %v773, 1.442695
    %v779 = vpow.pop %v778
    %v780 = vmul.f32 %v774, 1.442695
    %v781 = vpow.pop %v780
    %v782 = vmul.f32 %v775, 1.442695
    %v783 = vpow.pop %v782
    %v784 = vsel %vm759, %v777, 0.0
    %785 = vadd.xlane.f32.xlu0 %v784
    %v786 = vpop.xlane.xlu0 %785
    %v787 = vsel %vm759, %v779, 0.0
    %788 = vadd.xlane.f32.xlu0 %v787
    %v789 = vpop.xlane.xlu0 %788
    %v790 = vsel %vm759, %v781, 0.0
    %791 = vadd.xlane.f32.xlu0 %v790
    %v792 = vpop.xlane.xlu0 %791
    %v793 = vsel %vm759, %v783, 0.0
    %794 = vadd.xlane.f32.xlu0 %v793
    %v795 = vpop.xlane.xlu0 %794
    %v796 = vrcp.pop %v786
    %v797 = vrcp.pop %v789
    %v798 = vrcp.pop %v792
    %v799 = vrcp.pop %v795
    %v800 = vmul.f32 %v786, %v796
    %v801 = vmul.f32 %v789, %v797
    %v802 = vmul.f32 %v792, %v798
    %v803 = vmul.f32 %v795, %v799
    %v804 = vsub.f32 2.0, %v800
    %v805 = vsub.f32 2.0, %v801
    %v806 = vsub.f32 2.0, %v802
    %v807 = vsub.f32 2.0, %v803
    %v808 = vmul.f32 %v796, %v804
    %v809 = vmul.f32 %v797, %v805
    %v810 = vmul.f32 %v798, %v806
    %v811 = vmul.f32 %v799, %v807
    %v812 = vmul.f32 %v777, %v808
    %v813 = vmul.f32 %v779, %v809
    %v814 = vmul.f32 %v781, %v810
    %v815 = vmul.f32 %v783, %v811
    %v817 = vsel %vm759, %v812, 0
    %819 = vmatprep.subr.mxu0 0.0
    %820 = vmatpush1.msra.mxu0 %v345
    %821 = vmatprep.subr.mxu0 0.0
    %822 = vmatpush1.msra.mxu0 0.0
    %823 = vmatprep.subr.mxu0 0.0
    %824 = vmatpush1.msra.mxu0 0.0
    %825 = vmatprep.subr.mxu0 0.0
    %826 = vmatpush1.msra.mxu0 0.0
    %827 = vmatprep.subr.mxu0 0.0
    %828 = vmatpush1.msra.mxu0 0.0
    %829 = vmatprep.subr.mxu0 0.0
    %830 = vmatpush1.msra.mxu0 0.0
    %831 = vmatprep.subr.mxu0 0.0
    %832 = vmatpush1.msra.mxu0 0.0
    %833 = vmatprep.subr.mxu0 0.0
    %834 = vmatpush1.msra.mxu0 0.0
    %835 = vmatprep.subr.mxu0 0.0
    %836 = vmatpush1.msra.mxu0 0.0
    %837 = vmatprep.subr.mxu0 0.0
    %838 = vmatpush1.msra.mxu0 0.0
    %839 = vmatprep.subr.mxu0 0.0
    %840 = vmatpush1.msra.mxu0 0.0
    %841 = vmatprep.subr.mxu0 0.0
    %842 = vmatpush1.msra.mxu0 0.0
    %843 = vmatprep.subr.mxu0 0.0
    %844 = vmatpush1.msra.mxu0 0.0
    %845 = vmatprep.subr.mxu0 0.0
    %846 = vmatpush1.msra.mxu0 0.0
    %847 = vmatprep.subr.mxu0 0.0
    %848 = vmatpush1.msra.mxu0 0.0
    %849 = vmatprep.subr.mxu0 0.0
    %850 = vmatpush1.msra.mxu0 0.0
    %851 = vmatprep.subr.mxu0 0.0
    %852 = vmatpush1.msra.mxu0 0.0
    %853 = vmatprep.subr.mxu0 0.0
    %854 = vmatpush1.msra.mxu0 0.0
    %855 = vmatprep.subr.mxu0 0.0
    %856 = vmatpush1.msra.mxu0 0.0
    %857 = vmatprep.subr.mxu0 0.0
    %858 = vmatpush1.msra.mxu0 0.0
    %859 = vmatprep.subr.mxu0 0.0
    %860 = vmatpush1.msra.mxu0 0.0
    %861 = vmatprep.subr.mxu0 0.0
    %862 = vmatpush1.msra.mxu0 0.0
    %863 = vmatprep.subr.mxu0 0.0
    %864 = vmatpush1.msra.mxu0 0.0
    %865 = vmatprep.subr.mxu0 0.0
    %866 = vmatpush1.msra.mxu0 0.0
    %867 = vmatprep.subr.mxu0 0.0
    %868 = vmatpush1.msra.mxu0 0.0
    %869 = vmatprep.subr.mxu0 0.0
    %870 = vmatpush1.msra.mxu0 0.0
    %871 = vmatprep.subr.mxu0 0.0
    %872 = vmatpush1.msra.mxu0 0.0
    %873 = vmatprep.subr.mxu0 0.0
    %874 = vmatpush1.msra.mxu0 0.0
    %875 = vmatprep.subr.mxu0 0.0
    %876 = vmatpush1.msra.mxu0 0.0
    %877 = vmatprep.subr.mxu0 0.0
    %878 = vmatpush1.msra.mxu0 0.0
    %879 = vmatprep.subr.mxu0 0.0
    %880 = vmatpush1.msra.mxu0 0.0
    %881 = vmatprep.subr.mxu0 0.0
    %882 = vmatpush1.msra.mxu0 0.0
    %883 = vmatprep.mubr.f32.mxu0 0.0
    %884 = vmatmul.mubr.f32.gmra.mrb[0].mxu0 %v817
    %v885 = vpop.f32.mrb[0].mxu0
    %v886 = vadd.f32 0.0, %v885
    %v887 = vpop.f32.mrb[0].mxu0
    %888 = vdwg.mxu0
    %v890 = vsel %vm759, %v813, 0
    %892 = vmatprep.subr.mxu0 0.0
    %893 = vmatpush1.msra.mxu0 %v351
    %894 = vmatprep.subr.mxu0 0.0
    %895 = vmatpush1.msra.mxu0 0.0
    %896 = vmatprep.subr.mxu0 0.0
    %897 = vmatpush1.msra.mxu0 0.0
    %898 = vmatprep.subr.mxu0 0.0
    %899 = vmatpush1.msra.mxu0 0.0
    %900 = vmatprep.subr.mxu0 0.0
    %901 = vmatpush1.msra.mxu0 0.0
    %902 = vmatprep.subr.mxu0 0.0
    %903 = vmatpush1.msra.mxu0 0.0
    %904 = vmatprep.subr.mxu0 0.0
    %905 = vmatpush1.msra.mxu0 0.0
    %906 = vmatprep.subr.mxu0 0.0
    %907 = vmatpush1.msra.mxu0 0.0
    %908 = vmatprep.subr.mxu0 0.0
    %909 = vmatpush1.msra.mxu0 0.0
    %910 = vmatprep.subr.mxu0 0.0
    %911 = vmatpush1.msra.mxu0 0.0
    %912 = vmatprep.subr.mxu0 0.0
    %913 = vmatpush1.msra.mxu0 0.0
    %914 = vmatprep.subr.mxu0 0.0
    %915 = vmatpush1.msra.mxu0 0.0
    %916 = vmatprep.subr.mxu0 0.0
    %917 = vmatpush1.msra.mxu0 0.0
    %918 = vmatprep.subr.mxu0 0.0
    %919 = vmatpush1.msra.mxu0 0.0
    %920 = vmatprep.subr.mxu0 0.0
    %921 = vmatpush1.msra.mxu0 0.0
    %922 = vmatprep.subr.mxu0 0.0
    %923 = vmatpush1.msra.mxu0 0.0
    %924 = vmatprep.subr.mxu0 0.0
    %925 = vmatpush1.msra.mxu0 0.0
    %926 = vmatprep.subr.mxu0 0.0
    %927 = vmatpush1.msra.mxu0 0.0
    %928 = vmatprep.subr.mxu0 0.0
    %929 = vmatpush1.msra.mxu0 0.0
    %930 = vmatprep.subr.mxu0 0.0
    %931 = vmatpush1.msra.mxu0 0.0
    %932 = vmatprep.subr.mxu0 0.0
    %933 = vmatpush1.msra.mxu0 0.0
    %934 = vmatprep.subr.mxu0 0.0
    %935 = vmatpush1.msra.mxu0 0.0
    %936 = vmatprep.subr.mxu0 0.0
    %937 = vmatpush1.msra.mxu0 0.0
    %938 = vmatprep.subr.mxu0 0.0
    %939 = vmatpush1.msra.mxu0 0.0
    %940 = vmatprep.subr.mxu0 0.0
    %941 = vmatpush1.msra.mxu0 0.0
    %942 = vmatprep.subr.mxu0 0.0
    %943 = vmatpush1.msra.mxu0 0.0
    %944 = vmatprep.subr.mxu0 0.0
    %945 = vmatpush1.msra.mxu0 0.0
    %946 = vmatprep.subr.mxu0 0.0
    %947 = vmatpush1.msra.mxu0 0.0
    %948 = vmatprep.subr.mxu0 0.0
    %949 = vmatpush1.msra.mxu0 0.0
    %950 = vmatprep.subr.mxu0 0.0
    %951 = vmatpush1.msra.mxu0 0.0
    %952 = vmatprep.subr.mxu0 0.0
    %953 = vmatpush1.msra.mxu0 0.0
    %954 = vmatprep.subr.mxu0 0.0
    %955 = vmatpush1.msra.mxu0 0.0
    %956 = vmatprep.mubr.f32.mxu0 0.0
    %957 = vmatmul.mubr.f32.gmra.mrb[0].mxu0 %v890
    %v958 = vpop.f32.mrb[0].mxu0
    %v959 = vadd.f32 0.0, %v958
    %v960 = vpop.f32.mrb[0].mxu0
    %961 = vdwg.mxu0
    %v963 = vsel %vm759, %v814, 0
    %965 = vmatprep.subr.mxu0 0.0
    %966 = vmatpush1.msra.mxu0 %v357
    %967 = vmatprep.subr.mxu0 0.0
    %968 = vmatpush1.msra.mxu0 0.0
    %969 = vmatprep.subr.mxu0 0.0
    %970 = vmatpush1.msra.mxu0 0.0
    %971 = vmatprep.subr.mxu0 0.0
    %972 = vmatpush1.msra.mxu0 0.0
    %973 = vmatprep.subr.mxu0 0.0
    %974 = vmatpush1.msra.mxu0 0.0
    %975 = vmatprep.subr.mxu0 0.0
    %976 = vmatpush1.msra.mxu0 0.0
    %977 = vmatprep.subr.mxu0 0.0
    %978 = vmatpush1.msra.mxu0 0.0
    %979 = vmatprep.subr.mxu0 0.0
    %980 = vmatpush1.msra.mxu0 0.0
    %981 = vmatprep.subr.mxu0 0.0
    %982 = vmatpush1.msra.mxu0 0.0
    %983 = vmatprep.subr.mxu0 0.0
    %984 = vmatpush1.msra.mxu0 0.0
    %985 = vmatprep.subr.mxu0 0.0
    %986 = vmatpush1.msra.mxu0 0.0
    %987 = vmatprep.subr.mxu0 0.0
    %988 = vmatpush1.msra.mxu0 0.0
    %989 = vmatprep.subr.mxu0 0.0
    %990 = vmatpush1.msra.mxu0 0.0
    %991 = vmatprep.subr.mxu0 0.0
    %992 = vmatpush1.msra.mxu0 0.0
    %993 = vmatprep.subr.mxu0 0.0
    %994 = vmatpush1.msra.mxu0 0.0
    %995 = vmatprep.subr.mxu0 0.0
    %996 = vmatpush1.msra.mxu0 0.0
    %997 = vmatprep.subr.mxu0 0.0
    %998 = vmatpush1.msra.mxu0 0.0
    %999 = vmatprep.subr.mxu0 0.0
    %1000 = vmatpush1.msra.mxu0 0.0
    %1001 = vmatprep.subr.mxu0 0.0
    %1002 = vmatpush1.msra.mxu0 0.0
    %1003 = vmatprep.subr.mxu0 0.0
    %1004 = vmatpush1.msra.mxu0 0.0
    %1005 = vmatprep.subr.mxu0 0.0
    %1006 = vmatpush1.msra.mxu0 0.0
    %1007 = vmatprep.subr.mxu0 0.0
    %1008 = vmatpush1.msra.mxu0 0.0
    %1009 = vmatprep.subr.mxu0 0.0
    %1010 = vmatpush1.msra.mxu0 0.0
    %1011 = vmatprep.subr.mxu0 0.0
    %1012 = vmatpush1.msra.mxu0 0.0
    %1013 = vmatprep.subr.mxu0 0.0
    %1014 = vmatpush1.msra.mxu0 0.0
    %1015 = vmatprep.subr.mxu0 0.0
    %1016 = vmatpush1.msra.mxu0 0.0
    %1017 = vmatprep.subr.mxu0 0.0
    %1018 = vmatpush1.msra.mxu0 0.0
    %1019 = vmatprep.subr.mxu0 0.0
    %1020 = vmatpush1.msra.mxu0 0.0
    %1021 = vmatprep.subr.mxu0 0.0
    %1022 = vmatpush1.msra.mxu0 0.0
    %1023 = vmatprep.subr.mxu0 0.0
    %1024 = vmatpush1.msra.mxu0 0.0
    %1025 = vmatprep.subr.mxu0 0.0
    %1026 = vmatpush1.msra.mxu0 0.0
    %1027 = vmatprep.subr.mxu0 0.0
    %1028 = vmatpush1.msra.mxu0 0.0
    %1029 = vmatprep.mubr.f32.mxu0 0.0
    %1030 = vmatmul.mubr.f32.gmra.mrb[0].mxu0 %v963
    %v1031 = vpop.f32.mrb[0].mxu0
    %v1032 = vadd.f32 0.0, %v1031
    %v1033 = vpop.f32.mrb[0].mxu0
    %1034 = vdwg.mxu0
    %v1036 = vsel %vm759, %v815, 0
    %1038 = vmatprep.subr.mxu0 0.0
    %1039 = vmatpush1.msra.mxu0 %v363
    %1040 = vmatprep.subr.mxu0 0.0
    %1041 = vmatpush1.msra.mxu0 0.0
    %1042 = vmatprep.subr.mxu0 0.0
    %1043 = vmatpush1.msra.mxu0 0.0
    %1044 = vmatprep.subr.mxu0 0.0
    %1045 = vmatpush1.msra.mxu0 0.0
    %1046 = vmatprep.subr.mxu0 0.0
    %1047 = vmatpush1.msra.mxu0 0.0
    %1048 = vmatprep.subr.mxu0 0.0
    %1049 = vmatpush1.msra.mxu0 0.0
    %1050 = vmatprep.subr.mxu0 0.0
    %1051 = vmatpush1.msra.mxu0 0.0
    %1052 = vmatprep.subr.mxu0 0.0
    %1053 = vmatpush1.msra.mxu0 0.0
    %1054 = vmatprep.subr.mxu0 0.0
    %1055 = vmatpush1.msra.mxu0 0.0
    %1056 = vmatprep.subr.mxu0 0.0
    %1057 = vmatpush1.msra.mxu0 0.0
    %1058 = vmatprep.subr.mxu0 0.0
    %1059 = vmatpush1.msra.mxu0 0.0
    %1060 = vmatprep.subr.mxu0 0.0
    %1061 = vmatpush1.msra.mxu0 0.0
    %1062 = vmatprep.subr.mxu0 0.0
    %1063 = vmatpush1.msra.mxu0 0.0
    %1064 = vmatprep.subr.mxu0 0.0
    %1065 = vmatpush1.msra.mxu0 0.0
    %1066 = vmatprep.subr.mxu0 0.0
    %1067 = vmatpush1.msra.mxu0 0.0
    %1068 = vmatprep.subr.mxu0 0.0
    %1069 = vmatpush1.msra.mxu0 0.0
    %1070 = vmatprep.subr.mxu0 0.0
    %1071 = vmatpush1.msra.mxu0 0.0
    %1072 = vmatprep.subr.mxu0 0.0
    %1073 = vmatpush1.msra.mxu0 0.0
    %1074 = vmatprep.subr.mxu0 0.0
    %1075 = vmatpush1.msra.mxu0 0.0
    %1076 = vmatprep.subr.mxu0 0.0
    %1077 = vmatpush1.msra.mxu0 0.0
    %1078 = vmatprep.subr.mxu0 0.0
    %1079 = vmatpush1.msra.mxu0 0.0
    %1080 = vmatprep.subr.mxu0 0.0
    %1081 = vmatpush1.msra.mxu0 0.0
    %1082 = vmatprep.subr.mxu0 0.0
    %1083 = vmatpush1.msra.mxu0 0.0
    %1084 = vmatprep.subr.mxu0 0.0
    %1085 = vmatpush1.msra.mxu0 0.0
    %1086 = vmatprep.subr.mxu0 0.0
    %1087 = vmatpush1.msra.mxu0 0.0
    %1088 = vmatprep.subr.mxu0 0.0
    %1089 = vmatpush1.msra.mxu0 0.0
    %1090 = vmatprep.subr.mxu0 0.0
    %1091 = vmatpush1.msra.mxu0 0.0
    %1092 = vmatprep.subr.mxu0 0.0
    %1093 = vmatpush1.msra.mxu0 0.0
    %1094 = vmatprep.subr.mxu0 0.0
    %1095 = vmatpush1.msra.mxu0 0.0
    %1096 = vmatprep.subr.mxu0 0.0
    %1097 = vmatpush1.msra.mxu0 0.0
    %1098 = vmatprep.subr.mxu0 0.0
    %1099 = vmatpush1.msra.mxu0 0.0
    %1100 = vmatprep.subr.mxu0 0.0
    %1101 = vmatpush1.msra.mxu0 0.0
    %1102 = vmatprep.mubr.f32.mxu0 0.0
    %1103 = vmatmul.mubr.f32.gmra.mrb[0].mxu0 %v1036
    %v1104 = vpop.f32.mrb[0].mxu0
    %v1105 = vadd.f32 0.0, %v1104
    %v1106 = vpop.f32.mrb[0].mxu0
    %1107 = vdwg.mxu0
    %1108 = vrot.lane.b32.xlu0 %v224, 96
    %v1109 = vpop.permute.xlu0 %1108
    %1110 = vrot.lane.b32.xlu0 %v343, 96
    %v1111 = vpop.permute.xlu0 %1110
    %v1112 = vsel %vm454, %v1109, 0
    %v1114 = vsel %vm454, %v1111, 0
    %1116 = vmatprep.subr.mxu0 0.0
    %1117 = vmatpush1.xpose.msra.mxu0 %v1114
    %1118 = vmatprep.subr.mxu0 0.0
    %1119 = vmatpush1.xpose.msra.mxu0 0.0
    %1120 = vmatprep.subr.mxu0 0.0
    %1121 = vmatpush1.xpose.msra.mxu0 0.0
    %1122 = vmatprep.subr.mxu0 0.0
    %1123 = vmatpush1.xpose.msra.mxu0 0.0
    %1124 = vmatprep.subr.mxu0 0.0
    %1125 = vmatpush1.xpose.msra.mxu0 0.0
    %1126 = vmatprep.subr.mxu0 0.0
    %1127 = vmatpush1.xpose.msra.mxu0 0.0
    %1128 = vmatprep.subr.mxu0 0.0
    %1129 = vmatpush1.xpose.msra.mxu0 0.0
    %1130 = vmatprep.subr.mxu0 0.0
    %1131 = vmatpush1.xpose.msra.mxu0 0.0
    %1132 = vmatprep.subr.mxu0 0.0
    %1133 = vmatpush1.xpose.msra.mxu0 0.0
    %1134 = vmatprep.subr.mxu0 0.0
    %1135 = vmatpush1.xpose.msra.mxu0 0.0
    %1136 = vmatprep.subr.mxu0 0.0
    %1137 = vmatpush1.xpose.msra.mxu0 0.0
    %1138 = vmatprep.subr.mxu0 0.0
    %1139 = vmatpush1.xpose.msra.mxu0 0.0
    %1140 = vmatprep.subr.mxu0 0.0
    %1141 = vmatpush1.xpose.msra.mxu0 0.0
    %1142 = vmatprep.subr.mxu0 0.0
    %1143 = vmatpush1.xpose.msra.mxu0 0.0
    %1144 = vmatprep.subr.mxu0 0.0
    %1145 = vmatpush1.xpose.msra.mxu0 0.0
    %1146 = vmatprep.subr.mxu0 0.0
    %1147 = vmatpush1.xpose.msra.mxu0 0.0
    %1148 = vmatprep.subr.mxu0 0.0
    %1149 = vmatpush1.xpose.msra.mxu0 0.0
    %1150 = vmatprep.subr.mxu0 0.0
    %1151 = vmatpush1.xpose.msra.mxu0 0.0
    %1152 = vmatprep.subr.mxu0 0.0
    %1153 = vmatpush1.xpose.msra.mxu0 0.0
    %1154 = vmatprep.subr.mxu0 0.0
    %1155 = vmatpush1.xpose.msra.mxu0 0.0
    %1156 = vmatprep.subr.mxu0 0.0
    %1157 = vmatpush1.xpose.msra.mxu0 0.0
    %1158 = vmatprep.subr.mxu0 0.0
    %1159 = vmatpush1.xpose.msra.mxu0 0.0
    %1160 = vmatprep.subr.mxu0 0.0
    %1161 = vmatpush1.xpose.msra.mxu0 0.0
    %1162 = vmatprep.subr.mxu0 0.0
    %1163 = vmatpush1.xpose.msra.mxu0 0.0
    %1164 = vmatprep.subr.mxu0 0.0
    %1165 = vmatpush1.xpose.msra.mxu0 0.0
    %1166 = vmatprep.subr.mxu0 0.0
    %1167 = vmatpush1.xpose.msra.mxu0 0.0
    %1168 = vmatprep.subr.mxu0 0.0
    %1169 = vmatpush1.xpose.msra.mxu0 0.0
    %1170 = vmatprep.subr.mxu0 0.0
    %1171 = vmatpush1.xpose.msra.mxu0 0.0
    %1172 = vmatprep.subr.mxu0 0.0
    %1173 = vmatpush1.xpose.msra.mxu0 0.0
    %1174 = vmatprep.subr.mxu0 0.0
    %1175 = vmatpush1.xpose.msra.mxu0 0.0
    %1176 = vmatprep.subr.mxu0 0.0
    %1177 = vmatpush1.xpose.msra.mxu0 0.0
    %1178 = vmatprep.subr.mxu0 0.0
    %1179 = vmatpush1.xpose.msra.mxu0 0.0
    %1180 = vmatprep.mubr.f32.mxu0 0.0
    %1181 = vmatmul.mubr.f32.gmra.mrb[0].mxu0 %v1112
    %v1182 = vpop.f32.mrb[0].mxu0
    %v1183 = vadd.f32 0.0, %v1182
    %v1184 = vpop.f32.mrb[0].mxu0
    %1185 = vdwg.mxu0
    %1186 = vrot.lane.b32.xlu0 %v225, 96
    %v1187 = vpop.permute.xlu0 %1186
    %1188 = vrot.lane.b32.xlu0 %v349, 96
    %v1189 = vpop.permute.xlu0 %1188
    %v1190 = vsel %vm454, %v1187, 0
    %v1192 = vsel %vm454, %v1189, 0
    %1194 = vmatprep.subr.mxu0 0.0
    %1195 = vmatpush1.xpose.msra.mxu0 %v1192
    %1196 = vmatprep.subr.mxu0 0.0
    %1197 = vmatpush1.xpose.msra.mxu0 0.0
    %1198 = vmatprep.subr.mxu0 0.0
    %1199 = vmatpush1.xpose.msra.mxu0 0.0
    %1200 = vmatprep.subr.mxu0 0.0
    %1201 = vmatpush1.xpose.msra.mxu0 0.0
    %1202 = vmatprep.subr.mxu0 0.0
    %1203 = vmatpush1.xpose.msra.mxu0 0.0
    %1204 = vmatprep.subr.mxu0 0.0
    %1205 = vmatpush1.xpose.msra.mxu0 0.0
    %1206 = vmatprep.subr.mxu0 0.0
    %1207 = vmatpush1.xpose.msra.mxu0 0.0
    %1208 = vmatprep.subr.mxu0 0.0
    %1209 = vmatpush1.xpose.msra.mxu0 0.0
    %1210 = vmatprep.subr.mxu0 0.0
    %1211 = vmatpush1.xpose.msra.mxu0 0.0
    %1212 = vmatprep.subr.mxu0 0.0
    %1213 = vmatpush1.xpose.msra.mxu0 0.0
    %1214 = vmatprep.subr.mxu0 0.0
    %1215 = vmatpush1.xpose.msra.mxu0 0.0
    %1216 = vmatprep.subr.mxu0 0.0
    %1217 = vmatpush1.xpose.msra.mxu0 0.0
    %1218 = vmatprep.subr.mxu0 0.0
    %1219 = vmatpush1.xpose.msra.mxu0 0.0
    %1220 = vmatprep.subr.mxu0 0.0
    %1221 = vmatpush1.xpose.msra.mxu0 0.0
    %1222 = vmatprep.subr.mxu0 0.0
    %1223 = vmatpush1.xpose.msra.mxu0 0.0
    %1224 = vmatprep.subr.mxu0 0.0
    %1225 = vmatpush1.xpose.msra.mxu0 0.0
    %1226 = vmatprep.subr.mxu0 0.0
    %1227 = vmatpush1.xpose.msra.mxu0 0.0
    %1228 = vmatprep.subr.mxu0 0.0
    %1229 = vmatpush1.xpose.msra.mxu0 0.0
    %1230 = vmatprep.subr.mxu0 0.0
    %1231 = vmatpush1.xpose.msra.mxu0 0.0
    %1232 = vmatprep.subr.mxu0 0.0
    %1233 = vmatpush1.xpose.msra.mxu0 0.0
    %1234 = vmatprep.subr.mxu0 0.0
    %1235 = vmatpush1.xpose.msra.mxu0 0.0
    %1236 = vmatprep.subr.mxu0 0.0
    %1237 = vmatpush1.xpose.msra.mxu0 0.0
    %1238 = vmatprep.subr.mxu0 0.0
    %1239 = vmatpush1.xpose.msra.mxu0 0.0
    %1240 = vmatprep.subr.mxu0 0.0
    %1241 = vmatpush1.xpose.msra.mxu0 0.0
    %1242 = vmatprep.subr.mxu0 0.0
    %1243 = vmatpush1.xpose.msra.mxu0 0.0
    %1244 = vmatprep.subr.mxu0 0.0
    %1245 = vmatpush1.xpose.msra.mxu0 0.0
    %1246 = vmatprep.subr.mxu0 0.0
    %1247 = vmatpush1.xpose.msra.mxu0 0.0
    %1248 = vmatprep.subr.mxu0 0.0
    %1249 = vmatpush1.xpose.msra.mxu0 0.0
    %1250 = vmatprep.subr.mxu0 0.0
    %1251 = vmatpush1.xpose.msra.mxu0 0.0
    %1252 = vmatprep.subr.mxu0 0.0
    %1253 = vmatpush1.xpose.msra.mxu0 0.0
    %1254 = vmatprep.subr.mxu0 0.0
    %1255 = vmatpush1.xpose.msra.mxu0 0.0
    %1256 = vmatprep.subr.mxu0 0.0
    %1257 = vmatpush1.xpose.msra.mxu0 0.0
    %1258 = vmatprep.mubr.f32.mxu0 0.0
    %1259 = vmatmul.mubr.f32.gmra.mrb[0].mxu0 %v1190
    %v1260 = vpop.f32.mrb[0].mxu0
    %v1261 = vadd.f32 0.0, %v1260
    %v1262 = vpop.f32.mrb[0].mxu0
    %1263 = vdwg.mxu0
    %1264 = vrot.lane.b32.xlu0 %v226, 96
    %v1265 = vpop.permute.xlu0 %1264
    %1266 = vrot.lane.b32.xlu0 %v355, 96
    %v1267 = vpop.permute.xlu0 %1266
    %v1268 = vsel %vm454, %v1265, 0
    %v1270 = vsel %vm454, %v1267, 0
    %1272 = vmatprep.subr.mxu0 0.0
    %1273 = vmatpush1.xpose.msra.mxu0 %v1270
    %1274 = vmatprep.subr.mxu0 0.0
    %1275 = vmatpush1.xpose.msra.mxu0 0.0
    %1276 = vmatprep.subr.mxu0 0.0
    %1277 = vmatpush1.xpose.msra.mxu0 0.0
    %1278 = vmatprep.subr.mxu0 0.0
    %1279 = vmatpush1.xpose.msra.mxu0 0.0
    %1280 = vmatprep.subr.mxu0 0.0
    %1281 = vmatpush1.xpose.msra.mxu0 0.0
    %1282 = vmatprep.subr.mxu0 0.0
    %1283 = vmatpush1.xpose.msra.mxu0 0.0
    %1284 = vmatprep.subr.mxu0 0.0
    %1285 = vmatpush1.xpose.msra.mxu0 0.0
    %1286 = vmatprep.subr.mxu0 0.0
    %1287 = vmatpush1.xpose.msra.mxu0 0.0
    %1288 = vmatprep.subr.mxu0 0.0
    %1289 = vmatpush1.xpose.msra.mxu0 0.0
    %1290 = vmatprep.subr.mxu0 0.0
    %1291 = vmatpush1.xpose.msra.mxu0 0.0
    %1292 = vmatprep.subr.mxu0 0.0
    %1293 = vmatpush1.xpose.msra.mxu0 0.0
    %1294 = vmatprep.subr.mxu0 0.0
    %1295 = vmatpush1.xpose.msra.mxu0 0.0
    %1296 = vmatprep.subr.mxu0 0.0
    %1297 = vmatpush1.xpose.msra.mxu0 0.0
    %1298 = vmatprep.subr.mxu0 0.0
    %1299 = vmatpush1.xpose.msra.mxu0 0.0
    %1300 = vmatprep.subr.mxu0 0.0
    %1301 = vmatpush1.xpose.msra.mxu0 0.0
    %1302 = vmatprep.subr.mxu0 0.0
    %1303 = vmatpush1.xpose.msra.mxu0 0.0
    %1304 = vmatprep.subr.mxu0 0.0
    %1305 = vmatpush1.xpose.msra.mxu0 0.0
    %1306 = vmatprep.subr.mxu0 0.0
    %1307 = vmatpush1.xpose.msra.mxu0 0.0
    %1308 = vmatprep.subr.mxu0 0.0
    %1309 = vmatpush1.xpose.msra.mxu0 0.0
    %1310 = vmatprep.subr.mxu0 0.0
    %1311 = vmatpush1.xpose.msra.mxu0 0.0
    %1312 = vmatprep.subr.mxu0 0.0
    %1313 = vmatpush1.xpose.msra.mxu0 0.0
    %1314 = vmatprep.subr.mxu0 0.0
    %1315 = vmatpush1.xpose.msra.mxu0 0.0
    %1316 = vmatprep.subr.mxu0 0.0
    %1317 = vmatpush1.xpose.msra.mxu0 0.0
    %1318 = vmatprep.subr.mxu0 0.0
    %1319 = vmatpush1.xpose.msra.mxu0 0.0
    %1320 = vmatprep.subr.mxu0 0.0
    %1321 = vmatpush1.xpose.msra.mxu0 0.0
    %1322 = vmatprep.subr.mxu0 0.0
    %1323 = vmatpush1.xpose.msra.mxu0 0.0
    %1324 = vmatprep.subr.mxu0 0.0
    %1325 = vmatpush1.xpose.msra.mxu0 0.0
    %1326 = vmatprep.subr.mxu0 0.0
    %1327 = vmatpush1.xpose.msra.mxu0 0.0
    %1328 = vmatprep.subr.mxu0 0.0
    %1329 = vmatpush1.xpose.msra.mxu0 0.0
    %1330 = vmatprep.subr.mxu0 0.0
    %1331 = vmatpush1.xpose.msra.mxu0 0.0
    %1332 = vmatprep.subr.mxu0 0.0
    %1333 = vmatpush1.xpose.msra.mxu0 0.0
    %1334 = vmatprep.subr.mxu0 0.0
    %1335 = vmatpush1.xpose.msra.mxu0 0.0
    %1336 = vmatprep.mubr.f32.mxu0 0.0
    %1337 = vmatmul.mubr.f32.gmra.mrb[0].mxu0 %v1268
    %v1338 = vpop.f32.mrb[0].mxu0
    %v1339 = vadd.f32 0.0, %v1338
    %v1340 = vpop.f32.mrb[0].mxu0
    %1341 = vdwg.mxu0
    %1342 = vrot.lane.b32.xlu0 %v227, 96
    %v1343 = vpop.permute.xlu0 %1342
    %1344 = vrot.lane.b32.xlu0 %v361, 96
    %v1345 = vpop.permute.xlu0 %1344
    %v1346 = vsel %vm454, %v1343, 0
    %v1348 = vsel %vm454, %v1345, 0
    %1350 = vmatprep.subr.mxu0 0.0
    %1351 = vmatpush1.xpose.msra.mxu0 %v1348
    %1352 = vmatprep.subr.mxu0 0.0
    %1353 = vmatpush1.xpose.msra.mxu0 0.0
    %1354 = vmatprep.subr.mxu0 0.0
    %1355 = vmatpush1.xpose.msra.mxu0 0.0
    %1356 = vmatprep.subr.mxu0 0.0
    %1357 = vmatpush1.xpose.msra.mxu0 0.0
    %1358 = vmatprep.subr.mxu0 0.0
    %1359 = vmatpush1.xpose.msra.mxu0 0.0
    %1360 = vmatprep.subr.mxu0 0.0
    %1361 = vmatpush1.xpose.msra.mxu0 0.0
    %1362 = vmatprep.subr.mxu0 0.0
    %1363 = vmatpush1.xpose.msra.mxu0 0.0
    %1364 = vmatprep.subr.mxu0 0.0
    %1365 = vmatpush1.xpose.msra.mxu0 0.0
    %1366 = vmatprep.subr.mxu0 0.0
    %1367 = vmatpush1.xpose.msra.mxu0 0.0
    %1368 = vmatprep.subr.mxu0 0.0
    %1369 = vmatpush1.xpose.msra.mxu0 0.0
    %1370 = vmatprep.subr.mxu0 0.0
    %1371 = vmatpush1.xpose.msra.mxu0 0.0
    %1372 = vmatprep.subr.mxu0 0.0
    %1373 = vmatpush1.xpose.msra.mxu0 0.0
    %1374 = vmatprep.subr.mxu0 0.0
    %1375 = vmatpush1.xpose.msra.mxu0 0.0
    %1376 = vmatprep.subr.mxu0 0.0
    %1377 = vmatpush1.xpose.msra.mxu0 0.0
    %1378 = vmatprep.subr.mxu0 0.0
    %1379 = vmatpush1.xpose.msra.mxu0 0.0
    %1380 = vmatprep.subr.mxu0 0.0
    %1381 = vmatpush1.xpose.msra.mxu0 0.0
    %1382 = vmatprep.subr.mxu0 0.0
    %1383 = vmatpush1.xpose.msra.mxu0 0.0
    %1384 = vmatprep.subr.mxu0 0.0
    %1385 = vmatpush1.xpose.msra.mxu0 0.0
    %1386 = vmatprep.subr.mxu0 0.0
    %1387 = vmatpush1.xpose.msra.mxu0 0.0
    %1388 = vmatprep.subr.mxu0 0.0
    %1389 = vmatpush1.xpose.msra.mxu0 0.0
    %1390 = vmatprep.subr.mxu0 0.0
    %1391 = vmatpush1.xpose.msra.mxu0 0.0
    %1392 = vmatprep.subr.mxu0 0.0
    %1393 = vmatpush1.xpose.msra.mxu0 0.0
    %1394 = vmatprep.subr.mxu0 0.0
    %1395 = vmatpush1.xpose.msra.mxu0 0.0
    %1396 = vmatprep.subr.mxu0 0.0
    %1397 = vmatpush1.xpose.msra.mxu0 0.0
    %1398 = vmatprep.subr.mxu0 0.0
    %1399 = vmatpush1.xpose.msra.mxu0 0.0
    %1400 = vmatprep.subr.mxu0 0.0
    %1401 = vmatpush1.xpose.msra.mxu0 0.0
    %1402 = vmatprep.subr.mxu0 0.0
    %1403 = vmatpush1.xpose.msra.mxu0 0.0
    %1404 = vmatprep.subr.mxu0 0.0
    %1405 = vmatpush1.xpose.msra.mxu0 0.0
    %1406 = vmatprep.subr.mxu0 0.0
    %1407 = vmatpush1.xpose.msra.mxu0 0.0
    %1408 = vmatprep.subr.mxu0 0.0
    %1409 = vmatpush1.xpose.msra.mxu0 0.0
    %1410 = vmatprep.subr.mxu0 0.0
    %1411 = vmatpush1.xpose.msra.mxu0 0.0
    %1412 = vmatprep.subr.mxu0 0.0
    %1413 = vmatpush1.xpose.msra.mxu0 0.0
    %1414 = vmatprep.mubr.f32.mxu0 0.0
    %1415 = vmatmul.mubr.f32.gmra.mrb[0].mxu0 %v1346
    %v1416 = vpop.f32.mrb[0].mxu0
    %v1417 = vadd.f32 0.0, %v1416
    %v1418 = vpop.f32.mrb[0].mxu0
    %1419 = vdwg.mxu0
    %v1420 = vsel %vm759, %v1183, -inf
    %1421 = vmax.xlane.f32.xlu0 %v1420
    %v1422 = vpop.xlane.xlu0 %1421
    %v1423 = vsel %vm759, %v1261, -inf
    %1424 = vmax.xlane.f32.xlu0 %v1423
    %v1425 = vpop.xlane.xlu0 %1424
    %v1426 = vsel %vm759, %v1339, -inf
    %1427 = vmax.xlane.f32.xlu0 %v1426
    %v1428 = vpop.xlane.xlu0 %1427
    %v1429 = vsel %vm759, %v1417, -inf
    %1430 = vmax.xlane.f32.xlu0 %v1429
    %v1431 = vpop.xlane.xlu0 %1430
    %v1432 = vsub.f32 %v1183, %v1422
    %v1433 = vsub.f32 %v1261, %v1425
    %v1434 = vsub.f32 %v1339, %v1428
    %v1435 = vsub.f32 %v1417, %v1431
    %v1436 = vmul.f32 %v1432, 1.442695
    %v1437 = vpow.pop %v1436
    %v1438 = vmul.f32 %v1433, 1.442695
    %v1439 = vpow.pop %v1438
    %v1440 = vmul.f32 %v1434, 1.442695
    %v1441 = vpow.pop %v1440
    %v1442 = vmul.f32 %v1435, 1.442695
    %v1443 = vpow.pop %v1442
    %v1444 = vsel %vm759, %v1437, 0.0
    %1445 = vadd.xlane.f32.xlu0 %v1444
    %v1446 = vpop.xlane.xlu0 %1445
    %v1447 = vsel %vm759, %v1439, 0.0
    %1448 = vadd.xlane.f32.xlu0 %v1447
    %v1449 = vpop.xlane.xlu0 %1448
    %v1450 = vsel %vm759, %v1441, 0.0
    %1451 = vadd.xlane.f32.xlu0 %v1450
    %v1452 = vpop.xlane.xlu0 %1451
    %v1453 = vsel %vm759, %v1443, 0.0
    %1454 = vadd.xlane.f32.xlu0 %v1453
    %v1455 = vpop.xlane.xlu0 %1454
    %v1456 = vrcp.pop %v1446
    %v1457 = vrcp.pop %v1449
    %v1458 = vrcp.pop %v1452
    %v1459 = vrcp.pop %v1455
    %v1460 = vmul.f32 %v1446, %v1456
    %v1461 = vmul.f32 %v1449, %v1457
    %v1462 = vmul.f32 %v1452, %v1458
    %v1463 = vmul.f32 %v1455, %v1459
    %v1464 = vsub.f32 2.0, %v1460
    %v1465 = vsub.f32 2.0, %v1461
    %v1466 = vsub.f32 2.0, %v1462
    %v1467 = vsub.f32 2.0, %v1463
    %v1468 = vmul.f32 %v1456, %v1464
    %v1469 = vmul.f32 %v1457, %v1465
    %v1470 = vmul.f32 %v1458, %v1466
    %v1471 = vmul.f32 %v1459, %v1467
    %v1472 = vmul.f32 %v1437, %v1468
    %v1473 = vmul.f32 %v1439, %v1469
    %v1474 = vmul.f32 %v1441, %v1470
    %v1475 = vmul.f32 %v1443, %v1471
    %1477 = vrot.lane.b32.xlu0 %v345, 96
    %v1478 = vpop.permute.xlu0 %1477
    %v1481 = vsel %vm759, %v1472, 0
    %1483 = vmatprep.subr.mxu0 0.0
    %1484 = vmatpush1.msra.mxu0 %v1478
    %1485 = vmatprep.subr.mxu0 0.0
    %1486 = vmatpush1.msra.mxu0 0.0
    %1487 = vmatprep.subr.mxu0 0.0
    %1488 = vmatpush1.msra.mxu0 0.0
    %1489 = vmatprep.subr.mxu0 0.0
    %1490 = vmatpush1.msra.mxu0 0.0
    %1491 = vmatprep.subr.mxu0 0.0
    %1492 = vmatpush1.msra.mxu0 0.0
    %1493 = vmatprep.subr.mxu0 0.0
    %1494 = vmatpush1.msra.mxu0 0.0
    %1495 = vmatprep.subr.mxu0 0.0
    %1496 = vmatpush1.msra.mxu0 0.0
    %1497 = vmatprep.subr.mxu0 0.0
    %1498 = vmatpush1.msra.mxu0 0.0
    %1499 = vmatprep.subr.mxu0 0.0
    %1500 = vmatpush1.msra.mxu0 0.0
    %1501 = vmatprep.subr.mxu0 0.0
    %1502 = vmatpush1.msra.mxu0 0.0
    %1503 = vmatprep.subr.mxu0 0.0
    %1504 = vmatpush1.msra.mxu0 0.0
    %1505 = vmatprep.subr.mxu0 0.0
    %1506 = vmatpush1.msra.mxu0 0.0
    %1507 = vmatprep.subr.mxu0 0.0
    %1508 = vmatpush1.msra.mxu0 0.0
    %1509 = vmatprep.subr.mxu0 0.0
    %1510 = vmatpush1.msra.mxu0 0.0
    %1511 = vmatprep.subr.mxu0 0.0
    %1512 = vmatpush1.msra.mxu0 0.0
    %1513 = vmatprep.subr.mxu0 0.0
    %1514 = vmatpush1.msra.mxu0 0.0
    %1515 = vmatprep.subr.mxu0 0.0
    %1516 = vmatpush1.msra.mxu0 0.0
    %1517 = vmatprep.subr.mxu0 0.0
    %1518 = vmatpush1.msra.mxu0 0.0
    %1519 = vmatprep.subr.mxu0 0.0
    %1520 = vmatpush1.msra.mxu0 0.0
    %1521 = vmatprep.subr.mxu0 0.0
    %1522 = vmatpush1.msra.mxu0 0.0
    %1523 = vmatprep.subr.mxu0 0.0
    %1524 = vmatpush1.msra.mxu0 0.0
    %1525 = vmatprep.subr.mxu0 0.0
    %1526 = vmatpush1.msra.mxu0 0.0
    %1527 = vmatprep.subr.mxu0 0.0
    %1528 = vmatpush1.msra.mxu0 0.0
    %1529 = vmatprep.subr.mxu0 0.0
    %1530 = vmatpush1.msra.mxu0 0.0
    %1531 = vmatprep.subr.mxu0 0.0
    %1532 = vmatpush1.msra.mxu0 0.0
    %1533 = vmatprep.subr.mxu0 0.0
    %1534 = vmatpush1.msra.mxu0 0.0
    %1535 = vmatprep.subr.mxu0 0.0
    %1536 = vmatpush1.msra.mxu0 0.0
    %1537 = vmatprep.subr.mxu0 0.0
    %1538 = vmatpush1.msra.mxu0 0.0
    %1539 = vmatprep.subr.mxu0 0.0
    %1540 = vmatpush1.msra.mxu0 0.0
    %1541 = vmatprep.subr.mxu0 0.0
    %1542 = vmatpush1.msra.mxu0 0.0
    %1543 = vmatprep.subr.mxu0 0.0
    %1544 = vmatpush1.msra.mxu0 0.0
    %1545 = vmatprep.subr.mxu0 0.0
    %1546 = vmatpush1.msra.mxu0 0.0
    %1547 = vmatprep.mubr.f32.mxu0 0.0
    %1548 = vmatmul.mubr.f32.gmra.mrb[0].mxu0 %v1481
    %v1549 = vpop.f32.mrb[0].mxu0
    %v1550 = vadd.f32 0.0, %v1549
    %v1551 = vpop.f32.mrb[0].mxu0
    %1552 = vdwg.mxu0
    %1554 = vrot.lane.b32.xlu0 %v351, 96
    %v1555 = vpop.permute.xlu0 %1554
    %v1558 = vsel %vm759, %v1473, 0
    %1560 = vmatprep.subr.mxu0 0.0
    %1561 = vmatpush1.msra.mxu0 %v1555
    %1562 = vmatprep.subr.mxu0 0.0
    %1563 = vmatpush1.msra.mxu0 0.0
    %1564 = vmatprep.subr.mxu0 0.0
    %1565 = vmatpush1.msra.mxu0 0.0
    %1566 = vmatprep.subr.mxu0 0.0
    %1567 = vmatpush1.msra.mxu0 0.0
    %1568 = vmatprep.subr.mxu0 0.0
    %1569 = vmatpush1.msra.mxu0 0.0
    %1570 = vmatprep.subr.mxu0 0.0
    %1571 = vmatpush1.msra.mxu0 0.0
    %1572 = vmatprep.subr.mxu0 0.0
    %1573 = vmatpush1.msra.mxu0 0.0
    %1574 = vmatprep.subr.mxu0 0.0
    %1575 = vmatpush1.msra.mxu0 0.0
    %1576 = vmatprep.subr.mxu0 0.0
    %1577 = vmatpush1.msra.mxu0 0.0
    %1578 = vmatprep.subr.mxu0 0.0
    %1579 = vmatpush1.msra.mxu0 0.0
    %1580 = vmatprep.subr.mxu0 0.0
    %1581 = vmatpush1.msra.mxu0 0.0
    %1582 = vmatprep.subr.mxu0 0.0
    %1583 = vmatpush1.msra.mxu0 0.0
    %1584 = vmatprep.subr.mxu0 0.0
    %1585 = vmatpush1.msra.mxu0 0.0
    %1586 = vmatprep.subr.mxu0 0.0
    %1587 = vmatpush1.msra.mxu0 0.0
    %1588 = vmatprep.subr.mxu0 0.0
    %1589 = vmatpush1.msra.mxu0 0.0
    %1590 = vmatprep.subr.mxu0 0.0
    %1591 = vmatpush1.msra.mxu0 0.0
    %1592 = vmatprep.subr.mxu0 0.0
    %1593 = vmatpush1.msra.mxu0 0.0
    %1594 = vmatprep.subr.mxu0 0.0
    %1595 = vmatpush1.msra.mxu0 0.0
    %1596 = vmatprep.subr.mxu0 0.0
    %1597 = vmatpush1.msra.mxu0 0.0
    %1598 = vmatprep.subr.mxu0 0.0
    %1599 = vmatpush1.msra.mxu0 0.0
    %1600 = vmatprep.subr.mxu0 0.0
    %1601 = vmatpush1.msra.mxu0 0.0
    %1602 = vmatprep.subr.mxu0 0.0
    %1603 = vmatpush1.msra.mxu0 0.0
    %1604 = vmatprep.subr.mxu0 0.0
    %1605 = vmatpush1.msra.mxu0 0.0
    %1606 = vmatprep.subr.mxu0 0.0
    %1607 = vmatpush1.msra.mxu0 0.0
    %1608 = vmatprep.subr.mxu0 0.0
    %1609 = vmatpush1.msra.mxu0 0.0
    %1610 = vmatprep.subr.mxu0 0.0
    %1611 = vmatpush1.msra.mxu0 0.0
    %1612 = vmatprep.subr.mxu0 0.0
    %1613 = vmatpush1.msra.mxu0 0.0
    %1614 = vmatprep.subr.mxu0 0.0
    %1615 = vmatpush1.msra.mxu0 0.0
    %1616 = vmatprep.subr.mxu0 0.0
    %1617 = vmatpush1.msra.mxu0 0.0
    %1618 = vmatprep.subr.mxu0 0.0
    %1619 = vmatpush1.msra.mxu0 0.0
    %1620 = vmatprep.subr.mxu0 0.0
    %1621 = vmatpush1.msra.mxu0 0.0
    %1622 = vmatprep.subr.mxu0 0.0
    %1623 = vmatpush1.msra.mxu0 0.0
    %1624 = vmatprep.mubr.f32.mxu0 0.0
    %1625 = vmatmul.mubr.f32.gmra.mrb[0].mxu0 %v1558
    %v1626 = vpop.f32.mrb[0].mxu0
    %v1627 = vadd.f32 0.0, %v1626
    %v1628 = vpop.f32.mrb[0].mxu0
    %1629 = vdwg.mxu0
    %1631 = vrot.lane.b32.xlu0 %v357, 96
    %v1632 = vpop.permute.xlu0 %1631
    %v1635 = vsel %vm759, %v1474, 0
    %1637 = vmatprep.subr.mxu0 0.0
    %1638 = vmatpush1.msra.mxu0 %v1632
    %1639 = vmatprep.subr.mxu0 0.0
    %1640 = vmatpush1.msra.mxu0 0.0
    %1641 = vmatprep.subr.mxu0 0.0
    %1642 = vmatpush1.msra.mxu0 0.0
    %1643 = vmatprep.subr.mxu0 0.0
    %1644 = vmatpush1.msra.mxu0 0.0
    %1645 = vmatprep.subr.mxu0 0.0
    %1646 = vmatpush1.msra.mxu0 0.0
    %1647 = vmatprep.subr.mxu0 0.0
    %1648 = vmatpush1.msra.mxu0 0.0
    %1649 = vmatprep.subr.mxu0 0.0
    %1650 = vmatpush1.msra.mxu0 0.0
    %1651 = vmatprep.subr.mxu0 0.0
    %1652 = vmatpush1.msra.mxu0 0.0
    %1653 = vmatprep.subr.mxu0 0.0
    %1654 = vmatpush1.msra.mxu0 0.0
    %1655 = vmatprep.subr.mxu0 0.0
    %1656 = vmatpush1.msra.mxu0 0.0
    %1657 = vmatprep.subr.mxu0 0.0
    %1658 = vmatpush1.msra.mxu0 0.0
    %1659 = vmatprep.subr.mxu0 0.0
    %1660 = vmatpush1.msra.mxu0 0.0
    %1661 = vmatprep.subr.mxu0 0.0
    %1662 = vmatpush1.msra.mxu0 0.0
    %1663 = vmatprep.subr.mxu0 0.0
    %1664 = vmatpush1.msra.mxu0 0.0
    %1665 = vmatprep.subr.mxu0 0.0
    %1666 = vmatpush1.msra.mxu0 0.0
    %1667 = vmatprep.subr.mxu0 0.0
    %1668 = vmatpush1.msra.mxu0 0.0
    %1669 = vmatprep.subr.mxu0 0.0
    %1670 = vmatpush1.msra.mxu0 0.0
    %1671 = vmatprep.subr.mxu0 0.0
    %1672 = vmatpush1.msra.mxu0 0.0
    %1673 = vmatprep.subr.mxu0 0.0
    %1674 = vmatpush1.msra.mxu0 0.0
    %1675 = vmatprep.subr.mxu0 0.0
    %1676 = vmatpush1.msra.mxu0 0.0
    %1677 = vmatprep.subr.mxu0 0.0
    %1678 = vmatpush1.msra.mxu0 0.0
    %1679 = vmatprep.subr.mxu0 0.0
    %1680 = vmatpush1.msra.mxu0 0.0
    %1681 = vmatprep.subr.mxu0 0.0
    %1682 = vmatpush1.msra.mxu0 0.0
    %1683 = vmatprep.subr.mxu0 0.0
    %1684 = vmatpush1.msra.mxu0 0.0
    %1685 = vmatprep.subr.mxu0 0.0
    %1686 = vmatpush1.msra.mxu0 0.0
    %1687 = vmatprep.subr.mxu0 0.0
    %1688 = vmatpush1.msra.mxu0 0.0
    %1689 = vmatprep.subr.mxu0 0.0
    %1690 = vmatpush1.msra.mxu0 0.0
    %1691 = vmatprep.subr.mxu0 0.0
    %1692 = vmatpush1.msra.mxu0 0.0
    %1693 = vmatprep.subr.mxu0 0.0
    %1694 = vmatpush1.msra.mxu0 0.0
    %1695 = vmatprep.subr.mxu0 0.0
    %1696 = vmatpush1.msra.mxu0 0.0
    %1697 = vmatprep.subr.mxu0 0.0
    %1698 = vmatpush1.msra.mxu0 0.0
    %1699 = vmatprep.subr.mxu0 0.0
    %1700 = vmatpush1.msra.mxu0 0.0
    %1701 = vmatprep.mubr.f32.mxu0 0.0
    %1702 = vmatmul.mubr.f32.gmra.mrb[0].mxu0 %v1635
    %v1703 = vpop.f32.mrb[0].mxu0
    %v1704 = vadd.f32 0.0, %v1703
    %v1705 = vpop.f32.mrb[0].mxu0
    %1706 = vdwg.mxu0
    %1708 = vrot.lane.b32.xlu0 %v363, 96
    %v1709 = vpop.permute.xlu0 %1708
    %v1712 = vsel %vm759, %v1475, 0
    %1714 = vmatprep.subr.mxu0 0.0
    %1715 = vmatpush1.msra.mxu0 %v1709
    %1716 = vmatprep.subr.mxu0 0.0
    %1717 = vmatpush1.msra.mxu0 0.0
    %1718 = vmatprep.subr.mxu0 0.0
    %1719 = vmatpush1.msra.mxu0 0.0
    %1720 = vmatprep.subr.mxu0 0.0
    %1721 = vmatpush1.msra.mxu0 0.0
    %1722 = vmatprep.subr.mxu0 0.0
    %1723 = vmatpush1.msra.mxu0 0.0
    %1724 = vmatprep.subr.mxu0 0.0
    %1725 = vmatpush1.msra.mxu0 0.0
    %1726 = vmatprep.subr.mxu0 0.0
    %1727 = vmatpush1.msra.mxu0 0.0
    %1728 = vmatprep.subr.mxu0 0.0
    %1729 = vmatpush1.msra.mxu0 0.0
    %1730 = vmatprep.subr.mxu0 0.0
    %1731 = vmatpush1.msra.mxu0 0.0
    %1732 = vmatprep.subr.mxu0 0.0
    %1733 = vmatpush1.msra.mxu0 0.0
    %1734 = vmatprep.subr.mxu0 0.0
    %1735 = vmatpush1.msra.mxu0 0.0
    %1736 = vmatprep.subr.mxu0 0.0
    %1737 = vmatpush1.msra.mxu0 0.0
    %1738 = vmatprep.subr.mxu0 0.0
    %1739 = vmatpush1.msra.mxu0 0.0
    %1740 = vmatprep.subr.mxu0 0.0
    %1741 = vmatpush1.msra.mxu0 0.0
    %1742 = vmatprep.subr.mxu0 0.0
    %1743 = vmatpush1.msra.mxu0 0.0
    %1744 = vmatprep.subr.mxu0 0.0
    %1745 = vmatpush1.msra.mxu0 0.0
    %1746 = vmatprep.subr.mxu0 0.0
    %1747 = vmatpush1.msra.mxu0 0.0
    %1748 = vmatprep.subr.mxu0 0.0
    %1749 = vmatpush1.msra.mxu0 0.0
    %1750 = vmatprep.subr.mxu0 0.0
    %1751 = vmatpush1.msra.mxu0 0.0
    %1752 = vmatprep.subr.mxu0 0.0
    %1753 = vmatpush1.msra.mxu0 0.0
    %1754 = vmatprep.subr.mxu0 0.0
    %1755 = vmatpush1.msra.mxu0 0.0
    %1756 = vmatprep.subr.mxu0 0.0
    %1757 = vmatpush1.msra.mxu0 0.0
    %1758 = vmatprep.subr.mxu0 0.0
    %1759 = vmatpush1.msra.mxu0 0.0
    %1760 = vmatprep.subr.mxu0 0.0
    %1761 = vmatpush1.msra.mxu0 0.0
    %1762 = vmatprep.subr.mxu0 0.0
    %1763 = vmatpush1.msra.mxu0 0.0
    %1764 = vmatprep.subr.mxu0 0.0
    %1765 = vmatpush1.msra.mxu0 0.0
    %1766 = vmatprep.subr.mxu0 0.0
    %1767 = vmatpush1.msra.mxu0 0.0
    %1768 = vmatprep.subr.mxu0 0.0
    %1769 = vmatpush1.msra.mxu0 0.0
    %1770 = vmatprep.subr.mxu0 0.0
    %1771 = vmatpush1.msra.mxu0 0.0
    %1772 = vmatprep.subr.mxu0 0.0
    %1773 = vmatpush1.msra.mxu0 0.0
    %1774 = vmatprep.subr.mxu0 0.0
    %1775 = vmatpush1.msra.mxu0 0.0
    %1776 = vmatprep.subr.mxu0 0.0
    %1777 = vmatpush1.msra.mxu0 0.0
    %1778 = vmatprep.mubr.f32.mxu0 0.0
    %1779 = vmatmul.mubr.f32.gmra.mrb[0].mxu0 %v1712
    %v1780 = vpop.f32.mrb[0].mxu0
    %v1781 = vadd.f32 0.0, %v1780
    %v1782 = vpop.f32.mrb[0].mxu0
    %1783 = vdwg.mxu0
    %1784 = vrot.lane.b32.xlu0 %v224, 64
    %v1785 = vpop.permute.xlu0 %1784
    %1786 = vrot.lane.b32.xlu0 %v343, 64
    %v1787 = vpop.permute.xlu0 %1786
    %v1788 = vsel %vm454, %v1785, 0
    %v1790 = vsel %vm454, %v1787, 0
    %1792 = vmatprep.subr.mxu0 0.0
    %1793 = vmatpush1.xpose.msra.mxu0 %v1790
    %1794 = vmatprep.subr.mxu0 0.0
    %1795 = vmatpush1.xpose.msra.mxu0 0.0
    %1796 = vmatprep.subr.mxu0 0.0
    %1797 = vmatpush1.xpose.msra.mxu0 0.0
    %1798 = vmatprep.subr.mxu0 0.0
    %1799 = vmatpush1.xpose.msra.mxu0 0.0
    %1800 = vmatprep.subr.mxu0 0.0
    %1801 = vmatpush1.xpose.msra.mxu0 0.0
    %1802 = vmatprep.subr.mxu0 0.0
    %1803 = vmatpush1.xpose.msra.mxu0 0.0
    %1804 = vmatprep.subr.mxu0 0.0
    %1805 = vmatpush1.xpose.msra.mxu0 0.0
    %1806 = vmatprep.subr.mxu0 0.0
    %1807 = vmatpush1.xpose.msra.mxu0 0.0
    %1808 = vmatprep.subr.mxu0 0.0
    %1809 = vmatpush1.xpose.msra.mxu0 0.0
    %1810 = vmatprep.subr.mxu0 0.0
    %1811 = vmatpush1.xpose.msra.mxu0 0.0
    %1812 = vmatprep.subr.mxu0 0.0
    %1813 = vmatpush1.xpose.msra.mxu0 0.0
    %1814 = vmatprep.subr.mxu0 0.0
    %1815 = vmatpush1.xpose.msra.mxu0 0.0
    %1816 = vmatprep.subr.mxu0 0.0
    %1817 = vmatpush1.xpose.msra.mxu0 0.0
    %1818 = vmatprep.subr.mxu0 0.0
    %1819 = vmatpush1.xpose.msra.mxu0 0.0
    %1820 = vmatprep.subr.mxu0 0.0
    %1821 = vmatpush1.xpose.msra.mxu0 0.0
    %1822 = vmatprep.subr.mxu0 0.0
    %1823 = vmatpush1.xpose.msra.mxu0 0.0
    %1824 = vmatprep.subr.mxu0 0.0
    %1825 = vmatpush1.xpose.msra.mxu0 0.0
    %1826 = vmatprep.subr.mxu0 0.0
    %1827 = vmatpush1.xpose.msra.mxu0 0.0
    %1828 = vmatprep.subr.mxu0 0.0
    %1829 = vmatpush1.xpose.msra.mxu0 0.0
    %1830 = vmatprep.subr.mxu0 0.0
    %1831 = vmatpush1.xpose.msra.mxu0 0.0
    %1832 = vmatprep.subr.mxu0 0.0
    %1833 = vmatpush1.xpose.msra.mxu0 0.0
    %1834 = vmatprep.subr.mxu0 0.0
    %1835 = vmatpush1.xpose.msra.mxu0 0.0
    %1836 = vmatprep.subr.mxu0 0.0
    %1837 = vmatpush1.xpose.msra.mxu0 0.0
    %1838 = vmatprep.subr.mxu0 0.0
    %1839 = vmatpush1.xpose.msra.mxu0 0.0
    %1840 = vmatprep.subr.mxu0 0.0
    %1841 = vmatpush1.xpose.msra.mxu0 0.0
    %1842 = vmatprep.subr.mxu0 0.0
    %1843 = vmatpush1.xpose.msra.mxu0 0.0
    %1844 = vmatprep.subr.mxu0 0.0
    %1845 = vmatpush1.xpose.msra.mxu0 0.0
    %1846 = vmatprep.subr.mxu0 0.0
    %1847 = vmatpush1.xpose.msra.mxu0 0.0
    %1848 = vmatprep.subr.mxu0 0.0
    %1849 = vmatpush1.xpose.msra.mxu0 0.0
    %1850 = vmatprep.subr.mxu0 0.0
    %1851 = vmatpush1.xpose.msra.mxu0 0.0
    %1852 = vmatprep.subr.mxu0 0.0
    %1853 = vmatpush1.xpose.msra.mxu0 0.0
    %1854 = vmatprep.subr.mxu0 0.0
    %1855 = vmatpush1.xpose.msra.mxu0 0.0
    %1856 = vmatprep.mubr.f32.mxu0 0.0
    %1857 = vmatmul.mubr.f32.gmra.mrb[0].mxu0 %v1788
    %v1858 = vpop.f32.mrb[0].mxu0
    %v1859 = vadd.f32 0.0, %v1858
    %v1860 = vpop.f32.mrb[0].mxu0
    %1861 = vdwg.mxu0
    %1862 = vrot.lane.b32.xlu0 %v225, 64
    %v1863 = vpop.permute.xlu0 %1862
    %1864 = vrot.lane.b32.xlu0 %v349, 64
    %v1865 = vpop.permute.xlu0 %1864
    %v1866 = vsel %vm454, %v1863, 0
    %v1868 = vsel %vm454, %v1865, 0
    %1870 = vmatprep.subr.mxu0 0.0
    %1871 = vmatpush1.xpose.msra.mxu0 %v1868
    %1872 = vmatprep.subr.mxu0 0.0
    %1873 = vmatpush1.xpose.msra.mxu0 0.0
    %1874 = vmatprep.subr.mxu0 0.0
    %1875 = vmatpush1.xpose.msra.mxu0 0.0
    %1876 = vmatprep.subr.mxu0 0.0
    %1877 = vmatpush1.xpose.msra.mxu0 0.0
    %1878 = vmatprep.subr.mxu0 0.0
    %1879 = vmatpush1.xpose.msra.mxu0 0.0
    %1880 = vmatprep.subr.mxu0 0.0
    %1881 = vmatpush1.xpose.msra.mxu0 0.0
    %1882 = vmatprep.subr.mxu0 0.0
    %1883 = vmatpush1.xpose.msra.mxu0 0.0
    %1884 = vmatprep.subr.mxu0 0.0
    %1885 = vmatpush1.xpose.msra.mxu0 0.0
    %1886 = vmatprep.subr.mxu0 0.0
    %1887 = vmatpush1.xpose.msra.mxu0 0.0
    %1888 = vmatprep.subr.mxu0 0.0
    %1889 = vmatpush1.xpose.msra.mxu0 0.0
    %1890 = vmatprep.subr.mxu0 0.0
    %1891 = vmatpush1.xpose.msra.mxu0 0.0
    %1892 = vmatprep.subr.mxu0 0.0
    %1893 = vmatpush1.xpose.msra.mxu0 0.0
    %1894 = vmatprep.subr.mxu0 0.0
    %1895 = vmatpush1.xpose.msra.mxu0 0.0
    %1896 = vmatprep.subr.mxu0 0.0
    %1897 = vmatpush1.xpose.msra.mxu0 0.0
    %1898 = vmatprep.subr.mxu0 0.0
    %1899 = vmatpush1.xpose.msra.mxu0 0.0
    %1900 = vmatprep.subr.mxu0 0.0
    %1901 = vmatpush1.xpose.msra.mxu0 0.0
    %1902 = vmatprep.subr.mxu0 0.0
    %1903 = vmatpush1.xpose.msra.mxu0 0.0
    %1904 = vmatprep.subr.mxu0 0.0
    %1905 = vmatpush1.xpose.msra.mxu0 0.0
    %1906 = vmatprep.subr.mxu0 0.0
    %1907 = vmatpush1.xpose.msra.mxu0 0.0
    %1908 = vmatprep.subr.mxu0 0.0
    %1909 = vmatpush1.xpose.msra.mxu0 0.0
    %1910 = vmatprep.subr.mxu0 0.0
    %1911 = vmatpush1.xpose.msra.mxu0 0.0
    %1912 = vmatprep.subr.mxu0 0.0
    %1913 = vmatpush1.xpose.msra.mxu0 0.0
    %1914 = vmatprep.subr.mxu0 0.0
    %1915 = vmatpush1.xpose.msra.mxu0 0.0
    %1916 = vmatprep.subr.mxu0 0.0
    %1917 = vmatpush1.xpose.msra.mxu0 0.0
    %1918 = vmatprep.subr.mxu0 0.0
    %1919 = vmatpush1.xpose.msra.mxu0 0.0
    %1920 = vmatprep.subr.mxu0 0.0
    %1921 = vmatpush1.xpose.msra.mxu0 0.0
    %1922 = vmatprep.subr.mxu0 0.0
    %1923 = vmatpush1.xpose.msra.mxu0 0.0
    %1924 = vmatprep.subr.mxu0 0.0
    %1925 = vmatpush1.xpose.msra.mxu0 0.0
    %1926 = vmatprep.subr.mxu0 0.0
    %1927 = vmatpush1.xpose.msra.mxu0 0.0
    %1928 = vmatprep.subr.mxu0 0.0
    %1929 = vmatpush1.xpose.msra.mxu0 0.0
    %1930 = vmatprep.subr.mxu0 0.0
    %1931 = vmatpush1.xpose.msra.mxu0 0.0
    %1932 = vmatprep.subr.mxu0 0.0
    %1933 = vmatpush1.xpose.msra.mxu0 0.0
    %1934 = vmatprep.mubr.f32.mxu0 0.0
    %1935 = vmatmul.mubr.f32.gmra.mrb[0].mxu0 %v1866
    %v1936 = vpop.f32.mrb[0].mxu0
    %v1937 = vadd.f32 0.0, %v1936
    %v1938 = vpop.f32.mrb[0].mxu0
    %1939 = vdwg.mxu0
    %1940 = vrot.lane.b32.xlu0 %v226, 64
    %v1941 = vpop.permute.xlu0 %1940
    %1942 = vrot.lane.b32.xlu0 %v355, 64
    %v1943 = vpop.permute.xlu0 %1942
    %v1944 = vsel %vm454, %v1941, 0
    %v1946 = vsel %vm454, %v1943, 0
    %1948 = vmatprep.subr.mxu0 0.0
    %1949 = vmatpush1.xpose.msra.mxu0 %v1946
    %1950 = vmatprep.subr.mxu0 0.0
    %1951 = vmatpush1.xpose.msra.mxu0 0.0
    %1952 = vmatprep.subr.mxu0 0.0
    %1953 = vmatpush1.xpose.msra.mxu0 0.0
    %1954 = vmatprep.subr.mxu0 0.0
    %1955 = vmatpush1.xpose.msra.mxu0 0.0
    %1956 = vmatprep.subr.mxu0 0.0
    %1957 = vmatpush1.xpose.msra.mxu0 0.0
    %1958 = vmatprep.subr.mxu0 0.0
    %1959 = vmatpush1.xpose.msra.mxu0 0.0
    %1960 = vmatprep.subr.mxu0 0.0
    %1961 = vmatpush1.xpose.msra.mxu0 0.0
    %1962 = vmatprep.subr.mxu0 0.0
    %1963 = vmatpush1.xpose.msra.mxu0 0.0
    %1964 = vmatprep.subr.mxu0 0.0
    %1965 = vmatpush1.xpose.msra.mxu0 0.0
    %1966 = vmatprep.subr.mxu0 0.0
    %1967 = vmatpush1.xpose.msra.mxu0 0.0
    %1968 = vmatprep.subr.mxu0 0.0
    %1969 = vmatpush1.xpose.msra.mxu0 0.0
    %1970 = vmatprep.subr.mxu0 0.0
    %1971 = vmatpush1.xpose.msra.mxu0 0.0
    %1972 = vmatprep.subr.mxu0 0.0
    %1973 = vmatpush1.xpose.msra.mxu0 0.0
    %1974 = vmatprep.subr.mxu0 0.0
    %1975 = vmatpush1.xpose.msra.mxu0 0.0
    %1976 = vmatprep.subr.mxu0 0.0
    %1977 = vmatpush1.xpose.msra.mxu0 0.0
    %1978 = vmatprep.subr.mxu0 0.0
    %1979 = vmatpush1.xpose.msra.mxu0 0.0
    %1980 = vmatprep.subr.mxu0 0.0
    %1981 = vmatpush1.xpose.msra.mxu0 0.0
    %1982 = vmatprep.subr.mxu0 0.0
    %1983 = vmatpush1.xpose.msra.mxu0 0.0
    %1984 = vmatprep.subr.mxu0 0.0
    %1985 = vmatpush1.xpose.msra.mxu0 0.0
    %1986 = vmatprep.subr.mxu0 0.0
    %1987 = vmatpush1.xpose.msra.mxu0 0.0
    %1988 = vmatprep.subr.mxu0 0.0
    %1989 = vmatpush1.xpose.msra.mxu0 0.0
    %1990 = vmatprep.subr.mxu0 0.0
    %1991 = vmatpush1.xpose.msra.mxu0 0.0
    %1992 = vmatprep.subr.mxu0 0.0
    %1993 = vmatpush1.xpose.msra.mxu0 0.0
    %1994 = vmatprep.subr.mxu0 0.0
    %1995 = vmatpush1.xpose.msra.mxu0 0.0
    %1996 = vmatprep.subr.mxu0 0.0
    %1997 = vmatpush1.xpose.msra.mxu0 0.0
    %1998 = vmatprep.subr.mxu0 0.0
    %1999 = vmatpush1.xpose.msra.mxu0 0.0
    %2000 = vmatprep.subr.mxu0 0.0
    %2001 = vmatpush1.xpose.msra.mxu0 0.0
    %2002 = vmatprep.subr.mxu0 0.0
    %2003 = vmatpush1.xpose.msra.mxu0 0.0
    %2004 = vmatprep.subr.mxu0 0.0
    %2005 = vmatpush1.xpose.msra.mxu0 0.0
    %2006 = vmatprep.subr.mxu0 0.0
    %2007 = vmatpush1.xpose.msra.mxu0 0.0
    %2008 = vmatprep.subr.mxu0 0.0
    %2009 = vmatpush1.xpose.msra.mxu0 0.0
    %2010 = vmatprep.subr.mxu0 0.0
    %2011 = vmatpush1.xpose.msra.mxu0 0.0
    %2012 = vmatprep.mubr.f32.mxu0 0.0
    %2013 = vmatmul.mubr.f32.gmra.mrb[0].mxu0 %v1944
    %v2014 = vpop.f32.mrb[0].mxu0
    %v2015 = vadd.f32 0.0, %v2014
    %v2016 = vpop.f32.mrb[0].mxu0
    %2017 = vdwg.mxu0
    %2018 = vrot.lane.b32.xlu0 %v227, 64
    %v2019 = vpop.permute.xlu0 %2018
    %2020 = vrot.lane.b32.xlu0 %v361, 64
    %v2021 = vpop.permute.xlu0 %2020
    %v2022 = vsel %vm454, %v2019, 0
    %v2024 = vsel %vm454, %v2021, 0
    %2026 = vmatprep.subr.mxu0 0.0
    %2027 = vmatpush1.xpose.msra.mxu0 %v2024
    %2028 = vmatprep.subr.mxu0 0.0
    %2029 = vmatpush1.xpose.msra.mxu0 0.0
    %2030 = vmatprep.subr.mxu0 0.0
    %2031 = vmatpush1.xpose.msra.mxu0 0.0
    %2032 = vmatprep.subr.mxu0 0.0
    %2033 = vmatpush1.xpose.msra.mxu0 0.0
    %2034 = vmatprep.subr.mxu0 0.0
    %2035 = vmatpush1.xpose.msra.mxu0 0.0
    %2036 = vmatprep.subr.mxu0 0.0
    %2037 = vmatpush1.xpose.msra.mxu0 0.0
    %2038 = vmatprep.subr.mxu0 0.0
    %2039 = vmatpush1.xpose.msra.mxu0 0.0
    %2040 = vmatprep.subr.mxu0 0.0
    %2041 = vmatpush1.xpose.msra.mxu0 0.0
    %2042 = vmatprep.subr.mxu0 0.0
    %2043 = vmatpush1.xpose.msra.mxu0 0.0
    %2044 = vmatprep.subr.mxu0 0.0
    %2045 = vmatpush1.xpose.msra.mxu0 0.0
    %2046 = vmatprep.subr.mxu0 0.0
    %2047 = vmatpush1.xpose.msra.mxu0 0.0
    %2048 = vmatprep.subr.mxu0 0.0
    %2049 = vmatpush1.xpose.msra.mxu0 0.0
    %2050 = vmatprep.subr.mxu0 0.0
    %2051 = vmatpush1.xpose.msra.mxu0 0.0
    %2052 = vmatprep.subr.mxu0 0.0
    %2053 = vmatpush1.xpose.msra.mxu0 0.0
    %2054 = vmatprep.subr.mxu0 0.0
    %2055 = vmatpush1.xpose.msra.mxu0 0.0
    %2056 = vmatprep.subr.mxu0 0.0
    %2057 = vmatpush1.xpose.msra.mxu0 0.0
    %2058 = vmatprep.subr.mxu0 0.0
    %2059 = vmatpush1.xpose.msra.mxu0 0.0
    %2060 = vmatprep.subr.mxu0 0.0
    %2061 = vmatpush1.xpose.msra.mxu0 0.0
    %2062 = vmatprep.subr.mxu0 0.0
    %2063 = vmatpush1.xpose.msra.mxu0 0.0
    %2064 = vmatprep.subr.mxu0 0.0
    %2065 = vmatpush1.xpose.msra.mxu0 0.0
    %2066 = vmatprep.subr.mxu0 0.0
    %2067 = vmatpush1.xpose.msra.mxu0 0.0
    %2068 = vmatprep.subr.mxu0 0.0
    %2069 = vmatpush1.xpose.msra.mxu0 0.0
    %2070 = vmatprep.subr.mxu0 0.0
    %2071 = vmatpush1.xpose.msra.mxu0 0.0
    %2072 = vmatprep.subr.mxu0 0.0
    %2073 = vmatpush1.xpose.msra.mxu0 0.0
    %2074 = vmatprep.subr.mxu0 0.0
    %2075 = vmatpush1.xpose.msra.mxu0 0.0
    %2076 = vmatprep.subr.mxu0 0.0
    %2077 = vmatpush1.xpose.msra.mxu0 0.0
    %2078 = vmatprep.subr.mxu0 0.0
    %2079 = vmatpush1.xpose.msra.mxu0 0.0
    %2080 = vmatprep.subr.mxu0 0.0
    %2081 = vmatpush1.xpose.msra.mxu0 0.0
    %2082 = vmatprep.subr.mxu0 0.0
    %2083 = vmatpush1.xpose.msra.mxu0 0.0
    %2084 = vmatprep.subr.mxu0 0.0
    %2085 = vmatpush1.xpose.msra.mxu0 0.0
    %2086 = vmatprep.subr.mxu0 0.0
    %2087 = vmatpush1.xpose.msra.mxu0 0.0
    %2088 = vmatprep.subr.mxu0 0.0
    %2089 = vmatpush1.xpose.msra.mxu0 0.0
    %2090 = vmatprep.mubr.f32.mxu0 0.0
    %2091 = vmatmul.mubr.f32.gmra.mrb[0].mxu0 %v2022
    %v2092 = vpop.f32.mrb[0].mxu0
    %v2093 = vadd.f32 0.0, %v2092
    %v2094 = vpop.f32.mrb[0].mxu0
    %2095 = vdwg.mxu0
    %v2096 = vsel %vm759, %v1859, -inf
    %2097 = vmax.xlane.f32.xlu0 %v2096
    %v2098 = vpop.xlane.xlu0 %2097
    %v2099 = vsel %vm759, %v1937, -inf
    %2100 = vmax.xlane.f32.xlu0 %v2099
    %v2101 = vpop.xlane.xlu0 %2100
    %v2102 = vsel %vm759, %v2015, -inf
    %2103 = vmax.xlane.f32.xlu0 %v2102
    %v2104 = vpop.xlane.xlu0 %2103
    %v2105 = vsel %vm759, %v2093, -inf
    %2106 = vmax.xlane.f32.xlu0 %v2105
    %v2107 = vpop.xlane.xlu0 %2106
    %v2108 = vsub.f32 %v1859, %v2098
    %v2109 = vsub.f32 %v1937, %v2101
    %v2110 = vsub.f32 %v2015, %v2104
    %v2111 = vsub.f32 %v2093, %v2107
    %v2112 = vmul.f32 %v2108, 1.442695
    %v2113 = vpow.pop %v2112
    %v2114 = vmul.f32 %v2109, 1.442695
    %v2115 = vpow.pop %v2114
    %v2116 = vmul.f32 %v2110, 1.442695
    %v2117 = vpow.pop %v2116
    %v2118 = vmul.f32 %v2111, 1.442695
    %v2119 = vpow.pop %v2118
    %v2120 = vsel %vm759, %v2113, 0.0
    %2121 = vadd.xlane.f32.xlu0 %v2120
    %v2122 = vpop.xlane.xlu0 %2121
    %v2123 = vsel %vm759, %v2115, 0.0
    %2124 = vadd.xlane.f32.xlu0 %v2123
    %v2125 = vpop.xlane.xlu0 %2124
    %v2126 = vsel %vm759, %v2117, 0.0
    %2127 = vadd.xlane.f32.xlu0 %v2126
    %v2128 = vpop.xlane.xlu0 %2127
    %v2129 = vsel %vm759, %v2119, 0.0
    %2130 = vadd.xlane.f32.xlu0 %v2129
    %v2131 = vpop.xlane.xlu0 %2130
    %v2132 = vrcp.pop %v2122
    %v2133 = vrcp.pop %v2125
    %v2134 = vrcp.pop %v2128
    %v2135 = vrcp.pop %v2131
    %v2136 = vmul.f32 %v2122, %v2132
    %v2137 = vmul.f32 %v2125, %v2133
    %v2138 = vmul.f32 %v2128, %v2134
    %v2139 = vmul.f32 %v2131, %v2135
    %v2140 = vsub.f32 2.0, %v2136
    %v2141 = vsub.f32 2.0, %v2137
    %v2142 = vsub.f32 2.0, %v2138
    %v2143 = vsub.f32 2.0, %v2139
    %v2144 = vmul.f32 %v2132, %v2140
    %v2145 = vmul.f32 %v2133, %v2141
    %v2146 = vmul.f32 %v2134, %v2142
    %v2147 = vmul.f32 %v2135, %v2143
    %v2148 = vmul.f32 %v2113, %v2144
    %v2149 = vmul.f32 %v2115, %v2145
    %v2150 = vmul.f32 %v2117, %v2146
    %v2151 = vmul.f32 %v2119, %v2147
    %2152 = vrot.lane.b32.xlu0 %v345, 64
    %v2153 = vpop.permute.xlu0 %2152
    %v2156 = vsel %vm759, %v2148, 0
    %2158 = vmatprep.subr.mxu0 0.0
    %2159 = vmatpush1.msra.mxu0 %v2153
    %2160 = vmatprep.subr.mxu0 0.0
    %2161 = vmatpush1.msra.mxu0 0.0
    %2162 = vmatprep.subr.mxu0 0.0
    %2163 = vmatpush1.msra.mxu0 0.0
    %2164 = vmatprep.subr.mxu0 0.0
    %2165 = vmatpush1.msra.mxu0 0.0
    %2166 = vmatprep.subr.mxu0 0.0
    %2167 = vmatpush1.msra.mxu0 0.0
    %2168 = vmatprep.subr.mxu0 0.0
    %2169 = vmatpush1.msra.mxu0 0.0
    %2170 = vmatprep.subr.mxu0 0.0
    %2171 = vmatpush1.msra.mxu0 0.0
    %2172 = vmatprep.subr.mxu0 0.0
    %2173 = vmatpush1.msra.mxu0 0.0
    %2174 = vmatprep.subr.mxu0 0.0
    %2175 = vmatpush1.msra.mxu0 0.0
    %2176 = vmatprep.subr.mxu0 0.0
    %2177 = vmatpush1.msra.mxu0 0.0
    %2178 = vmatprep.subr.mxu0 0.0
    %2179 = vmatpush1.msra.mxu0 0.0
    %2180 = vmatprep.subr.mxu0 0.0
    %2181 = vmatpush1.msra.mxu0 0.0
    %2182 = vmatprep.subr.mxu0 0.0
    %2183 = vmatpush1.msra.mxu0 0.0
    %2184 = vmatprep.subr.mxu0 0.0
    %2185 = vmatpush1.msra.mxu0 0.0
    %2186 = vmatprep.subr.mxu0 0.0
    %2187 = vmatpush1.msra.mxu0 0.0
    %2188 = vmatprep.subr.mxu0 0.0
    %2189 = vmatpush1.msra.mxu0 0.0
    %2190 = vmatprep.subr.mxu0 0.0
    %2191 = vmatpush1.msra.mxu0 0.0
    %2192 = vmatprep.subr.mxu0 0.0
    %2193 = vmatpush1.msra.mxu0 0.0
    %2194 = vmatprep.subr.mxu0 0.0
    %2195 = vmatpush1.msra.mxu0 0.0
    %2196 = vmatprep.subr.mxu0 0.0
    %2197 = vmatpush1.msra.mxu0 0.0
    %2198 = vmatprep.subr.mxu0 0.0
    %2199 = vmatpush1.msra.mxu0 0.0
    %2200 = vmatprep.subr.mxu0 0.0
    %2201 = vmatpush1.msra.mxu0 0.0
    %2202 = vmatprep.subr.mxu0 0.0
    %2203 = vmatpush1.msra.mxu0 0.0
    %2204 = vmatprep.subr.mxu0 0.0
    %2205 = vmatpush1.msra.mxu0 0.0
    %2206 = vmatprep.subr.mxu0 0.0
    %2207 = vmatpush1.msra.mxu0 0.0
    %2208 = vmatprep.subr.mxu0 0.0
    %2209 = vmatpush1.msra.mxu0 0.0
    %2210 = vmatprep.subr.mxu0 0.0
    %2211 = vmatpush1.msra.mxu0 0.0
    %2212 = vmatprep.subr.mxu0 0.0
    %2213 = vmatpush1.msra.mxu0 0.0
    %2214 = vmatprep.subr.mxu0 0.0
    %2215 = vmatpush1.msra.mxu0 0.0
    %2216 = vmatprep.subr.mxu0 0.0
    %2217 = vmatpush1.msra.mxu0 0.0
    %2218 = vmatprep.subr.mxu0 0.0
    %2219 = vmatpush1.msra.mxu0 0.0
    %2220 = vmatprep.subr.mxu0 0.0
    %2221 = vmatpush1.msra.mxu0 0.0
    %2222 = vmatprep.mubr.f32.mxu0 0.0
    %2223 = vmatmul.mubr.f32.gmra.mrb[0].mxu0 %v2156
    %v2224 = vpop.f32.mrb[0].mxu0
    %v2225 = vadd.f32 0.0, %v2224
    %v2226 = vpop.f32.mrb[0].mxu0
    %2227 = vdwg.mxu0
    %2228 = vrot.lane.b32.xlu0 %v351, 64
    %v2229 = vpop.permute.xlu0 %2228
    %v2232 = vsel %vm759, %v2149, 0
    %2234 = vmatprep.subr.mxu0 0.0
    %2235 = vmatpush1.msra.mxu0 %v2229
    %2236 = vmatprep.subr.mxu0 0.0
    %2237 = vmatpush1.msra.mxu0 0.0
    %2238 = vmatprep.subr.mxu0 0.0
    %2239 = vmatpush1.msra.mxu0 0.0
    %2240 = vmatprep.subr.mxu0 0.0
    %2241 = vmatpush1.msra.mxu0 0.0
    %2242 = vmatprep.subr.mxu0 0.0
    %2243 = vmatpush1.msra.mxu0 0.0
    %2244 = vmatprep.subr.mxu0 0.0
    %2245 = vmatpush1.msra.mxu0 0.0
    %2246 = vmatprep.subr.mxu0 0.0
    %2247 = vmatpush1.msra.mxu0 0.0
    %2248 = vmatprep.subr.mxu0 0.0
    %2249 = vmatpush1.msra.mxu0 0.0
    %2250 = vmatprep.subr.mxu0 0.0
    %2251 = vmatpush1.msra.mxu0 0.0
    %2252 = vmatprep.subr.mxu0 0.0
    %2253 = vmatpush1.msra.mxu0 0.0
    %2254 = vmatprep.subr.mxu0 0.0
    %2255 = vmatpush1.msra.mxu0 0.0
    %2256 = vmatprep.subr.mxu0 0.0
    %2257 = vmatpush1.msra.mxu0 0.0
    %2258 = vmatprep.subr.mxu0 0.0
    %2259 = vmatpush1.msra.mxu0 0.0
    %2260 = vmatprep.subr.mxu0 0.0
    %2261 = vmatpush1.msra.mxu0 0.0
    %2262 = vmatprep.subr.mxu0 0.0
    %2263 = vmatpush1.msra.mxu0 0.0
    %2264 = vmatprep.subr.mxu0 0.0
    %2265 = vmatpush1.msra.mxu0 0.0
    %2266 = vmatprep.subr.mxu0 0.0
    %2267 = vmatpush1.msra.mxu0 0.0
    %2268 = vmatprep.subr.mxu0 0.0
    %2269 = vmatpush1.msra.mxu0 0.0
    %2270 = vmatprep.subr.mxu0 0.0
    %2271 = vmatpush1.msra.mxu0 0.0
    %2272 = vmatprep.subr.mxu0 0.0
    %2273 = vmatpush1.msra.mxu0 0.0
    %2274 = vmatprep.subr.mxu0 0.0
    %2275 = vmatpush1.msra.mxu0 0.0
    %2276 = vmatprep.subr.mxu0 0.0
    %2277 = vmatpush1.msra.mxu0 0.0
    %2278 = vmatprep.subr.mxu0 0.0
    %2279 = vmatpush1.msra.mxu0 0.0
    %2280 = vmatprep.subr.mxu0 0.0
    %2281 = vmatpush1.msra.mxu0 0.0
    %2282 = vmatprep.subr.mxu0 0.0
    %2283 = vmatpush1.msra.mxu0 0.0
    %2284 = vmatprep.subr.mxu0 0.0
    %2285 = vmatpush1.msra.mxu0 0.0
    %2286 = vmatprep.subr.mxu0 0.0
    %2287 = vmatpush1.msra.mxu0 0.0
    %2288 = vmatprep.subr.mxu0 0.0
    %2289 = vmatpush1.msra.mxu0 0.0
    %2290 = vmatprep.subr.mxu0 0.0
    %2291 = vmatpush1.msra.mxu0 0.0
    %2292 = vmatprep.subr.mxu0 0.0
    %2293 = vmatpush1.msra.mxu0 0.0
    %2294 = vmatprep.subr.mxu0 0.0
    %2295 = vmatpush1.msra.mxu0 0.0
    %2296 = vmatprep.subr.mxu0 0.0
    %2297 = vmatpush1.msra.mxu0 0.0
    %2298 = vmatprep.mubr.f32.mxu0 0.0
    %2299 = vmatmul.mubr.f32.gmra.mrb[0].mxu0 %v2232
    %v2300 = vpop.f32.mrb[0].mxu0
    %v2301 = vadd.f32 0.0, %v2300
    %v2302 = vpop.f32.mrb[0].mxu0
    %2303 = vdwg.mxu0
    %2304 = vrot.lane.b32.xlu0 %v357, 64
    %v2305 = vpop.permute.xlu0 %2304
    %v2308 = vsel %vm759, %v2150, 0
    %2310 = vmatprep.subr.mxu0 0.0
    %2311 = vmatpush1.msra.mxu0 %v2305
    %2312 = vmatprep.subr.mxu0 0.0
    %2313 = vmatpush1.msra.mxu0 0.0
    %2314 = vmatprep.subr.mxu0 0.0
    %2315 = vmatpush1.msra.mxu0 0.0
    %2316 = vmatprep.subr.mxu0 0.0
    %2317 = vmatpush1.msra.mxu0 0.0
    %2318 = vmatprep.subr.mxu0 0.0
    %2319 = vmatpush1.msra.mxu0 0.0
    %2320 = vmatprep.subr.mxu0 0.0
    %2321 = vmatpush1.msra.mxu0 0.0
    %2322 = vmatprep.subr.mxu0 0.0
    %2323 = vmatpush1.msra.mxu0 0.0
    %2324 = vmatprep.subr.mxu0 0.0
    %2325 = vmatpush1.msra.mxu0 0.0
    %2326 = vmatprep.subr.mxu0 0.0
    %2327 = vmatpush1.msra.mxu0 0.0
    %2328 = vmatprep.subr.mxu0 0.0
    %2329 = vmatpush1.msra.mxu0 0.0
    %2330 = vmatprep.subr.mxu0 0.0
    %2331 = vmatpush1.msra.mxu0 0.0
    %2332 = vmatprep.subr.mxu0 0.0
    %2333 = vmatpush1.msra.mxu0 0.0
    %2334 = vmatprep.subr.mxu0 0.0
    %2335 = vmatpush1.msra.mxu0 0.0
    %2336 = vmatprep.subr.mxu0 0.0
    %2337 = vmatpush1.msra.mxu0 0.0
    %2338 = vmatprep.subr.mxu0 0.0
    %2339 = vmatpush1.msra.mxu0 0.0
    %2340 = vmatprep.subr.mxu0 0.0
    %2341 = vmatpush1.msra.mxu0 0.0
    %2342 = vmatprep.subr.mxu0 0.0
    %2343 = vmatpush1.msra.mxu0 0.0
    %2344 = vmatprep.subr.mxu0 0.0
    %2345 = vmatpush1.msra.mxu0 0.0
    %2346 = vmatprep.subr.mxu0 0.0
    %2347 = vmatpush1.msra.mxu0 0.0
    %2348 = vmatprep.subr.mxu0 0.0
    %2349 = vmatpush1.msra.mxu0 0.0
    %2350 = vmatprep.subr.mxu0 0.0
    %2351 = vmatpush1.msra.mxu0 0.0
    %2352 = vmatprep.subr.mxu0 0.0
    %2353 = vmatpush1.msra.mxu0 0.0
    %2354 = vmatprep.subr.mxu0 0.0
    %2355 = vmatpush1.msra.mxu0 0.0
    %2356 = vmatprep.subr.mxu0 0.0
    %2357 = vmatpush1.msra.mxu0 0.0
    %2358 = vmatprep.subr.mxu0 0.0
    %2359 = vmatpush1.msra.mxu0 0.0
    %2360 = vmatprep.subr.mxu0 0.0
    %2361 = vmatpush1.msra.mxu0 0.0
    %2362 = vmatprep.subr.mxu0 0.0
    %2363 = vmatpush1.msra.mxu0 0.0
    %2364 = vmatprep.subr.mxu0 0.0
    %2365 = vmatpush1.msra.mxu0 0.0
    %2366 = vmatprep.subr.mxu0 0.0
    %2367 = vmatpush1.msra.mxu0 0.0
    %2368 = vmatprep.subr.mxu0 0.0
    %2369 = vmatpush1.msra.mxu0 0.0
    %2370 = vmatprep.subr.mxu0 0.0
    %2371 = vmatpush1.msra.mxu0 0.0
    %2372 = vmatprep.subr.mxu0 0.0
    %2373 = vmatpush1.msra.mxu0 0.0
    %2374 = vmatprep.mubr.f32.mxu0 0.0
    %2375 = vmatmul.mubr.f32.gmra.mrb[0].mxu0 %v2308
    %v2376 = vpop.f32.mrb[0].mxu0
    %v2377 = vadd.f32 0.0, %v2376
    %v2378 = vpop.f32.mrb[0].mxu0
    %2379 = vdwg.mxu0
    %2380 = vrot.lane.b32.xlu0 %v363, 64
    %v2381 = vpop.permute.xlu0 %2380
    %v2384 = vsel %vm759, %v2151, 0
    %2386 = vmatprep.subr.mxu0 0.0
    %2387 = vmatpush1.msra.mxu0 %v2381
    %2388 = vmatprep.subr.mxu0 0.0
    %2389 = vmatpush1.msra.mxu0 0.0
    %2390 = vmatprep.subr.mxu0 0.0
    %2391 = vmatpush1.msra.mxu0 0.0
    %2392 = vmatprep.subr.mxu0 0.0
    %2393 = vmatpush1.msra.mxu0 0.0
    %2394 = vmatprep.subr.mxu0 0.0
    %2395 = vmatpush1.msra.mxu0 0.0
    %2396 = vmatprep.subr.mxu0 0.0
    %2397 = vmatpush1.msra.mxu0 0.0
    %2398 = vmatprep.subr.mxu0 0.0
    %2399 = vmatpush1.msra.mxu0 0.0
    %2400 = vmatprep.subr.mxu0 0.0
    %2401 = vmatpush1.msra.mxu0 0.0
    %2402 = vmatprep.subr.mxu0 0.0
    %2403 = vmatpush1.msra.mxu0 0.0
    %2404 = vmatprep.subr.mxu0 0.0
    %2405 = vmatpush1.msra.mxu0 0.0
    %2406 = vmatprep.subr.mxu0 0.0
    %2407 = vmatpush1.msra.mxu0 0.0
    %2408 = vmatprep.subr.mxu0 0.0
    %2409 = vmatpush1.msra.mxu0 0.0
    %2410 = vmatprep.subr.mxu0 0.0
    %2411 = vmatpush1.msra.mxu0 0.0
    %2412 = vmatprep.subr.mxu0 0.0
    %2413 = vmatpush1.msra.mxu0 0.0
    %2414 = vmatprep.subr.mxu0 0.0
    %2415 = vmatpush1.msra.mxu0 0.0
    %2416 = vmatprep.subr.mxu0 0.0
    %2417 = vmatpush1.msra.mxu0 0.0
    %2418 = vmatprep.subr.mxu0 0.0
    %2419 = vmatpush1.msra.mxu0 0.0
    %2420 = vmatprep.subr.mxu0 0.0
    %2421 = vmatpush1.msra.mxu0 0.0
    %2422 = vmatprep.subr.mxu0 0.0
    %2423 = vmatpush1.msra.mxu0 0.0
    %2424 = vmatprep.subr.mxu0 0.0
    %2425 = vmatpush1.msra.mxu0 0.0
    %2426 = vmatprep.subr.mxu0 0.0
    %2427 = vmatpush1.msra.mxu0 0.0
    %2428 = vmatprep.subr.mxu0 0.0
    %2429 = vmatpush1.msra.mxu0 0.0
    %2430 = vmatprep.subr.mxu0 0.0
    %2431 = vmatpush1.msra.mxu0 0.0
    %2432 = vmatprep.subr.mxu0 0.0
    %2433 = vmatpush1.msra.mxu0 0.0
    %2434 = vmatprep.subr.mxu0 0.0
    %2435 = vmatpush1.msra.mxu0 0.0
    %2436 = vmatprep.subr.mxu0 0.0
    %2437 = vmatpush1.msra.mxu0 0.0
    %2438 = vmatprep.subr.mxu0 0.0
    %2439 = vmatpush1.msra.mxu0 0.0
    %2440 = vmatprep.subr.mxu0 0.0
    %2441 = vmatpush1.msra.mxu0 0.0
    %2442 = vmatprep.subr.mxu0 0.0
    %2443 = vmatpush1.msra.mxu0 0.0
    %2444 = vmatprep.subr.mxu0 0.0
    %2445 = vmatpush1.msra.mxu0 0.0
    %2446 = vmatprep.subr.mxu0 0.0
    %2447 = vmatpush1.msra.mxu0 0.0
    %2448 = vmatprep.subr.mxu0 0.0
    %2449 = vmatpush1.msra.mxu0 0.0
    %2450 = vmatprep.mubr.f32.mxu0 0.0
    %2451 = vmatmul.mubr.f32.gmra.mrb[0].mxu0 %v2384
    %v2452 = vpop.f32.mrb[0].mxu0
    %v2453 = vadd.f32 0.0, %v2452
    %v2454 = vpop.f32.mrb[0].mxu0
    %2455 = vdwg.mxu0
    %2456 = vrot.lane.b32.xlu0 %v224, 32
    %v2457 = vpop.permute.xlu0 %2456
    %2458 = vrot.lane.b32.xlu0 %v343, 32
    %v2459 = vpop.permute.xlu0 %2458
    %v2460 = vsel %vm454, %v2457, 0
    %v2462 = vsel %vm454, %v2459, 0
    %2464 = vmatprep.subr.mxu0 0.0
    %2465 = vmatpush1.xpose.msra.mxu0 %v2462
    %2466 = vmatprep.subr.mxu0 0.0
    %2467 = vmatpush1.xpose.msra.mxu0 0.0
    %2468 = vmatprep.subr.mxu0 0.0
    %2469 = vmatpush1.xpose.msra.mxu0 0.0
    %2470 = vmatprep.subr.mxu0 0.0
    %2471 = vmatpush1.xpose.msra.mxu0 0.0
    %2472 = vmatprep.subr.mxu0 0.0
    %2473 = vmatpush1.xpose.msra.mxu0 0.0
    %2474 = vmatprep.subr.mxu0 0.0
    %2475 = vmatpush1.xpose.msra.mxu0 0.0
    %2476 = vmatprep.subr.mxu0 0.0
    %2477 = vmatpush1.xpose.msra.mxu0 0.0
    %2478 = vmatprep.subr.mxu0 0.0
    %2479 = vmatpush1.xpose.msra.mxu0 0.0
    %2480 = vmatprep.subr.mxu0 0.0
    %2481 = vmatpush1.xpose.msra.mxu0 0.0
    %2482 = vmatprep.subr.mxu0 0.0
    %2483 = vmatpush1.xpose.msra.mxu0 0.0
    %2484 = vmatprep.subr.mxu0 0.0
    %2485 = vmatpush1.xpose.msra.mxu0 0.0
    %2486 = vmatprep.subr.mxu0 0.0
    %2487 = vmatpush1.xpose.msra.mxu0 0.0
    %2488 = vmatprep.subr.mxu0 0.0
    %2489 = vmatpush1.xpose.msra.mxu0 0.0
    %2490 = vmatprep.subr.mxu0 0.0
    %2491 = vmatpush1.xpose.msra.mxu0 0.0
    %2492 = vmatprep.subr.mxu0 0.0
    %2493 = vmatpush1.xpose.msra.mxu0 0.0
    %2494 = vmatprep.subr.mxu0 0.0
    %2495 = vmatpush1.xpose.msra.mxu0 0.0
    %2496 = vmatprep.subr.mxu0 0.0
    %2497 = vmatpush1.xpose.msra.mxu0 0.0
    %2498 = vmatprep.subr.mxu0 0.0
    %2499 = vmatpush1.xpose.msra.mxu0 0.0
    %2500 = vmatprep.subr.mxu0 0.0
    %2501 = vmatpush1.xpose.msra.mxu0 0.0
    %2502 = vmatprep.subr.mxu0 0.0
    %2503 = vmatpush1.xpose.msra.mxu0 0.0
    %2504 = vmatprep.subr.mxu0 0.0
    %2505 = vmatpush1.xpose.msra.mxu0 0.0
    %2506 = vmatprep.subr.mxu0 0.0
    %2507 = vmatpush1.xpose.msra.mxu0 0.0
    %2508 = vmatprep.subr.mxu0 0.0
    %2509 = vmatpush1.xpose.msra.mxu0 0.0
    %2510 = vmatprep.subr.mxu0 0.0
    %2511 = vmatpush1.xpose.msra.mxu0 0.0
    %2512 = vmatprep.subr.mxu0 0.0
    %2513 = vmatpush1.xpose.msra.mxu0 0.0
    %2514 = vmatprep.subr.mxu0 0.0
    %2515 = vmatpush1.xpose.msra.mxu0 0.0
    %2516 = vmatprep.subr.mxu0 0.0
    %2517 = vmatpush1.xpose.msra.mxu0 0.0
    %2518 = vmatprep.subr.mxu0 0.0
    %2519 = vmatpush1.xpose.msra.mxu0 0.0
    %2520 = vmatprep.subr.mxu0 0.0
    %2521 = vmatpush1.xpose.msra.mxu0 0.0
    %2522 = vmatprep.subr.mxu0 0.0
    %2523 = vmatpush1.xpose.msra.mxu0 0.0
    %2524 = vmatprep.subr.mxu0 0.0
    %2525 = vmatpush1.xpose.msra.mxu0 0.0
    %2526 = vmatprep.subr.mxu0 0.0
    %2527 = vmatpush1.xpose.msra.mxu0 0.0
    %2528 = vmatprep.mubr.f32.mxu0 0.0
    %2529 = vmatmul.mubr.f32.gmra.mrb[0].mxu0 %v2460
    %v2530 = vpop.f32.mrb[0].mxu0
    %v2531 = vadd.f32 0.0, %v2530
    %v2532 = vpop.f32.mrb[0].mxu0
    %2533 = vdwg.mxu0
    %2534 = vrot.lane.b32.xlu0 %v225, 32
    %v2535 = vpop.permute.xlu0 %2534
    %2536 = vrot.lane.b32.xlu0 %v349, 32
    %v2537 = vpop.permute.xlu0 %2536
    %v2538 = vsel %vm454, %v2535, 0
    %v2540 = vsel %vm454, %v2537, 0
    %2542 = vmatprep.subr.mxu0 0.0
    %2543 = vmatpush1.xpose.msra.mxu0 %v2540
    %2544 = vmatprep.subr.mxu0 0.0
    %2545 = vmatpush1.xpose.msra.mxu0 0.0
    %2546 = vmatprep.subr.mxu0 0.0
    %2547 = vmatpush1.xpose.msra.mxu0 0.0
    %2548 = vmatprep.subr.mxu0 0.0
    %2549 = vmatpush1.xpose.msra.mxu0 0.0
    %2550 = vmatprep.subr.mxu0 0.0
    %2551 = vmatpush1.xpose.msra.mxu0 0.0
    %2552 = vmatprep.subr.mxu0 0.0
    %2553 = vmatpush1.xpose.msra.mxu0 0.0
    %2554 = vmatprep.subr.mxu0 0.0
    %2555 = vmatpush1.xpose.msra.mxu0 0.0
    %2556 = vmatprep.subr.mxu0 0.0
    %2557 = vmatpush1.xpose.msra.mxu0 0.0
    %2558 = vmatprep.subr.mxu0 0.0
    %2559 = vmatpush1.xpose.msra.mxu0 0.0
    %2560 = vmatprep.subr.mxu0 0.0
    %2561 = vmatpush1.xpose.msra.mxu0 0.0
    %2562 = vmatprep.subr.mxu0 0.0
    %2563 = vmatpush1.xpose.msra.mxu0 0.0
    %2564 = vmatprep.subr.mxu0 0.0
    %2565 = vmatpush1.xpose.msra.mxu0 0.0
    %2566 = vmatprep.subr.mxu0 0.0
    %2567 = vmatpush1.xpose.msra.mxu0 0.0
    %2568 = vmatprep.subr.mxu0 0.0
    %2569 = vmatpush1.xpose.msra.mxu0 0.0
    %2570 = vmatprep.subr.mxu0 0.0
    %2571 = vmatpush1.xpose.msra.mxu0 0.0
    %2572 = vmatprep.subr.mxu0 0.0
    %2573 = vmatpush1.xpose.msra.mxu0 0.0
    %2574 = vmatprep.subr.mxu0 0.0
    %2575 = vmatpush1.xpose.msra.mxu0 0.0
    %2576 = vmatprep.subr.mxu0 0.0
    %2577 = vmatpush1.xpose.msra.mxu0 0.0
    %2578 = vmatprep.subr.mxu0 0.0
    %2579 = vmatpush1.xpose.msra.mxu0 0.0
    %2580 = vmatprep.subr.mxu0 0.0
    %2581 = vmatpush1.xpose.msra.mxu0 0.0
    %2582 = vmatprep.subr.mxu0 0.0
    %2583 = vmatpush1.xpose.msra.mxu0 0.0
    %2584 = vmatprep.subr.mxu0 0.0
    %2585 = vmatpush1.xpose.msra.mxu0 0.0
    %2586 = vmatprep.subr.mxu0 0.0
    %2587 = vmatpush1.xpose.msra.mxu0 0.0
    %2588 = vmatprep.subr.mxu0 0.0
    %2589 = vmatpush1.xpose.msra.mxu0 0.0
    %2590 = vmatprep.subr.mxu0 0.0
    %2591 = vmatpush1.xpose.msra.mxu0 0.0
    %2592 = vmatprep.subr.mxu0 0.0
    %2593 = vmatpush1.xpose.msra.mxu0 0.0
    %2594 = vmatprep.subr.mxu0 0.0
    %2595 = vmatpush1.xpose.msra.mxu0 0.0
    %2596 = vmatprep.subr.mxu0 0.0
    %2597 = vmatpush1.xpose.msra.mxu0 0.0
    %2598 = vmatprep.subr.mxu0 0.0
    %2599 = vmatpush1.xpose.msra.mxu0 0.0
    %2600 = vmatprep.subr.mxu0 0.0
    %2601 = vmatpush1.xpose.msra.mxu0 0.0
    %2602 = vmatprep.subr.mxu0 0.0
    %2603 = vmatpush1.xpose.msra.mxu0 0.0
    %2604 = vmatprep.subr.mxu0 0.0
    %2605 = vmatpush1.xpose.msra.mxu0 0.0
    %2606 = vmatprep.mubr.f32.mxu0 0.0
    %2607 = vmatmul.mubr.f32.gmra.mrb[0].mxu0 %v2538
    %v2608 = vpop.f32.mrb[0].mxu0
    %v2609 = vadd.f32 0.0, %v2608
    %v2610 = vpop.f32.mrb[0].mxu0
    %2611 = vdwg.mxu0
    %2612 = vrot.lane.b32.xlu0 %v226, 32
    %v2613 = vpop.permute.xlu0 %2612
    %2614 = vrot.lane.b32.xlu0 %v355, 32
    %v2615 = vpop.permute.xlu0 %2614
    %v2616 = vsel %vm454, %v2613, 0
    %v2618 = vsel %vm454, %v2615, 0
    %2620 = vmatprep.subr.mxu0 0.0
    %2621 = vmatpush1.xpose.msra.mxu0 %v2618
    %2622 = vmatprep.subr.mxu0 0.0
    %2623 = vmatpush1.xpose.msra.mxu0 0.0
    %2624 = vmatprep.subr.mxu0 0.0
    %2625 = vmatpush1.xpose.msra.mxu0 0.0
    %2626 = vmatprep.subr.mxu0 0.0
    %2627 = vmatpush1.xpose.msra.mxu0 0.0
    %2628 = vmatprep.subr.mxu0 0.0
    %2629 = vmatpush1.xpose.msra.mxu0 0.0
    %2630 = vmatprep.subr.mxu0 0.0
    %2631 = vmatpush1.xpose.msra.mxu0 0.0
    %2632 = vmatprep.subr.mxu0 0.0
    %2633 = vmatpush1.xpose.msra.mxu0 0.0
    %2634 = vmatprep.subr.mxu0 0.0
    %2635 = vmatpush1.xpose.msra.mxu0 0.0
    %2636 = vmatprep.subr.mxu0 0.0
    %2637 = vmatpush1.xpose.msra.mxu0 0.0
    %2638 = vmatprep.subr.mxu0 0.0
    %2639 = vmatpush1.xpose.msra.mxu0 0.0
    %2640 = vmatprep.subr.mxu0 0.0
    %2641 = vmatpush1.xpose.msra.mxu0 0.0
    %2642 = vmatprep.subr.mxu0 0.0
    %2643 = vmatpush1.xpose.msra.mxu0 0.0
    %2644 = vmatprep.subr.mxu0 0.0
    %2645 = vmatpush1.xpose.msra.mxu0 0.0
    %2646 = vmatprep.subr.mxu0 0.0
    %2647 = vmatpush1.xpose.msra.mxu0 0.0
    %2648 = vmatprep.subr.mxu0 0.0
    %2649 = vmatpush1.xpose.msra.mxu0 0.0
    %2650 = vmatprep.subr.mxu0 0.0
    %2651 = vmatpush1.xpose.msra.mxu0 0.0
    %2652 = vmatprep.subr.mxu0 0.0
    %2653 = vmatpush1.xpose.msra.mxu0 0.0
    %2654 = vmatprep.subr.mxu0 0.0
    %2655 = vmatpush1.xpose.msra.mxu0 0.0
    %2656 = vmatprep.subr.mxu0 0.0
    %2657 = vmatpush1.xpose.msra.mxu0 0.0
    %2658 = vmatprep.subr.mxu0 0.0
    %2659 = vmatpush1.xpose.msra.mxu0 0.0
    %2660 = vmatprep.subr.mxu0 0.0
    %2661 = vmatpush1.xpose.msra.mxu0 0.0
    %2662 = vmatprep.subr.mxu0 0.0
    %2663 = vmatpush1.xpose.msra.mxu0 0.0
    %2664 = vmatprep.subr.mxu0 0.0
    %2665 = vmatpush1.xpose.msra.mxu0 0.0
    %2666 = vmatprep.subr.mxu0 0.0
    %2667 = vmatpush1.xpose.msra.mxu0 0.0
    %2668 = vmatprep.subr.mxu0 0.0
    %2669 = vmatpush1.xpose.msra.mxu0 0.0
    %2670 = vmatprep.subr.mxu0 0.0
    %2671 = vmatpush1.xpose.msra.mxu0 0.0
    %2672 = vmatprep.subr.mxu0 0.0
    %2673 = vmatpush1.xpose.msra.mxu0 0.0
    %2674 = vmatprep.subr.mxu0 0.0
    %2675 = vmatpush1.xpose.msra.mxu0 0.0
    %2676 = vmatprep.subr.mxu0 0.0
    %2677 = vmatpush1.xpose.msra.mxu0 0.0
    %2678 = vmatprep.subr.mxu0 0.0
    %2679 = vmatpush1.xpose.msra.mxu0 0.0
    %2680 = vmatprep.subr.mxu0 0.0
    %2681 = vmatpush1.xpose.msra.mxu0 0.0
    %2682 = vmatprep.subr.mxu0 0.0
    %2683 = vmatpush1.xpose.msra.mxu0 0.0
    %2684 = vmatprep.mubr.f32.mxu0 0.0
    %2685 = vmatmul.mubr.f32.gmra.mrb[0].mxu0 %v2616
    %v2686 = vpop.f32.mrb[0].mxu0
    %v2687 = vadd.f32 0.0, %v2686
    %v2688 = vpop.f32.mrb[0].mxu0
    %2689 = vdwg.mxu0
    %2690 = vrot.lane.b32.xlu0 %v227, 32
    %v2691 = vpop.permute.xlu0 %2690
    %2692 = vrot.lane.b32.xlu0 %v361, 32
    %v2693 = vpop.permute.xlu0 %2692
    %v2694 = vsel %vm454, %v2691, 0
    %v2696 = vsel %vm454, %v2693, 0
    %2698 = vmatprep.subr.mxu0 0.0
    %2699 = vmatpush1.xpose.msra.mxu0 %v2696
    %2700 = vmatprep.subr.mxu0 0.0
    %2701 = vmatpush1.xpose.msra.mxu0 0.0
    %2702 = vmatprep.subr.mxu0 0.0
    %2703 = vmatpush1.xpose.msra.mxu0 0.0
    %2704 = vmatprep.subr.mxu0 0.0
    %2705 = vmatpush1.xpose.msra.mxu0 0.0
    %2706 = vmatprep.subr.mxu0 0.0
    %2707 = vmatpush1.xpose.msra.mxu0 0.0
    %2708 = vmatprep.subr.mxu0 0.0
    %2709 = vmatpush1.xpose.msra.mxu0 0.0
    %2710 = vmatprep.subr.mxu0 0.0
    %2711 = vmatpush1.xpose.msra.mxu0 0.0
    %2712 = vmatprep.subr.mxu0 0.0
    %2713 = vmatpush1.xpose.msra.mxu0 0.0
    %2714 = vmatprep.subr.mxu0 0.0
    %2715 = vmatpush1.xpose.msra.mxu0 0.0
    %2716 = vmatprep.subr.mxu0 0.0
    %2717 = vmatpush1.xpose.msra.mxu0 0.0
    %2718 = vmatprep.subr.mxu0 0.0
    %2719 = vmatpush1.xpose.msra.mxu0 0.0
    %2720 = vmatprep.subr.mxu0 0.0
    %2721 = vmatpush1.xpose.msra.mxu0 0.0
    %2722 = vmatprep.subr.mxu0 0.0
    %2723 = vmatpush1.xpose.msra.mxu0 0.0
    %2724 = vmatprep.subr.mxu0 0.0
    %2725 = vmatpush1.xpose.msra.mxu0 0.0
    %2726 = vmatprep.subr.mxu0 0.0
    %2727 = vmatpush1.xpose.msra.mxu0 0.0
    %2728 = vmatprep.subr.mxu0 0.0
    %2729 = vmatpush1.xpose.msra.mxu0 0.0
    %2730 = vmatprep.subr.mxu0 0.0
    %2731 = vmatpush1.xpose.msra.mxu0 0.0
    %2732 = vmatprep.subr.mxu0 0.0
    %2733 = vmatpush1.xpose.msra.mxu0 0.0
    %2734 = vmatprep.subr.mxu0 0.0
    %2735 = vmatpush1.xpose.msra.mxu0 0.0
    %2736 = vmatprep.subr.mxu0 0.0
    %2737 = vmatpush1.xpose.msra.mxu0 0.0
    %2738 = vmatprep.subr.mxu0 0.0
    %2739 = vmatpush1.xpose.msra.mxu0 0.0
    %2740 = vmatprep.subr.mxu0 0.0
    %2741 = vmatpush1.xpose.msra.mxu0 0.0
    %2742 = vmatprep.subr.mxu0 0.0
    %2743 = vmatpush1.xpose.msra.mxu0 0.0
    %2744 = vmatprep.subr.mxu0 0.0
    %2745 = vmatpush1.xpose.msra.mxu0 0.0
    %2746 = vmatprep.subr.mxu0 0.0
    %2747 = vmatpush1.xpose.msra.mxu0 0.0
    %2748 = vmatprep.subr.mxu0 0.0
    %2749 = vmatpush1.xpose.msra.mxu0 0.0
    %2750 = vmatprep.subr.mxu0 0.0
    %2751 = vmatpush1.xpose.msra.mxu0 0.0
    %2752 = vmatprep.subr.mxu0 0.0
    %2753 = vmatpush1.xpose.msra.mxu0 0.0
    %2754 = vmatprep.subr.mxu0 0.0
    %2755 = vmatpush1.xpose.msra.mxu0 0.0
    %2756 = vmatprep.subr.mxu0 0.0
    %2757 = vmatpush1.xpose.msra.mxu0 0.0
    %2758 = vmatprep.subr.mxu0 0.0
    %2759 = vmatpush1.xpose.msra.mxu0 0.0
    %2760 = vmatprep.subr.mxu0 0.0
    %2761 = vmatpush1.xpose.msra.mxu0 0.0
    %2762 = vmatprep.mubr.f32.mxu0 0.0
    %2763 = vmatmul.mubr.f32.gmra.mrb[0].mxu0 %v2694
    %v2764 = vpop.f32.mrb[0].mxu0
    %v2765 = vadd.f32 0.0, %v2764
    %v2766 = vpop.f32.mrb[0].mxu0
    %2767 = vdwg.mxu0
    %v2768 = vsel %vm759, %v2531, -inf
    %2769 = vmax.xlane.f32.xlu0 %v2768
    %v2770 = vpop.xlane.xlu0 %2769
    %v2771 = vsel %vm759, %v2609, -inf
    %2772 = vmax.xlane.f32.xlu0 %v2771
    %v2773 = vpop.xlane.xlu0 %2772
    %v2774 = vsel %vm759, %v2687, -inf
    %2775 = vmax.xlane.f32.xlu0 %v2774
    %v2776 = vpop.xlane.xlu0 %2775
    %v2777 = vsel %vm759, %v2765, -inf
    %2778 = vmax.xlane.f32.xlu0 %v2777
    %v2779 = vpop.xlane.xlu0 %2778
    %v2780 = vsub.f32 %v2531, %v2770
    %v2781 = vsub.f32 %v2609, %v2773
    %v2782 = vsub.f32 %v2687, %v2776
    %v2783 = vsub.f32 %v2765, %v2779
    %v2784 = vmul.f32 %v2780, 1.442695
    %v2785 = vpow.pop %v2784
    %v2786 = vmul.f32 %v2781, 1.442695
    %v2787 = vpow.pop %v2786
    %v2788 = vmul.f32 %v2782, 1.442695
    %v2789 = vpow.pop %v2788
    %v2790 = vmul.f32 %v2783, 1.442695
    %v2791 = vpow.pop %v2790
    %v2792 = vsel %vm759, %v2785, 0.0
    %2793 = vadd.xlane.f32.xlu0 %v2792
    %v2794 = vpop.xlane.xlu0 %2793
    %v2795 = vsel %vm759, %v2787, 0.0
    %2796 = vadd.xlane.f32.xlu0 %v2795
    %v2797 = vpop.xlane.xlu0 %2796
    %v2798 = vsel %vm759, %v2789, 0.0
    %2799 = vadd.xlane.f32.xlu0 %v2798
    %v2800 = vpop.xlane.xlu0 %2799
    %v2801 = vsel %vm759, %v2791, 0.0
    %2802 = vadd.xlane.f32.xlu0 %v2801
    %v2803 = vpop.xlane.xlu0 %2802
    %v2804 = vrcp.pop %v2794
    %v2805 = vrcp.pop %v2797
    %v2806 = vrcp.pop %v2800
    %v2807 = vrcp.pop %v2803
    %v2808 = vmul.f32 %v2794, %v2804
    %v2809 = vmul.f32 %v2797, %v2805
    %v2810 = vmul.f32 %v2800, %v2806
    %v2811 = vmul.f32 %v2803, %v2807
    %v2812 = vsub.f32 2.0, %v2808
    %v2813 = vsub.f32 2.0, %v2809
    %v2814 = vsub.f32 2.0, %v2810
    %v2815 = vsub.f32 2.0, %v2811
    %v2816 = vmul.f32 %v2804, %v2812
    %v2817 = vmul.f32 %v2805, %v2813
    %v2818 = vmul.f32 %v2806, %v2814
    %v2819 = vmul.f32 %v2807, %v2815
    %v2820 = vmul.f32 %v2785, %v2816
    %v2821 = vmul.f32 %v2787, %v2817
    %v2822 = vmul.f32 %v2789, %v2818
    %v2823 = vmul.f32 %v2791, %v2819
    %2824 = vrot.lane.b32.xlu0 %v345, 32
    %v2825 = vpop.permute.xlu0 %2824
    %v2828 = vsel %vm759, %v2820, 0
    %2830 = vmatprep.subr.mxu0 0.0
    %2831 = vmatpush1.msra.mxu0 %v2825
    %2832 = vmatprep.subr.mxu0 0.0
    %2833 = vmatpush1.msra.mxu0 0.0
    %2834 = vmatprep.subr.mxu0 0.0
    %2835 = vmatpush1.msra.mxu0 0.0
    %2836 = vmatprep.subr.mxu0 0.0
    %2837 = vmatpush1.msra.mxu0 0.0
    %2838 = vmatprep.subr.mxu0 0.0
    %2839 = vmatpush1.msra.mxu0 0.0
    %2840 = vmatprep.subr.mxu0 0.0
    %2841 = vmatpush1.msra.mxu0 0.0
    %2842 = vmatprep.subr.mxu0 0.0
    %2843 = vmatpush1.msra.mxu0 0.0
    %2844 = vmatprep.subr.mxu0 0.0
    %2845 = vmatpush1.msra.mxu0 0.0
    %2846 = vmatprep.subr.mxu0 0.0
    %2847 = vmatpush1.msra.mxu0 0.0
    %2848 = vmatprep.subr.mxu0 0.0
    %2849 = vmatpush1.msra.mxu0 0.0
    %2850 = vmatprep.subr.mxu0 0.0
    %2851 = vmatpush1.msra.mxu0 0.0
    %2852 = vmatprep.subr.mxu0 0.0
    %2853 = vmatpush1.msra.mxu0 0.0
    %2854 = vmatprep.subr.mxu0 0.0
    %2855 = vmatpush1.msra.mxu0 0.0
    %2856 = vmatprep.subr.mxu0 0.0
    %2857 = vmatpush1.msra.mxu0 0.0
    %2858 = vmatprep.subr.mxu0 0.0
    %2859 = vmatpush1.msra.mxu0 0.0
    %2860 = vmatprep.subr.mxu0 0.0
    %2861 = vmatpush1.msra.mxu0 0.0
    %2862 = vmatprep.subr.mxu0 0.0
    %2863 = vmatpush1.msra.mxu0 0.0
    %2864 = vmatprep.subr.mxu0 0.0
    %2865 = vmatpush1.msra.mxu0 0.0
    %2866 = vmatprep.subr.mxu0 0.0
    %2867 = vmatpush1.msra.mxu0 0.0
    %2868 = vmatprep.subr.mxu0 0.0
    %2869 = vmatpush1.msra.mxu0 0.0
    %2870 = vmatprep.subr.mxu0 0.0
    %2871 = vmatpush1.msra.mxu0 0.0
    %2872 = vmatprep.subr.mxu0 0.0
    %2873 = vmatpush1.msra.mxu0 0.0
    %2874 = vmatprep.subr.mxu0 0.0
    %2875 = vmatpush1.msra.mxu0 0.0
    %2876 = vmatprep.subr.mxu0 0.0
    %2877 = vmatpush1.msra.mxu0 0.0
    %2878 = vmatprep.subr.mxu0 0.0
    %2879 = vmatpush1.msra.mxu0 0.0
    %2880 = vmatprep.subr.mxu0 0.0
    %2881 = vmatpush1.msra.mxu0 0.0
    %2882 = vmatprep.subr.mxu0 0.0
    %2883 = vmatpush1.msra.mxu0 0.0
    %2884 = vmatprep.subr.mxu0 0.0
    %2885 = vmatpush1.msra.mxu0 0.0
    %2886 = vmatprep.subr.mxu0 0.0
    %2887 = vmatpush1.msra.mxu0 0.0
    %2888 = vmatprep.subr.mxu0 0.0
    %2889 = vmatpush1.msra.mxu0 0.0
    %2890 = vmatprep.subr.mxu0 0.0
    %2891 = vmatpush1.msra.mxu0 0.0
    %2892 = vmatprep.subr.mxu0 0.0
    %2893 = vmatpush1.msra.mxu0 0.0
    %2894 = vmatprep.mubr.f32.mxu0 0.0
    %2895 = vmatmul.mubr.f32.gmra.mrb[0].mxu0 %v2828
    %v2896 = vpop.f32.mrb[0].mxu0
    %v2897 = vadd.f32 0.0, %v2896
    %v2898 = vpop.f32.mrb[0].mxu0
    %2899 = vdwg.mxu0
    %2900 = vrot.lane.b32.xlu0 %v351, 32
    %v2901 = vpop.permute.xlu0 %2900
    %v2904 = vsel %vm759, %v2821, 0
    %2906 = vmatprep.subr.mxu0 0.0
    %2907 = vmatpush1.msra.mxu0 %v2901
    %2908 = vmatprep.subr.mxu0 0.0
    %2909 = vmatpush1.msra.mxu0 0.0
    %2910 = vmatprep.subr.mxu0 0.0
    %2911 = vmatpush1.msra.mxu0 0.0
    %2912 = vmatprep.subr.mxu0 0.0
    %2913 = vmatpush1.msra.mxu0 0.0
    %2914 = vmatprep.subr.mxu0 0.0
    %2915 = vmatpush1.msra.mxu0 0.0
    %2916 = vmatprep.subr.mxu0 0.0
    %2917 = vmatpush1.msra.mxu0 0.0
    %2918 = vmatprep.subr.mxu0 0.0
    %2919 = vmatpush1.msra.mxu0 0.0
    %2920 = vmatprep.subr.mxu0 0.0
    %2921 = vmatpush1.msra.mxu0 0.0
    %2922 = vmatprep.subr.mxu0 0.0
    %2923 = vmatpush1.msra.mxu0 0.0
    %2924 = vmatprep.subr.mxu0 0.0
    %2925 = vmatpush1.msra.mxu0 0.0
    %2926 = vmatprep.subr.mxu0 0.0
    %2927 = vmatpush1.msra.mxu0 0.0
    %2928 = vmatprep.subr.mxu0 0.0
    %2929 = vmatpush1.msra.mxu0 0.0
    %2930 = vmatprep.subr.mxu0 0.0
    %2931 = vmatpush1.msra.mxu0 0.0
    %2932 = vmatprep.subr.mxu0 0.0
    %2933 = vmatpush1.msra.mxu0 0.0
    %2934 = vmatprep.subr.mxu0 0.0
    %2935 = vmatpush1.msra.mxu0 0.0
    %2936 = vmatprep.subr.mxu0 0.0
    %2937 = vmatpush1.msra.mxu0 0.0
    %2938 = vmatprep.subr.mxu0 0.0
    %2939 = vmatpush1.msra.mxu0 0.0
    %2940 = vmatprep.subr.mxu0 0.0
    %2941 = vmatpush1.msra.mxu0 0.0
    %2942 = vmatprep.subr.mxu0 0.0
    %2943 = vmatpush1.msra.mxu0 0.0
    %2944 = vmatprep.subr.mxu0 0.0
    %2945 = vmatpush1.msra.mxu0 0.0
    %2946 = vmatprep.subr.mxu0 0.0
    %2947 = vmatpush1.msra.mxu0 0.0
    %2948 = vmatprep.subr.mxu0 0.0
    %2949 = vmatpush1.msra.mxu0 0.0
    %2950 = vmatprep.subr.mxu0 0.0
    %2951 = vmatpush1.msra.mxu0 0.0
    %2952 = vmatprep.subr.mxu0 0.0
    %2953 = vmatpush1.msra.mxu0 0.0
    %2954 = vmatprep.subr.mxu0 0.0
    %2955 = vmatpush1.msra.mxu0 0.0
    %2956 = vmatprep.subr.mxu0 0.0
    %2957 = vmatpush1.msra.mxu0 0.0
    %2958 = vmatprep.subr.mxu0 0.0
    %2959 = vmatpush1.msra.mxu0 0.0
    %2960 = vmatprep.subr.mxu0 0.0
    %2961 = vmatpush1.msra.mxu0 0.0
    %2962 = vmatprep.subr.mxu0 0.0
    %2963 = vmatpush1.msra.mxu0 0.0
    %2964 = vmatprep.subr.mxu0 0.0
    %2965 = vmatpush1.msra.mxu0 0.0
    %2966 = vmatprep.subr.mxu0 0.0
    %2967 = vmatpush1.msra.mxu0 0.0
    %2968 = vmatprep.subr.mxu0 0.0
    %2969 = vmatpush1.msra.mxu0 0.0
    %2970 = vmatprep.mubr.f32.mxu0 0.0
    %2971 = vmatmul.mubr.f32.gmra.mrb[0].mxu0 %v2904
    %v2972 = vpop.f32.mrb[0].mxu0
    %v2973 = vadd.f32 0.0, %v2972
    %v2974 = vpop.f32.mrb[0].mxu0
    %2975 = vdwg.mxu0
    %2976 = vrot.lane.b32.xlu0 %v357, 32
    %v2977 = vpop.permute.xlu0 %2976
    %v2980 = vsel %vm759, %v2822, 0
    %2982 = vmatprep.subr.mxu0 0.0
    %2983 = vmatpush1.msra.mxu0 %v2977
    %2984 = vmatprep.subr.mxu0 0.0
    %2985 = vmatpush1.msra.mxu0 0.0
    %2986 = vmatprep.subr.mxu0 0.0
    %2987 = vmatpush1.msra.mxu0 0.0
    %2988 = vmatprep.subr.mxu0 0.0
    %2989 = vmatpush1.msra.mxu0 0.0
    %2990 = vmatprep.subr.mxu0 0.0
    %2991 = vmatpush1.msra.mxu0 0.0
    %2992 = vmatprep.subr.mxu0 0.0
    %2993 = vmatpush1.msra.mxu0 0.0
    %2994 = vmatprep.subr.mxu0 0.0
    %2995 = vmatpush1.msra.mxu0 0.0
    %2996 = vmatprep.subr.mxu0 0.0
    %2997 = vmatpush1.msra.mxu0 0.0
    %2998 = vmatprep.subr.mxu0 0.0
    %2999 = vmatpush1.msra.mxu0 0.0
    %3000 = vmatprep.subr.mxu0 0.0
    %3001 = vmatpush1.msra.mxu0 0.0
    %3002 = vmatprep.subr.mxu0 0.0
    %3003 = vmatpush1.msra.mxu0 0.0
    %3004 = vmatprep.subr.mxu0 0.0
    %3005 = vmatpush1.msra.mxu0 0.0
    %3006 = vmatprep.subr.mxu0 0.0
    %3007 = vmatpush1.msra.mxu0 0.0
    %3008 = vmatprep.subr.mxu0 0.0
    %3009 = vmatpush1.msra.mxu0 0.0
    %3010 = vmatprep.subr.mxu0 0.0
    %3011 = vmatpush1.msra.mxu0 0.0
    %3012 = vmatprep.subr.mxu0 0.0
    %3013 = vmatpush1.msra.mxu0 0.0
    %3014 = vmatprep.subr.mxu0 0.0
    %3015 = vmatpush1.msra.mxu0 0.0
    %3016 = vmatprep.subr.mxu0 0.0
    %3017 = vmatpush1.msra.mxu0 0.0
    %3018 = vmatprep.subr.mxu0 0.0
    %3019 = vmatpush1.msra.mxu0 0.0
    %3020 = vmatprep.subr.mxu0 0.0
    %3021 = vmatpush1.msra.mxu0 0.0
    %3022 = vmatprep.subr.mxu0 0.0
    %3023 = vmatpush1.msra.mxu0 0.0
    %3024 = vmatprep.subr.mxu0 0.0
    %3025 = vmatpush1.msra.mxu0 0.0
    %3026 = vmatprep.subr.mxu0 0.0
    %3027 = vmatpush1.msra.mxu0 0.0
    %3028 = vmatprep.subr.mxu0 0.0
    %3029 = vmatpush1.msra.mxu0 0.0
    %3030 = vmatprep.subr.mxu0 0.0
    %3031 = vmatpush1.msra.mxu0 0.0
    %3032 = vmatprep.subr.mxu0 0.0
    %3033 = vmatpush1.msra.mxu0 0.0
    %3034 = vmatprep.subr.mxu0 0.0
    %3035 = vmatpush1.msra.mxu0 0.0
    %3036 = vmatprep.subr.mxu0 0.0
    %3037 = vmatpush1.msra.mxu0 0.0
    %3038 = vmatprep.subr.mxu0 0.0
    %3039 = vmatpush1.msra.mxu0 0.0
    %3040 = vmatprep.subr.mxu0 0.0
    %3041 = vmatpush1.msra.mxu0 0.0
    %3042 = vmatprep.subr.mxu0 0.0
    %3043 = vmatpush1.msra.mxu0 0.0
    %3044 = vmatprep.subr.mxu0 0.0
    %3045 = vmatpush1.msra.mxu0 0.0
    %3046 = vmatprep.mubr.f32.mxu0 0.0
    %3047 = vmatmul.mubr.f32.gmra.mrb[0].mxu0 %v2980
    %v3048 = vpop.f32.mrb[0].mxu0
    %v3049 = vadd.f32 0.0, %v3048
    %v3050 = vpop.f32.mrb[0].mxu0
    %3051 = vdwg.mxu0
    %3052 = vrot.lane.b32.xlu0 %v363, 32
    %v3053 = vpop.permute.xlu0 %3052
    %v3056 = vsel %vm759, %v2823, 0
    %3058 = vmatprep.subr.mxu0 0.0
    %3059 = vmatpush1.msra.mxu0 %v3053
    %3060 = vmatprep.subr.mxu0 0.0
    %3061 = vmatpush1.msra.mxu0 0.0
    %3062 = vmatprep.subr.mxu0 0.0
    %3063 = vmatpush1.msra.mxu0 0.0
    %3064 = vmatprep.subr.mxu0 0.0
    %3065 = vmatpush1.msra.mxu0 0.0
    %3066 = vmatprep.subr.mxu0 0.0
    %3067 = vmatpush1.msra.mxu0 0.0
    %3068 = vmatprep.subr.mxu0 0.0
    %3069 = vmatpush1.msra.mxu0 0.0
    %3070 = vmatprep.subr.mxu0 0.0
    %3071 = vmatpush1.msra.mxu0 0.0
    %3072 = vmatprep.subr.mxu0 0.0
    %3073 = vmatpush1.msra.mxu0 0.0
    %3074 = vmatprep.subr.mxu0 0.0
    %3075 = vmatpush1.msra.mxu0 0.0
    %3076 = vmatprep.subr.mxu0 0.0
    %3077 = vmatpush1.msra.mxu0 0.0
    %3078 = vmatprep.subr.mxu0 0.0
    %3079 = vmatpush1.msra.mxu0 0.0
    %3080 = vmatprep.subr.mxu0 0.0
    %3081 = vmatpush1.msra.mxu0 0.0
    %3082 = vmatprep.subr.mxu0 0.0
    %3083 = vmatpush1.msra.mxu0 0.0
    %3084 = vmatprep.subr.mxu0 0.0
    %3085 = vmatpush1.msra.mxu0 0.0
    %3086 = vmatprep.subr.mxu0 0.0
    %3087 = vmatpush1.msra.mxu0 0.0
    %3088 = vmatprep.subr.mxu0 0.0
    %3089 = vmatpush1.msra.mxu0 0.0
    %3090 = vmatprep.subr.mxu0 0.0
    %3091 = vmatpush1.msra.mxu0 0.0
    %3092 = vmatprep.subr.mxu0 0.0
    %3093 = vmatpush1.msra.mxu0 0.0
    %3094 = vmatprep.subr.mxu0 0.0
    %3095 = vmatpush1.msra.mxu0 0.0
    %3096 = vmatprep.subr.mxu0 0.0
    %3097 = vmatpush1.msra.mxu0 0.0
    %3098 = vmatprep.subr.mxu0 0.0
    %3099 = vmatpush1.msra.mxu0 0.0
    %3100 = vmatprep.subr.mxu0 0.0
    %3101 = vmatpush1.msra.mxu0 0.0
    %3102 = vmatprep.subr.mxu0 0.0
    %3103 = vmatpush1.msra.mxu0 0.0
    %3104 = vmatprep.subr.mxu0 0.0
    %3105 = vmatpush1.msra.mxu0 0.0
    %3106 = vmatprep.subr.mxu0 0.0
    %3107 = vmatpush1.msra.mxu0 0.0
    %3108 = vmatprep.subr.mxu0 0.0
    %3109 = vmatpush1.msra.mxu0 0.0
    %3110 = vmatprep.subr.mxu0 0.0
    %3111 = vmatpush1.msra.mxu0 0.0
    %3112 = vmatprep.subr.mxu0 0.0
    %3113 = vmatpush1.msra.mxu0 0.0
    %3114 = vmatprep.subr.mxu0 0.0
    %3115 = vmatpush1.msra.mxu0 0.0
    %3116 = vmatprep.subr.mxu0 0.0
    %3117 = vmatpush1.msra.mxu0 0.0
    %3118 = vmatprep.subr.mxu0 0.0
    %3119 = vmatpush1.msra.mxu0 0.0
    %3120 = vmatprep.subr.mxu0 0.0
    %3121 = vmatpush1.msra.mxu0 0.0
    %3122 = vmatprep.mubr.f32.mxu0 0.0
    %3123 = vmatmul.mubr.f32.gmra.mrb[0].mxu0 %v3056
    %v3124 = vpop.f32.mrb[0].mxu0
    %v3125 = vadd.f32 0.0, %v3124
    %v3126 = vpop.f32.mrb[0].mxu0
    %3127 = vdwg.mxu0
    %v3128 = vld [vmem:[#allocation10] sm:$0xff]
    %v3129 = vld [vmem:[#allocation10 + $0x8] sm:$0xff]
    %v3130 = vld [vmem:[#allocation10 + $0x10] sm:$0xff]
    %v3131 = vld [vmem:[#allocation10 + $0x18] sm:$0xff]
    %v3132 = vld [vmem:[#allocation10 + $0x20] sm:$0xff]
    %v3133 = vld [vmem:[#allocation10 + $0x28] sm:$0xff]
    %v3134 = vld [vmem:[#allocation10 + $0x30] sm:$0xff]
    %v3135 = vld [vmem:[#allocation10 + $0x38] sm:$0xff]
    %v3136 = vld [vmem:[#allocation10 + $0x40] sm:$0xff]
    %v3137 = vld [vmem:[#allocation10 + $0x48] sm:$0xff]
    %v3138 = vld [vmem:[#allocation10 + $0x50] sm:$0xff]
    %v3139 = vld [vmem:[#allocation10 + $0x58] sm:$0xff]
    %v3140 = vld [vmem:[#allocation10 + $0x60] sm:$0xff]
    %v3141 = vld [vmem:[#allocation10 + $0x68] sm:$0xff]
    %v3142 = vld [vmem:[#allocation10 + $0x70] sm:$0xff]
    %v3143 = vld [vmem:[#allocation10 + $0x78] sm:$0xff]
    %v3145 = vsel %vm454, %v1550, 0
    %v3148 = vsel %vm454, %v1627, 0
    %v3151 = vsel %vm454, %v1704, 0
    %v3154 = vsel %vm454, %v1781, 0
    %3156 = vmatprep.subr.mxu0 %v3137
    %3157 = vmatpush1.msra.mxu0 %v3136
    %3158 = vmatprep.subr.mxu0 %v3139
    %3159 = vmatpush1.msra.mxu0 %v3138
    %3160 = vmatprep.subr.mxu0 %v3141
    %3161 = vmatpush1.msra.mxu0 %v3140
    %3162 = vmatprep.subr.mxu0 %v3143
    %3163 = vmatpush1.msra.mxu0 %v3142
    %3164 = vmatprep.subr.mxu0 0.0
    %3165 = vmatpush1.msra.mxu0 0.0
    %3166 = vmatprep.subr.mxu0 0.0
    %3167 = vmatpush1.msra.mxu0 0.0
    %3168 = vmatprep.subr.mxu0 0.0
    %3169 = vmatpush1.msra.mxu0 0.0
    %3170 = vmatprep.subr.mxu0 0.0
    %3171 = vmatpush1.msra.mxu0 0.0
    %3172 = vmatprep.subr.mxu0 0.0
    %3173 = vmatpush1.msra.mxu0 0.0
    %3174 = vmatprep.subr.mxu0 0.0
    %3175 = vmatpush1.msra.mxu0 0.0
    %3176 = vmatprep.subr.mxu0 0.0
    %3177 = vmatpush1.msra.mxu0 0.0
    %3178 = vmatprep.subr.mxu0 0.0
    %3179 = vmatpush1.msra.mxu0 0.0
    %3180 = vmatprep.subr.mxu0 0.0
    %3181 = vmatpush1.msra.mxu0 0.0
    %3182 = vmatprep.subr.mxu0 0.0
    %3183 = vmatpush1.msra.mxu0 0.0
    %3184 = vmatprep.subr.mxu0 0.0
    %3185 = vmatpush1.msra.mxu0 0.0
    %3186 = vmatprep.subr.mxu0 0.0
    %3187 = vmatpush1.msra.mxu0 0.0
    %3188 = vmatprep.subr.mxu0 0.0
    %3189 = vmatpush1.msra.mxu0 0.0
    %3190 = vmatprep.subr.mxu0 0.0
    %3191 = vmatpush1.msra.mxu0 0.0
    %3192 = vmatprep.subr.mxu0 0.0
    %3193 = vmatpush1.msra.mxu0 0.0
    %3194 = vmatprep.subr.mxu0 0.0
    %3195 = vmatpush1.msra.mxu0 0.0
    %3196 = vmatprep.subr.mxu0 0.0
    %3197 = vmatpush1.msra.mxu0 0.0
    %3198 = vmatprep.subr.mxu0 0.0
    %3199 = vmatpush1.msra.mxu0 0.0
    %3200 = vmatprep.subr.mxu0 0.0
    %3201 = vmatpush1.msra.mxu0 0.0
    %3202 = vmatprep.subr.mxu0 0.0
    %3203 = vmatpush1.msra.mxu0 0.0
    %3204 = vmatprep.subr.mxu0 0.0
    %3205 = vmatpush1.msra.mxu0 0.0
    %3206 = vmatprep.subr.mxu0 0.0
    %3207 = vmatpush1.msra.mxu0 0.0
    %3208 = vmatprep.subr.mxu0 0.0
    %3209 = vmatpush1.msra.mxu0 0.0
    %3210 = vmatprep.subr.mxu0 0.0
    %3211 = vmatpush1.msra.mxu0 0.0
    %3212 = vmatprep.subr.mxu0 0.0
    %3213 = vmatpush1.msra.mxu0 0.0
    %3214 = vmatprep.subr.mxu0 0.0
    %3215 = vmatpush1.msra.mxu0 0.0
    %3216 = vmatprep.subr.mxu0 0.0
    %3217 = vmatpush1.msra.mxu0 0.0
    %3218 = vmatprep.subr.mxu0 0.0
    %3219 = vmatpush1.msra.mxu0 0.0
    %3220 = vmatprep.mubr.f32.mxu0 0.0
    %3221 = vmatmul.mubr.f32.gmra.mrb[0].mxu0 %v3145
    %v3222 = vpop.f32.mrb[0].mxu0
    %v3223 = vadd.f32 0.0, %v3222
    %v3224 = vpop.f32.mrb[0].mxu0
    %v3225 = vadd.f32 0.0, %v3224
    %3226 = vmatprep.mubr.f32.mxu0 0.0
    %3227 = vmatmul.mubr.f32.gmra.mrb[0].mxu0 %v3148
    %v3228 = vpop.f32.mrb[0].mxu0
    %v3229 = vadd.f32 0.0, %v3228
    %v3230 = vpop.f32.mrb[0].mxu0
    %v3231 = vadd.f32 0.0, %v3230
    %3232 = vmatprep.mubr.f32.mxu0 0.0
    %3233 = vmatmul.mubr.f32.gmra.mrb[0].mxu0 %v3151
    %v3234 = vpop.f32.mrb[0].mxu0
    %v3235 = vadd.f32 0.0, %v3234
    %v3236 = vpop.f32.mrb[0].mxu0
    %v3237 = vadd.f32 0.0, %v3236
    %3238 = vmatprep.mubr.f32.mxu0 0.0
    %3239 = vmatmul.mubr.f32.gmra.mrb[0].mxu0 %v3154
    %v3240 = vpop.f32.mrb[0].mxu0
    %v3241 = vadd.f32 0.0, %v3240
    %v3242 = vpop.f32.mrb[0].mxu0
    %v3243 = vadd.f32 0.0, %v3242
    %3244 = vdwg.mxu0
    %v3246 = vsel %vm454, %v886, 0
    %v3249 = vsel %vm454, %v959, 0
    %v3252 = vsel %vm454, %v1032, 0
    %v3255 = vsel %vm454, %v1105, 0
    %3257 = vmatprep.subr.mxu0 %v3129
    %3258 = vmatpush1.msra.mxu0 %v3128
    %3259 = vmatprep.subr.mxu0 %v3131
    %3260 = vmatpush1.msra.mxu0 %v3130
    %3261 = vmatprep.subr.mxu0 %v3133
    %3262 = vmatpush1.msra.mxu0 %v3132
    %3263 = vmatprep.subr.mxu0 %v3135
    %3264 = vmatpush1.msra.mxu0 %v3134
    %3265 = vmatprep.subr.mxu0 0.0
    %3266 = vmatpush1.msra.mxu0 0.0
    %3267 = vmatprep.subr.mxu0 0.0
    %3268 = vmatpush1.msra.mxu0 0.0
    %3269 = vmatprep.subr.mxu0 0.0
    %3270 = vmatpush1.msra.mxu0 0.0
    %3271 = vmatprep.subr.mxu0 0.0
    %3272 = vmatpush1.msra.mxu0 0.0
    %3273 = vmatprep.subr.mxu0 0.0
    %3274 = vmatpush1.msra.mxu0 0.0
    %3275 = vmatprep.subr.mxu0 0.0
    %3276 = vmatpush1.msra.mxu0 0.0
    %3277 = vmatprep.subr.mxu0 0.0
    %3278 = vmatpush1.msra.mxu0 0.0
    %3279 = vmatprep.subr.mxu0 0.0
    %3280 = vmatpush1.msra.mxu0 0.0
    %3281 = vmatprep.subr.mxu0 0.0
    %3282 = vmatpush1.msra.mxu0 0.0
    %3283 = vmatprep.subr.mxu0 0.0
    %3284 = vmatpush1.msra.mxu0 0.0
    %3285 = vmatprep.subr.mxu0 0.0
    %3286 = vmatpush1.msra.mxu0 0.0
    %3287 = vmatprep.subr.mxu0 0.0
    %3288 = vmatpush1.msra.mxu0 0.0
    %3289 = vmatprep.subr.mxu0 0.0
    %3290 = vmatpush1.msra.mxu0 0.0
    %3291 = vmatprep.subr.mxu0 0.0
    %3292 = vmatpush1.msra.mxu0 0.0
    %3293 = vmatprep.subr.mxu0 0.0
    %3294 = vmatpush1.msra.mxu0 0.0
    %3295 = vmatprep.subr.mxu0 0.0
    %3296 = vmatpush1.msra.mxu0 0.0
    %3297 = vmatprep.subr.mxu0 0.0
    %3298 = vmatpush1.msra.mxu0 0.0
    %3299 = vmatprep.subr.mxu0 0.0
    %3300 = vmatpush1.msra.mxu0 0.0
    %3301 = vmatprep.subr.mxu0 0.0
    %3302 = vmatpush1.msra.mxu0 0.0
    %3303 = vmatprep.subr.mxu0 0.0
    %3304 = vmatpush1.msra.mxu0 0.0
    %3305 = vmatprep.subr.mxu0 0.0
    %3306 = vmatpush1.msra.mxu0 0.0
    %3307 = vmatprep.subr.mxu0 0.0
    %3308 = vmatpush1.msra.mxu0 0.0
    %3309 = vmatprep.subr.mxu0 0.0
    %3310 = vmatpush1.msra.mxu0 0.0
    %3311 = vmatprep.subr.mxu0 0.0
    %3312 = vmatpush1.msra.mxu0 0.0
    %3313 = vmatprep.subr.mxu0 0.0
    %3314 = vmatpush1.msra.mxu0 0.0
    %3315 = vmatprep.subr.mxu0 0.0
    %3316 = vmatpush1.msra.mxu0 0.0
    %3317 = vmatprep.subr.mxu0 0.0
    %3318 = vmatpush1.msra.mxu0 0.0
    %3319 = vmatprep.subr.mxu0 0.0
    %3320 = vmatpush1.msra.mxu0 0.0
    %3321 = vmatprep.mubr.f32.mxu0 0.0
    %3322 = vmatmul.mubr.f32.gmra.mrb[0].mxu0 %v3246
    %v3323 = vpop.f32.mrb[0].mxu0
    %v3324 = vadd.f32 %v3223, %v3323
    %v3325 = vpop.f32.mrb[0].mxu0
    %v3326 = vadd.f32 %v3225, %v3325
    %3327 = vmatprep.mubr.f32.mxu0 0.0
    %3328 = vmatmul.mubr.f32.gmra.mrb[0].mxu0 %v3249
    %v3329 = vpop.f32.mrb[0].mxu0
    %v3330 = vadd.f32 %v3229, %v3329
    %v3331 = vpop.f32.mrb[0].mxu0
    %v3332 = vadd.f32 %v3231, %v3331
    %3333 = vmatprep.mubr.f32.mxu0 0.0
    %3334 = vmatmul.mubr.f32.gmra.mrb[0].mxu0 %v3252
    %v3335 = vpop.f32.mrb[0].mxu0
    %v3336 = vadd.f32 %v3235, %v3335
    %v3337 = vpop.f32.mrb[0].mxu0
    %v3338 = vadd.f32 %v3237, %v3337
    %3339 = vmatprep.mubr.f32.mxu0 0.0
    %3340 = vmatmul.mubr.f32.gmra.mrb[0].mxu0 %v3255
    %v3341 = vpop.f32.mrb[0].mxu0
    %v3342 = vadd.f32 %v3241, %v3341
    %v3343 = vpop.f32.mrb[0].mxu0
    %v3344 = vadd.f32 %v3243, %v3343
    %3345 = vdwg.mxu0
    %v3346 = vld [vmem:[#allocation10 + $0x80] sm:$0xff]
    %v3347 = vld [vmem:[#allocation10 + $0x88] sm:$0xff]
    %v3348 = vld [vmem:[#allocation10 + $0x90] sm:$0xff]
    %v3349 = vld [vmem:[#allocation10 + $0x98] sm:$0xff]
    %v3350 = vld [vmem:[#allocation10 + $0xa0] sm:$0xff]
    %v3351 = vld [vmem:[#allocation10 + $0xa8] sm:$0xff]
    %v3352 = vld [vmem:[#allocation10 + $0xb0] sm:$0xff]
    %v3353 = vld [vmem:[#allocation10 + $0xb8] sm:$0xff]
    %v3355 = vsel %vm454, %v2225, 0
    %v3358 = vsel %vm454, %v2301, 0
    %v3361 = vsel %vm454, %v2377, 0
    %v3364 = vsel %vm454, %v2453, 0
    %3366 = vmatprep.subr.mxu0 %v3347
    %3367 = vmatpush1.msra.mxu0 %v3346
    %3368 = vmatprep.subr.mxu0 %v3349
    %3369 = vmatpush1.msra.mxu0 %v3348
    %3370 = vmatprep.subr.mxu0 %v3351
    %3371 = vmatpush1.msra.mxu0 %v3350
    %3372 = vmatprep.subr.mxu0 %v3353
    %3373 = vmatpush1.msra.mxu0 %v3352
    %3374 = vmatprep.subr.mxu0 0.0
    %3375 = vmatpush1.msra.mxu0 0.0
    %3376 = vmatprep.subr.mxu0 0.0
    %3377 = vmatpush1.msra.mxu0 0.0
    %3378 = vmatprep.subr.mxu0 0.0
    %3379 = vmatpush1.msra.mxu0 0.0
    %3380 = vmatprep.subr.mxu0 0.0
    %3381 = vmatpush1.msra.mxu0 0.0
    %3382 = vmatprep.subr.mxu0 0.0
    %3383 = vmatpush1.msra.mxu0 0.0
    %3384 = vmatprep.subr.mxu0 0.0
    %3385 = vmatpush1.msra.mxu0 0.0
    %3386 = vmatprep.subr.mxu0 0.0
    %3387 = vmatpush1.msra.mxu0 0.0
    %3388 = vmatprep.subr.mxu0 0.0
    %3389 = vmatpush1.msra.mxu0 0.0
    %3390 = vmatprep.subr.mxu0 0.0
    %3391 = vmatpush1.msra.mxu0 0.0
    %3392 = vmatprep.subr.mxu0 0.0
    %3393 = vmatpush1.msra.mxu0 0.0
    %3394 = vmatprep.subr.mxu0 0.0
    %3395 = vmatpush1.msra.mxu0 0.0
    %3396 = vmatprep.subr.mxu0 0.0
    %3397 = vmatpush1.msra.mxu0 0.0
    %3398 = vmatprep.subr.mxu0 0.0
    %3399 = vmatpush1.msra.mxu0 0.0
    %3400 = vmatprep.subr.mxu0 0.0
    %3401 = vmatpush1.msra.mxu0 0.0
    %3402 = vmatprep.subr.mxu0 0.0
    %3403 = vmatpush1.msra.mxu0 0.0
    %3404 = vmatprep.subr.mxu0 0.0
    %3405 = vmatpush1.msra.mxu0 0.0
    %3406 = vmatprep.subr.mxu0 0.0
    %3407 = vmatpush1.msra.mxu0 0.0
    %3408 = vmatprep.subr.mxu0 0.0
    %3409 = vmatpush1.msra.mxu0 0.0
    %3410 = vmatprep.subr.mxu0 0.0
    %3411 = vmatpush1.msra.mxu0 0.0
    %3412 = vmatprep.subr.mxu0 0.0
    %3413 = vmatpush1.msra.mxu0 0.0
    %3414 = vmatprep.subr.mxu0 0.0
    %3415 = vmatpush1.msra.mxu0 0.0
    %3416 = vmatprep.subr.mxu0 0.0
    %3417 = vmatpush1.msra.mxu0 0.0
    %3418 = vmatprep.subr.mxu0 0.0
    %3419 = vmatpush1.msra.mxu0 0.0
    %3420 = vmatprep.subr.mxu0 0.0
    %3421 = vmatpush1.msra.mxu0 0.0
    %3422 = vmatprep.subr.mxu0 0.0
    %3423 = vmatpush1.msra.mxu0 0.0
    %3424 = vmatprep.subr.mxu0 0.0
    %3425 = vmatpush1.msra.mxu0 0.0
    %3426 = vmatprep.subr.mxu0 0.0
    %3427 = vmatpush1.msra.mxu0 0.0
    %3428 = vmatprep.subr.mxu0 0.0
    %3429 = vmatpush1.msra.mxu0 0.0
    %3430 = vmatprep.mubr.f32.mxu0 0.0
    %3431 = vmatmul.mubr.f32.gmra.mrb[0].mxu0 %v3355
    %v3432 = vpop.f32.mrb[0].mxu0
    %v3433 = vadd.f32 0.0, %v3432
    %v3434 = vpop.f32.mrb[0].mxu0
    %v3435 = vadd.f32 0.0, %v3434
    %3436 = vmatprep.mubr.f32.mxu0 0.0
    %3437 = vmatmul.mubr.f32.gmra.mrb[0].mxu0 %v3358
    %v3438 = vpop.f32.mrb[0].mxu0
    %v3439 = vadd.f32 0.0, %v3438
    %v3440 = vpop.f32.mrb[0].mxu0
    %v3441 = vadd.f32 0.0, %v3440
    %3442 = vmatprep.mubr.f32.mxu0 0.0
    %3443 = vmatmul.mubr.f32.gmra.mrb[0].mxu0 %v3361
    %v3444 = vpop.f32.mrb[0].mxu0
    %v3445 = vadd.f32 0.0, %v3444
    %v3446 = vpop.f32.mrb[0].mxu0
    %v3447 = vadd.f32 0.0, %v3446
    %3448 = vmatprep.mubr.f32.mxu0 0.0
    %3449 = vmatmul.mubr.f32.gmra.mrb[0].mxu0 %v3364
    %v3450 = vpop.f32.mrb[0].mxu0
    %v3451 = vadd.f32 0.0, %v3450
    %v3452 = vpop.f32.mrb[0].mxu0
    %v3453 = vadd.f32 0.0, %v3452
    %3454 = vdwg.mxu0
    %v3455 = vadd.f32 %v3324, %v3433
    %v3456 = vadd.f32 %v3326, %v3435
    %v3457 = vadd.f32 %v3330, %v3439
    %v3458 = vadd.f32 %v3332, %v3441
    %v3459 = vadd.f32 %v3336, %v3445
    %v3460 = vadd.f32 %v3338, %v3447
    %v3461 = vadd.f32 %v3342, %v3451
    %v3462 = vadd.f32 %v3344, %v3453
    %v3463 = vld [vmem:[#allocation10 + $0xc0] sm:$0xff]
    %v3464 = vld [vmem:[#allocation10 + $0xc8] sm:$0xff]
    %v3465 = vld [vmem:[#allocation10 + $0xd0] sm:$0xff]
    %v3466 = vld [vmem:[#allocation10 + $0xd8] sm:$0xff]
    %v3467 = vld [vmem:[#allocation10 + $0xe0] sm:$0xff]
    %v3468 = vld [vmem:[#allocation10 + $0xe8] sm:$0xff]
    %v3469 = vld [vmem:[#allocation10 + $0xf0] sm:$0xff]
    %v3470 = vld [vmem:[#allocation10 + $0xf8] sm:$0xff]
    %v3472 = vsel %vm454, %v2897, 0
    %v3475 = vsel %vm454, %v2973, 0
    %v3478 = vsel %vm454, %v3049, 0
    %v3481 = vsel %vm454, %v3125, 0
    %3483 = vmatprep.subr.mxu0 %v3464
    %3484 = vmatpush1.msra.mxu0 %v3463
    %3485 = vmatprep.subr.mxu0 %v3466
    %3486 = vmatpush1.msra.mxu0 %v3465
    %3487 = vmatprep.subr.mxu0 %v3468
    %3488 = vmatpush1.msra.mxu0 %v3467
    %3489 = vmatprep.subr.mxu0 %v3470
    %3490 = vmatpush1.msra.mxu0 %v3469
    %3491 = vmatprep.subr.mxu0 0.0
    %3492 = vmatpush1.msra.mxu0 0.0
    %3493 = vmatprep.subr.mxu0 0.0
    %3494 = vmatpush1.msra.mxu0 0.0
    %3495 = vmatprep.subr.mxu0 0.0
    %3496 = vmatpush1.msra.mxu0 0.0
    %3497 = vmatprep.subr.mxu0 0.0
    %3498 = vmatpush1.msra.mxu0 0.0
    %3499 = vmatprep.subr.mxu0 0.0
    %3500 = vmatpush1.msra.mxu0 0.0
    %3501 = vmatprep.subr.mxu0 0.0
    %3502 = vmatpush1.msra.mxu0 0.0
    %3503 = vmatprep.subr.mxu0 0.0
    %3504 = vmatpush1.msra.mxu0 0.0
    %3505 = vmatprep.subr.mxu0 0.0
    %3506 = vmatpush1.msra.mxu0 0.0
    %3507 = vmatprep.subr.mxu0 0.0
    %3508 = vmatpush1.msra.mxu0 0.0
    %3509 = vmatprep.subr.mxu0 0.0
    %3510 = vmatpush1.msra.mxu0 0.0
    %3511 = vmatprep.subr.mxu0 0.0
    %3512 = vmatpush1.msra.mxu0 0.0
    %3513 = vmatprep.subr.mxu0 0.0
    %3514 = vmatpush1.msra.mxu0 0.0
    %3515 = vmatprep.subr.mxu0 0.0
    %3516 = vmatpush1.msra.mxu0 0.0
    %3517 = vmatprep.subr.mxu0 0.0
    %3518 = vmatpush1.msra.mxu0 0.0
    %3519 = vmatprep.subr.mxu0 0.0
    %3520 = vmatpush1.msra.mxu0 0.0
    %3521 = vmatprep.subr.mxu0 0.0
    %3522 = vmatpush1.msra.mxu0 0.0
    %3523 = vmatprep.subr.mxu0 0.0
    %3524 = vmatpush1.msra.mxu0 0.0
    %3525 = vmatprep.subr.mxu0 0.0
    %3526 = vmatpush1.msra.mxu0 0.0
    %3527 = vmatprep.subr.mxu0 0.0
    %3528 = vmatpush1.msra.mxu0 0.0
    %3529 = vmatprep.subr.mxu0 0.0
    %3530 = vmatpush1.msra.mxu0 0.0
    %3531 = vmatprep.subr.mxu0 0.0
    %3532 = vmatpush1.msra.mxu0 0.0
    %3533 = vmatprep.subr.mxu0 0.0
    %3534 = vmatpush1.msra.mxu0 0.0
    %3535 = vmatprep.subr.mxu0 0.0
    %3536 = vmatpush1.msra.mxu0 0.0
    %3537 = vmatprep.subr.mxu0 0.0
    %3538 = vmatpush1.msra.mxu0 0.0
    %3539 = vmatprep.subr.mxu0 0.0
    %3540 = vmatpush1.msra.mxu0 0.0
    %3541 = vmatprep.subr.mxu0 0.0
    %3542 = vmatpush1.msra.mxu0 0.0
    %3543 = vmatprep.subr.mxu0 0.0
    %3544 = vmatpush1.msra.mxu0 0.0
    %3545 = vmatprep.subr.mxu0 0.0
    %3546 = vmatpush1.msra.mxu0 0.0
    %3547 = vmatprep.mubr.f32.mxu0 0.0
    %3548 = vmatmul.mubr.f32.gmra.mrb[0].mxu0 %v3472
    %v3549 = vpop.f32.mrb[0].mxu0
    %v3550 = vadd.f32 0.0, %v3549
    %v3551 = vpop.f32.mrb[0].mxu0
    %v3552 = vadd.f32 0.0, %v3551
    %3553 = vmatprep.mubr.f32.mxu0 0.0
    %3554 = vmatmul.mubr.f32.gmra.mrb[0].mxu0 %v3475
    %v3555 = vpop.f32.mrb[0].mxu0
    %v3556 = vadd.f32 0.0, %v3555
    %v3557 = vpop.f32.mrb[0].mxu0
    %v3558 = vadd.f32 0.0, %v3557
    %3559 = vmatprep.mubr.f32.mxu0 0.0
    %3560 = vmatmul.mubr.f32.gmra.mrb[0].mxu0 %v3478
    %v3561 = vpop.f32.mrb[0].mxu0
    %v3562 = vadd.f32 0.0, %v3561
    %v3563 = vpop.f32.mrb[0].mxu0
    %v3564 = vadd.f32 0.0, %v3563
    %3565 = vmatprep.mubr.f32.mxu0 0.0
    %3566 = vmatmul.mubr.f32.gmra.mrb[0].mxu0 %v3481
    %v3567 = vpop.f32.mrb[0].mxu0
    %v3568 = vadd.f32 0.0, %v3567
    %v3569 = vpop.f32.mrb[0].mxu0
    %v3570 = vadd.f32 0.0, %v3569
    %3571 = vdwg.mxu0
    %v3572 = vadd.f32 %v3455, %v3550
    %v3573 = vadd.f32 %v3456, %v3552
    %v3574 = vadd.f32 %v3457, %v3556
    %v3575 = vadd.f32 %v3458, %v3558
    %v3576 = vadd.f32 %v3459, %v3562
    %v3577 = vadd.f32 %v3460, %v3564
    %v3578 = vadd.f32 %v3461, %v3568
    %v3579 = vadd.f32 %v3462, %v3570
    %v3581 = vsel %vm454, %v450, 0
    %v3584 = vsel %vm454, %v3572, 0
    %3586 = vmatprep.subr.mxu0 0.0
    %3587 = vmatpush1.xpose.msra.mxu0 %v3584
    %3588 = vmatprep.subr.mxu0 0.0
    %3589 = vmatpush1.xpose.msra.mxu0 0.0
    %3590 = vmatprep.subr.mxu0 0.0
    %3591 = vmatpush1.xpose.msra.mxu0 0.0
    %3592 = vmatprep.subr.mxu0 0.0
    %3593 = vmatpush1.xpose.msra.mxu0 0.0
    %3594 = vmatprep.subr.mxu0 0.0
    %3595 = vmatpush1.xpose.msra.mxu0 0.0
    %3596 = vmatprep.subr.mxu0 0.0
    %3597 = vmatpush1.xpose.msra.mxu0 0.0
    %3598 = vmatprep.subr.mxu0 0.0
    %3599 = vmatpush1.xpose.msra.mxu0 0.0
    %3600 = vmatprep.subr.mxu0 0.0
    %3601 = vmatpush1.xpose.msra.mxu0 0.0
    %3602 = vmatprep.subr.mxu0 0.0
    %3603 = vmatpush1.xpose.msra.mxu0 0.0
    %3604 = vmatprep.subr.mxu0 0.0
    %3605 = vmatpush1.xpose.msra.mxu0 0.0
    %3606 = vmatprep.subr.mxu0 0.0
    %3607 = vmatpush1.xpose.msra.mxu0 0.0
    %3608 = vmatprep.subr.mxu0 0.0
    %3609 = vmatpush1.xpose.msra.mxu0 0.0
    %3610 = vmatprep.subr.mxu0 0.0
    %3611 = vmatpush1.xpose.msra.mxu0 0.0
    %3612 = vmatprep.subr.mxu0 0.0
    %3613 = vmatpush1.xpose.msra.mxu0 0.0
    %3614 = vmatprep.subr.mxu0 0.0
    %3615 = vmatpush1.xpose.msra.mxu0 0.0
    %3616 = vmatprep.subr.mxu0 0.0
    %3617 = vmatpush1.xpose.msra.mxu0 0.0
    %3618 = vmatprep.subr.mxu0 0.0
    %3619 = vmatpush1.xpose.msra.mxu0 0.0
    %3620 = vmatprep.subr.mxu0 0.0
    %3621 = vmatpush1.xpose.msra.mxu0 0.0
    %3622 = vmatprep.subr.mxu0 0.0
    %3623 = vmatpush1.xpose.msra.mxu0 0.0
    %3624 = vmatprep.subr.mxu0 0.0
    %3625 = vmatpush1.xpose.msra.mxu0 0.0
    %3626 = vmatprep.subr.mxu0 0.0
    %3627 = vmatpush1.xpose.msra.mxu0 0.0
    %3628 = vmatprep.subr.mxu0 0.0
    %3629 = vmatpush1.xpose.msra.mxu0 0.0
    %3630 = vmatprep.subr.mxu0 0.0
    %3631 = vmatpush1.xpose.msra.mxu0 0.0
    %3632 = vmatprep.subr.mxu0 0.0
    %3633 = vmatpush1.xpose.msra.mxu0 0.0
    %3634 = vmatprep.subr.mxu0 0.0
    %3635 = vmatpush1.xpose.msra.mxu0 0.0
    %3636 = vmatprep.subr.mxu0 0.0
    %3637 = vmatpush1.xpose.msra.mxu0 0.0
    %3638 = vmatprep.subr.mxu0 0.0
    %3639 = vmatpush1.xpose.msra.mxu0 0.0
    %3640 = vmatprep.subr.mxu0 0.0
    %3641 = vmatpush1.xpose.msra.mxu0 0.0
    %3642 = vmatprep.subr.mxu0 0.0
    %3643 = vmatpush1.xpose.msra.mxu0 0.0
    %3644 = vmatprep.subr.mxu0 0.0
    %3645 = vmatpush1.xpose.msra.mxu0 0.0
    %3646 = vmatprep.subr.mxu0 0.0
    %3647 = vmatpush1.xpose.msra.mxu0 0.0
    %3648 = vmatprep.subr.mxu0 0.0
    %3649 = vmatpush1.xpose.msra.mxu0 0.0
    %3650 = vmatprep.mubr.f32.mxu0 0.0
    %3651 = vmatmul.mubr.f32.gmra.mrb[0].mxu0 %v3581
    %v3652 = vpop.f32.mrb[0].mxu0
    %v3653 = vadd.f32 0.0, %v3652
    %v3654 = vpop.f32.mrb[0].mxu0
    %3655 = vdwg.mxu0
    %v3657 = vsel %vm454, %v451, 0
    %v3660 = vsel %vm454, %v3574, 0
    %3662 = vmatprep.subr.mxu0 0.0
    %3663 = vmatpush1.xpose.msra.mxu0 %v3660
    %3664 = vmatprep.subr.mxu0 0.0
    %3665 = vmatpush1.xpose.msra.mxu0 0.0
    %3666 = vmatprep.subr.mxu0 0.0
    %3667 = vmatpush1.xpose.msra.mxu0 0.0
    %3668 = vmatprep.subr.mxu0 0.0
    %3669 = vmatpush1.xpose.msra.mxu0 0.0
    %3670 = vmatprep.subr.mxu0 0.0
    %3671 = vmatpush1.xpose.msra.mxu0 0.0
    %3672 = vmatprep.subr.mxu0 0.0
    %3673 = vmatpush1.xpose.msra.mxu0 0.0
    %3674 = vmatprep.subr.mxu0 0.0
    %3675 = vmatpush1.xpose.msra.mxu0 0.0
    %3676 = vmatprep.subr.mxu0 0.0
    %3677 = vmatpush1.xpose.msra.mxu0 0.0
    %3678 = vmatprep.subr.mxu0 0.0
    %3679 = vmatpush1.xpose.msra.mxu0 0.0
    %3680 = vmatprep.subr.mxu0 0.0
    %3681 = vmatpush1.xpose.msra.mxu0 0.0
    %3682 = vmatprep.subr.mxu0 0.0
    %3683 = vmatpush1.xpose.msra.mxu0 0.0
    %3684 = vmatprep.subr.mxu0 0.0
    %3685 = vmatpush1.xpose.msra.mxu0 0.0
    %3686 = vmatprep.subr.mxu0 0.0
    %3687 = vmatpush1.xpose.msra.mxu0 0.0
    %3688 = vmatprep.subr.mxu0 0.0
    %3689 = vmatpush1.xpose.msra.mxu0 0.0
    %3690 = vmatprep.subr.mxu0 0.0
    %3691 = vmatpush1.xpose.msra.mxu0 0.0
    %3692 = vmatprep.subr.mxu0 0.0
    %3693 = vmatpush1.xpose.msra.mxu0 0.0
    %3694 = vmatprep.subr.mxu0 0.0
    %3695 = vmatpush1.xpose.msra.mxu0 0.0
    %3696 = vmatprep.subr.mxu0 0.0
    %3697 = vmatpush1.xpose.msra.mxu0 0.0
    %3698 = vmatprep.subr.mxu0 0.0
    %3699 = vmatpush1.xpose.msra.mxu0 0.0
    %3700 = vmatprep.subr.mxu0 0.0
    %3701 = vmatpush1.xpose.msra.mxu0 0.0
    %3702 = vmatprep.subr.mxu0 0.0
    %3703 = vmatpush1.xpose.msra.mxu0 0.0
    %3704 = vmatprep.subr.mxu0 0.0
    %3705 = vmatpush1.xpose.msra.mxu0 0.0
    %3706 = vmatprep.subr.mxu0 0.0
    %3707 = vmatpush1.xpose.msra.mxu0 0.0
    %3708 = vmatprep.subr.mxu0 0.0
    %3709 = vmatpush1.xpose.msra.mxu0 0.0
    %3710 = vmatprep.subr.mxu0 0.0
    %3711 = vmatpush1.xpose.msra.mxu0 0.0
    %3712 = vmatprep.subr.mxu0 0.0
    %3713 = vmatpush1.xpose.msra.mxu0 0.0
    %3714 = vmatprep.subr.mxu0 0.0
    %3715 = vmatpush1.xpose.msra.mxu0 0.0
    %3716 = vmatprep.subr.mxu0 0.0
    %3717 = vmatpush1.xpose.msra.mxu0 0.0
    %3718 = vmatprep.subr.mxu0 0.0
    %3719 = vmatpush1.xpose.msra.mxu0 0.0
    %3720 = vmatprep.subr.mxu0 0.0
    %3721 = vmatpush1.xpose.msra.mxu0 0.0
    %3722 = vmatprep.subr.mxu0 0.0
    %3723 = vmatpush1.xpose.msra.mxu0 0.0
    %3724 = vmatprep.subr.mxu0 0.0
    %3725 = vmatpush1.xpose.msra.mxu0 0.0
    %3726 = vmatprep.mubr.f32.mxu0 0.0
    %3727 = vmatmul.mubr.f32.gmra.mrb[0].mxu0 %v3657
    %v3728 = vpop.f32.mrb[0].mxu0
    %v3729 = vadd.f32 0.0, %v3728
    %v3730 = vpop.f32.mrb[0].mxu0
    %3731 = vdwg.mxu0
    %v3733 = vsel %vm454, %v452, 0
    %v3736 = vsel %vm454, %v3576, 0
    %3738 = vmatprep.subr.mxu0 0.0
    %3739 = vmatpush1.xpose.msra.mxu0 %v3736
    %3740 = vmatprep.subr.mxu0 0.0
    %3741 = vmatpush1.xpose.msra.mxu0 0.0
    %3742 = vmatprep.subr.mxu0 0.0
    %3743 = vmatpush1.xpose.msra.mxu0 0.0
    %3744 = vmatprep.subr.mxu0 0.0
    %3745 = vmatpush1.xpose.msra.mxu0 0.0
    %3746 = vmatprep.subr.mxu0 0.0
    %3747 = vmatpush1.xpose.msra.mxu0 0.0
    %3748 = vmatprep.subr.mxu0 0.0
    %3749 = vmatpush1.xpose.msra.mxu0 0.0
    %3750 = vmatprep.subr.mxu0 0.0
    %3751 = vmatpush1.xpose.msra.mxu0 0.0
    %3752 = vmatprep.subr.mxu0 0.0
    %3753 = vmatpush1.xpose.msra.mxu0 0.0
    %3754 = vmatprep.subr.mxu0 0.0
    %3755 = vmatpush1.xpose.msra.mxu0 0.0
    %3756 = vmatprep.subr.mxu0 0.0
    %3757 = vmatpush1.xpose.msra.mxu0 0.0
    %3758 = vmatprep.subr.mxu0 0.0
    %3759 = vmatpush1.xpose.msra.mxu0 0.0
    %3760 = vmatprep.subr.mxu0 0.0
    %3761 = vmatpush1.xpose.msra.mxu0 0.0
    %3762 = vmatprep.subr.mxu0 0.0
    %3763 = vmatpush1.xpose.msra.mxu0 0.0
    %3764 = vmatprep.subr.mxu0 0.0
    %3765 = vmatpush1.xpose.msra.mxu0 0.0
    %3766 = vmatprep.subr.mxu0 0.0
    %3767 = vmatpush1.xpose.msra.mxu0 0.0
    %3768 = vmatprep.subr.mxu0 0.0
    %3769 = vmatpush1.xpose.msra.mxu0 0.0
    %3770 = vmatprep.subr.mxu0 0.0
    %3771 = vmatpush1.xpose.msra.mxu0 0.0
    %3772 = vmatprep.subr.mxu0 0.0
    %3773 = vmatpush1.xpose.msra.mxu0 0.0
    %3774 = vmatprep.subr.mxu0 0.0
    %3775 = vmatpush1.xpose.msra.mxu0 0.0
    %3776 = vmatprep.subr.mxu0 0.0
    %3777 = vmatpush1.xpose.msra.mxu0 0.0
    %3778 = vmatprep.subr.mxu0 0.0
    %3779 = vmatpush1.xpose.msra.mxu0 0.0
    %3780 = vmatprep.subr.mxu0 0.0
    %3781 = vmatpush1.xpose.msra.mxu0 0.0
    %3782 = vmatprep.subr.mxu0 0.0
    %3783 = vmatpush1.xpose.msra.mxu0 0.0
    %3784 = vmatprep.subr.mxu0 0.0
    %3785 = vmatpush1.xpose.msra.mxu0 0.0
    %3786 = vmatprep.subr.mxu0 0.0
    %3787 = vmatpush1.xpose.msra.mxu0 0.0
    %3788 = vmatprep.subr.mxu0 0.0
    %3789 = vmatpush1.xpose.msra.mxu0 0.0
    %3790 = vmatprep.subr.mxu0 0.0
    %3791 = vmatpush1.xpose.msra.mxu0 0.0
    %3792 = vmatprep.subr.mxu0 0.0
    %3793 = vmatpush1.xpose.msra.mxu0 0.0
    %3794 = vmatprep.subr.mxu0 0.0
    %3795 = vmatpush1.xpose.msra.mxu0 0.0
    %3796 = vmatprep.subr.mxu0 0.0
    %3797 = vmatpush1.xpose.msra.mxu0 0.0
    %3798 = vmatprep.subr.mxu0 0.0
    %3799 = vmatpush1.xpose.msra.mxu0 0.0
    %3800 = vmatprep.subr.mxu0 0.0
    %3801 = vmatpush1.xpose.msra.mxu0 0.0
    %3802 = vmatprep.mubr.f32.mxu0 0.0
    %3803 = vmatmul.mubr.f32.gmra.mrb[0].mxu0 %v3733
    %v3804 = vpop.f32.mrb[0].mxu0
    %v3805 = vadd.f32 0.0, %v3804
    %v3806 = vpop.f32.mrb[0].mxu0
    %3807 = vdwg.mxu0
    %v3809 = vsel %vm454, %v453, 0
    %v3812 = vsel %vm454, %v3578, 0
    %3814 = vmatprep.subr.mxu0 0.0
    %3815 = vmatpush1.xpose.msra.mxu0 %v3812
    %3816 = vmatprep.subr.mxu0 0.0
    %3817 = vmatpush1.xpose.msra.mxu0 0.0
    %3818 = vmatprep.subr.mxu0 0.0
    %3819 = vmatpush1.xpose.msra.mxu0 0.0
    %3820 = vmatprep.subr.mxu0 0.0
    %3821 = vmatpush1.xpose.msra.mxu0 0.0
    %3822 = vmatprep.subr.mxu0 0.0
    %3823 = vmatpush1.xpose.msra.mxu0 0.0
    %3824 = vmatprep.subr.mxu0 0.0
    %3825 = vmatpush1.xpose.msra.mxu0 0.0
    %3826 = vmatprep.subr.mxu0 0.0
    %3827 = vmatpush1.xpose.msra.mxu0 0.0
    %3828 = vmatprep.subr.mxu0 0.0
    %3829 = vmatpush1.xpose.msra.mxu0 0.0
    %3830 = vmatprep.subr.mxu0 0.0
    %3831 = vmatpush1.xpose.msra.mxu0 0.0
    %3832 = vmatprep.subr.mxu0 0.0
    %3833 = vmatpush1.xpose.msra.mxu0 0.0
    %3834 = vmatprep.subr.mxu0 0.0
    %3835 = vmatpush1.xpose.msra.mxu0 0.0
    %3836 = vmatprep.subr.mxu0 0.0
    %3837 = vmatpush1.xpose.msra.mxu0 0.0
    %3838 = vmatprep.subr.mxu0 0.0
    %3839 = vmatpush1.xpose.msra.mxu0 0.0
    %3840 = vmatprep.subr.mxu0 0.0
    %3841 = vmatpush1.xpose.msra.mxu0 0.0
    %3842 = vmatprep.subr.mxu0 0.0
    %3843 = vmatpush1.xpose.msra.mxu0 0.0
    %3844 = vmatprep.subr.mxu0 0.0
    %3845 = vmatpush1.xpose.msra.mxu0 0.0
    %3846 = vmatprep.subr.mxu0 0.0
    %3847 = vmatpush1.xpose.msra.mxu0 0.0
    %3848 = vmatprep.subr.mxu0 0.0
    %3849 = vmatpush1.xpose.msra.mxu0 0.0
    %3850 = vmatprep.subr.mxu0 0.0
    %3851 = vmatpush1.xpose.msra.mxu0 0.0
    %3852 = vmatprep.subr.mxu0 0.0
    %3853 = vmatpush1.xpose.msra.mxu0 0.0
    %3854 = vmatprep.subr.mxu0 0.0
    %3855 = vmatpush1.xpose.msra.mxu0 0.0
    %3856 = vmatprep.subr.mxu0 0.0
    %3857 = vmatpush1.xpose.msra.mxu0 0.0
    %3858 = vmatprep.subr.mxu0 0.0
    %3859 = vmatpush1.xpose.msra.mxu0 0.0
    %3860 = vmatprep.subr.mxu0 0.0
    %3861 = vmatpush1.xpose.msra.mxu0 0.0
    %3862 = vmatprep.subr.mxu0 0.0
    %3863 = vmatpush1.xpose.msra.mxu0 0.0
    %3864 = vmatprep.subr.mxu0 0.0
    %3865 = vmatpush1.xpose.msra.mxu0 0.0
    %3866 = vmatprep.subr.mxu0 0.0
    %3867 = vmatpush1.xpose.msra.mxu0 0.0
    %3868 = vmatprep.subr.mxu0 0.0
    %3869 = vmatpush1.xpose.msra.mxu0 0.0
    %3870 = vmatprep.subr.mxu0 0.0
    %3871 = vmatpush1.xpose.msra.mxu0 0.0
    %3872 = vmatprep.subr.mxu0 0.0
    %3873 = vmatpush1.xpose.msra.mxu0 0.0
    %3874 = vmatprep.subr.mxu0 0.0
    %3875 = vmatpush1.xpose.msra.mxu0 0.0
    %3876 = vmatprep.subr.mxu0 0.0
    %3877 = vmatpush1.xpose.msra.mxu0 0.0
    %3878 = vmatprep.mubr.f32.mxu0 0.0
    %3879 = vmatmul.mubr.f32.gmra.mrb[0].mxu0 %v3809
    %v3880 = vpop.f32.mrb[0].mxu0
    %v3881 = vadd.f32 0.0, %v3880
    %v3882 = vpop.f32.mrb[0].mxu0
    %3883 = vdwg.mxu0
    %v3884 = vsel %vm759, %v3653, -inf
    %3885 = vmax.xlane.f32.xlu0 %v3884
    %v3886 = vpop.xlane.xlu0 %3885
    %v3887 = vsel %vm759, %v3729, -inf
    %3888 = vmax.xlane.f32.xlu0 %v3887
    %v3889 = vpop.xlane.xlu0 %3888
    %v3890 = vsel %vm759, %v3805, -inf
    %3891 = vmax.xlane.f32.xlu0 %v3890
    %v3892 = vpop.xlane.xlu0 %3891
    %v3893 = vsel %vm759, %v3881, -inf
    %3894 = vmax.xlane.f32.xlu0 %v3893
    %v3895 = vpop.xlane.xlu0 %3894
    %v3896 = vsub.f32 %v3653, %v3886
    %v3897 = vsub.f32 %v3729, %v3889
    %v3898 = vsub.f32 %v3805, %v3892
    %v3899 = vsub.f32 %v3881, %v3895
    %v3900 = vmul.f32 %v3896, 1.442695
    %v3901 = vpow.pop %v3900
    %v3902 = vmul.f32 %v3897, 1.442695
    %v3903 = vpow.pop %v3902
    %v3904 = vmul.f32 %v3898, 1.442695
    %v3905 = vpow.pop %v3904
    %v3906 = vmul.f32 %v3899, 1.442695
    %v3907 = vpow.pop %v3906
    %v3908 = vsel %vm759, %v3901, 0.0
    %3909 = vadd.xlane.f32.xlu0 %v3908
    %v3910 = vpop.xlane.xlu0 %3909
    %v3911 = vsel %vm759, %v3903, 0.0
    %3912 = vadd.xlane.f32.xlu0 %v3911
    %v3913 = vpop.xlane.xlu0 %3912
    %v3914 = vsel %vm759, %v3905, 0.0
    %3915 = vadd.xlane.f32.xlu0 %v3914
    %v3916 = vpop.xlane.xlu0 %3915
    %v3917 = vsel %vm759, %v3907, 0.0
    %3918 = vadd.xlane.f32.xlu0 %v3917
    %v3919 = vpop.xlane.xlu0 %3918
    %v3920 = vrcp.pop %v3910
    %v3921 = vrcp.pop %v3913
    %v3922 = vrcp.pop %v3916
    %v3923 = vrcp.pop %v3919
    %v3924 = vmul.f32 %v3910, %v3920
    %v3925 = vmul.f32 %v3913, %v3921
    %v3926 = vmul.f32 %v3916, %v3922
    %v3927 = vmul.f32 %v3919, %v3923
    %v3928 = vsub.f32 2.0, %v3924
    %v3929 = vsub.f32 2.0, %v3925
    %v3930 = vsub.f32 2.0, %v3926
    %v3931 = vsub.f32 2.0, %v3927
    %v3932 = vmul.f32 %v3920, %v3928
    %v3933 = vmul.f32 %v3921, %v3929
    %v3934 = vmul.f32 %v3922, %v3930
    %v3935 = vmul.f32 %v3923, %v3931
    %v3936 = vmul.f32 %v3901, %v3932
    %v3937 = vmul.f32 %v3903, %v3933
    %v3938 = vmul.f32 %v3905, %v3934
    %v3939 = vmul.f32 %v3907, %v3935
    %v3941 = vsel %vm759, %v3936, 0
    %3943 = vmatprep.subr.mxu0 0.0
    %3944 = vmatpush1.msra.mxu0 %v3573
    %3945 = vmatprep.subr.mxu0 0.0
    %3946 = vmatpush1.msra.mxu0 0.0
    %3947 = vmatprep.subr.mxu0 0.0
    %3948 = vmatpush1.msra.mxu0 0.0
    %3949 = vmatprep.subr.mxu0 0.0
    %3950 = vmatpush1.msra.mxu0 0.0
    %3951 = vmatprep.subr.mxu0 0.0
    %3952 = vmatpush1.msra.mxu0 0.0
    %3953 = vmatprep.subr.mxu0 0.0
    %3954 = vmatpush1.msra.mxu0 0.0
    %3955 = vmatprep.subr.mxu0 0.0
    %3956 = vmatpush1.msra.mxu0 0.0
    %3957 = vmatprep.subr.mxu0 0.0
    %3958 = vmatpush1.msra.mxu0 0.0
    %3959 = vmatprep.subr.mxu0 0.0
    %3960 = vmatpush1.msra.mxu0 0.0
    %3961 = vmatprep.subr.mxu0 0.0
    %3962 = vmatpush1.msra.mxu0 0.0
    %3963 = vmatprep.subr.mxu0 0.0
    %3964 = vmatpush1.msra.mxu0 0.0
    %3965 = vmatprep.subr.mxu0 0.0
    %3966 = vmatpush1.msra.mxu0 0.0
    %3967 = vmatprep.subr.mxu0 0.0
    %3968 = vmatpush1.msra.mxu0 0.0
    %3969 = vmatprep.subr.mxu0 0.0
    %3970 = vmatpush1.msra.mxu0 0.0
    %3971 = vmatprep.subr.mxu0 0.0
    %3972 = vmatpush1.msra.mxu0 0.0
    %3973 = vmatprep.subr.mxu0 0.0
    %3974 = vmatpush1.msra.mxu0 0.0
    %3975 = vmatprep.subr.mxu0 0.0
    %3976 = vmatpush1.msra.mxu0 0.0
    %3977 = vmatprep.subr.mxu0 0.0
    %3978 = vmatpush1.msra.mxu0 0.0
    %3979 = vmatprep.subr.mxu0 0.0
    %3980 = vmatpush1.msra.mxu0 0.0
    %3981 = vmatprep.subr.mxu0 0.0
    %3982 = vmatpush1.msra.mxu0 0.0
    %3983 = vmatprep.subr.mxu0 0.0
    %3984 = vmatpush1.msra.mxu0 0.0
    %3985 = vmatprep.subr.mxu0 0.0
    %3986 = vmatpush1.msra.mxu0 0.0
    %3987 = vmatprep.subr.mxu0 0.0
    %3988 = vmatpush1.msra.mxu0 0.0
    %3989 = vmatprep.subr.mxu0 0.0
    %3990 = vmatpush1.msra.mxu0 0.0
    %3991 = vmatprep.subr.mxu0 0.0
    %3992 = vmatpush1.msra.mxu0 0.0
    %3993 = vmatprep.subr.mxu0 0.0
    %3994 = vmatpush1.msra.mxu0 0.0
    %3995 = vmatprep.subr.mxu0 0.0
    %3996 = vmatpush1.msra.mxu0 0.0
    %3997 = vmatprep.subr.mxu0 0.0
    %3998 = vmatpush1.msra.mxu0 0.0
    %3999 = vmatprep.subr.mxu0 0.0
    %4000 = vmatpush1.msra.mxu0 0.0
    %4001 = vmatprep.subr.mxu0 0.0
    %4002 = vmatpush1.msra.mxu0 0.0
    %4003 = vmatprep.subr.mxu0 0.0
    %4004 = vmatpush1.msra.mxu0 0.0
    %4005 = vmatprep.subr.mxu0 0.0
    %4006 = vmatpush1.msra.mxu0 0.0
    %4007 = vmatprep.mubr.f32.mxu0 0.0
    %4008 = vmatmul.mubr.f32.gmra.mrb[0].mxu0 %v3941
    %v4009 = vpop.f32.mrb[0].mxu0
    %v4010 = vadd.f32 0.0, %v4009
    %v4011 = vpop.f32.mrb[0].mxu0
    %4012 = vdwg.mxu0
    %v4014 = vsel %vm759, %v3937, 0
    %4016 = vmatprep.subr.mxu0 0.0
    %4017 = vmatpush1.msra.mxu0 %v3575
    %4018 = vmatprep.subr.mxu0 0.0
    %4019 = vmatpush1.msra.mxu0 0.0
    %4020 = vmatprep.subr.mxu0 0.0
    %4021 = vmatpush1.msra.mxu0 0.0
    %4022 = vmatprep.subr.mxu0 0.0
    %4023 = vmatpush1.msra.mxu0 0.0
    %4024 = vmatprep.subr.mxu0 0.0
    %4025 = vmatpush1.msra.mxu0 0.0
    %4026 = vmatprep.subr.mxu0 0.0
    %4027 = vmatpush1.msra.mxu0 0.0
    %4028 = vmatprep.subr.mxu0 0.0
    %4029 = vmatpush1.msra.mxu0 0.0
    %4030 = vmatprep.subr.mxu0 0.0
    %4031 = vmatpush1.msra.mxu0 0.0
    %4032 = vmatprep.subr.mxu0 0.0
    %4033 = vmatpush1.msra.mxu0 0.0
    %4034 = vmatprep.subr.mxu0 0.0
    %4035 = vmatpush1.msra.mxu0 0.0
    %4036 = vmatprep.subr.mxu0 0.0
    %4037 = vmatpush1.msra.mxu0 0.0
    %4038 = vmatprep.subr.mxu0 0.0
    %4039 = vmatpush1.msra.mxu0 0.0
    %4040 = vmatprep.subr.mxu0 0.0
    %4041 = vmatpush1.msra.mxu0 0.0
    %4042 = vmatprep.subr.mxu0 0.0
    %4043 = vmatpush1.msra.mxu0 0.0
    %4044 = vmatprep.subr.mxu0 0.0
    %4045 = vmatpush1.msra.mxu0 0.0
    %4046 = vmatprep.subr.mxu0 0.0
    %4047 = vmatpush1.msra.mxu0 0.0
    %4048 = vmatprep.subr.mxu0 0.0
    %4049 = vmatpush1.msra.mxu0 0.0
    %4050 = vmatprep.subr.mxu0 0.0
    %4051 = vmatpush1.msra.mxu0 0.0
    %4052 = vmatprep.subr.mxu0 0.0
    %4053 = vmatpush1.msra.mxu0 0.0
    %4054 = vmatprep.subr.mxu0 0.0
    %4055 = vmatpush1.msra.mxu0 0.0
    %4056 = vmatprep.subr.mxu0 0.0
    %4057 = vmatpush1.msra.mxu0 0.0
    %4058 = vmatprep.subr.mxu0 0.0
    %4059 = vmatpush1.msra.mxu0 0.0
    %4060 = vmatprep.subr.mxu0 0.0
    %4061 = vmatpush1.msra.mxu0 0.0
    %4062 = vmatprep.subr.mxu0 0.0
    %4063 = vmatpush1.msra.mxu0 0.0
    %4064 = vmatprep.subr.mxu0 0.0
    %4065 = vmatpush1.msra.mxu0 0.0
    %4066 = vmatprep.subr.mxu0 0.0
    %4067 = vmatpush1.msra.mxu0 0.0
    %4068 = vmatprep.subr.mxu0 0.0
    %4069 = vmatpush1.msra.mxu0 0.0
    %4070 = vmatprep.subr.mxu0 0.0
    %4071 = vmatpush1.msra.mxu0 0.0
    %4072 = vmatprep.subr.mxu0 0.0
    %4073 = vmatpush1.msra.mxu0 0.0
    %4074 = vmatprep.subr.mxu0 0.0
    %4075 = vmatpush1.msra.mxu0 0.0
    %4076 = vmatprep.subr.mxu0 0.0
    %4077 = vmatpush1.msra.mxu0 0.0
    %4078 = vmatprep.subr.mxu0 0.0
    %4079 = vmatpush1.msra.mxu0 0.0
    %4080 = vmatprep.mubr.f32.mxu0 0.0
    %4081 = vmatmul.mubr.f32.gmra.mrb[0].mxu0 %v4014
    %v4082 = vpop.f32.mrb[0].mxu0
    %v4083 = vadd.f32 0.0, %v4082
    %v4084 = vpop.f32.mrb[0].mxu0
    %4085 = vdwg.mxu0
    %v4087 = vsel %vm759, %v3938, 0
    %4089 = vmatprep.subr.mxu0 0.0
    %4090 = vmatpush1.msra.mxu0 %v3577
    %4091 = vmatprep.subr.mxu0 0.0
    %4092 = vmatpush1.msra.mxu0 0.0
    %4093 = vmatprep.subr.mxu0 0.0
    %4094 = vmatpush1.msra.mxu0 0.0
    %4095 = vmatprep.subr.mxu0 0.0
    %4096 = vmatpush1.msra.mxu0 0.0
    %4097 = vmatprep.subr.mxu0 0.0
    %4098 = vmatpush1.msra.mxu0 0.0
    %4099 = vmatprep.subr.mxu0 0.0
    %4100 = vmatpush1.msra.mxu0 0.0
    %4101 = vmatprep.subr.mxu0 0.0
    %4102 = vmatpush1.msra.mxu0 0.0
    %4103 = vmatprep.subr.mxu0 0.0
    %4104 = vmatpush1.msra.mxu0 0.0
    %4105 = vmatprep.subr.mxu0 0.0
    %4106 = vmatpush1.msra.mxu0 0.0
    %4107 = vmatprep.subr.mxu0 0.0
    %4108 = vmatpush1.msra.mxu0 0.0
    %4109 = vmatprep.subr.mxu0 0.0
    %4110 = vmatpush1.msra.mxu0 0.0
    %4111 = vmatprep.subr.mxu0 0.0
    %4112 = vmatpush1.msra.mxu0 0.0
    %4113 = vmatprep.subr.mxu0 0.0
    %4114 = vmatpush1.msra.mxu0 0.0
    %4115 = vmatprep.subr.mxu0 0.0
    %4116 = vmatpush1.msra.mxu0 0.0
    %4117 = vmatprep.subr.mxu0 0.0
    %4118 = vmatpush1.msra.mxu0 0.0
    %4119 = vmatprep.subr.mxu0 0.0
    %4120 = vmatpush1.msra.mxu0 0.0
    %4121 = vmatprep.subr.mxu0 0.0
    %4122 = vmatpush1.msra.mxu0 0.0
    %4123 = vmatprep.subr.mxu0 0.0
    %4124 = vmatpush1.msra.mxu0 0.0
    %4125 = vmatprep.subr.mxu0 0.0
    %4126 = vmatpush1.msra.mxu0 0.0
    %4127 = vmatprep.subr.mxu0 0.0
    %4128 = vmatpush1.msra.mxu0 0.0
    %4129 = vmatprep.subr.mxu0 0.0
    %4130 = vmatpush1.msra.mxu0 0.0
    %4131 = vmatprep.subr.mxu0 0.0
    %4132 = vmatpush1.msra.mxu0 0.0
    %4133 = vmatprep.subr.mxu0 0.0
    %4134 = vmatpush1.msra.mxu0 0.0
    %4135 = vmatprep.subr.mxu0 0.0
    %4136 = vmatpush1.msra.mxu0 0.0
    %4137 = vmatprep.subr.mxu0 0.0
    %4138 = vmatpush1.msra.mxu0 0.0
    %4139 = vmatprep.subr.mxu0 0.0
    %4140 = vmatpush1.msra.mxu0 0.0
    %4141 = vmatprep.subr.mxu0 0.0
    %4142 = vmatpush1.msra.mxu0 0.0
    %4143 = vmatprep.subr.mxu0 0.0
    %4144 = vmatpush1.msra.mxu0 0.0
    %4145 = vmatprep.subr.mxu0 0.0
    %4146 = vmatpush1.msra.mxu0 0.0
    %4147 = vmatprep.subr.mxu0 0.0
    %4148 = vmatpush1.msra.mxu0 0.0
    %4149 = vmatprep.subr.mxu0 0.0
    %4150 = vmatpush1.msra.mxu0 0.0
    %4151 = vmatprep.subr.mxu0 0.0
    %4152 = vmatpush1.msra.mxu0 0.0
    %4153 = vmatprep.mubr.f32.mxu0 0.0
    %4154 = vmatmul.mubr.f32.gmra.mrb[0].mxu0 %v4087
    %v4155 = vpop.f32.mrb[0].mxu0
    %v4156 = vadd.f32 0.0, %v4155
    %v4157 = vpop.f32.mrb[0].mxu0
    %4158 = vdwg.mxu0
    %v4160 = vsel %vm759, %v3939, 0
    %4162 = vmatprep.subr.mxu0 0.0
    %4163 = vmatpush1.msra.mxu0 %v3579
    %4164 = vmatprep.subr.mxu0 0.0
    %4165 = vmatpush1.msra.mxu0 0.0
    %4166 = vmatprep.subr.mxu0 0.0
    %4167 = vmatpush1.msra.mxu0 0.0
    %4168 = vmatprep.subr.mxu0 0.0
    %4169 = vmatpush1.msra.mxu0 0.0
    %4170 = vmatprep.subr.mxu0 0.0
    %4171 = vmatpush1.msra.mxu0 0.0
    %4172 = vmatprep.subr.mxu0 0.0
    %4173 = vmatpush1.msra.mxu0 0.0
    %4174 = vmatprep.subr.mxu0 0.0
    %4175 = vmatpush1.msra.mxu0 0.0
    %4176 = vmatprep.subr.mxu0 0.0
    %4177 = vmatpush1.msra.mxu0 0.0
    %4178 = vmatprep.subr.mxu0 0.0
    %4179 = vmatpush1.msra.mxu0 0.0
    %4180 = vmatprep.subr.mxu0 0.0
    %4181 = vmatpush1.msra.mxu0 0.0
    %4182 = vmatprep.subr.mxu0 0.0
    %4183 = vmatpush1.msra.mxu0 0.0
    %4184 = vmatprep.subr.mxu0 0.0
    %4185 = vmatpush1.msra.mxu0 0.0
    %4186 = vmatprep.subr.mxu0 0.0
    %4187 = vmatpush1.msra.mxu0 0.0
    %4188 = vmatprep.subr.mxu0 0.0
    %4189 = vmatpush1.msra.mxu0 0.0
    %4190 = vmatprep.subr.mxu0 0.0
    %4191 = vmatpush1.msra.mxu0 0.0
    %4192 = vmatprep.subr.mxu0 0.0
    %4193 = vmatpush1.msra.mxu0 0.0
    %4194 = vmatprep.subr.mxu0 0.0
    %4195 = vmatpush1.msra.mxu0 0.0
    %4196 = vmatprep.subr.mxu0 0.0
    %4197 = vmatpush1.msra.mxu0 0.0
    %4198 = vmatprep.subr.mxu0 0.0
    %4199 = vmatpush1.msra.mxu0 0.0
    %4200 = vmatprep.subr.mxu0 0.0
    %4201 = vmatpush1.msra.mxu0 0.0
    %4202 = vmatprep.subr.mxu0 0.0
    %4203 = vmatpush1.msra.mxu0 0.0
    %4204 = vmatprep.subr.mxu0 0.0
    %4205 = vmatpush1.msra.mxu0 0.0
    %4206 = vmatprep.subr.mxu0 0.0
    %4207 = vmatpush1.msra.mxu0 0.0
    %4208 = vmatprep.subr.mxu0 0.0
    %4209 = vmatpush1.msra.mxu0 0.0
    %4210 = vmatprep.subr.mxu0 0.0
    %4211 = vmatpush1.msra.mxu0 0.0
    %4212 = vmatprep.subr.mxu0 0.0
    %4213 = vmatpush1.msra.mxu0 0.0
    %4214 = vmatprep.subr.mxu0 0.0
    %4215 = vmatpush1.msra.mxu0 0.0
    %4216 = vmatprep.subr.mxu0 0.0
    %4217 = vmatpush1.msra.mxu0 0.0
    %4218 = vmatprep.subr.mxu0 0.0
    %4219 = vmatpush1.msra.mxu0 0.0
    %4220 = vmatprep.subr.mxu0 0.0
    %4221 = vmatpush1.msra.mxu0 0.0
    %4222 = vmatprep.subr.mxu0 0.0
    %4223 = vmatpush1.msra.mxu0 0.0
    %4224 = vmatprep.subr.mxu0 0.0
    %4225 = vmatpush1.msra.mxu0 0.0
    %4226 = vmatprep.mubr.f32.mxu0 0.0
    %4227 = vmatmul.mubr.f32.gmra.mrb[0].mxu0 %v4160
    %v4228 = vpop.f32.mrb[0].mxu0
    %v4229 = vadd.f32 0.0, %v4228
    %v4230 = vpop.f32.mrb[0].mxu0
    %4231 = vdwg.mxu0
    %4232 = vrot.lane.b32.xlu0 %v450, 96
    %v4233 = vpop.permute.xlu0 %4232
    %4234 = vrot.lane.b32.xlu0 %v3572, 96
    %v4235 = vpop.permute.xlu0 %4234
    %v4236 = vsel %vm454, %v4233, 0
    %v4238 = vsel %vm454, %v4235, 0
    %4240 = vmatprep.subr.mxu0 0.0
    %4241 = vmatpush1.xpose.msra.mxu0 %v4238
    %4242 = vmatprep.subr.mxu0 0.0
    %4243 = vmatpush1.xpose.msra.mxu0 0.0
    %4244 = vmatprep.subr.mxu0 0.0
    %4245 = vmatpush1.xpose.msra.mxu0 0.0
    %4246 = vmatprep.subr.mxu0 0.0
    %4247 = vmatpush1.xpose.msra.mxu0 0.0
    %4248 = vmatprep.subr.mxu0 0.0
    %4249 = vmatpush1.xpose.msra.mxu0 0.0
    %4250 = vmatprep.subr.mxu0 0.0
    %4251 = vmatpush1.xpose.msra.mxu0 0.0
    %4252 = vmatprep.subr.mxu0 0.0
    %4253 = vmatpush1.xpose.msra.mxu0 0.0
    %4254 = vmatprep.subr.mxu0 0.0
    %4255 = vmatpush1.xpose.msra.mxu0 0.0
    %4256 = vmatprep.subr.mxu0 0.0
    %4257 = vmatpush1.xpose.msra.mxu0 0.0
    %4258 = vmatprep.subr.mxu0 0.0
    %4259 = vmatpush1.xpose.msra.mxu0 0.0
    %4260 = vmatprep.subr.mxu0 0.0
    %4261 = vmatpush1.xpose.msra.mxu0 0.0
    %4262 = vmatprep.subr.mxu0 0.0
    %4263 = vmatpush1.xpose.msra.mxu0 0.0
    %4264 = vmatprep.subr.mxu0 0.0
    %4265 = vmatpush1.xpose.msra.mxu0 0.0
    %4266 = vmatprep.subr.mxu0 0.0
    %4267 = vmatpush1.xpose.msra.mxu0 0.0
    %4268 = vmatprep.subr.mxu0 0.0
    %4269 = vmatpush1.xpose.msra.mxu0 0.0
    %4270 = vmatprep.subr.mxu0 0.0
    %4271 = vmatpush1.xpose.msra.mxu0 0.0
    %4272 = vmatprep.subr.mxu0 0.0
    %4273 = vmatpush1.xpose.msra.mxu0 0.0
    %4274 = vmatprep.subr.mxu0 0.0
    %4275 = vmatpush1.xpose.msra.mxu0 0.0
    %4276 = vmatprep.subr.mxu0 0.0
    %4277 = vmatpush1.xpose.msra.mxu0 0.0
    %4278 = vmatprep.subr.mxu0 0.0
    %4279 = vmatpush1.xpose.msra.mxu0 0.0
    %4280 = vmatprep.subr.mxu0 0.0
    %4281 = vmatpush1.xpose.msra.mxu0 0.0
    %4282 = vmatprep.subr.mxu0 0.0
    %4283 = vmatpush1.xpose.msra.mxu0 0.0
    %4284 = vmatprep.subr.mxu0 0.0
    %4285 = vmatpush1.xpose.msra.mxu0 0.0
    %4286 = vmatprep.subr.mxu0 0.0
    %4287 = vmatpush1.xpose.msra.mxu0 0.0
    %4288 = vmatprep.subr.mxu0 0.0
    %4289 = vmatpush1.xpose.msra.mxu0 0.0
    %4290 = vmatprep.subr.mxu0 0.0
    %4291 = vmatpush1.xpose.msra.mxu0 0.0
    %4292 = vmatprep.subr.mxu0 0.0
    %4293 = vmatpush1.xpose.msra.mxu0 0.0
    %4294 = vmatprep.subr.mxu0 0.0
    %4295 = vmatpush1.xpose.msra.mxu0 0.0
    %4296 = vmatprep.subr.mxu0 0.0
    %4297 = vmatpush1.xpose.msra.mxu0 0.0
    %4298 = vmatprep.subr.mxu0 0.0
    %4299 = vmatpush1.xpose.msra.mxu0 0.0
    %4300 = vmatprep.subr.mxu0 0.0
    %4301 = vmatpush1.xpose.msra.mxu0 0.0
    %4302 = vmatprep.subr.mxu0 0.0
    %4303 = vmatpush1.xpose.msra.mxu0 0.0
    %4304 = vmatprep.mubr.f32.mxu0 0.0
    %4305 = vmatmul.mubr.f32.gmra.mrb[0].mxu0 %v4236
    %v4306 = vpop.f32.mrb[0].mxu0
    %v4307 = vadd.f32 0.0, %v4306
    %v4308 = vpop.f32.mrb[0].mxu0
    %4309 = vdwg.mxu0
    %4310 = vrot.lane.b32.xlu0 %v451, 96
    %v4311 = vpop.permute.xlu0 %4310
    %4312 = vrot.lane.b32.xlu0 %v3574, 96
    %v4313 = vpop.permute.xlu0 %4312
    %v4314 = vsel %vm454, %v4311, 0
    %v4316 = vsel %vm454, %v4313, 0
    %4318 = vmatprep.subr.mxu0 0.0
    %4319 = vmatpush1.xpose.msra.mxu0 %v4316
    %4320 = vmatprep.subr.mxu0 0.0
    %4321 = vmatpush1.xpose.msra.mxu0 0.0
    %4322 = vmatprep.subr.mxu0 0.0
    %4323 = vmatpush1.xpose.msra.mxu0 0.0
    %4324 = vmatprep.subr.mxu0 0.0
    %4325 = vmatpush1.xpose.msra.mxu0 0.0
    %4326 = vmatprep.subr.mxu0 0.0
    %4327 = vmatpush1.xpose.msra.mxu0 0.0
    %4328 = vmatprep.subr.mxu0 0.0
    %4329 = vmatpush1.xpose.msra.mxu0 0.0
    %4330 = vmatprep.subr.mxu0 0.0
    %4331 = vmatpush1.xpose.msra.mxu0 0.0
    %4332 = vmatprep.subr.mxu0 0.0
    %4333 = vmatpush1.xpose.msra.mxu0 0.0
    %4334 = vmatprep.subr.mxu0 0.0
    %4335 = vmatpush1.xpose.msra.mxu0 0.0
    %4336 = vmatprep.subr.mxu0 0.0
    %4337 = vmatpush1.xpose.msra.mxu0 0.0
    %4338 = vmatprep.subr.mxu0 0.0
    %4339 = vmatpush1.xpose.msra.mxu0 0.0
    %4340 = vmatprep.subr.mxu0 0.0
    %4341 = vmatpush1.xpose.msra.mxu0 0.0
    %4342 = vmatprep.subr.mxu0 0.0
    %4343 = vmatpush1.xpose.msra.mxu0 0.0
    %4344 = vmatprep.subr.mxu0 0.0
    %4345 = vmatpush1.xpose.msra.mxu0 0.0
    %4346 = vmatprep.subr.mxu0 0.0
    %4347 = vmatpush1.xpose.msra.mxu0 0.0
    %4348 = vmatprep.subr.mxu0 0.0
    %4349 = vmatpush1.xpose.msra.mxu0 0.0
    %4350 = vmatprep.subr.mxu0 0.0
    %4351 = vmatpush1.xpose.msra.mxu0 0.0
    %4352 = vmatprep.subr.mxu0 0.0
    %4353 = vmatpush1.xpose.msra.mxu0 0.0
    %4354 = vmatprep.subr.mxu0 0.0
    %4355 = vmatpush1.xpose.msra.mxu0 0.0
    %4356 = vmatprep.subr.mxu0 0.0
    %4357 = vmatpush1.xpose.msra.mxu0 0.0
    %4358 = vmatprep.subr.mxu0 0.0
    %4359 = vmatpush1.xpose.msra.mxu0 0.0
    %4360 = vmatprep.subr.mxu0 0.0
    %4361 = vmatpush1.xpose.msra.mxu0 0.0
    %4362 = vmatprep.subr.mxu0 0.0
    %4363 = vmatpush1.xpose.msra.mxu0 0.0
    %4364 = vmatprep.subr.mxu0 0.0
    %4365 = vmatpush1.xpose.msra.mxu0 0.0
    %4366 = vmatprep.subr.mxu0 0.0
    %4367 = vmatpush1.xpose.msra.mxu0 0.0
    %4368 = vmatprep.subr.mxu0 0.0
    %4369 = vmatpush1.xpose.msra.mxu0 0.0
    %4370 = vmatprep.subr.mxu0 0.0
    %4371 = vmatpush1.xpose.msra.mxu0 0.0
    %4372 = vmatprep.subr.mxu0 0.0
    %4373 = vmatpush1.xpose.msra.mxu0 0.0
    %4374 = vmatprep.subr.mxu0 0.0
    %4375 = vmatpush1.xpose.msra.mxu0 0.0
    %4376 = vmatprep.subr.mxu0 0.0
    %4377 = vmatpush1.xpose.msra.mxu0 0.0
    %4378 = vmatprep.subr.mxu0 0.0
    %4379 = vmatpush1.xpose.msra.mxu0 0.0
    %4380 = vmatprep.subr.mxu0 0.0
    %4381 = vmatpush1.xpose.msra.mxu0 0.0
    %4382 = vmatprep.mubr.f32.mxu0 0.0
    %4383 = vmatmul.mubr.f32.gmra.mrb[0].mxu0 %v4314
    %v4384 = vpop.f32.mrb[0].mxu0
    %v4385 = vadd.f32 0.0, %v4384
    %v4386 = vpop.f32.mrb[0].mxu0
    %4387 = vdwg.mxu0
    %4388 = vrot.lane.b32.xlu0 %v452, 96
    %v4389 = vpop.permute.xlu0 %4388
    %4390 = vrot.lane.b32.xlu0 %v3576, 96
    %v4391 = vpop.permute.xlu0 %4390
    %v4392 = vsel %vm454, %v4389, 0
    %v4394 = vsel %vm454, %v4391, 0
    %4396 = vmatprep.subr.mxu0 0.0
    %4397 = vmatpush1.xpose.msra.mxu0 %v4394
    %4398 = vmatprep.subr.mxu0 0.0
    %4399 = vmatpush1.xpose.msra.mxu0 0.0
    %4400 = vmatprep.subr.mxu0 0.0
    %4401 = vmatpush1.xpose.msra.mxu0 0.0
    %4402 = vmatprep.subr.mxu0 0.0
    %4403 = vmatpush1.xpose.msra.mxu0 0.0
    %4404 = vmatprep.subr.mxu0 0.0
    %4405 = vmatpush1.xpose.msra.mxu0 0.0
    %4406 = vmatprep.subr.mxu0 0.0
    %4407 = vmatpush1.xpose.msra.mxu0 0.0
    %4408 = vmatprep.subr.mxu0 0.0
    %4409 = vmatpush1.xpose.msra.mxu0 0.0
    %4410 = vmatprep.subr.mxu0 0.0
    %4411 = vmatpush1.xpose.msra.mxu0 0.0
    %4412 = vmatprep.subr.mxu0 0.0
    %4413 = vmatpush1.xpose.msra.mxu0 0.0
    %4414 = vmatprep.subr.mxu0 0.0
    %4415 = vmatpush1.xpose.msra.mxu0 0.0
    %4416 = vmatprep.subr.mxu0 0.0
    %4417 = vmatpush1.xpose.msra.mxu0 0.0
    %4418 = vmatprep.subr.mxu0 0.0
    %4419 = vmatpush1.xpose.msra.mxu0 0.0
    %4420 = vmatprep.subr.mxu0 0.0
    %4421 = vmatpush1.xpose.msra.mxu0 0.0
    %4422 = vmatprep.subr.mxu0 0.0
    %4423 = vmatpush1.xpose.msra.mxu0 0.0
    %4424 = vmatprep.subr.mxu0 0.0
    %4425 = vmatpush1.xpose.msra.mxu0 0.0
    %4426 = vmatprep.subr.mxu0 0.0
    %4427 = vmatpush1.xpose.msra.mxu0 0.0
    %4428 = vmatprep.subr.mxu0 0.0
    %4429 = vmatpush1.xpose.msra.mxu0 0.0
    %4430 = vmatprep.subr.mxu0 0.0
    %4431 = vmatpush1.xpose.msra.mxu0 0.0
    %4432 = vmatprep.subr.mxu0 0.0
    %4433 = vmatpush1.xpose.msra.mxu0 0.0
    %4434 = vmatprep.subr.mxu0 0.0
    %4435 = vmatpush1.xpose.msra.mxu0 0.0
    %4436 = vmatprep.subr.mxu0 0.0
    %4437 = vmatpush1.xpose.msra.mxu0 0.0
    %4438 = vmatprep.subr.mxu0 0.0
    %4439 = vmatpush1.xpose.msra.mxu0 0.0
    %4440 = vmatprep.subr.mxu0 0.0
    %4441 = vmatpush1.xpose.msra.mxu0 0.0
    %4442 = vmatprep.subr.mxu0 0.0
    %4443 = vmatpush1.xpose.msra.mxu0 0.0
    %4444 = vmatprep.subr.mxu0 0.0
    %4445 = vmatpush1.xpose.msra.mxu0 0.0
    %4446 = vmatprep.subr.mxu0 0.0
    %4447 = vmatpush1.xpose.msra.mxu0 0.0
    %4448 = vmatprep.subr.mxu0 0.0
    %4449 = vmatpush1.xpose.msra.mxu0 0.0
    %4450 = vmatprep.subr.mxu0 0.0
    %4451 = vmatpush1.xpose.msra.mxu0 0.0
    %4452 = vmatprep.subr.mxu0 0.0
    %4453 = vmatpush1.xpose.msra.mxu0 0.0
    %4454 = vmatprep.subr.mxu0 0.0
    %4455 = vmatpush1.xpose.msra.mxu0 0.0
    %4456 = vmatprep.subr.mxu0 0.0
    %4457 = vmatpush1.xpose.msra.mxu0 0.0
    %4458 = vmatprep.subr.mxu0 0.0
    %4459 = vmatpush1.xpose.msra.mxu0 0.0
    %4460 = vmatprep.mubr.f32.mxu0 0.0
    %4461 = vmatmul.mubr.f32.gmra.mrb[0].mxu0 %v4392
    %v4462 = vpop.f32.mrb[0].mxu0
    %v4463 = vadd.f32 0.0, %v4462
    %v4464 = vpop.f32.mrb[0].mxu0
    %4465 = vdwg.mxu0
    %4466 = vrot.lane.b32.xlu0 %v453, 96
    %v4467 = vpop.permute.xlu0 %4466
    %4468 = vrot.lane.b32.xlu0 %v3578, 96
    %v4469 = vpop.permute.xlu0 %4468
    %v4470 = vsel %vm454, %v4467, 0
    %v4472 = vsel %vm454, %v4469, 0
    %4474 = vmatprep.subr.mxu0 0.0
    %4475 = vmatpush1.xpose.msra.mxu0 %v4472
    %4476 = vmatprep.subr.mxu0 0.0
    %4477 = vmatpush1.xpose.msra.mxu0 0.0
    %4478 = vmatprep.subr.mxu0 0.0
    %4479 = vmatpush1.xpose.msra.mxu0 0.0
    %4480 = vmatprep.subr.mxu0 0.0
    %4481 = vmatpush1.xpose.msra.mxu0 0.0
    %4482 = vmatprep.subr.mxu0 0.0
    %4483 = vmatpush1.xpose.msra.mxu0 0.0
    %4484 = vmatprep.subr.mxu0 0.0
    %4485 = vmatpush1.xpose.msra.mxu0 0.0
    %4486 = vmatprep.subr.mxu0 0.0
    %4487 = vmatpush1.xpose.msra.mxu0 0.0
    %4488 = vmatprep.subr.mxu0 0.0
    %4489 = vmatpush1.xpose.msra.mxu0 0.0
    %4490 = vmatprep.subr.mxu0 0.0
    %4491 = vmatpush1.xpose.msra.mxu0 0.0
    %4492 = vmatprep.subr.mxu0 0.0
    %4493 = vmatpush1.xpose.msra.mxu0 0.0
    %4494 = vmatprep.subr.mxu0 0.0
    %4495 = vmatpush1.xpose.msra.mxu0 0.0
    %4496 = vmatprep.subr.mxu0 0.0
    %4497 = vmatpush1.xpose.msra.mxu0 0.0
    %4498 = vmatprep.subr.mxu0 0.0
    %4499 = vmatpush1.xpose.msra.mxu0 0.0
    %4500 = vmatprep.subr.mxu0 0.0
    %4501 = vmatpush1.xpose.msra.mxu0 0.0
    %4502 = vmatprep.subr.mxu0 0.0
    %4503 = vmatpush1.xpose.msra.mxu0 0.0
    %4504 = vmatprep.subr.mxu0 0.0
    %4505 = vmatpush1.xpose.msra.mxu0 0.0
    %4506 = vmatprep.subr.mxu0 0.0
    %4507 = vmatpush1.xpose.msra.mxu0 0.0
    %4508 = vmatprep.subr.mxu0 0.0
    %4509 = vmatpush1.xpose.msra.mxu0 0.0
    %4510 = vmatprep.subr.mxu0 0.0
    %4511 = vmatpush1.xpose.msra.mxu0 0.0
    %4512 = vmatprep.subr.mxu0 0.0
    %4513 = vmatpush1.xpose.msra.mxu0 0.0
    %4514 = vmatprep.subr.mxu0 0.0
    %4515 = vmatpush1.xpose.msra.mxu0 0.0
    %4516 = vmatprep.subr.mxu0 0.0
    %4517 = vmatpush1.xpose.msra.mxu0 0.0
    %4518 = vmatprep.subr.mxu0 0.0
    %4519 = vmatpush1.xpose.msra.mxu0 0.0
    %4520 = vmatprep.subr.mxu0 0.0
    %4521 = vmatpush1.xpose.msra.mxu0 0.0
    %4522 = vmatprep.subr.mxu0 0.0
    %4523 = vmatpush1.xpose.msra.mxu0 0.0
    %4524 = vmatprep.subr.mxu0 0.0
    %4525 = vmatpush1.xpose.msra.mxu0 0.0
    %4526 = vmatprep.subr.mxu0 0.0
    %4527 = vmatpush1.xpose.msra.mxu0 0.0
    %4528 = vmatprep.subr.mxu0 0.0
    %4529 = vmatpush1.xpose.msra.mxu0 0.0
    %4530 = vmatprep.subr.mxu0 0.0
    %4531 = vmatpush1.xpose.msra.mxu0 0.0
    %4532 = vmatprep.subr.mxu0 0.0
    %4533 = vmatpush1.xpose.msra.mxu0 0.0
    %4534 = vmatprep.subr.mxu0 0.0
    %4535 = vmatpush1.xpose.msra.mxu0 0.0
    %4536 = vmatprep.subr.mxu0 0.0
    %4537 = vmatpush1.xpose.msra.mxu0 0.0
    %4538 = vmatprep.mubr.f32.mxu0 0.0
    %4539 = vmatmul.mubr.f32.gmra.mrb[0].mxu0 %v4470
    %v4540 = vpop.f32.mrb[0].mxu0
    %v4541 = vadd.f32 0.0, %v4540
    %v4542 = vpop.f32.mrb[0].mxu0
    %4543 = vdwg.mxu0
    %v4544 = vsel %vm759, %v4307, -inf
    %4545 = vmax.xlane.f32.xlu0 %v4544
    %v4546 = vpop.xlane.xlu0 %4545
    %v4547 = vsel %vm759, %v4385, -inf
    %4548 = vmax.xlane.f32.xlu0 %v4547
    %v4549 = vpop.xlane.xlu0 %4548
    %v4550 = vsel %vm759, %v4463, -inf
    %4551 = vmax.xlane.f32.xlu0 %v4550
    %v4552 = vpop.xlane.xlu0 %4551
    %v4553 = vsel %vm759, %v4541, -inf
    %4554 = vmax.xlane.f32.xlu0 %v4553
    %v4555 = vpop.xlane.xlu0 %4554
    %v4556 = vsub.f32 %v4307, %v4546
    %v4557 = vsub.f32 %v4385, %v4549
    %v4558 = vsub.f32 %v4463, %v4552
    %v4559 = vsub.f32 %v4541, %v4555
    %v4560 = vmul.f32 %v4556, 1.442695
    %v4561 = vpow.pop %v4560
    %v4562 = vmul.f32 %v4557, 1.442695
    %v4563 = vpow.pop %v4562
    %v4564 = vmul.f32 %v4558, 1.442695
    %v4565 = vpow.pop %v4564
    %v4566 = vmul.f32 %v4559, 1.442695
    %v4567 = vpow.pop %v4566
    %v4568 = vsel %vm759, %v4561, 0.0
    %4569 = vadd.xlane.f32.xlu0 %v4568
    %v4570 = vpop.xlane.xlu0 %4569
    %v4571 = vsel %vm759, %v4563, 0.0
    %4572 = vadd.xlane.f32.xlu0 %v4571
    %v4573 = vpop.xlane.xlu0 %4572
    %v4574 = vsel %vm759, %v4565, 0.0
    %4575 = vadd.xlane.f32.xlu0 %v4574
    %v4576 = vpop.xlane.xlu0 %4575
    %v4577 = vsel %vm759, %v4567, 0.0
    %4578 = vadd.xlane.f32.xlu0 %v4577
    %v4579 = vpop.xlane.xlu0 %4578
    %v4580 = vrcp.pop %v4570
    %v4581 = vrcp.pop %v4573
    %v4582 = vrcp.pop %v4576
    %v4583 = vrcp.pop %v4579
    %v4584 = vmul.f32 %v4570, %v4580
    %v4585 = vmul.f32 %v4573, %v4581
    %v4586 = vmul.f32 %v4576, %v4582
    %v4587 = vmul.f32 %v4579, %v4583
    %v4588 = vsub.f32 2.0, %v4584
    %v4589 = vsub.f32 2.0, %v4585
    %v4590 = vsub.f32 2.0, %v4586
    %v4591 = vsub.f32 2.0, %v4587
    %v4592 = vmul.f32 %v4580, %v4588
    %v4593 = vmul.f32 %v4581, %v4589
    %v4594 = vmul.f32 %v4582, %v4590
    %v4595 = vmul.f32 %v4583, %v4591
    %v4596 = vmul.f32 %v4561, %v4592
    %v4597 = vmul.f32 %v4563, %v4593
    %v4598 = vmul.f32 %v4565, %v4594
    %v4599 = vmul.f32 %v4567, %v4595
    %4601 = vrot.lane.b32.xlu0 %v3573, 96
    %v4602 = vpop.permute.xlu0 %4601
    %v4605 = vsel %vm759, %v4596, 0
    %4607 = vmatprep.subr.mxu0 0.0
    %4608 = vmatpush1.msra.mxu0 %v4602
    %4609 = vmatprep.subr.mxu0 0.0
    %4610 = vmatpush1.msra.mxu0 0.0
    %4611 = vmatprep.subr.mxu0 0.0
    %4612 = vmatpush1.msra.mxu0 0.0
    %4613 = vmatprep.subr.mxu0 0.0
    %4614 = vmatpush1.msra.mxu0 0.0
    %4615 = vmatprep.subr.mxu0 0.0
    %4616 = vmatpush1.msra.mxu0 0.0
    %4617 = vmatprep.subr.mxu0 0.0
    %4618 = vmatpush1.msra.mxu0 0.0
    %4619 = vmatprep.subr.mxu0 0.0
    %4620 = vmatpush1.msra.mxu0 0.0
    %4621 = vmatprep.subr.mxu0 0.0
    %4622 = vmatpush1.msra.mxu0 0.0
    %4623 = vmatprep.subr.mxu0 0.0
    %4624 = vmatpush1.msra.mxu0 0.0
    %4625 = vmatprep.subr.mxu0 0.0
    %4626 = vmatpush1.msra.mxu0 0.0
    %4627 = vmatprep.subr.mxu0 0.0
    %4628 = vmatpush1.msra.mxu0 0.0
    %4629 = vmatprep.subr.mxu0 0.0
    %4630 = vmatpush1.msra.mxu0 0.0
    %4631 = vmatprep.subr.mxu0 0.0
    %4632 = vmatpush1.msra.mxu0 0.0
    %4633 = vmatprep.subr.mxu0 0.0
    %4634 = vmatpush1.msra.mxu0 0.0
    %4635 = vmatprep.subr.mxu0 0.0
    %4636 = vmatpush1.msra.mxu0 0.0
    %4637 = vmatprep.subr.mxu0 0.0
    %4638 = vmatpush1.msra.mxu0 0.0
    %4639 = vmatprep.subr.mxu0 0.0
    %4640 = vmatpush1.msra.mxu0 0.0
    %4641 = vmatprep.subr.mxu0 0.0
    %4642 = vmatpush1.msra.mxu0 0.0
    %4643 = vmatprep.subr.mxu0 0.0
    %4644 = vmatpush1.msra.mxu0 0.0
    %4645 = vmatprep.subr.mxu0 0.0
    %4646 = vmatpush1.msra.mxu0 0.0
    %4647 = vmatprep.subr.mxu0 0.0
    %4648 = vmatpush1.msra.mxu0 0.0
    %4649 = vmatprep.subr.mxu0 0.0
    %4650 = vmatpush1.msra.mxu0 0.0
    %4651 = vmatprep.subr.mxu0 0.0
    %4652 = vmatpush1.msra.mxu0 0.0
    %4653 = vmatprep.subr.mxu0 0.0
    %4654 = vmatpush1.msra.mxu0 0.0
    %4655 = vmatprep.subr.mxu0 0.0
    %4656 = vmatpush1.msra.mxu0 0.0
    %4657 = vmatprep.subr.mxu0 0.0
    %4658 = vmatpush1.msra.mxu0 0.0
    %4659 = vmatprep.subr.mxu0 0.0
    %4660 = vmatpush1.msra.mxu0 0.0
    %4661 = vmatprep.subr.mxu0 0.0
    %4662 = vmatpush1.msra.mxu0 0.0
    %4663 = vmatprep.subr.mxu0 0.0
    %4664 = vmatpush1.msra.mxu0 0.0
    %4665 = vmatprep.subr.mxu0 0.0
    %4666 = vmatpush1.msra.mxu0 0.0
    %4667 = vmatprep.subr.mxu0 0.0
    %4668 = vmatpush1.msra.mxu0 0.0
    %4669 = vmatprep.subr.mxu0 0.0
    %4670 = vmatpush1.msra.mxu0 0.0
    %4671 = vmatprep.mubr.f32.mxu0 0.0
    %4672 = vmatmul.mubr.f32.gmra.mrb[0].mxu0 %v4605
    %v4673 = vpop.f32.mrb[0].mxu0
    %v4674 = vadd.f32 0.0, %v4673
    %v4675 = vpop.f32.mrb[0].mxu0
    %4676 = vdwg.mxu0
    %4678 = vrot.lane.b32.xlu0 %v3575, 96
    %v4679 = vpop.permute.xlu0 %4678
    %v4682 = vsel %vm759, %v4597, 0
    %4684 = vmatprep.subr.mxu0 0.0
    %4685 = vmatpush1.msra.mxu0 %v4679
    %4686 = vmatprep.subr.mxu0 0.0
    %4687 = vmatpush1.msra.mxu0 0.0
    %4688 = vmatprep.subr.mxu0 0.0
    %4689 = vmatpush1.msra.mxu0 0.0
    %4690 = vmatprep.subr.mxu0 0.0
    %4691 = vmatpush1.msra.mxu0 0.0
    %4692 = vmatprep.subr.mxu0 0.0
    %4693 = vmatpush1.msra.mxu0 0.0
    %4694 = vmatprep.subr.mxu0 0.0
    %4695 = vmatpush1.msra.mxu0 0.0
    %4696 = vmatprep.subr.mxu0 0.0
    %4697 = vmatpush1.msra.mxu0 0.0
    %4698 = vmatprep.subr.mxu0 0.0
    %4699 = vmatpush1.msra.mxu0 0.0
    %4700 = vmatprep.subr.mxu0 0.0
    %4701 = vmatpush1.msra.mxu0 0.0
    %4702 = vmatprep.subr.mxu0 0.0
    %4703 = vmatpush1.msra.mxu0 0.0
    %4704 = vmatprep.subr.mxu0 0.0
    %4705 = vmatpush1.msra.mxu0 0.0
    %4706 = vmatprep.subr.mxu0 0.0
    %4707 = vmatpush1.msra.mxu0 0.0
    %4708 = vmatprep.subr.mxu0 0.0
    %4709 = vmatpush1.msra.mxu0 0.0
    %4710 = vmatprep.subr.mxu0 0.0
    %4711 = vmatpush1.msra.mxu0 0.0
    %4712 = vmatprep.subr.mxu0 0.0
    %4713 = vmatpush1.msra.mxu0 0.0
    %4714 = vmatprep.subr.mxu0 0.0
    %4715 = vmatpush1.msra.mxu0 0.0
    %4716 = vmatprep.subr.mxu0 0.0
    %4717 = vmatpush1.msra.mxu0 0.0
    %4718 = vmatprep.subr.mxu0 0.0
    %4719 = vmatpush1.msra.mxu0 0.0
    %4720 = vmatprep.subr.mxu0 0.0
    %4721 = vmatpush1.msra.mxu0 0.0
    %4722 = vmatprep.subr.mxu0 0.0
    %4723 = vmatpush1.msra.mxu0 0.0
    %4724 = vmatprep.subr.mxu0 0.0
    %4725 = vmatpush1.msra.mxu0 0.0
    %4726 = vmatprep.subr.mxu0 0.0
    %4727 = vmatpush1.msra.mxu0 0.0
    %4728 = vmatprep.subr.mxu0 0.0
    %4729 = vmatpush1.msra.mxu0 0.0
    %4730 = vmatprep.subr.mxu0 0.0
    %4731 = vmatpush1.msra.mxu0 0.0
    %4732 = vmatprep.subr.mxu0 0.0
    %4733 = vmatpush1.msra.mxu0 0.0
    %4734 = vmatprep.subr.mxu0 0.0
    %4735 = vmatpush1.msra.mxu0 0.0
    %4736 = vmatprep.subr.mxu0 0.0
    %4737 = vmatpush1.msra.mxu0 0.0
    %4738 = vmatprep.subr.mxu0 0.0
    %4739 = vmatpush1.msra.mxu0 0.0
    %4740 = vmatprep.subr.mxu0 0.0
    %4741 = vmatpush1.msra.mxu0 0.0
    %4742 = vmatprep.subr.mxu0 0.0
    %4743 = vmatpush1.msra.mxu0 0.0
    %4744 = vmatprep.subr.mxu0 0.0
    %4745 = vmatpush1.msra.mxu0 0.0
    %4746 = vmatprep.subr.mxu0 0.0
    %4747 = vmatpush1.msra.mxu0 0.0
    %4748 = vmatprep.mubr.f32.mxu0 0.0
    %4749 = vmatmul.mubr.f32.gmra.mrb[0].mxu0 %v4682
    %v4750 = vpop.f32.mrb[0].mxu0
    %v4751 = vadd.f32 0.0, %v4750
    %v4752 = vpop.f32.mrb[0].mxu0
    %4753 = vdwg.mxu0
    %4755 = vrot.lane.b32.xlu0 %v3577, 96
    %v4756 = vpop.permute.xlu0 %4755
    %v4759 = vsel %vm759, %v4598, 0
    %4761 = vmatprep.subr.mxu0 0.0
    %4762 = vmatpush1.msra.mxu0 %v4756
    %4763 = vmatprep.subr.mxu0 0.0
    %4764 = vmatpush1.msra.mxu0 0.0
    %4765 = vmatprep.subr.mxu0 0.0
    %4766 = vmatpush1.msra.mxu0 0.0
    %4767 = vmatprep.subr.mxu0 0.0
    %4768 = vmatpush1.msra.mxu0 0.0
    %4769 = vmatprep.subr.mxu0 0.0
    %4770 = vmatpush1.msra.mxu0 0.0
    %4771 = vmatprep.subr.mxu0 0.0
    %4772 = vmatpush1.msra.mxu0 0.0
    %4773 = vmatprep.subr.mxu0 0.0
    %4774 = vmatpush1.msra.mxu0 0.0
    %4775 = vmatprep.subr.mxu0 0.0
    %4776 = vmatpush1.msra.mxu0 0.0
    %4777 = vmatprep.subr.mxu0 0.0
    %4778 = vmatpush1.msra.mxu0 0.0
    %4779 = vmatprep.subr.mxu0 0.0
    %4780 = vmatpush1.msra.mxu0 0.0
    %4781 = vmatprep.subr.mxu0 0.0
    %4782 = vmatpush1.msra.mxu0 0.0
    %4783 = vmatprep.subr.mxu0 0.0
    %4784 = vmatpush1.msra.mxu0 0.0
    %4785 = vmatprep.subr.mxu0 0.0
    %4786 = vmatpush1.msra.mxu0 0.0
    %4787 = vmatprep.subr.mxu0 0.0
    %4788 = vmatpush1.msra.mxu0 0.0
    %4789 = vmatprep.subr.mxu0 0.0
    %4790 = vmatpush1.msra.mxu0 0.0
    %4791 = vmatprep.subr.mxu0 0.0
    %4792 = vmatpush1.msra.mxu0 0.0
    %4793 = vmatprep.subr.mxu0 0.0
    %4794 = vmatpush1.msra.mxu0 0.0
    %4795 = vmatprep.subr.mxu0 0.0
    %4796 = vmatpush1.msra.mxu0 0.0
    %4797 = vmatprep.subr.mxu0 0.0
    %4798 = vmatpush1.msra.mxu0 0.0
    %4799 = vmatprep.subr.mxu0 0.0
    %4800 = vmatpush1.msra.mxu0 0.0
    %4801 = vmatprep.subr.mxu0 0.0
    %4802 = vmatpush1.msra.mxu0 0.0
    %4803 = vmatprep.subr.mxu0 0.0
    %4804 = vmatpush1.msra.mxu0 0.0
    %4805 = vmatprep.subr.mxu0 0.0
    %4806 = vmatpush1.msra.mxu0 0.0
    %4807 = vmatprep.subr.mxu0 0.0
    %4808 = vmatpush1.msra.mxu0 0.0
    %4809 = vmatprep.subr.mxu0 0.0
    %4810 = vmatpush1.msra.mxu0 0.0
    %4811 = vmatprep.subr.mxu0 0.0
    %4812 = vmatpush1.msra.mxu0 0.0
    %4813 = vmatprep.subr.mxu0 0.0
    %4814 = vmatpush1.msra.mxu0 0.0
    %4815 = vmatprep.subr.mxu0 0.0
    %4816 = vmatpush1.msra.mxu0 0.0
    %4817 = vmatprep.subr.mxu0 0.0
    %4818 = vmatpush1.msra.mxu0 0.0
    %4819 = vmatprep.subr.mxu0 0.0
    %4820 = vmatpush1.msra.mxu0 0.0
    %4821 = vmatprep.subr.mxu0 0.0
    %4822 = vmatpush1.msra.mxu0 0.0
    %4823 = vmatprep.subr.mxu0 0.0
    %4824 = vmatpush1.msra.mxu0 0.0
    %4825 = vmatprep.mubr.f32.mxu0 0.0
    %4826 = vmatmul.mubr.f32.gmra.mrb[0].mxu0 %v4759
    %v4827 = vpop.f32.mrb[0].mxu0
    %v4828 = vadd.f32 0.0, %v4827
    %v4829 = vpop.f32.mrb[0].mxu0
    %4830 = vdwg.mxu0
    %4832 = vrot.lane.b32.xlu0 %v3579, 96
    %v4833 = vpop.permute.xlu0 %4832
    %v4836 = vsel %vm759, %v4599, 0
    %4838 = vmatprep.subr.mxu0 0.0
    %4839 = vmatpush1.msra.mxu0 %v4833
    %4840 = vmatprep.subr.mxu0 0.0
    %4841 = vmatpush1.msra.mxu0 0.0
    %4842 = vmatprep.subr.mxu0 0.0
    %4843 = vmatpush1.msra.mxu0 0.0
    %4844 = vmatprep.subr.mxu0 0.0
    %4845 = vmatpush1.msra.mxu0 0.0
    %4846 = vmatprep.subr.mxu0 0.0
    %4847 = vmatpush1.msra.mxu0 0.0
    %4848 = vmatprep.subr.mxu0 0.0
    %4849 = vmatpush1.msra.mxu0 0.0
    %4850 = vmatprep.subr.mxu0 0.0
    %4851 = vmatpush1.msra.mxu0 0.0
    %4852 = vmatprep.subr.mxu0 0.0
    %4853 = vmatpush1.msra.mxu0 0.0
    %4854 = vmatprep.subr.mxu0 0.0
    %4855 = vmatpush1.msra.mxu0 0.0
    %4856 = vmatprep.subr.mxu0 0.0
    %4857 = vmatpush1.msra.mxu0 0.0
    %4858 = vmatprep.subr.mxu0 0.0
    %4859 = vmatpush1.msra.mxu0 0.0
    %4860 = vmatprep.subr.mxu0 0.0
    %4861 = vmatpush1.msra.mxu0 0.0
    %4862 = vmatprep.subr.mxu0 0.0
    %4863 = vmatpush1.msra.mxu0 0.0
    %4864 = vmatprep.subr.mxu0 0.0
    %4865 = vmatpush1.msra.mxu0 0.0
    %4866 = vmatprep.subr.mxu0 0.0
    %4867 = vmatpush1.msra.mxu0 0.0
    %4868 = vmatprep.subr.mxu0 0.0
    %4869 = vmatpush1.msra.mxu0 0.0
    %4870 = vmatprep.subr.mxu0 0.0
    %4871 = vmatpush1.msra.mxu0 0.0
    %4872 = vmatprep.subr.mxu0 0.0
    %4873 = vmatpush1.msra.mxu0 0.0
    %4874 = vmatprep.subr.mxu0 0.0
    %4875 = vmatpush1.msra.mxu0 0.0
    %4876 = vmatprep.subr.mxu0 0.0
    %4877 = vmatpush1.msra.mxu0 0.0
    %4878 = vmatprep.subr.mxu0 0.0
    %4879 = vmatpush1.msra.mxu0 0.0
    %4880 = vmatprep.subr.mxu0 0.0
    %4881 = vmatpush1.msra.mxu0 0.0
    %4882 = vmatprep.subr.mxu0 0.0
    %4883 = vmatpush1.msra.mxu0 0.0
    %4884 = vmatprep.subr.mxu0 0.0
    %4885 = vmatpush1.msra.mxu0 0.0
    %4886 = vmatprep.subr.mxu0 0.0
    %4887 = vmatpush1.msra.mxu0 0.0
    %4888 = vmatprep.subr.mxu0 0.0
    %4889 = vmatpush1.msra.mxu0 0.0
    %4890 = vmatprep.subr.mxu0 0.0
    %4891 = vmatpush1.msra.mxu0 0.0
    %4892 = vmatprep.subr.mxu0 0.0
    %4893 = vmatpush1.msra.mxu0 0.0
    %4894 = vmatprep.subr.mxu0 0.0
    %4895 = vmatpush1.msra.mxu0 0.0
    %4896 = vmatprep.subr.mxu0 0.0
    %4897 = vmatpush1.msra.mxu0 0.0
    %4898 = vmatprep.subr.mxu0 0.0
    %4899 = vmatpush1.msra.mxu0 0.0
    %4900 = vmatprep.subr.mxu0 0.0
    %4901 = vmatpush1.msra.mxu0 0.0
    %4902 = vmatprep.mubr.f32.mxu0 0.0
    %4903 = vmatmul.mubr.f32.gmra.mrb[0].mxu0 %v4836
    %v4904 = vpop.f32.mrb[0].mxu0
    %v4905 = vadd.f32 0.0, %v4904
    %v4906 = vpop.f32.mrb[0].mxu0
    %4907 = vdwg.mxu0
    %4908 = vrot.lane.b32.xlu0 %v450, 64
    %v4909 = vpop.permute.xlu0 %4908
    %4910 = vrot.lane.b32.xlu0 %v3572, 64
    %v4911 = vpop.permute.xlu0 %4910
    %v4912 = vsel %vm454, %v4909, 0
    %v4914 = vsel %vm454, %v4911, 0
    %4916 = vmatprep.subr.mxu0 0.0
    %4917 = vmatpush1.xpose.msra.mxu0 %v4914
    %4918 = vmatprep.subr.mxu0 0.0
    %4919 = vmatpush1.xpose.msra.mxu0 0.0
    %4920 = vmatprep.subr.mxu0 0.0
    %4921 = vmatpush1.xpose.msra.mxu0 0.0
    %4922 = vmatprep.subr.mxu0 0.0
    %4923 = vmatpush1.xpose.msra.mxu0 0.0
    %4924 = vmatprep.subr.mxu0 0.0
    %4925 = vmatpush1.xpose.msra.mxu0 0.0
    %4926 = vmatprep.subr.mxu0 0.0
    %4927 = vmatpush1.xpose.msra.mxu0 0.0
    %4928 = vmatprep.subr.mxu0 0.0
    %4929 = vmatpush1.xpose.msra.mxu0 0.0
    %4930 = vmatprep.subr.mxu0 0.0
    %4931 = vmatpush1.xpose.msra.mxu0 0.0
    %4932 = vmatprep.subr.mxu0 0.0
    %4933 = vmatpush1.xpose.msra.mxu0 0.0
    %4934 = vmatprep.subr.mxu0 0.0
    %4935 = vmatpush1.xpose.msra.mxu0 0.0
    %4936 = vmatprep.subr.mxu0 0.0
    %4937 = vmatpush1.xpose.msra.mxu0 0.0
    %4938 = vmatprep.subr.mxu0 0.0
    %4939 = vmatpush1.xpose.msra.mxu0 0.0
    %4940 = vmatprep.subr.mxu0 0.0
    %4941 = vmatpush1.xpose.msra.mxu0 0.0
    %4942 = vmatprep.subr.mxu0 0.0
    %4943 = vmatpush1.xpose.msra.mxu0 0.0
    %4944 = vmatprep.subr.mxu0 0.0
    %4945 = vmatpush1.xpose.msra.mxu0 0.0
    %4946 = vmatprep.subr.mxu0 0.0
    %4947 = vmatpush1.xpose.msra.mxu0 0.0
    %4948 = vmatprep.subr.mxu0 0.0
    %4949 = vmatpush1.xpose.msra.mxu0 0.0
    %4950 = vmatprep.subr.mxu0 0.0
    %4951 = vmatpush1.xpose.msra.mxu0 0.0
    %4952 = vmatprep.subr.mxu0 0.0
    %4953 = vmatpush1.xpose.msra.mxu0 0.0
    %4954 = vmatprep.subr.mxu0 0.0
    %4955 = vmatpush1.xpose.msra.mxu0 0.0
    %4956 = vmatprep.subr.mxu0 0.0
    %4957 = vmatpush1.xpose.msra.mxu0 0.0
    %4958 = vmatprep.subr.mxu0 0.0
    %4959 = vmatpush1.xpose.msra.mxu0 0.0
    %4960 = vmatprep.subr.mxu0 0.0
    %4961 = vmatpush1.xpose.msra.mxu0 0.0
    %4962 = vmatprep.subr.mxu0 0.0
    %4963 = vmatpush1.xpose.msra.mxu0 0.0
    %4964 = vmatprep.subr.mxu0 0.0
    %4965 = vmatpush1.xpose.msra.mxu0 0.0
    %4966 = vmatprep.subr.mxu0 0.0
    %4967 = vmatpush1.xpose.msra.mxu0 0.0
    %4968 = vmatprep.subr.mxu0 0.0
    %4969 = vmatpush1.xpose.msra.mxu0 0.0
    %4970 = vmatprep.subr.mxu0 0.0
    %4971 = vmatpush1.xpose.msra.mxu0 0.0
    %4972 = vmatprep.subr.mxu0 0.0
    %4973 = vmatpush1.xpose.msra.mxu0 0.0
    %4974 = vmatprep.subr.mxu0 0.0
    %4975 = vmatpush1.xpose.msra.mxu0 0.0
    %4976 = vmatprep.subr.mxu0 0.0
    %4977 = vmatpush1.xpose.msra.mxu0 0.0
    %4978 = vmatprep.subr.mxu0 0.0
    %4979 = vmatpush1.xpose.msra.mxu0 0.0
    %4980 = vmatprep.mubr.f32.mxu0 0.0
    %4981 = vmatmul.mubr.f32.gmra.mrb[0].mxu0 %v4912
    %v4982 = vpop.f32.mrb[0].mxu0
    %v4983 = vadd.f32 0.0, %v4982
    %v4984 = vpop.f32.mrb[0].mxu0
    %4985 = vdwg.mxu0
    %4986 = vrot.lane.b32.xlu0 %v451, 64
    %v4987 = vpop.permute.xlu0 %4986
    %4988 = vrot.lane.b32.xlu0 %v3574, 64
    %v4989 = vpop.permute.xlu0 %4988
    %v4990 = vsel %vm454, %v4987, 0
    %v4992 = vsel %vm454, %v4989, 0
    %4994 = vmatprep.subr.mxu0 0.0
    %4995 = vmatpush1.xpose.msra.mxu0 %v4992
    %4996 = vmatprep.subr.mxu0 0.0
    %4997 = vmatpush1.xpose.msra.mxu0 0.0
    %4998 = vmatprep.subr.mxu0 0.0
    %4999 = vmatpush1.xpose.msra.mxu0 0.0
    %5000 = vmatprep.subr.mxu0 0.0
    %5001 = vmatpush1.xpose.msra.mxu0 0.0
    %5002 = vmatprep.subr.mxu0 0.0
    %5003 = vmatpush1.xpose.msra.mxu0 0.0
    %5004 = vmatprep.subr.mxu0 0.0
    %5005 = vmatpush1.xpose.msra.mxu0 0.0
    %5006 = vmatprep.subr.mxu0 0.0
    %5007 = vmatpush1.xpose.msra.mxu0 0.0
    %5008 = vmatprep.subr.mxu0 0.0
    %5009 = vmatpush1.xpose.msra.mxu0 0.0
    %5010 = vmatprep.subr.mxu0 0.0
    %5011 = vmatpush1.xpose.msra.mxu0 0.0
    %5012 = vmatprep.subr.mxu0 0.0
    %5013 = vmatpush1.xpose.msra.mxu0 0.0
    %5014 = vmatprep.subr.mxu0 0.0
    %5015 = vmatpush1.xpose.msra.mxu0 0.0
    %5016 = vmatprep.subr.mxu0 0.0
    %5017 = vmatpush1.xpose.msra.mxu0 0.0
    %5018 = vmatprep.subr.mxu0 0.0
    %5019 = vmatpush1.xpose.msra.mxu0 0.0
    %5020 = vmatprep.subr.mxu0 0.0
    %5021 = vmatpush1.xpose.msra.mxu0 0.0
    %5022 = vmatprep.subr.mxu0 0.0
    %5023 = vmatpush1.xpose.msra.mxu0 0.0
    %5024 = vmatprep.subr.mxu0 0.0
    %5025 = vmatpush1.xpose.msra.mxu0 0.0
    %5026 = vmatprep.subr.mxu0 0.0
    %5027 = vmatpush1.xpose.msra.mxu0 0.0
    %5028 = vmatprep.subr.mxu0 0.0
    %5029 = vmatpush1.xpose.msra.mxu0 0.0
    %5030 = vmatprep.subr.mxu0 0.0
    %5031 = vmatpush1.xpose.msra.mxu0 0.0
    %5032 = vmatprep.subr.mxu0 0.0
    %5033 = vmatpush1.xpose.msra.mxu0 0.0
    %5034 = vmatprep.subr.mxu0 0.0
    %5035 = vmatpush1.xpose.msra.mxu0 0.0
    %5036 = vmatprep.subr.mxu0 0.0
    %5037 = vmatpush1.xpose.msra.mxu0 0.0
    %5038 = vmatprep.subr.mxu0 0.0
    %5039 = vmatpush1.xpose.msra.mxu0 0.0
    %5040 = vmatprep.subr.mxu0 0.0
    %5041 = vmatpush1.xpose.msra.mxu0 0.0
    %5042 = vmatprep.subr.mxu0 0.0
    %5043 = vmatpush1.xpose.msra.mxu0 0.0
    %5044 = vmatprep.subr.mxu0 0.0
    %5045 = vmatpush1.xpose.msra.mxu0 0.0
    %5046 = vmatprep.subr.mxu0 0.0
    %5047 = vmatpush1.xpose.msra.mxu0 0.0
    %5048 = vmatprep.subr.mxu0 0.0
    %5049 = vmatpush1.xpose.msra.mxu0 0.0
    %5050 = vmatprep.subr.mxu0 0.0
    %5051 = vmatpush1.xpose.msra.mxu0 0.0
    %5052 = vmatprep.subr.mxu0 0.0
    %5053 = vmatpush1.xpose.msra.mxu0 0.0
    %5054 = vmatprep.subr.mxu0 0.0
    %5055 = vmatpush1.xpose.msra.mxu0 0.0
    %5056 = vmatprep.subr.mxu0 0.0
    %5057 = vmatpush1.xpose.msra.mxu0 0.0
    %5058 = vmatprep.mubr.f32.mxu0 0.0
    %5059 = vmatmul.mubr.f32.gmra.mrb[0].mxu0 %v4990
    %v5060 = vpop.f32.mrb[0].mxu0
    %v5061 = vadd.f32 0.0, %v5060
    %v5062 = vpop.f32.mrb[0].mxu0
    %5063 = vdwg.mxu0
    %5064 = vrot.lane.b32.xlu0 %v452, 64
    %v5065 = vpop.permute.xlu0 %5064
    %5066 = vrot.lane.b32.xlu0 %v3576, 64
    %v5067 = vpop.permute.xlu0 %5066
    %v5068 = vsel %vm454, %v5065, 0
    %v5070 = vsel %vm454, %v5067, 0
    %5072 = vmatprep.subr.mxu0 0.0
    %5073 = vmatpush1.xpose.msra.mxu0 %v5070
    %5074 = vmatprep.subr.mxu0 0.0
    %5075 = vmatpush1.xpose.msra.mxu0 0.0
    %5076 = vmatprep.subr.mxu0 0.0
    %5077 = vmatpush1.xpose.msra.mxu0 0.0
    %5078 = vmatprep.subr.mxu0 0.0
    %5079 = vmatpush1.xpose.msra.mxu0 0.0
    %5080 = vmatprep.subr.mxu0 0.0
    %5081 = vmatpush1.xpose.msra.mxu0 0.0
    %5082 = vmatprep.subr.mxu0 0.0
    %5083 = vmatpush1.xpose.msra.mxu0 0.0
    %5084 = vmatprep.subr.mxu0 0.0
    %5085 = vmatpush1.xpose.msra.mxu0 0.0
    %5086 = vmatprep.subr.mxu0 0.0
    %5087 = vmatpush1.xpose.msra.mxu0 0.0
    %5088 = vmatprep.subr.mxu0 0.0
    %5089 = vmatpush1.xpose.msra.mxu0 0.0
    %5090 = vmatprep.subr.mxu0 0.0
    %5091 = vmatpush1.xpose.msra.mxu0 0.0
    %5092 = vmatprep.subr.mxu0 0.0
    %5093 = vmatpush1.xpose.msra.mxu0 0.0
    %5094 = vmatprep.subr.mxu0 0.0
    %5095 = vmatpush1.xpose.msra.mxu0 0.0
    %5096 = vmatprep.subr.mxu0 0.0
    %5097 = vmatpush1.xpose.msra.mxu0 0.0
    %5098 = vmatprep.subr.mxu0 0.0
    %5099 = vmatpush1.xpose.msra.mxu0 0.0
    %5100 = vmatprep.subr.mxu0 0.0
    %5101 = vmatpush1.xpose.msra.mxu0 0.0
    %5102 = vmatprep.subr.mxu0 0.0
    %5103 = vmatpush1.xpose.msra.mxu0 0.0
    %5104 = vmatprep.subr.mxu0 0.0
    %5105 = vmatpush1.xpose.msra.mxu0 0.0
    %5106 = vmatprep.subr.mxu0 0.0
    %5107 = vmatpush1.xpose.msra.mxu0 0.0
    %5108 = vmatprep.subr.mxu0 0.0
    %5109 = vmatpush1.xpose.msra.mxu0 0.0
    %5110 = vmatprep.subr.mxu0 0.0
    %5111 = vmatpush1.xpose.msra.mxu0 0.0
    %5112 = vmatprep.subr.mxu0 0.0
    %5113 = vmatpush1.xpose.msra.mxu0 0.0
    %5114 = vmatprep.subr.mxu0 0.0
    %5115 = vmatpush1.xpose.msra.mxu0 0.0
    %5116 = vmatprep.subr.mxu0 0.0
    %5117 = vmatpush1.xpose.msra.mxu0 0.0
    %5118 = vmatprep.subr.mxu0 0.0
    %5119 = vmatpush1.xpose.msra.mxu0 0.0
    %5120 = vmatprep.subr.mxu0 0.0
    %5121 = vmatpush1.xpose.msra.mxu0 0.0
    %5122 = vmatprep.subr.mxu0 0.0
    %5123 = vmatpush1.xpose.msra.mxu0 0.0
    %5124 = vmatprep.subr.mxu0 0.0
    %5125 = vmatpush1.xpose.msra.mxu0 0.0
    %5126 = vmatprep.subr.mxu0 0.0
    %5127 = vmatpush1.xpose.msra.mxu0 0.0
    %5128 = vmatprep.subr.mxu0 0.0
    %5129 = vmatpush1.xpose.msra.mxu0 0.0
    %5130 = vmatprep.subr.mxu0 0.0
    %5131 = vmatpush1.xpose.msra.mxu0 0.0
    %5132 = vmatprep.subr.mxu0 0.0
    %5133 = vmatpush1.xpose.msra.mxu0 0.0
    %5134 = vmatprep.subr.mxu0 0.0
    %5135 = vmatpush1.xpose.msra.mxu0 0.0
    %5136 = vmatprep.mubr.f32.mxu0 0.0
    %5137 = vmatmul.mubr.f32.gmra.mrb[0].mxu0 %v5068
    %v5138 = vpop.f32.mrb[0].mxu0
    %v5139 = vadd.f32 0.0, %v5138
    %v5140 = vpop.f32.mrb[0].mxu0
    %5141 = vdwg.mxu0
    %5142 = vrot.lane.b32.xlu0 %v453, 64
    %v5143 = vpop.permute.xlu0 %5142
    %5144 = vrot.lane.b32.xlu0 %v3578, 64
    %v5145 = vpop.permute.xlu0 %5144
    %v5146 = vsel %vm454, %v5143, 0
    %v5148 = vsel %vm454, %v5145, 0
    %5150 = vmatprep.subr.mxu0 0.0
    %5151 = vmatpush1.xpose.msra.mxu0 %v5148
    %5152 = vmatprep.subr.mxu0 0.0
    %5153 = vmatpush1.xpose.msra.mxu0 0.0
    %5154 = vmatprep.subr.mxu0 0.0
    %5155 = vmatpush1.xpose.msra.mxu0 0.0
    %5156 = vmatprep.subr.mxu0 0.0
    %5157 = vmatpush1.xpose.msra.mxu0 0.0
    %5158 = vmatprep.subr.mxu0 0.0
    %5159 = vmatpush1.xpose.msra.mxu0 0.0
    %5160 = vmatprep.subr.mxu0 0.0
    %5161 = vmatpush1.xpose.msra.mxu0 0.0
    %5162 = vmatprep.subr.mxu0 0.0
    %5163 = vmatpush1.xpose.msra.mxu0 0.0
    %5164 = vmatprep.subr.mxu0 0.0
    %5165 = vmatpush1.xpose.msra.mxu0 0.0
    %5166 = vmatprep.subr.mxu0 0.0
    %5167 = vmatpush1.xpose.msra.mxu0 0.0
    %5168 = vmatprep.subr.mxu0 0.0
    %5169 = vmatpush1.xpose.msra.mxu0 0.0
    %5170 = vmatprep.subr.mxu0 0.0
    %5171 = vmatpush1.xpose.msra.mxu0 0.0
    %5172 = vmatprep.subr.mxu0 0.0
    %5173 = vmatpush1.xpose.msra.mxu0 0.0
    %5174 = vmatprep.subr.mxu0 0.0
    %5175 = vmatpush1.xpose.msra.mxu0 0.0
    %5176 = vmatprep.subr.mxu0 0.0
    %5177 = vmatpush1.xpose.msra.mxu0 0.0
    %5178 = vmatprep.subr.mxu0 0.0
    %5179 = vmatpush1.xpose.msra.mxu0 0.0
    %5180 = vmatprep.subr.mxu0 0.0
    %5181 = vmatpush1.xpose.msra.mxu0 0.0
    %5182 = vmatprep.subr.mxu0 0.0
    %5183 = vmatpush1.xpose.msra.mxu0 0.0
    %5184 = vmatprep.subr.mxu0 0.0
    %5185 = vmatpush1.xpose.msra.mxu0 0.0
    %5186 = vmatprep.subr.mxu0 0.0
    %5187 = vmatpush1.xpose.msra.mxu0 0.0
    %5188 = vmatprep.subr.mxu0 0.0
    %5189 = vmatpush1.xpose.msra.mxu0 0.0
    %5190 = vmatprep.subr.mxu0 0.0
    %5191 = vmatpush1.xpose.msra.mxu0 0.0
    %5192 = vmatprep.subr.mxu0 0.0
    %5193 = vmatpush1.xpose.msra.mxu0 0.0
    %5194 = vmatprep.subr.mxu0 0.0
    %5195 = vmatpush1.xpose.msra.mxu0 0.0
    %5196 = vmatprep.subr.mxu0 0.0
    %5197 = vmatpush1.xpose.msra.mxu0 0.0
    %5198 = vmatprep.subr.mxu0 0.0
    %5199 = vmatpush1.xpose.msra.mxu0 0.0
    %5200 = vmatprep.subr.mxu0 0.0
    %5201 = vmatpush1.xpose.msra.mxu0 0.0
    %5202 = vmatprep.subr.mxu0 0.0
    %5203 = vmatpush1.xpose.msra.mxu0 0.0
    %5204 = vmatprep.subr.mxu0 0.0
    %5205 = vmatpush1.xpose.msra.mxu0 0.0
    %5206 = vmatprep.subr.mxu0 0.0
    %5207 = vmatpush1.xpose.msra.mxu0 0.0
    %5208 = vmatprep.subr.mxu0 0.0
    %5209 = vmatpush1.xpose.msra.mxu0 0.0
    %5210 = vmatprep.subr.mxu0 0.0
    %5211 = vmatpush1.xpose.msra.mxu0 0.0
    %5212 = vmatprep.subr.mxu0 0.0
    %5213 = vmatpush1.xpose.msra.mxu0 0.0
    %5214 = vmatprep.mubr.f32.mxu0 0.0
    %5215 = vmatmul.mubr.f32.gmra.mrb[0].mxu0 %v5146
    %v5216 = vpop.f32.mrb[0].mxu0
    %v5217 = vadd.f32 0.0, %v5216
    %v5218 = vpop.f32.mrb[0].mxu0
    %5219 = vdwg.mxu0
    %v5220 = vsel %vm759, %v4983, -inf
    %5221 = vmax.xlane.f32.xlu0 %v5220
    %v5222 = vpop.xlane.xlu0 %5221
    %v5223 = vsel %vm759, %v5061, -inf
    %5224 = vmax.xlane.f32.xlu0 %v5223
    %v5225 = vpop.xlane.xlu0 %5224
    %v5226 = vsel %vm759, %v5139, -inf
    %5227 = vmax.xlane.f32.xlu0 %v5226
    %v5228 = vpop.xlane.xlu0 %5227
    %v5229 = vsel %vm759, %v5217, -inf
    %5230 = vmax.xlane.f32.xlu0 %v5229
    %v5231 = vpop.xlane.xlu0 %5230
    %v5232 = vsub.f32 %v4983, %v5222
    %v5233 = vsub.f32 %v5061, %v5225
    %v5234 = vsub.f32 %v5139, %v5228
    %v5235 = vsub.f32 %v5217, %v5231
    %v5236 = vmul.f32 %v5232, 1.442695
    %v5237 = vpow.pop %v5236
    %v5238 = vmul.f32 %v5233, 1.442695
    %v5239 = vpow.pop %v5238
    %v5240 = vmul.f32 %v5234, 1.442695
    %v5241 = vpow.pop %v5240
    %v5242 = vmul.f32 %v5235, 1.442695
    %v5243 = vpow.pop %v5242
    %v5244 = vsel %vm759, %v5237, 0.0
    %5245 = vadd.xlane.f32.xlu0 %v5244
    %v5246 = vpop.xlane.xlu0 %5245
    %v5247 = vsel %vm759, %v5239, 0.0
    %5248 = vadd.xlane.f32.xlu0 %v5247
    %v5249 = vpop.xlane.xlu0 %5248
    %v5250 = vsel %vm759, %v5241, 0.0
    %5251 = vadd.xlane.f32.xlu0 %v5250
    %v5252 = vpop.xlane.xlu0 %5251
    %v5253 = vsel %vm759, %v5243, 0.0
    %5254 = vadd.xlane.f32.xlu0 %v5253
    %v5255 = vpop.xlane.xlu0 %5254
    %v5256 = vrcp.pop %v5246
    %v5257 = vrcp.pop %v5249
    %v5258 = vrcp.pop %v5252
    %v5259 = vrcp.pop %v5255
    %v5260 = vmul.f32 %v5246, %v5256
    %v5261 = vmul.f32 %v5249, %v5257
    %v5262 = vmul.f32 %v5252, %v5258
    %v5263 = vmul.f32 %v5255, %v5259
    %v5264 = vsub.f32 2.0, %v5260
    %v5265 = vsub.f32 2.0, %v5261
    %v5266 = vsub.f32 2.0, %v5262
    %v5267 = vsub.f32 2.0, %v5263
    %v5268 = vmul.f32 %v5256, %v5264
    %v5269 = vmul.f32 %v5257, %v5265
    %v5270 = vmul.f32 %v5258, %v5266
    %v5271 = vmul.f32 %v5259, %v5267
    %v5272 = vmul.f32 %v5237, %v5268
    %v5273 = vmul.f32 %v5239, %v5269
    %v5274 = vmul.f32 %v5241, %v5270
    %v5275 = vmul.f32 %v5243, %v5271
    %5276 = vrot.lane.b32.xlu0 %v3573, 64
    %v5277 = vpop.permute.xlu0 %5276
    %v5280 = vsel %vm759, %v5272, 0
    %5282 = vmatprep.subr.mxu0 0.0
    %5283 = vmatpush1.msra.mxu0 %v5277
    %5284 = vmatprep.subr.mxu0 0.0
    %5285 = vmatpush1.msra.mxu0 0.0
    %5286 = vmatprep.subr.mxu0 0.0
    %5287 = vmatpush1.msra.mxu0 0.0
    %5288 = vmatprep.subr.mxu0 0.0
    %5289 = vmatpush1.msra.mxu0 0.0
    %5290 = vmatprep.subr.mxu0 0.0
    %5291 = vmatpush1.msra.mxu0 0.0
    %5292 = vmatprep.subr.mxu0 0.0
    %5293 = vmatpush1.msra.mxu0 0.0
    %5294 = vmatprep.subr.mxu0 0.0
    %5295 = vmatpush1.msra.mxu0 0.0
    %5296 = vmatprep.subr.mxu0 0.0
    %5297 = vmatpush1.msra.mxu0 0.0
    %5298 = vmatprep.subr.mxu0 0.0
    %5299 = vmatpush1.msra.mxu0 0.0
    %5300 = vmatprep.subr.mxu0 0.0
    %5301 = vmatpush1.msra.mxu0 0.0
    %5302 = vmatprep.subr.mxu0 0.0
    %5303 = vmatpush1.msra.mxu0 0.0
    %5304 = vmatprep.subr.mxu0 0.0
    %5305 = vmatpush1.msra.mxu0 0.0
    %5306 = vmatprep.subr.mxu0 0.0
    %5307 = vmatpush1.msra.mxu0 0.0
    %5308 = vmatprep.subr.mxu0 0.0
    %5309 = vmatpush1.msra.mxu0 0.0
    %5310 = vmatprep.subr.mxu0 0.0
    %5311 = vmatpush1.msra.mxu0 0.0
    %5312 = vmatprep.subr.mxu0 0.0
    %5313 = vmatpush1.msra.mxu0 0.0
    %5314 = vmatprep.subr.mxu0 0.0
    %5315 = vmatpush1.msra.mxu0 0.0
    %5316 = vmatprep.subr.mxu0 0.0
    %5317 = vmatpush1.msra.mxu0 0.0
    %5318 = vmatprep.subr.mxu0 0.0
    %5319 = vmatpush1.msra.mxu0 0.0
    %5320 = vmatprep.subr.mxu0 0.0
    %5321 = vmatpush1.msra.mxu0 0.0
    %5322 = vmatprep.subr.mxu0 0.0
    %5323 = vmatpush1.msra.mxu0 0.0
    %5324 = vmatprep.subr.mxu0 0.0
    %5325 = vmatpush1.msra.mxu0 0.0
    %5326 = vmatprep.subr.mxu0 0.0
    %5327 = vmatpush1.msra.mxu0 0.0
    %5328 = vmatprep.subr.mxu0 0.0
    %5329 = vmatpush1.msra.mxu0 0.0
    %5330 = vmatprep.subr.mxu0 0.0
    %5331 = vmatpush1.msra.mxu0 0.0
    %5332 = vmatprep.subr.mxu0 0.0
    %5333 = vmatpush1.msra.mxu0 0.0
    %5334 = vmatprep.subr.mxu0 0.0
    %5335 = vmatpush1.msra.mxu0 0.0
    %5336 = vmatprep.subr.mxu0 0.0
    %5337 = vmatpush1.msra.mxu0 0.0
    %5338 = vmatprep.subr.mxu0 0.0
    %5339 = vmatpush1.msra.mxu0 0.0
    %5340 = vmatprep.subr.mxu0 0.0
    %5341 = vmatpush1.msra.mxu0 0.0
    %5342 = vmatprep.subr.mxu0 0.0
    %5343 = vmatpush1.msra.mxu0 0.0
    %5344 = vmatprep.subr.mxu0 0.0
    %5345 = vmatpush1.msra.mxu0 0.0
    %5346 = vmatprep.mubr.f32.mxu0 0.0
    %5347 = vmatmul.mubr.f32.gmra.mrb[0].mxu0 %v5280
    %v5348 = vpop.f32.mrb[0].mxu0
    %v5349 = vadd.f32 0.0, %v5348
    %v5350 = vpop.f32.mrb[0].mxu0
    %5351 = vdwg.mxu0
    %5352 = vrot.lane.b32.xlu0 %v3575, 64
    %v5353 = vpop.permute.xlu0 %5352
    %v5356 = vsel %vm759, %v5273, 0
    %5358 = vmatprep.subr.mxu0 0.0
    %5359 = vmatpush1.msra.mxu0 %v5353
    %5360 = vmatprep.subr.mxu0 0.0
    %5361 = vmatpush1.msra.mxu0 0.0
    %5362 = vmatprep.subr.mxu0 0.0
    %5363 = vmatpush1.msra.mxu0 0.0
    %5364 = vmatprep.subr.mxu0 0.0
    %5365 = vmatpush1.msra.mxu0 0.0
    %5366 = vmatprep.subr.mxu0 0.0
    %5367 = vmatpush1.msra.mxu0 0.0
    %5368 = vmatprep.subr.mxu0 0.0
    %5369 = vmatpush1.msra.mxu0 0.0
    %5370 = vmatprep.subr.mxu0 0.0
    %5371 = vmatpush1.msra.mxu0 0.0
    %5372 = vmatprep.subr.mxu0 0.0
    %5373 = vmatpush1.msra.mxu0 0.0
    %5374 = vmatprep.subr.mxu0 0.0
    %5375 = vmatpush1.msra.mxu0 0.0
    %5376 = vmatprep.subr.mxu0 0.0
    %5377 = vmatpush1.msra.mxu0 0.0
    %5378 = vmatprep.subr.mxu0 0.0
    %5379 = vmatpush1.msra.mxu0 0.0
    %5380 = vmatprep.subr.mxu0 0.0
    %5381 = vmatpush1.msra.mxu0 0.0
    %5382 = vmatprep.subr.mxu0 0.0
    %5383 = vmatpush1.msra.mxu0 0.0
    %5384 = vmatprep.subr.mxu0 0.0
    %5385 = vmatpush1.msra.mxu0 0.0
    %5386 = vmatprep.subr.mxu0 0.0
    %5387 = vmatpush1.msra.mxu0 0.0
    %5388 = vmatprep.subr.mxu0 0.0
    %5389 = vmatpush1.msra.mxu0 0.0
    %5390 = vmatprep.subr.mxu0 0.0
    %5391 = vmatpush1.msra.mxu0 0.0
    %5392 = vmatprep.subr.mxu0 0.0
    %5393 = vmatpush1.msra.mxu0 0.0
    %5394 = vmatprep.subr.mxu0 0.0
    %5395 = vmatpush1.msra.mxu0 0.0
    %5396 = vmatprep.subr.mxu0 0.0
    %5397 = vmatpush1.msra.mxu0 0.0
    %5398 = vmatprep.subr.mxu0 0.0
    %5399 = vmatpush1.msra.mxu0 0.0
    %5400 = vmatprep.subr.mxu0 0.0
    %5401 = vmatpush1.msra.mxu0 0.0
    %5402 = vmatprep.subr.mxu0 0.0
    %5403 = vmatpush1.msra.mxu0 0.0
    %5404 = vmatprep.subr.mxu0 0.0
    %5405 = vmatpush1.msra.mxu0 0.0
    %5406 = vmatprep.subr.mxu0 0.0
    %5407 = vmatpush1.msra.mxu0 0.0
    %5408 = vmatprep.subr.mxu0 0.0
    %5409 = vmatpush1.msra.mxu0 0.0
    %5410 = vmatprep.subr.mxu0 0.0
    %5411 = vmatpush1.msra.mxu0 0.0
    %5412 = vmatprep.subr.mxu0 0.0
    %5413 = vmatpush1.msra.mxu0 0.0
    %5414 = vmatprep.subr.mxu0 0.0
    %5415 = vmatpush1.msra.mxu0 0.0
    %5416 = vmatprep.subr.mxu0 0.0
    %5417 = vmatpush1.msra.mxu0 0.0
    %5418 = vmatprep.subr.mxu0 0.0
    %5419 = vmatpush1.msra.mxu0 0.0
    %5420 = vmatprep.subr.mxu0 0.0
    %5421 = vmatpush1.msra.mxu0 0.0
    %5422 = vmatprep.mubr.f32.mxu0 0.0
    %5423 = vmatmul.mubr.f32.gmra.mrb[0].mxu0 %v5356
    %v5424 = vpop.f32.mrb[0].mxu0
    %v5425 = vadd.f32 0.0, %v5424
    %v5426 = vpop.f32.mrb[0].mxu0
    %5427 = vdwg.mxu0
    %5428 = vrot.lane.b32.xlu0 %v3577, 64
    %v5429 = vpop.permute.xlu0 %5428
    %v5432 = vsel %vm759, %v5274, 0
    %5434 = vmatprep.subr.mxu0 0.0
    %5435 = vmatpush1.msra.mxu0 %v5429
    %5436 = vmatprep.subr.mxu0 0.0
    %5437 = vmatpush1.msra.mxu0 0.0
    %5438 = vmatprep.subr.mxu0 0.0
    %5439 = vmatpush1.msra.mxu0 0.0
    %5440 = vmatprep.subr.mxu0 0.0
    %5441 = vmatpush1.msra.mxu0 0.0
    %5442 = vmatprep.subr.mxu0 0.0
    %5443 = vmatpush1.msra.mxu0 0.0
    %5444 = vmatprep.subr.mxu0 0.0
    %5445 = vmatpush1.msra.mxu0 0.0
    %5446 = vmatprep.subr.mxu0 0.0
    %5447 = vmatpush1.msra.mxu0 0.0
    %5448 = vmatprep.subr.mxu0 0.0
    %5449 = vmatpush1.msra.mxu0 0.0
    %5450 = vmatprep.subr.mxu0 0.0
    %5451 = vmatpush1.msra.mxu0 0.0
    %5452 = vmatprep.subr.mxu0 0.0
    %5453 = vmatpush1.msra.mxu0 0.0
    %5454 = vmatprep.subr.mxu0 0.0
    %5455 = vmatpush1.msra.mxu0 0.0
    %5456 = vmatprep.subr.mxu0 0.0
    %5457 = vmatpush1.msra.mxu0 0.0
    %5458 = vmatprep.subr.mxu0 0.0
    %5459 = vmatpush1.msra.mxu0 0.0
    %5460 = vmatprep.subr.mxu0 0.0
    %5461 = vmatpush1.msra.mxu0 0.0
    %5462 = vmatprep.subr.mxu0 0.0
    %5463 = vmatpush1.msra.mxu0 0.0
    %5464 = vmatprep.subr.mxu0 0.0
    %5465 = vmatpush1.msra.mxu0 0.0
    %5466 = vmatprep.subr.mxu0 0.0
    %5467 = vmatpush1.msra.mxu0 0.0
    %5468 = vmatprep.subr.mxu0 0.0
    %5469 = vmatpush1.msra.mxu0 0.0
    %5470 = vmatprep.subr.mxu0 0.0
    %5471 = vmatpush1.msra.mxu0 0.0
    %5472 = vmatprep.subr.mxu0 0.0
    %5473 = vmatpush1.msra.mxu0 0.0
    %5474 = vmatprep.subr.mxu0 0.0
    %5475 = vmatpush1.msra.mxu0 0.0
    %5476 = vmatprep.subr.mxu0 0.0
    %5477 = vmatpush1.msra.mxu0 0.0
    %5478 = vmatprep.subr.mxu0 0.0
    %5479 = vmatpush1.msra.mxu0 0.0
    %5480 = vmatprep.subr.mxu0 0.0
    %5481 = vmatpush1.msra.mxu0 0.0
    %5482 = vmatprep.subr.mxu0 0.0
    %5483 = vmatpush1.msra.mxu0 0.0
    %5484 = vmatprep.subr.mxu0 0.0
    %5485 = vmatpush1.msra.mxu0 0.0
    %5486 = vmatprep.subr.mxu0 0.0
    %5487 = vmatpush1.msra.mxu0 0.0
    %5488 = vmatprep.subr.mxu0 0.0
    %5489 = vmatpush1.msra.mxu0 0.0
    %5490 = vmatprep.subr.mxu0 0.0
    %5491 = vmatpush1.msra.mxu0 0.0
    %5492 = vmatprep.subr.mxu0 0.0
    %5493 = vmatpush1.msra.mxu0 0.0
    %5494 = vmatprep.subr.mxu0 0.0
    %5495 = vmatpush1.msra.mxu0 0.0
    %5496 = vmatprep.subr.mxu0 0.0
    %5497 = vmatpush1.msra.mxu0 0.0
    %5498 = vmatprep.mubr.f32.mxu0 0.0
    %5499 = vmatmul.mubr.f32.gmra.mrb[0].mxu0 %v5432
    %v5500 = vpop.f32.mrb[0].mxu0
    %v5501 = vadd.f32 0.0, %v5500
    %v5502 = vpop.f32.mrb[0].mxu0
    %5503 = vdwg.mxu0
    %5504 = vrot.lane.b32.xlu0 %v3579, 64
    %v5505 = vpop.permute.xlu0 %5504
    %v5508 = vsel %vm759, %v5275, 0
    %5510 = vmatprep.subr.mxu0 0.0
    %5511 = vmatpush1.msra.mxu0 %v5505
    %5512 = vmatprep.subr.mxu0 0.0
    %5513 = vmatpush1.msra.mxu0 0.0
    %5514 = vmatprep.subr.mxu0 0.0
    %5515 = vmatpush1.msra.mxu0 0.0
    %5516 = vmatprep.subr.mxu0 0.0
    %5517 = vmatpush1.msra.mxu0 0.0
    %5518 = vmatprep.subr.mxu0 0.0
    %5519 = vmatpush1.msra.mxu0 0.0
    %5520 = vmatprep.subr.mxu0 0.0
    %5521 = vmatpush1.msra.mxu0 0.0
    %5522 = vmatprep.subr.mxu0 0.0
    %5523 = vmatpush1.msra.mxu0 0.0
    %5524 = vmatprep.subr.mxu0 0.0
    %5525 = vmatpush1.msra.mxu0 0.0
    %5526 = vmatprep.subr.mxu0 0.0
    %5527 = vmatpush1.msra.mxu0 0.0
    %5528 = vmatprep.subr.mxu0 0.0
    %5529 = vmatpush1.msra.mxu0 0.0
    %5530 = vmatprep.subr.mxu0 0.0
    %5531 = vmatpush1.msra.mxu0 0.0
    %5532 = vmatprep.subr.mxu0 0.0
    %5533 = vmatpush1.msra.mxu0 0.0
    %5534 = vmatprep.subr.mxu0 0.0
    %5535 = vmatpush1.msra.mxu0 0.0
    %5536 = vmatprep.subr.mxu0 0.0
    %5537 = vmatpush1.msra.mxu0 0.0
    %5538 = vmatprep.subr.mxu0 0.0
    %5539 = vmatpush1.msra.mxu0 0.0
    %5540 = vmatprep.subr.mxu0 0.0
    %5541 = vmatpush1.msra.mxu0 0.0
    %5542 = vmatprep.subr.mxu0 0.0
    %5543 = vmatpush1.msra.mxu0 0.0
    %5544 = vmatprep.subr.mxu0 0.0
    %5545 = vmatpush1.msra.mxu0 0.0
    %5546 = vmatprep.subr.mxu0 0.0
    %5547 = vmatpush1.msra.mxu0 0.0
    %5548 = vmatprep.subr.mxu0 0.0
    %5549 = vmatpush1.msra.mxu0 0.0
    %5550 = vmatprep.subr.mxu0 0.0
    %5551 = vmatpush1.msra.mxu0 0.0
    %5552 = vmatprep.subr.mxu0 0.0
    %5553 = vmatpush1.msra.mxu0 0.0
    %5554 = vmatprep.subr.mxu0 0.0
    %5555 = vmatpush1.msra.mxu0 0.0
    %5556 = vmatprep.subr.mxu0 0.0
    %5557 = vmatpush1.msra.mxu0 0.0
    %5558 = vmatprep.subr.mxu0 0.0
    %5559 = vmatpush1.msra.mxu0 0.0
    %5560 = vmatprep.subr.mxu0 0.0
    %5561 = vmatpush1.msra.mxu0 0.0
    %5562 = vmatprep.subr.mxu0 0.0
    %5563 = vmatpush1.msra.mxu0 0.0
    %5564 = vmatprep.subr.mxu0 0.0
    %5565 = vmatpush1.msra.mxu0 0.0
    %5566 = vmatprep.subr.mxu0 0.0
    %5567 = vmatpush1.msra.mxu0 0.0
    %5568 = vmatprep.subr.mxu0 0.0
    %5569 = vmatpush1.msra.mxu0 0.0
    %5570 = vmatprep.subr.mxu0 0.0
    %5571 = vmatpush1.msra.mxu0 0.0
    %5572 = vmatprep.subr.mxu0 0.0
    %5573 = vmatpush1.msra.mxu0 0.0
    %5574 = vmatprep.mubr.f32.mxu0 0.0
    %5575 = vmatmul.mubr.f32.gmra.mrb[0].mxu0 %v5508
    %v5576 = vpop.f32.mrb[0].mxu0
    %v5577 = vadd.f32 0.0, %v5576
    %v5578 = vpop.f32.mrb[0].mxu0
    %5579 = vdwg.mxu0
    %5580 = vrot.lane.b32.xlu0 %v450, 32
    %v5581 = vpop.permute.xlu0 %5580
    %5582 = vrot.lane.b32.xlu0 %v3572, 32
    %v5583 = vpop.permute.xlu0 %5582
    %v5584 = vsel %vm454, %v5581, 0
    %v5586 = vsel %vm454, %v5583, 0
    %5588 = vmatprep.subr.mxu0 0.0
    %5589 = vmatpush1.xpose.msra.mxu0 %v5586
    %5590 = vmatprep.subr.mxu0 0.0
    %5591 = vmatpush1.xpose.msra.mxu0 0.0
    %5592 = vmatprep.subr.mxu0 0.0
    %5593 = vmatpush1.xpose.msra.mxu0 0.0
    %5594 = vmatprep.subr.mxu0 0.0
    %5595 = vmatpush1.xpose.msra.mxu0 0.0
    %5596 = vmatprep.subr.mxu0 0.0
    %5597 = vmatpush1.xpose.msra.mxu0 0.0
    %5598 = vmatprep.subr.mxu0 0.0
    %5599 = vmatpush1.xpose.msra.mxu0 0.0
    %5600 = vmatprep.subr.mxu0 0.0
    %5601 = vmatpush1.xpose.msra.mxu0 0.0
    %5602 = vmatprep.subr.mxu0 0.0
    %5603 = vmatpush1.xpose.msra.mxu0 0.0
    %5604 = vmatprep.subr.mxu0 0.0
    %5605 = vmatpush1.xpose.msra.mxu0 0.0
    %5606 = vmatprep.subr.mxu0 0.0
    %5607 = vmatpush1.xpose.msra.mxu0 0.0
    %5608 = vmatprep.subr.mxu0 0.0
    %5609 = vmatpush1.xpose.msra.mxu0 0.0
    %5610 = vmatprep.subr.mxu0 0.0
    %5611 = vmatpush1.xpose.msra.mxu0 0.0
    %5612 = vmatprep.subr.mxu0 0.0
    %5613 = vmatpush1.xpose.msra.mxu0 0.0
    %5614 = vmatprep.subr.mxu0 0.0
    %5615 = vmatpush1.xpose.msra.mxu0 0.0
    %5616 = vmatprep.subr.mxu0 0.0
    %5617 = vmatpush1.xpose.msra.mxu0 0.0
    %5618 = vmatprep.subr.mxu0 0.0
    %5619 = vmatpush1.xpose.msra.mxu0 0.0
    %5620 = vmatprep.subr.mxu0 0.0
    %5621 = vmatpush1.xpose.msra.mxu0 0.0
    %5622 = vmatprep.subr.mxu0 0.0
    %5623 = vmatpush1.xpose.msra.mxu0 0.0
    %5624 = vmatprep.subr.mxu0 0.0
    %5625 = vmatpush1.xpose.msra.mxu0 0.0
    %5626 = vmatprep.subr.mxu0 0.0
    %5627 = vmatpush1.xpose.msra.mxu0 0.0
    %5628 = vmatprep.subr.mxu0 0.0
    %5629 = vmatpush1.xpose.msra.mxu0 0.0
    %5630 = vmatprep.subr.mxu0 0.0
    %5631 = vmatpush1.xpose.msra.mxu0 0.0
    %5632 = vmatprep.subr.mxu0 0.0
    %5633 = vmatpush1.xpose.msra.mxu0 0.0
    %5634 = vmatprep.subr.mxu0 0.0
    %5635 = vmatpush1.xpose.msra.mxu0 0.0
    %5636 = vmatprep.subr.mxu0 0.0
    %5637 = vmatpush1.xpose.msra.mxu0 0.0
    %5638 = vmatprep.subr.mxu0 0.0
    %5639 = vmatpush1.xpose.msra.mxu0 0.0
    %5640 = vmatprep.subr.mxu0 0.0
    %5641 = vmatpush1.xpose.msra.mxu0 0.0
    %5642 = vmatprep.subr.mxu0 0.0
    %5643 = vmatpush1.xpose.msra.mxu0 0.0
    %5644 = vmatprep.subr.mxu0 0.0
    %5645 = vmatpush1.xpose.msra.mxu0 0.0
    %5646 = vmatprep.subr.mxu0 0.0
    %5647 = vmatpush1.xpose.msra.mxu0 0.0
    %5648 = vmatprep.subr.mxu0 0.0
    %5649 = vmatpush1.xpose.msra.mxu0 0.0
    %5650 = vmatprep.subr.mxu0 0.0
    %5651 = vmatpush1.xpose.msra.mxu0 0.0
    %5652 = vmatprep.mubr.f32.mxu0 0.0
    %5653 = vmatmul.mubr.f32.gmra.mrb[0].mxu0 %v5584
    %v5654 = vpop.f32.mrb[0].mxu0
    %v5655 = vadd.f32 0.0, %v5654
    %v5656 = vpop.f32.mrb[0].mxu0
    %5657 = vdwg.mxu0
    %5658 = vrot.lane.b32.xlu0 %v451, 32
    %v5659 = vpop.permute.xlu0 %5658
    %5660 = vrot.lane.b32.xlu0 %v3574, 32
    %v5661 = vpop.permute.xlu0 %5660
    %v5662 = vsel %vm454, %v5659, 0
    %v5664 = vsel %vm454, %v5661, 0
    %5666 = vmatprep.subr.mxu0 0.0
    %5667 = vmatpush1.xpose.msra.mxu0 %v5664
    %5668 = vmatprep.subr.mxu0 0.0
    %5669 = vmatpush1.xpose.msra.mxu0 0.0
    %5670 = vmatprep.subr.mxu0 0.0
    %5671 = vmatpush1.xpose.msra.mxu0 0.0
    %5672 = vmatprep.subr.mxu0 0.0
    %5673 = vmatpush1.xpose.msra.mxu0 0.0
    %5674 = vmatprep.subr.mxu0 0.0
    %5675 = vmatpush1.xpose.msra.mxu0 0.0
    %5676 = vmatprep.subr.mxu0 0.0
    %5677 = vmatpush1.xpose.msra.mxu0 0.0
    %5678 = vmatprep.subr.mxu0 0.0
    %5679 = vmatpush1.xpose.msra.mxu0 0.0
    %5680 = vmatprep.subr.mxu0 0.0
    %5681 = vmatpush1.xpose.msra.mxu0 0.0
    %5682 = vmatprep.subr.mxu0 0.0
    %5683 = vmatpush1.xpose.msra.mxu0 0.0
    %5684 = vmatprep.subr.mxu0 0.0
    %5685 = vmatpush1.xpose.msra.mxu0 0.0
    %5686 = vmatprep.subr.mxu0 0.0
    %5687 = vmatpush1.xpose.msra.mxu0 0.0
    %5688 = vmatprep.subr.mxu0 0.0
    %5689 = vmatpush1.xpose.msra.mxu0 0.0
    %5690 = vmatprep.subr.mxu0 0.0
    %5691 = vmatpush1.xpose.msra.mxu0 0.0
    %5692 = vmatprep.subr.mxu0 0.0
    %5693 = vmatpush1.xpose.msra.mxu0 0.0
    %5694 = vmatprep.subr.mxu0 0.0
    %5695 = vmatpush1.xpose.msra.mxu0 0.0
    %5696 = vmatprep.subr.mxu0 0.0
    %5697 = vmatpush1.xpose.msra.mxu0 0.0
    %5698 = vmatprep.subr.mxu0 0.0
    %5699 = vmatpush1.xpose.msra.mxu0 0.0
    %5700 = vmatprep.subr.mxu0 0.0
    %5701 = vmatpush1.xpose.msra.mxu0 0.0
    %5702 = vmatprep.subr.mxu0 0.0
    %5703 = vmatpush1.xpose.msra.mxu0 0.0
    %5704 = vmatprep.subr.mxu0 0.0
    %5705 = vmatpush1.xpose.msra.mxu0 0.0
    %5706 = vmatprep.subr.mxu0 0.0
    %5707 = vmatpush1.xpose.msra.mxu0 0.0
    %5708 = vmatprep.subr.mxu0 0.0
    %5709 = vmatpush1.xpose.msra.mxu0 0.0
    %5710 = vmatprep.subr.mxu0 0.0
    %5711 = vmatpush1.xpose.msra.mxu0 0.0
    %5712 = vmatprep.subr.mxu0 0.0
    %5713 = vmatpush1.xpose.msra.mxu0 0.0
    %5714 = vmatprep.subr.mxu0 0.0
    %5715 = vmatpush1.xpose.msra.mxu0 0.0
    %5716 = vmatprep.subr.mxu0 0.0
    %5717 = vmatpush1.xpose.msra.mxu0 0.0
    %5718 = vmatprep.subr.mxu0 0.0
    %5719 = vmatpush1.xpose.msra.mxu0 0.0
    %5720 = vmatprep.subr.mxu0 0.0
    %5721 = vmatpush1.xpose.msra.mxu0 0.0
    %5722 = vmatprep.subr.mxu0 0.0
    %5723 = vmatpush1.xpose.msra.mxu0 0.0
    %5724 = vmatprep.subr.mxu0 0.0
    %5725 = vmatpush1.xpose.msra.mxu0 0.0
    %5726 = vmatprep.subr.mxu0 0.0
    %5727 = vmatpush1.xpose.msra.mxu0 0.0
    %5728 = vmatprep.subr.mxu0 0.0
    %5729 = vmatpush1.xpose.msra.mxu0 0.0
    %5730 = vmatprep.mubr.f32.mxu0 0.0
    %5731 = vmatmul.mubr.f32.gmra.mrb[0].mxu0 %v5662
    %v5732 = vpop.f32.mrb[0].mxu0
    %v5733 = vadd.f32 0.0, %v5732
    %v5734 = vpop.f32.mrb[0].mxu0
    %5735 = vdwg.mxu0
    %5736 = vrot.lane.b32.xlu0 %v452, 32
    %v5737 = vpop.permute.xlu0 %5736
    %5738 = vrot.lane.b32.xlu0 %v3576, 32
    %v5739 = vpop.permute.xlu0 %5738
    %v5740 = vsel %vm454, %v5737, 0
    %v5742 = vsel %vm454, %v5739, 0
    %5744 = vmatprep.subr.mxu0 0.0
    %5745 = vmatpush1.xpose.msra.mxu0 %v5742
    %5746 = vmatprep.subr.mxu0 0.0
    %5747 = vmatpush1.xpose.msra.mxu0 0.0
    %5748 = vmatprep.subr.mxu0 0.0
    %5749 = vmatpush1.xpose.msra.mxu0 0.0
    %5750 = vmatprep.subr.mxu0 0.0
    %5751 = vmatpush1.xpose.msra.mxu0 0.0
    %5752 = vmatprep.subr.mxu0 0.0
    %5753 = vmatpush1.xpose.msra.mxu0 0.0
    %5754 = vmatprep.subr.mxu0 0.0
    %5755 = vmatpush1.xpose.msra.mxu0 0.0
    %5756 = vmatprep.subr.mxu0 0.0
    %5757 = vmatpush1.xpose.msra.mxu0 0.0
    %5758 = vmatprep.subr.mxu0 0.0
    %5759 = vmatpush1.xpose.msra.mxu0 0.0
    %5760 = vmatprep.subr.mxu0 0.0
    %5761 = vmatpush1.xpose.msra.mxu0 0.0
    %5762 = vmatprep.subr.mxu0 0.0
    %5763 = vmatpush1.xpose.msra.mxu0 0.0
    %5764 = vmatprep.subr.mxu0 0.0
    %5765 = vmatpush1.xpose.msra.mxu0 0.0
    %5766 = vmatprep.subr.mxu0 0.0
    %5767 = vmatpush1.xpose.msra.mxu0 0.0
    %5768 = vmatprep.subr.mxu0 0.0
    %5769 = vmatpush1.xpose.msra.mxu0 0.0
    %5770 = vmatprep.subr.mxu0 0.0
    %5771 = vmatpush1.xpose.msra.mxu0 0.0
    %5772 = vmatprep.subr.mxu0 0.0
    %5773 = vmatpush1.xpose.msra.mxu0 0.0
    %5774 = vmatprep.subr.mxu0 0.0
    %5775 = vmatpush1.xpose.msra.mxu0 0.0
    %5776 = vmatprep.subr.mxu0 0.0
    %5777 = vmatpush1.xpose.msra.mxu0 0.0
    %5778 = vmatprep.subr.mxu0 0.0
    %5779 = vmatpush1.xpose.msra.mxu0 0.0
    %5780 = vmatprep.subr.mxu0 0.0
    %5781 = vmatpush1.xpose.msra.mxu0 0.0
    %5782 = vmatprep.subr.mxu0 0.0
    %5783 = vmatpush1.xpose.msra.mxu0 0.0
    %5784 = vmatprep.subr.mxu0 0.0
    %5785 = vmatpush1.xpose.msra.mxu0 0.0
    %5786 = vmatprep.subr.mxu0 0.0
    %5787 = vmatpush1.xpose.msra.mxu0 0.0
    %5788 = vmatprep.subr.mxu0 0.0
    %5789 = vmatpush1.xpose.msra.mxu0 0.0
    %5790 = vmatprep.subr.mxu0 0.0
    %5791 = vmatpush1.xpose.msra.mxu0 0.0
    %5792 = vmatprep.subr.mxu0 0.0
    %5793 = vmatpush1.xpose.msra.mxu0 0.0
    %5794 = vmatprep.subr.mxu0 0.0
    %5795 = vmatpush1.xpose.msra.mxu0 0.0
    %5796 = vmatprep.subr.mxu0 0.0
    %5797 = vmatpush1.xpose.msra.mxu0 0.0
    %5798 = vmatprep.subr.mxu0 0.0
    %5799 = vmatpush1.xpose.msra.mxu0 0.0
    %5800 = vmatprep.subr.mxu0 0.0
    %5801 = vmatpush1.xpose.msra.mxu0 0.0
    %5802 = vmatprep.subr.mxu0 0.0
    %5803 = vmatpush1.xpose.msra.mxu0 0.0
    %5804 = vmatprep.subr.mxu0 0.0
    %5805 = vmatpush1.xpose.msra.mxu0 0.0
    %5806 = vmatprep.subr.mxu0 0.0
    %5807 = vmatpush1.xpose.msra.mxu0 0.0
    %5808 = vmatprep.mubr.f32.mxu0 0.0
    %5809 = vmatmul.mubr.f32.gmra.mrb[0].mxu0 %v5740
    %v5810 = vpop.f32.mrb[0].mxu0
    %v5811 = vadd.f32 0.0, %v5810
    %v5812 = vpop.f32.mrb[0].mxu0
    %5813 = vdwg.mxu0
    %5814 = vrot.lane.b32.xlu0 %v453, 32
    %v5815 = vpop.permute.xlu0 %5814
    %5816 = vrot.lane.b32.xlu0 %v3578, 32
    %v5817 = vpop.permute.xlu0 %5816
    %v5818 = vsel %vm454, %v5815, 0
    %v5820 = vsel %vm454, %v5817, 0
    %5822 = vmatprep.subr.mxu0 0.0
    %5823 = vmatpush1.xpose.msra.mxu0 %v5820
    %5824 = vmatprep.subr.mxu0 0.0
    %5825 = vmatpush1.xpose.msra.mxu0 0.0
    %5826 = vmatprep.subr.mxu0 0.0
    %5827 = vmatpush1.xpose.msra.mxu0 0.0
    %5828 = vmatprep.subr.mxu0 0.0
    %5829 = vmatpush1.xpose.msra.mxu0 0.0
    %5830 = vmatprep.subr.mxu0 0.0
    %5831 = vmatpush1.xpose.msra.mxu0 0.0
    %5832 = vmatprep.subr.mxu0 0.0
    %5833 = vmatpush1.xpose.msra.mxu0 0.0
    %5834 = vmatprep.subr.mxu0 0.0
    %5835 = vmatpush1.xpose.msra.mxu0 0.0
    %5836 = vmatprep.subr.mxu0 0.0
    %5837 = vmatpush1.xpose.msra.mxu0 0.0
    %5838 = vmatprep.subr.mxu0 0.0
    %5839 = vmatpush1.xpose.msra.mxu0 0.0
    %5840 = vmatprep.subr.mxu0 0.0
    %5841 = vmatpush1.xpose.msra.mxu0 0.0
    %5842 = vmatprep.subr.mxu0 0.0
    %5843 = vmatpush1.xpose.msra.mxu0 0.0
    %5844 = vmatprep.subr.mxu0 0.0
    %5845 = vmatpush1.xpose.msra.mxu0 0.0
    %5846 = vmatprep.subr.mxu0 0.0
    %5847 = vmatpush1.xpose.msra.mxu0 0.0
    %5848 = vmatprep.subr.mxu0 0.0
    %5849 = vmatpush1.xpose.msra.mxu0 0.0
    %5850 = vmatprep.subr.mxu0 0.0
    %5851 = vmatpush1.xpose.msra.mxu0 0.0
    %5852 = vmatprep.subr.mxu0 0.0
    %5853 = vmatpush1.xpose.msra.mxu0 0.0
    %5854 = vmatprep.subr.mxu0 0.0
    %5855 = vmatpush1.xpose.msra.mxu0 0.0
    %5856 = vmatprep.subr.mxu0 0.0
    %5857 = vmatpush1.xpose.msra.mxu0 0.0
    %5858 = vmatprep.subr.mxu0 0.0
    %5859 = vmatpush1.xpose.msra.mxu0 0.0
    %5860 = vmatprep.subr.mxu0 0.0
    %5861 = vmatpush1.xpose.msra.mxu0 0.0
    %5862 = vmatprep.subr.mxu0 0.0
    %5863 = vmatpush1.xpose.msra.mxu0 0.0
    %5864 = vmatprep.subr.mxu0 0.0
    %5865 = vmatpush1.xpose.msra.mxu0 0.0
    %5866 = vmatprep.subr.mxu0 0.0
    %5867 = vmatpush1.xpose.msra.mxu0 0.0
    %5868 = vmatprep.subr.mxu0 0.0
    %5869 = vmatpush1.xpose.msra.mxu0 0.0
    %5870 = vmatprep.subr.mxu0 0.0
    %5871 = vmatpush1.xpose.msra.mxu0 0.0
    %5872 = vmatprep.subr.mxu0 0.0
    %5873 = vmatpush1.xpose.msra.mxu0 0.0
    %5874 = vmatprep.subr.mxu0 0.0
    %5875 = vmatpush1.xpose.msra.mxu0 0.0
    %5876 = vmatprep.subr.mxu0 0.0
    %5877 = vmatpush1.xpose.msra.mxu0 0.0
    %5878 = vmatprep.subr.mxu0 0.0
    %5879 = vmatpush1.xpose.msra.mxu0 0.0
    %5880 = vmatprep.subr.mxu0 0.0
    %5881 = vmatpush1.xpose.msra.mxu0 0.0
    %5882 = vmatprep.subr.mxu0 0.0
    %5883 = vmatpush1.xpose.msra.mxu0 0.0
    %5884 = vmatprep.subr.mxu0 0.0
    %5885 = vmatpush1.xpose.msra.mxu0 0.0
    %5886 = vmatprep.mubr.f32.mxu0 0.0
    %5887 = vmatmul.mubr.f32.gmra.mrb[0].mxu0 %v5818
    %v5888 = vpop.f32.mrb[0].mxu0
    %v5889 = vadd.f32 0.0, %v5888
    %v5890 = vpop.f32.mrb[0].mxu0
    %5891 = vdwg.mxu0
    %v5892 = vsel %vm759, %v5655, -inf
    %5893 = vmax.xlane.f32.xlu0 %v5892
    %v5894 = vpop.xlane.xlu0 %5893
    %v5895 = vsel %vm759, %v5733, -inf
    %5896 = vmax.xlane.f32.xlu0 %v5895
    %v5897 = vpop.xlane.xlu0 %5896
    %v5898 = vsel %vm759, %v5811, -inf
    %5899 = vmax.xlane.f32.xlu0 %v5898
    %v5900 = vpop.xlane.xlu0 %5899
    %v5901 = vsel %vm759, %v5889, -inf
    %5902 = vmax.xlane.f32.xlu0 %v5901
    %v5903 = vpop.xlane.xlu0 %5902
    %v5904 = vsub.f32 %v5655, %v5894
    %v5905 = vsub.f32 %v5733, %v5897
    %v5906 = vsub.f32 %v5811, %v5900
    %v5907 = vsub.f32 %v5889, %v5903
    %v5908 = vmul.f32 %v5904, 1.442695
    %v5909 = vpow.pop %v5908
    %v5910 = vmul.f32 %v5905, 1.442695
    %v5911 = vpow.pop %v5910
    %v5912 = vmul.f32 %v5906, 1.442695
    %v5913 = vpow.pop %v5912
    %v5914 = vmul.f32 %v5907, 1.442695
    %v5915 = vpow.pop %v5914
    %v5916 = vsel %vm759, %v5909, 0.0
    %5917 = vadd.xlane.f32.xlu0 %v5916
    %v5918 = vpop.xlane.xlu0 %5917
    %v5919 = vsel %vm759, %v5911, 0.0
    %5920 = vadd.xlane.f32.xlu0 %v5919
    %v5921 = vpop.xlane.xlu0 %5920
    %v5922 = vsel %vm759, %v5913, 0.0
    %5923 = vadd.xlane.f32.xlu0 %v5922
    %v5924 = vpop.xlane.xlu0 %5923
    %v5925 = vsel %vm759, %v5915, 0.0
    %5926 = vadd.xlane.f32.xlu0 %v5925
    %v5927 = vpop.xlane.xlu0 %5926
    %v5928 = vrcp.pop %v5918
    %v5929 = vrcp.pop %v5921
    %v5930 = vrcp.pop %v5924
    %v5931 = vrcp.pop %v5927
    %v5932 = vmul.f32 %v5918, %v5928
    %v5933 = vmul.f32 %v5921, %v5929
    %v5934 = vmul.f32 %v5924, %v5930
    %v5935 = vmul.f32 %v5927, %v5931
    %v5936 = vsub.f32 2.0, %v5932
    %v5937 = vsub.f32 2.0, %v5933
    %v5938 = vsub.f32 2.0, %v5934
    %v5939 = vsub.f32 2.0, %v5935
    %v5940 = vmul.f32 %v5928, %v5936
    %v5941 = vmul.f32 %v5929, %v5937
    %v5942 = vmul.f32 %v5930, %v5938
    %v5943 = vmul.f32 %v5931, %v5939
    %v5944 = vmul.f32 %v5909, %v5940
    %v5945 = vmul.f32 %v5911, %v5941
    %v5946 = vmul.f32 %v5913, %v5942
    %v5947 = vmul.f32 %v5915, %v5943
    %5948 = vrot.lane.b32.xlu0 %v3573, 32
    %v5949 = vpop.permute.xlu0 %5948
    %v5952 = vsel %vm759, %v5944, 0
    %5954 = vmatprep.subr.mxu0 0.0
    %5955 = vmatpush1.msra.mxu0 %v5949
    %5956 = vmatprep.subr.mxu0 0.0
    %5957 = vmatpush1.msra.mxu0 0.0
    %5958 = vmatprep.subr.mxu0 0.0
    %5959 = vmatpush1.msra.mxu0 0.0
    %5960 = vmatprep.subr.mxu0 0.0
    %5961 = vmatpush1.msra.mxu0 0.0
    %5962 = vmatprep.subr.mxu0 0.0
    %5963 = vmatpush1.msra.mxu0 0.0
    %5964 = vmatprep.subr.mxu0 0.0
    %5965 = vmatpush1.msra.mxu0 0.0
    %5966 = vmatprep.subr.mxu0 0.0
    %5967 = vmatpush1.msra.mxu0 0.0
    %5968 = vmatprep.subr.mxu0 0.0
    %5969 = vmatpush1.msra.mxu0 0.0
    %5970 = vmatprep.subr.mxu0 0.0
    %5971 = vmatpush1.msra.mxu0 0.0
    %5972 = vmatprep.subr.mxu0 0.0
    %5973 = vmatpush1.msra.mxu0 0.0
    %5974 = vmatprep.subr.mxu0 0.0
    %5975 = vmatpush1.msra.mxu0 0.0
    %5976 = vmatprep.subr.mxu0 0.0
    %5977 = vmatpush1.msra.mxu0 0.0
    %5978 = vmatprep.subr.mxu0 0.0
    %5979 = vmatpush1.msra.mxu0 0.0
    %5980 = vmatprep.subr.mxu0 0.0
    %5981 = vmatpush1.msra.mxu0 0.0
    %5982 = vmatprep.subr.mxu0 0.0
    %5983 = vmatpush1.msra.mxu0 0.0
    %5984 = vmatprep.subr.mxu0 0.0
    %5985 = vmatpush1.msra.mxu0 0.0
    %5986 = vmatprep.subr.mxu0 0.0
    %5987 = vmatpush1.msra.mxu0 0.0
    %5988 = vmatprep.subr.mxu0 0.0
    %5989 = vmatpush1.msra.mxu0 0.0
    %5990 = vmatprep.subr.mxu0 0.0
    %5991 = vmatpush1.msra.mxu0 0.0
    %5992 = vmatprep.subr.mxu0 0.0
    %5993 = vmatpush1.msra.mxu0 0.0
    %5994 = vmatprep.subr.mxu0 0.0
    %5995 = vmatpush1.msra.mxu0 0.0
    %5996 = vmatprep.subr.mxu0 0.0
    %5997 = vmatpush1.msra.mxu0 0.0
    %5998 = vmatprep.subr.mxu0 0.0
    %5999 = vmatpush1.msra.mxu0 0.0
    %6000 = vmatprep.subr.mxu0 0.0
    %6001 = vmatpush1.msra.mxu0 0.0
    %6002 = vmatprep.subr.mxu0 0.0
    %6003 = vmatpush1.msra.mxu0 0.0
    %6004 = vmatprep.subr.mxu0 0.0
    %6005 = vmatpush1.msra.mxu0 0.0
    %6006 = vmatprep.subr.mxu0 0.0
    %6007 = vmatpush1.msra.mxu0 0.0
    %6008 = vmatprep.subr.mxu0 0.0
    %6009 = vmatpush1.msra.mxu0 0.0
    %6010 = vmatprep.subr.mxu0 0.0
    %6011 = vmatpush1.msra.mxu0 0.0
    %6012 = vmatprep.subr.mxu0 0.0
    %6013 = vmatpush1.msra.mxu0 0.0
    %6014 = vmatprep.subr.mxu0 0.0
    %6015 = vmatpush1.msra.mxu0 0.0
    %6016 = vmatprep.subr.mxu0 0.0
    %6017 = vmatpush1.msra.mxu0 0.0
    %6018 = vmatprep.mubr.f32.mxu0 0.0
    %6019 = vmatmul.mubr.f32.gmra.mrb[0].mxu0 %v5952
    %v6020 = vpop.f32.mrb[0].mxu0
    %v6021 = vadd.f32 0.0, %v6020
    %v6022 = vpop.f32.mrb[0].mxu0
    %6023 = vdwg.mxu0
    %6024 = vrot.lane.b32.xlu0 %v3575, 32
    %v6025 = vpop.permute.xlu0 %6024
    %v6028 = vsel %vm759, %v5945, 0
    %6030 = vmatprep.subr.mxu0 0.0
    %6031 = vmatpush1.msra.mxu0 %v6025
    %6032 = vmatprep.subr.mxu0 0.0
    %6033 = vmatpush1.msra.mxu0 0.0
    %6034 = vmatprep.subr.mxu0 0.0
    %6035 = vmatpush1.msra.mxu0 0.0
    %6036 = vmatprep.subr.mxu0 0.0
    %6037 = vmatpush1.msra.mxu0 0.0
    %6038 = vmatprep.subr.mxu0 0.0
    %6039 = vmatpush1.msra.mxu0 0.0
    %6040 = vmatprep.subr.mxu0 0.0
    %6041 = vmatpush1.msra.mxu0 0.0
    %6042 = vmatprep.subr.mxu0 0.0
    %6043 = vmatpush1.msra.mxu0 0.0
    %6044 = vmatprep.subr.mxu0 0.0
    %6045 = vmatpush1.msra.mxu0 0.0
    %6046 = vmatprep.subr.mxu0 0.0
    %6047 = vmatpush1.msra.mxu0 0.0
    %6048 = vmatprep.subr.mxu0 0.0
    %6049 = vmatpush1.msra.mxu0 0.0
    %6050 = vmatprep.subr.mxu0 0.0
    %6051 = vmatpush1.msra.mxu0 0.0
    %6052 = vmatprep.subr.mxu0 0.0
    %6053 = vmatpush1.msra.mxu0 0.0
    %6054 = vmatprep.subr.mxu0 0.0
    %6055 = vmatpush1.msra.mxu0 0.0
    %6056 = vmatprep.subr.mxu0 0.0
    %6057 = vmatpush1.msra.mxu0 0.0
    %6058 = vmatprep.subr.mxu0 0.0
    %6059 = vmatpush1.msra.mxu0 0.0
    %6060 = vmatprep.subr.mxu0 0.0
    %6061 = vmatpush1.msra.mxu0 0.0
    %6062 = vmatprep.subr.mxu0 0.0
    %6063 = vmatpush1.msra.mxu0 0.0
    %6064 = vmatprep.subr.mxu0 0.0
    %6065 = vmatpush1.msra.mxu0 0.0
    %6066 = vmatprep.subr.mxu0 0.0
    %6067 = vmatpush1.msra.mxu0 0.0
    %6068 = vmatprep.subr.mxu0 0.0
    %6069 = vmatpush1.msra.mxu0 0.0
    %6070 = vmatprep.subr.mxu0 0.0
    %6071 = vmatpush1.msra.mxu0 0.0
    %6072 = vmatprep.subr.mxu0 0.0
    %6073 = vmatpush1.msra.mxu0 0.0
    %6074 = vmatprep.subr.mxu0 0.0
    %6075 = vmatpush1.msra.mxu0 0.0
    %6076 = vmatprep.subr.mxu0 0.0
    %6077 = vmatpush1.msra.mxu0 0.0
    %6078 = vmatprep.subr.mxu0 0.0
    %6079 = vmatpush1.msra.mxu0 0.0
    %6080 = vmatprep.subr.mxu0 0.0
    %6081 = vmatpush1.msra.mxu0 0.0
    %6082 = vmatprep.subr.mxu0 0.0
    %6083 = vmatpush1.msra.mxu0 0.0
    %6084 = vmatprep.subr.mxu0 0.0
    %6085 = vmatpush1.msra.mxu0 0.0
    %6086 = vmatprep.subr.mxu0 0.0
    %6087 = vmatpush1.msra.mxu0 0.0
    %6088 = vmatprep.subr.mxu0 0.0
    %6089 = vmatpush1.msra.mxu0 0.0
    %6090 = vmatprep.subr.mxu0 0.0
    %6091 = vmatpush1.msra.mxu0 0.0
    %6092 = vmatprep.subr.mxu0 0.0
    %6093 = vmatpush1.msra.mxu0 0.0
    %6094 = vmatprep.mubr.f32.mxu0 0.0
    %6095 = vmatmul.mubr.f32.gmra.mrb[0].mxu0 %v6028
    %v6096 = vpop.f32.mrb[0].mxu0
    %v6097 = vadd.f32 0.0, %v6096
    %v6098 = vpop.f32.mrb[0].mxu0
    %6099 = vdwg.mxu0
    %6100 = vrot.lane.b32.xlu0 %v3577, 32
    %v6101 = vpop.permute.xlu0 %6100
    %v6104 = vsel %vm759, %v5946, 0
    %6106 = vmatprep.subr.mxu0 0.0
    %6107 = vmatpush1.msra.mxu0 %v6101
    %6108 = vmatprep.subr.mxu0 0.0
    %6109 = vmatpush1.msra.mxu0 0.0
    %6110 = vmatprep.subr.mxu0 0.0
    %6111 = vmatpush1.msra.mxu0 0.0
    %6112 = vmatprep.subr.mxu0 0.0
    %6113 = vmatpush1.msra.mxu0 0.0
    %6114 = vmatprep.subr.mxu0 0.0
    %6115 = vmatpush1.msra.mxu0 0.0
    %6116 = vmatprep.subr.mxu0 0.0
    %6117 = vmatpush1.msra.mxu0 0.0
    %6118 = vmatprep.subr.mxu0 0.0
    %6119 = vmatpush1.msra.mxu0 0.0
    %6120 = vmatprep.subr.mxu0 0.0
    %6121 = vmatpush1.msra.mxu0 0.0
    %6122 = vmatprep.subr.mxu0 0.0
    %6123 = vmatpush1.msra.mxu0 0.0
    %6124 = vmatprep.subr.mxu0 0.0
    %6125 = vmatpush1.msra.mxu0 0.0
    %6126 = vmatprep.subr.mxu0 0.0
    %6127 = vmatpush1.msra.mxu0 0.0
    %6128 = vmatprep.subr.mxu0 0.0
    %6129 = vmatpush1.msra.mxu0 0.0
    %6130 = vmatprep.subr.mxu0 0.0
    %6131 = vmatpush1.msra.mxu0 0.0
    %6132 = vmatprep.subr.mxu0 0.0
    %6133 = vmatpush1.msra.mxu0 0.0
    %6134 = vmatprep.subr.mxu0 0.0
    %6135 = vmatpush1.msra.mxu0 0.0
    %6136 = vmatprep.subr.mxu0 0.0
    %6137 = vmatpush1.msra.mxu0 0.0
    %6138 = vmatprep.subr.mxu0 0.0
    %6139 = vmatpush1.msra.mxu0 0.0
    %6140 = vmatprep.subr.mxu0 0.0
    %6141 = vmatpush1.msra.mxu0 0.0
    %6142 = vmatprep.subr.mxu0 0.0
    %6143 = vmatpush1.msra.mxu0 0.0
    %6144 = vmatprep.subr.mxu0 0.0
    %6145 = vmatpush1.msra.mxu0 0.0
    %6146 = vmatprep.subr.mxu0 0.0
    %6147 = vmatpush1.msra.mxu0 0.0
    %6148 = vmatprep.subr.mxu0 0.0
    %6149 = vmatpush1.msra.mxu0 0.0
    %6150 = vmatprep.subr.mxu0 0.0
    %6151 = vmatpush1.msra.mxu0 0.0
    %6152 = vmatprep.subr.mxu0 0.0
    %6153 = vmatpush1.msra.mxu0 0.0
    %6154 = vmatprep.subr.mxu0 0.0
    %6155 = vmatpush1.msra.mxu0 0.0
    %6156 = vmatprep.subr.mxu0 0.0
    %6157 = vmatpush1.msra.mxu0 0.0
    %6158 = vmatprep.subr.mxu0 0.0
    %6159 = vmatpush1.msra.mxu0 0.0
    %6160 = vmatprep.subr.mxu0 0.0
    %6161 = vmatpush1.msra.mxu0 0.0
    %6162 = vmatprep.subr.mxu0 0.0
    %6163 = vmatpush1.msra.mxu0 0.0
    %6164 = vmatprep.subr.mxu0 0.0
    %6165 = vmatpush1.msra.mxu0 0.0
    %6166 = vmatprep.subr.mxu0 0.0
    %6167 = vmatpush1.msra.mxu0 0.0
    %6168 = vmatprep.subr.mxu0 0.0
    %6169 = vmatpush1.msra.mxu0 0.0
    %6170 = vmatprep.mubr.f32.mxu0 0.0
    %6171 = vmatmul.mubr.f32.gmra.mrb[0].mxu0 %v6104
    %v6172 = vpop.f32.mrb[0].mxu0
    %v6173 = vadd.f32 0.0, %v6172
    %v6174 = vpop.f32.mrb[0].mxu0
    %6175 = vdwg.mxu0
    %6176 = vrot.lane.b32.xlu0 %v3579, 32
    %v6177 = vpop.permute.xlu0 %6176
    %v6180 = vsel %vm759, %v5947, 0
    %6182 = vmatprep.subr.mxu0 0.0
    %6183 = vmatpush1.msra.mxu0 %v6177
    %6184 = vmatprep.subr.mxu0 0.0
    %6185 = vmatpush1.msra.mxu0 0.0
    %6186 = vmatprep.subr.mxu0 0.0
    %6187 = vmatpush1.msra.mxu0 0.0
    %6188 = vmatprep.subr.mxu0 0.0
    %6189 = vmatpush1.msra.mxu0 0.0
    %6190 = vmatprep.subr.mxu0 0.0
    %6191 = vmatpush1.msra.mxu0 0.0
    %6192 = vmatprep.subr.mxu0 0.0
    %6193 = vmatpush1.msra.mxu0 0.0
    %6194 = vmatprep.subr.mxu0 0.0
    %6195 = vmatpush1.msra.mxu0 0.0
    %6196 = vmatprep.subr.mxu0 0.0
    %6197 = vmatpush1.msra.mxu0 0.0
    %6198 = vmatprep.subr.mxu0 0.0
    %6199 = vmatpush1.msra.mxu0 0.0
    %6200 = vmatprep.subr.mxu0 0.0
    %6201 = vmatpush1.msra.mxu0 0.0
    %6202 = vmatprep.subr.mxu0 0.0
    %6203 = vmatpush1.msra.mxu0 0.0
    %6204 = vmatprep.subr.mxu0 0.0
    %6205 = vmatpush1.msra.mxu0 0.0
    %6206 = vmatprep.subr.mxu0 0.0
    %6207 = vmatpush1.msra.mxu0 0.0
    %6208 = vmatprep.subr.mxu0 0.0
    %6209 = vmatpush1.msra.mxu0 0.0
    %6210 = vmatprep.subr.mxu0 0.0
    %6211 = vmatpush1.msra.mxu0 0.0
    %6212 = vmatprep.subr.mxu0 0.0
    %6213 = vmatpush1.msra.mxu0 0.0
    %6214 = vmatprep.subr.mxu0 0.0
    %6215 = vmatpush1.msra.mxu0 0.0
    %6216 = vmatprep.subr.mxu0 0.0
    %6217 = vmatpush1.msra.mxu0 0.0
    %6218 = vmatprep.subr.mxu0 0.0
    %6219 = vmatpush1.msra.mxu0 0.0
    %6220 = vmatprep.subr.mxu0 0.0
    %6221 = vmatpush1.msra.mxu0 0.0
    %6222 = vmatprep.subr.mxu0 0.0
    %6223 = vmatpush1.msra.mxu0 0.0
    %6224 = vmatprep.subr.mxu0 0.0
    %6225 = vmatpush1.msra.mxu0 0.0
    %6226 = vmatprep.subr.mxu0 0.0
    %6227 = vmatpush1.msra.mxu0 0.0
    %6228 = vmatprep.subr.mxu0 0.0
    %6229 = vmatpush1.msra.mxu0 0.0
    %6230 = vmatprep.subr.mxu0 0.0
    %6231 = vmatpush1.msra.mxu0 0.0
    %6232 = vmatprep.subr.mxu0 0.0
    %6233 = vmatpush1.msra.mxu0 0.0
    %6234 = vmatprep.subr.mxu0 0.0
    %6235 = vmatpush1.msra.mxu0 0.0
    %6236 = vmatprep.subr.mxu0 0.0
    %6237 = vmatpush1.msra.mxu0 0.0
    %6238 = vmatprep.subr.mxu0 0.0
    %6239 = vmatpush1.msra.mxu0 0.0
    %6240 = vmatprep.subr.mxu0 0.0
    %6241 = vmatpush1.msra.mxu0 0.0
    %6242 = vmatprep.subr.mxu0 0.0
    %6243 = vmatpush1.msra.mxu0 0.0
    %6244 = vmatprep.subr.mxu0 0.0
    %6245 = vmatpush1.msra.mxu0 0.0
    %6246 = vmatprep.mubr.f32.mxu0 0.0
    %6247 = vmatmul.mubr.f32.gmra.mrb[0].mxu0 %v6180
    %v6248 = vpop.f32.mrb[0].mxu0
    %v6249 = vadd.f32 0.0, %v6248
    %v6250 = vpop.f32.mrb[0].mxu0
    %6251 = vdwg.mxu0
    %v6252 = vld [vmem:[#allocation11] sm:$0xff]
    %v6253 = vld [vmem:[#allocation11 + $0x8] sm:$0xff]
    %v6254 = vld [vmem:[#allocation11 + $0x10] sm:$0xff]
    %v6255 = vld [vmem:[#allocation11 + $0x18] sm:$0xff]
    %v6256 = vld [vmem:[#allocation11 + $0x20] sm:$0xff]
    %v6257 = vld [vmem:[#allocation11 + $0x28] sm:$0xff]
    %v6258 = vld [vmem:[#allocation11 + $0x30] sm:$0xff]
    %v6259 = vld [vmem:[#allocation11 + $0x38] sm:$0xff]
    %v6261 = vsel %vm454, %v4674, 0
    %v6264 = vsel %vm454, %v4751, 0
    %v6267 = vsel %vm454, %v4828, 0
    %v6270 = vsel %vm454, %v4905, 0
    %6272 = vmatprep.subr.mxu0 0.0
    %6273 = vmatpush1.msra.mxu0 %v6256
    %6274 = vmatprep.subr.mxu0 0.0
    %6275 = vmatpush1.msra.mxu0 %v6257
    %6276 = vmatprep.subr.mxu0 0.0
    %6277 = vmatpush1.msra.mxu0 %v6258
    %6278 = vmatprep.subr.mxu0 0.0
    %6279 = vmatpush1.msra.mxu0 %v6259
    %6280 = vmatprep.subr.mxu0 0.0
    %6281 = vmatpush1.msra.mxu0 0.0
    %6282 = vmatprep.subr.mxu0 0.0
    %6283 = vmatpush1.msra.mxu0 0.0
    %6284 = vmatprep.subr.mxu0 0.0
    %6285 = vmatpush1.msra.mxu0 0.0
    %6286 = vmatprep.subr.mxu0 0.0
    %6287 = vmatpush1.msra.mxu0 0.0
    %6288 = vmatprep.subr.mxu0 0.0
    %6289 = vmatpush1.msra.mxu0 0.0
    %6290 = vmatprep.subr.mxu0 0.0
    %6291 = vmatpush1.msra.mxu0 0.0
    %6292 = vmatprep.subr.mxu0 0.0
    %6293 = vmatpush1.msra.mxu0 0.0
    %6294 = vmatprep.subr.mxu0 0.0
    %6295 = vmatpush1.msra.mxu0 0.0
    %6296 = vmatprep.subr.mxu0 0.0
    %6297 = vmatpush1.msra.mxu0 0.0
    %6298 = vmatprep.subr.mxu0 0.0
    %6299 = vmatpush1.msra.mxu0 0.0
    %6300 = vmatprep.subr.mxu0 0.0
    %6301 = vmatpush1.msra.mxu0 0.0
    %6302 = vmatprep.subr.mxu0 0.0
    %6303 = vmatpush1.msra.mxu0 0.0
    %6304 = vmatprep.subr.mxu0 0.0
    %6305 = vmatpush1.msra.mxu0 0.0
    %6306 = vmatprep.subr.mxu0 0.0
    %6307 = vmatpush1.msra.mxu0 0.0
    %6308 = vmatprep.subr.mxu0 0.0
    %6309 = vmatpush1.msra.mxu0 0.0
    %6310 = vmatprep.subr.mxu0 0.0
    %6311 = vmatpush1.msra.mxu0 0.0
    %6312 = vmatprep.subr.mxu0 0.0
    %6313 = vmatpush1.msra.mxu0 0.0
    %6314 = vmatprep.subr.mxu0 0.0
    %6315 = vmatpush1.msra.mxu0 0.0
    %6316 = vmatprep.subr.mxu0 0.0
    %6317 = vmatpush1.msra.mxu0 0.0
    %6318 = vmatprep.subr.mxu0 0.0
    %6319 = vmatpush1.msra.mxu0 0.0
    %6320 = vmatprep.subr.mxu0 0.0
    %6321 = vmatpush1.msra.mxu0 0.0
    %6322 = vmatprep.subr.mxu0 0.0
    %6323 = vmatpush1.msra.mxu0 0.0
    %6324 = vmatprep.subr.mxu0 0.0
    %6325 = vmatpush1.msra.mxu0 0.0
    %6326 = vmatprep.subr.mxu0 0.0
    %6327 = vmatpush1.msra.mxu0 0.0
    %6328 = vmatprep.subr.mxu0 0.0
    %6329 = vmatpush1.msra.mxu0 0.0
    %6330 = vmatprep.subr.mxu0 0.0
    %6331 = vmatpush1.msra.mxu0 0.0
    %6332 = vmatprep.subr.mxu0 0.0
    %6333 = vmatpush1.msra.mxu0 0.0
    %6334 = vmatprep.subr.mxu0 0.0
    %6335 = vmatpush1.msra.mxu0 0.0
    %6336 = vmatprep.mubr.f32.mxu0 0.0
    %6337 = vmatmul.mubr.f32.gmra.mrb[0].mxu0 %v6261
    %v6338 = vpop.f32.mrb[0].mxu0
    %v6339 = vadd.f32 0.0, %v6338
    %v6340 = vpop.f32.mrb[0].mxu0
    %6341 = vmatprep.mubr.f32.mxu0 0.0
    %6342 = vmatmul.mubr.f32.gmra.mrb[0].mxu0 %v6264
    %v6343 = vpop.f32.mrb[0].mxu0
    %v6344 = vadd.f32 0.0, %v6343
    %v6345 = vpop.f32.mrb[0].mxu0
    %6346 = vmatprep.mubr.f32.mxu0 0.0
    %6347 = vmatmul.mubr.f32.gmra.mrb[0].mxu0 %v6267
    %v6348 = vpop.f32.mrb[0].mxu0
    %v6349 = vadd.f32 0.0, %v6348
    %v6350 = vpop.f32.mrb[0].mxu0
    %6351 = vmatprep.mubr.f32.mxu0 0.0
    %6352 = vmatmul.mubr.f32.gmra.mrb[0].mxu0 %v6270
    %v6353 = vpop.f32.mrb[0].mxu0
    %v6354 = vadd.f32 0.0, %v6353
    %v6355 = vpop.f32.mrb[0].mxu0
    %6356 = vdwg.mxu0
    %v6358 = vsel %vm454, %v4010, 0
    %v6361 = vsel %vm454, %v4083, 0
    %v6364 = vsel %vm454, %v4156, 0
    %v6367 = vsel %vm454, %v4229, 0
    %6369 = vmatprep.subr.mxu0 0.0
    %6370 = vmatpush1.msra.mxu0 %v6252
    %6371 = vmatprep.subr.mxu0 0.0
    %6372 = vmatpush1.msra.mxu0 %v6253
    %6373 = vmatprep.subr.mxu0 0.0
    %6374 = vmatpush1.msra.mxu0 %v6254
    %6375 = vmatprep.subr.mxu0 0.0
    %6376 = vmatpush1.msra.mxu0 %v6255
    %6377 = vmatprep.subr.mxu0 0.0
    %6378 = vmatpush1.msra.mxu0 0.0
    %6379 = vmatprep.subr.mxu0 0.0
    %6380 = vmatpush1.msra.mxu0 0.0
    %6381 = vmatprep.subr.mxu0 0.0
    %6382 = vmatpush1.msra.mxu0 0.0
    %6383 = vmatprep.subr.mxu0 0.0
    %6384 = vmatpush1.msra.mxu0 0.0
    %6385 = vmatprep.subr.mxu0 0.0
    %6386 = vmatpush1.msra.mxu0 0.0
    %6387 = vmatprep.subr.mxu0 0.0
    %6388 = vmatpush1.msra.mxu0 0.0
    %6389 = vmatprep.subr.mxu0 0.0
    %6390 = vmatpush1.msra.mxu0 0.0
    %6391 = vmatprep.subr.mxu0 0.0
    %6392 = vmatpush1.msra.mxu0 0.0
    %6393 = vmatprep.subr.mxu0 0.0
    %6394 = vmatpush1.msra.mxu0 0.0
    %6395 = vmatprep.subr.mxu0 0.0
    %6396 = vmatpush1.msra.mxu0 0.0
    %6397 = vmatprep.subr.mxu0 0.0
    %6398 = vmatpush1.msra.mxu0 0.0
    %6399 = vmatprep.subr.mxu0 0.0
    %6400 = vmatpush1.msra.mxu0 0.0
    %6401 = vmatprep.subr.mxu0 0.0
    %6402 = vmatpush1.msra.mxu0 0.0
    %6403 = vmatprep.subr.mxu0 0.0
    %6404 = vmatpush1.msra.mxu0 0.0
    %6405 = vmatprep.subr.mxu0 0.0
    %6406 = vmatpush1.msra.mxu0 0.0
    %6407 = vmatprep.subr.mxu0 0.0
    %6408 = vmatpush1.msra.mxu0 0.0
    %6409 = vmatprep.subr.mxu0 0.0
    %6410 = vmatpush1.msra.mxu0 0.0
    %6411 = vmatprep.subr.mxu0 0.0
    %6412 = vmatpush1.msra.mxu0 0.0
    %6413 = vmatprep.subr.mxu0 0.0
    %6414 = vmatpush1.msra.mxu0 0.0
    %6415 = vmatprep.subr.mxu0 0.0
    %6416 = vmatpush1.msra.mxu0 0.0
    %6417 = vmatprep.subr.mxu0 0.0
    %6418 = vmatpush1.msra.mxu0 0.0
    %6419 = vmatprep.subr.mxu0 0.0
    %6420 = vmatpush1.msra.mxu0 0.0
    %6421 = vmatprep.subr.mxu0 0.0
    %6422 = vmatpush1.msra.mxu0 0.0
    %6423 = vmatprep.subr.mxu0 0.0
    %6424 = vmatpush1.msra.mxu0 0.0
    %6425 = vmatprep.subr.mxu0 0.0
    %6426 = vmatpush1.msra.mxu0 0.0
    %6427 = vmatprep.subr.mxu0 0.0
    %6428 = vmatpush1.msra.mxu0 0.0
    %6429 = vmatprep.subr.mxu0 0.0
    %6430 = vmatpush1.msra.mxu0 0.0
    %6431 = vmatprep.subr.mxu0 0.0
    %6432 = vmatpush1.msra.mxu0 0.0
    %6433 = vmatprep.mubr.f32.mxu0 0.0
    %6434 = vmatmul.mubr.f32.gmra.mrb[0].mxu0 %v6358
    %v6435 = vpop.f32.mrb[0].mxu0
    %v6436 = vadd.f32 %v6339, %v6435
    %v6437 = vpop.f32.mrb[0].mxu0
    %6438 = vmatprep.mubr.f32.mxu0 0.0
    %6439 = vmatmul.mubr.f32.gmra.mrb[0].mxu0 %v6361
    %v6440 = vpop.f32.mrb[0].mxu0
    %v6441 = vadd.f32 %v6344, %v6440
    %v6442 = vpop.f32.mrb[0].mxu0
    %6443 = vmatprep.mubr.f32.mxu0 0.0
    %6444 = vmatmul.mubr.f32.gmra.mrb[0].mxu0 %v6364
    %v6445 = vpop.f32.mrb[0].mxu0
    %v6446 = vadd.f32 %v6349, %v6445
    %v6447 = vpop.f32.mrb[0].mxu0
    %6448 = vmatprep.mubr.f32.mxu0 0.0
    %6449 = vmatmul.mubr.f32.gmra.mrb[0].mxu0 %v6367
    %v6450 = vpop.f32.mrb[0].mxu0
    %v6451 = vadd.f32 %v6354, %v6450
    %v6452 = vpop.f32.mrb[0].mxu0
    %6453 = vdwg.mxu0
    %v6454 = vld [vmem:[#allocation11 + $0x40] sm:$0xff]
    %v6455 = vld [vmem:[#allocation11 + $0x48] sm:$0xff]
    %v6456 = vld [vmem:[#allocation11 + $0x50] sm:$0xff]
    %v6457 = vld [vmem:[#allocation11 + $0x58] sm:$0xff]
    %v6459 = vsel %vm454, %v5349, 0
    %v6462 = vsel %vm454, %v5425, 0
    %v6465 = vsel %vm454, %v5501, 0
    %v6468 = vsel %vm454, %v5577, 0
    %6470 = vmatprep.subr.mxu0 0.0
    %6471 = vmatpush1.msra.mxu0 %v6454
    %6472 = vmatprep.subr.mxu0 0.0
    %6473 = vmatpush1.msra.mxu0 %v6455
    %6474 = vmatprep.subr.mxu0 0.0
    %6475 = vmatpush1.msra.mxu0 %v6456
    %6476 = vmatprep.subr.mxu0 0.0
    %6477 = vmatpush1.msra.mxu0 %v6457
    %6478 = vmatprep.subr.mxu0 0.0
    %6479 = vmatpush1.msra.mxu0 0.0
    %6480 = vmatprep.subr.mxu0 0.0
    %6481 = vmatpush1.msra.mxu0 0.0
    %6482 = vmatprep.subr.mxu0 0.0
    %6483 = vmatpush1.msra.mxu0 0.0
    %6484 = vmatprep.subr.mxu0 0.0
    %6485 = vmatpush1.msra.mxu0 0.0
    %6486 = vmatprep.subr.mxu0 0.0
    %6487 = vmatpush1.msra.mxu0 0.0
    %6488 = vmatprep.subr.mxu0 0.0
    %6489 = vmatpush1.msra.mxu0 0.0
    %6490 = vmatprep.subr.mxu0 0.0
    %6491 = vmatpush1.msra.mxu0 0.0
    %6492 = vmatprep.subr.mxu0 0.0
    %6493 = vmatpush1.msra.mxu0 0.0
    %6494 = vmatprep.subr.mxu0 0.0
    %6495 = vmatpush1.msra.mxu0 0.0
    %6496 = vmatprep.subr.mxu0 0.0
    %6497 = vmatpush1.msra.mxu0 0.0
    %6498 = vmatprep.subr.mxu0 0.0
    %6499 = vmatpush1.msra.mxu0 0.0
    %6500 = vmatprep.subr.mxu0 0.0
    %6501 = vmatpush1.msra.mxu0 0.0
    %6502 = vmatprep.subr.mxu0 0.0
    %6503 = vmatpush1.msra.mxu0 0.0
    %6504 = vmatprep.subr.mxu0 0.0
    %6505 = vmatpush1.msra.mxu0 0.0
    %6506 = vmatprep.subr.mxu0 0.0
    %6507 = vmatpush1.msra.mxu0 0.0
    %6508 = vmatprep.subr.mxu0 0.0
    %6509 = vmatpush1.msra.mxu0 0.0
    %6510 = vmatprep.subr.mxu0 0.0
    %6511 = vmatpush1.msra.mxu0 0.0
    %6512 = vmatprep.subr.mxu0 0.0
    %6513 = vmatpush1.msra.mxu0 0.0
    %6514 = vmatprep.subr.mxu0 0.0
    %6515 = vmatpush1.msra.mxu0 0.0
    %6516 = vmatprep.subr.mxu0 0.0
    %6517 = vmatpush1.msra.mxu0 0.0
    %6518 = vmatprep.subr.mxu0 0.0
    %6519 = vmatpush1.msra.mxu0 0.0
    %6520 = vmatprep.subr.mxu0 0.0
    %6521 = vmatpush1.msra.mxu0 0.0
    %6522 = vmatprep.subr.mxu0 0.0
    %6523 = vmatpush1.msra.mxu0 0.0
    %6524 = vmatprep.subr.mxu0 0.0
    %6525 = vmatpush1.msra.mxu0 0.0
    %6526 = vmatprep.subr.mxu0 0.0
    %6527 = vmatpush1.msra.mxu0 0.0
    %6528 = vmatprep.subr.mxu0 0.0
    %6529 = vmatpush1.msra.mxu0 0.0
    %6530 = vmatprep.subr.mxu0 0.0
    %6531 = vmatpush1.msra.mxu0 0.0
    %6532 = vmatprep.subr.mxu0 0.0
    %6533 = vmatpush1.msra.mxu0 0.0
    %6534 = vmatprep.mubr.f32.mxu0 0.0
    %6535 = vmatmul.mubr.f32.gmra.mrb[0].mxu0 %v6459
    %v6536 = vpop.f32.mrb[0].mxu0
    %v6537 = vadd.f32 0.0, %v6536
    %v6538 = vpop.f32.mrb[0].mxu0
    %6539 = vmatprep.mubr.f32.mxu0 0.0
    %6540 = vmatmul.mubr.f32.gmra.mrb[0].mxu0 %v6462
    %v6541 = vpop.f32.mrb[0].mxu0
    %v6542 = vadd.f32 0.0, %v6541
    %v6543 = vpop.f32.mrb[0].mxu0
    %6544 = vmatprep.mubr.f32.mxu0 0.0
    %6545 = vmatmul.mubr.f32.gmra.mrb[0].mxu0 %v6465
    %v6546 = vpop.f32.mrb[0].mxu0
    %v6547 = vadd.f32 0.0, %v6546
    %v6548 = vpop.f32.mrb[0].mxu0
    %6549 = vmatprep.mubr.f32.mxu0 0.0
    %6550 = vmatmul.mubr.f32.gmra.mrb[0].mxu0 %v6468
    %v6551 = vpop.f32.mrb[0].mxu0
    %v6552 = vadd.f32 0.0, %v6551
    %v6553 = vpop.f32.mrb[0].mxu0
    %6554 = vdwg.mxu0
    %v6555 = vadd.f32 %v6436, %v6537
    %v6556 = vadd.f32 %v6441, %v6542
    %v6557 = vadd.f32 %v6446, %v6547
    %v6558 = vadd.f32 %v6451, %v6552
    %v6559 = vld [vmem:[#allocation11 + $0x60] sm:$0xff]
    %v6560 = vld [vmem:[#allocation11 + $0x68] sm:$0xff]
    %v6561 = vld [vmem:[#allocation11 + $0x70] sm:$0xff]
    %v6562 = vld [vmem:[#allocation11 + $0x78] sm:$0xff]
    %v6564 = vsel %vm454, %v6021, 0
    %v6567 = vsel %vm454, %v6097, 0
    %v6570 = vsel %vm454, %v6173, 0
    %v6573 = vsel %vm454, %v6249, 0
    %6575 = vmatprep.subr.mxu0 0.0
    %6576 = vmatpush1.msra.mxu0 %v6559
    %6577 = vmatprep.subr.mxu0 0.0
    %6578 = vmatpush1.msra.mxu0 %v6560
    %6579 = vmatprep.subr.mxu0 0.0
    %6580 = vmatpush1.msra.mxu0 %v6561
    %6581 = vmatprep.subr.mxu0 0.0
    %6582 = vmatpush1.msra.mxu0 %v6562
    %6583 = vmatprep.subr.mxu0 0.0
    %6584 = vmatpush1.msra.mxu0 0.0
    %6585 = vmatprep.subr.mxu0 0.0
    %6586 = vmatpush1.msra.mxu0 0.0
    %6587 = vmatprep.subr.mxu0 0.0
    %6588 = vmatpush1.msra.mxu0 0.0
    %6589 = vmatprep.subr.mxu0 0.0
    %6590 = vmatpush1.msra.mxu0 0.0
    %6591 = vmatprep.subr.mxu0 0.0
    %6592 = vmatpush1.msra.mxu0 0.0
    %6593 = vmatprep.subr.mxu0 0.0
    %6594 = vmatpush1.msra.mxu0 0.0
    %6595 = vmatprep.subr.mxu0 0.0
    %6596 = vmatpush1.msra.mxu0 0.0
    %6597 = vmatprep.subr.mxu0 0.0
    %6598 = vmatpush1.msra.mxu0 0.0
    %6599 = vmatprep.subr.mxu0 0.0
    %6600 = vmatpush1.msra.mxu0 0.0
    %6601 = vmatprep.subr.mxu0 0.0
    %6602 = vmatpush1.msra.mxu0 0.0
    %6603 = vmatprep.subr.mxu0 0.0
    %6604 = vmatpush1.msra.mxu0 0.0
    %6605 = vmatprep.subr.mxu0 0.0
    %6606 = vmatpush1.msra.mxu0 0.0
    %6607 = vmatprep.subr.mxu0 0.0
    %6608 = vmatpush1.msra.mxu0 0.0
    %6609 = vmatprep.subr.mxu0 0.0
    %6610 = vmatpush1.msra.mxu0 0.0
    %6611 = vmatprep.subr.mxu0 0.0
    %6612 = vmatpush1.msra.mxu0 0.0
    %6613 = vmatprep.subr.mxu0 0.0
    %6614 = vmatpush1.msra.mxu0 0.0
    %6615 = vmatprep.subr.mxu0 0.0
    %6616 = vmatpush1.msra.mxu0 0.0
    %6617 = vmatprep.subr.mxu0 0.0
    %6618 = vmatpush1.msra.mxu0 0.0
    %6619 = vmatprep.subr.mxu0 0.0
    %6620 = vmatpush1.msra.mxu0 0.0
    %6621 = vmatprep.subr.mxu0 0.0
    %6622 = vmatpush1.msra.mxu0 0.0
    %6623 = vmatprep.subr.mxu0 0.0
    %6624 = vmatpush1.msra.mxu0 0.0
    %6625 = vmatprep.subr.mxu0 0.0
    %6626 = vmatpush1.msra.mxu0 0.0
    %6627 = vmatprep.subr.mxu0 0.0
    %6628 = vmatpush1.msra.mxu0 0.0
    %6629 = vmatprep.subr.mxu0 0.0
    %6630 = vmatpush1.msra.mxu0 0.0
    %6631 = vmatprep.subr.mxu0 0.0
    %6632 = vmatpush1.msra.mxu0 0.0
    %6633 = vmatprep.subr.mxu0 0.0
    %6634 = vmatpush1.msra.mxu0 0.0
    %6635 = vmatprep.subr.mxu0 0.0
    %6636 = vmatpush1.msra.mxu0 0.0
    %6637 = vmatprep.subr.mxu0 0.0
    %6638 = vmatpush1.msra.mxu0 0.0
    %6639 = vmatprep.mubr.f32.mxu0 0.0
    %6640 = vmatmul.mubr.f32.gmra.mrb[0].mxu0 %v6564
    %v6641 = vpop.f32.mrb[0].mxu0
    %v6642 = vadd.f32 0.0, %v6641
    %v6643 = vpop.f32.mrb[0].mxu0
    %6644 = vmatprep.mubr.f32.mxu0 0.0
    %6645 = vmatmul.mubr.f32.gmra.mrb[0].mxu0 %v6567
    %v6646 = vpop.f32.mrb[0].mxu0
    %v6647 = vadd.f32 0.0, %v6646
    %v6648 = vpop.f32.mrb[0].mxu0
    %6649 = vmatprep.mubr.f32.mxu0 0.0
    %6650 = vmatmul.mubr.f32.gmra.mrb[0].mxu0 %v6570
    %v6651 = vpop.f32.mrb[0].mxu0
    %v6652 = vadd.f32 0.0, %v6651
    %v6653 = vpop.f32.mrb[0].mxu0
    %6654 = vmatprep.mubr.f32.mxu0 0.0
    %6655 = vmatmul.mubr.f32.gmra.mrb[0].mxu0 %v6573
    %v6656 = vpop.f32.mrb[0].mxu0
    %v6657 = vadd.f32 0.0, %v6656
    %v6658 = vpop.f32.mrb[0].mxu0
    %6659 = vdwg.mxu0
    %v6660 = vadd.f32 %v6555, %v6642
    %v6661 = vadd.f32 %v6556, %v6647
    %v6662 = vadd.f32 %v6557, %v6652
    %v6663 = vadd.f32 %v6558, %v6657
    %v6664 = vld [vmem:[%s6] sm:$0x1]
    %v6666 = vlaneseq
    %v6667 = vshrl.u32 %v6666, 7
    %v6668 = vsub.s32 0, %v6667
    %v6669 = vrot.slane %v6664, %v6668
    %v6671 = vadd.f32 %v6660, %v6669
    %v6672 = vadd.f32 %v6661, %v6669
    %v6673 = vadd.f32 %v6662, %v6669
    %v6674 = vadd.f32 %v6663, %v6669
    %v6675 = vadd.f32 %v119, %v6671
    %v6676 = vadd.f32 %v120, %v6672
    %v6677 = vadd.f32 %v121, %v6673
    %v6678 = vadd.f32 %v122, %v6674
    %6679 = vadd.xlane.f32.xlu0 %v6675
    %v6680 = vpop.xlane.xlu0 %6679
    %6681 = vadd.xlane.f32.xlu0 %v6676
    %v6682 = vpop.xlane.xlu0 %6681
    %6683 = vadd.xlane.f32.xlu0 %v6677
    %v6684 = vpop.xlane.xlu0 %6683
    %6685 = vadd.xlane.f32.xlu0 %v6678
    %v6686 = vpop.xlane.xlu0 %6685
    %v6687 = vrcp.pop 128.0
    %v6688 = vmul.f32 %v6680, %v6687
    %v6689 = vmul.f32 %v6682, %v6687
    %v6690 = vmul.f32 %v6684, %v6687
    %v6691 = vmul.f32 %v6686, %v6687
    %v6692 = vsub.f32 %v6675, %v6688
    %v6693 = vsub.f32 %v6676, %v6689
    %v6694 = vsub.f32 %v6677, %v6690
    %v6695 = vsub.f32 %v6678, %v6691
    %v6696 = vmul.f32 %v6692, %v6692
    %v6697 = vmul.f32 %v6693, %v6693
    %v6698 = vmul.f32 %v6694, %v6694
    %v6699 = vmul.f32 %v6695, %v6695
    %6700 = vadd.xlane.f32.xlu0 %v6696
    %v6701 = vpop.xlane.xlu0 %6700
    %6702 = vadd.xlane.f32.xlu0 %v6697
    %v6703 = vpop.xlane.xlu0 %6702
    %6704 = vadd.xlane.f32.xlu0 %v6698
    %v6705 = vpop.xlane.xlu0 %6704
    %6706 = vadd.xlane.f32.xlu0 %v6699
    %v6707 = vpop.xlane.xlu0 %6706
    %v6708 = vmul.f32 %v6701, %v6687
    %v6709 = vmul.f32 %v6703, %v6687
    %v6710 = vmul.f32 %v6705, %v6687
    %v6711 = vmul.f32 %v6707, %v6687
    %v6712 = vadd.f32 %v6708, 1e-05
    %v6713 = vadd.f32 %v6709, 1e-05
    %v6714 = vadd.f32 %v6710, 1e-05
    %v6715 = vadd.f32 %v6711, 1e-05
    %v6716 = vrsqrt.pop %v6712
    %v6717 = vrsqrt.pop %v6713
    %v6718 = vrsqrt.pop %v6714
    %v6719 = vrsqrt.pop %v6715
    %v6720 = vmul.f32 %v6692, %v6716
    %v6721 = vmul.f32 %v6693, %v6717
    %v6722 = vmul.f32 %v6694, %v6718
    %v6723 = vmul.f32 %v6695, %v6719
    %v6724 = vld [vmem:[%s7] sm:$0x1]
    %v6726 = vlaneseq
    %v6727 = vshrl.u32 %v6726, 7
    %v6728 = vsub.s32 0, %v6727
    %v6729 = vrot.slane %v6724, %v6728
    %v6731 = vmul.f32 %v6720, %v6729
    %v6732 = vmul.f32 %v6721, %v6729
    %v6733 = vmul.f32 %v6722, %v6729
    %v6734 = vmul.f32 %v6723, %v6729
    %v6735 = vld [vmem:[%s8] sm:$0x1]
    %v6737 = vlaneseq
    %v6738 = vshrl.u32 %v6737, 7
    %v6739 = vsub.s32 0, %v6738
    %v6740 = vrot.slane %v6735, %v6739
    %v6742 = vadd.f32 %v6731, %v6740
    %v6743 = vadd.f32 %v6732, %v6740
    %v6744 = vadd.f32 %v6733, %v6740
    %v6745 = vadd.f32 %v6734, %v6740
    %6746 = vst [vmem:[#allocation13] sm:$0xff] %v6742
    %6747 = vst [vmem:[#allocation13 + $0x8] sm:$0xff] %v6743
    %6748 = vst [vmem:[#allocation13 + $0x10] sm:$0xff] %v6744
    %6749 = vst [vmem:[#allocation13 + $0x18] sm:$0xff] %v6745
    // Predicated region
    $region62: #{tpu_custom_call.1} parent=1 // pred_check
      _
    $region63: #{tpu_custom_call.1} parent=1 // pred_check_branch
      %6751 = sbr.rel (0) target = $region65
    $region64: #{tpu_custom_call.1} parent=1 // pred_region
      %s6753 = ssub.s32 512, 512
      %6754 = vsyncadd [#allocation4], %s6753
      %s6755 = sshll.u32 [#allocation13], 4
      %s6756 = int_to_ptr.vmem [resolvable:$true] %s6755
      %6761 = dma.vmem_to_hbm [thread:$0]  %s6756, 512, %s9, [#allocation4], 128, 128, 8
    $region65: #{tpu_custom_call.1} parent=1 // pred_fallthru
      _
    // Predicated region
    $region66: #{tpu_custom_call.1} parent=1 // pred_check
      _
    $region67: #{tpu_custom_call.1} parent=1 // pred_check_branch
      %6763 = sbr.rel (0) target = $region69
    $region68: #{tpu_custom_call.1} parent=1 // pred_region
      %6764 = dma.done [#allocation4], 512
    $region69: #{tpu_custom_call.1} parent=1 // pred_fallthru
      _
    %6765 = vsyncpa [#allocation3], 1
    %6766 = vsyncpa [#allocation6], 1
    %6767 = vsyncpa [#allocation9], 1
    %6768 = vsyncpa [#allocation12], 1
    %6769 = vsyncpa [#allocation4], 1

</llo_original>
